<compile_context>
chip_gen: v6e
topology: v6e:2x2x1
jax: 0.10.0
libtpu: 0.0.40
codegen_flags: <defaults>
</compile_context>

<pallas_src>
import jax
import jax.numpy as jnp
from jax.experimental import pallas as pl
from jax.experimental.pallas import tpu as pltpu

EPS = 1e-5
LANES = 128


def _round_up(x, m):
    return (x + m - 1) // m * m


def _pad_last(a, target):
    pad = target - a.shape[-1]
    if pad == 0:
        return a
    return jnp.pad(a, [(0, 0)] * (a.ndim - 1) + [(0, pad)])


# ---------------------------------------------------------------------------
# Pallas kernels
# ---------------------------------------------------------------------------
def conv3x3_stats_kernel(xp_ref, w_ref, y_ref, s_ref, q_ref):
    """3x3 conv as 9 shifted MXU dots + per-channel sum / sum-of-squares."""
    hh, ww, cout = y_ref.shape
    cin = xp_ref.shape[-1]
    acc = jnp.zeros((hh * ww, cout), jnp.float32)
    for kh in range(3):
        for kw in range(3):
            patch = xp_ref[kh:kh + hh, kw:kw + ww, :].reshape(hh * ww, cin)
            acc += jnp.dot(patch, w_ref[kh * 3 + kw],
                           preferred_element_type=jnp.float32)
    y_ref[...] = acc.reshape(hh, ww, cout)
    s_ref[...] = jnp.sum(acc, axis=0, keepdims=True)
    q_ref[...] = jnp.sum(acc * acc, axis=0, keepdims=True)


def bn_relu_conv3x3_stats_kernel(y1_ref, sc_ref, sh_ref, w_ref,
                                 y2_ref, s_ref, q_ref, padbuf):
    """Apply BN1 (folded scale/shift) + ReLU, then 3x3 conv + stats of y2."""
    hh, ww, cmid = y1_ref.shape
    cout = y2_ref.shape[-1]
    out1 = jnp.maximum(y1_ref[...] * sc_ref[...] + sh_ref[...], 0.0)
    padbuf[...] = jnp.zeros_like(padbuf)              # zero spatial halo
    padbuf[1:hh + 1, 1:ww + 1, :] = out1
    acc = jnp.zeros((hh * ww, cout), jnp.float32)
    for kh in range(3):
        for kw in range(3):
            patch = padbuf[kh:kh + hh, kw:kw + ww, :].reshape(hh * ww, cmid)
            acc += jnp.dot(patch, w_ref[kh * 3 + kw],
                           preferred_element_type=jnp.float32)
    y2_ref[...] = acc.reshape(hh, ww, cout)
    s_ref[...] = jnp.sum(acc, axis=0, keepdims=True)
    q_ref[...] = jnp.sum(acc * acc, axis=0, keepdims=True)


def bn_shortcut_add_relu_kernel(y2_ref, sc_ref, sh_ref, x_ref, ws_ref, bs_ref,
                                o_ref):
    """BN2 + fused 1x1-conv shortcut + residual add + ReLU."""
    hh, ww, cout = o_ref.shape
    cin = x_ref.shape[-1]
    ybn = y2_ref[...] * sc_ref[...] + sh_ref[...]
    idn = jnp.dot(x_ref[...].reshape(hh * ww, cin), ws_ref[...],
                  preferred_element_type=jnp.float32) + bs_ref[...]
    o_ref[...] = jnp.maximum(ybn + idn.reshape(hh, ww, cout), 0.0)


def bn_add_relu_kernel(y2_ref, sc_ref, sh_ref, id_ref, o_ref):
    """BN2 + identity residual add + ReLU (in_channels == out_channels)."""
    o_ref[...] = jnp.maximum(
        y2_ref[...] * sc_ref[...] + sh_ref[...] + id_ref[...], 0.0)


# ---------------------------------------------------------------------------
# Host-side glue
# ---------------------------------------------------------------------------
def _compiler_params():
    return pltpu.CompilerParams(
        dimension_semantics=("parallel",),       # shard image tiles across TCs
        vmem_limit_bytes=32 * 1024 * 1024,       # explicit, safe on v5e/v6e/v7x
    )


def _bn_scale_shift(s_tiles, q_tiles, count, gamma, beta):
    """Fold global training-mode BN stats into per-channel scale/shift (tiny)."""
    total = jnp.sum(s_tiles, axis=0)                         # (1, Cp)
    total_sq = jnp.sum(q_tiles, axis=0)                      # (1, Cp)
    mean = total / count
    var = jnp.maximum(total_sq / count - mean * mean, 0.0)   # biased batch var
    scale = gamma * jax.lax.rsqrt(var + EPS)
    shift = beta - mean * scale
    return scale, shift


def resblock_forward(params, x_nchw):
    n, cin, h, w = x_nchw.shape
    cout = params["w1"].shape[0]
    cp_ = _round_up(cout, LANES)          # lane-dense channel dim
    m = n * h * w
    cparams = _compiler_params()

    x = jnp.transpose(x_nchw, (0, 2, 3, 1)).astype(jnp.float32)   # NHWC
    x_sp = jnp.pad(x, ((0, 0), (1, 1), (1, 1), (0, 0)))           # spatial halo

    # ---- conv1 (+ BN1 stats) ----------------------------------------------
    w1 = _pad_last(
        jnp.transpose(params["w1"], (2, 3, 1, 0)).reshape(9, cin, cout), cp_)
    y1, s1, q1 = pl.pallas_call(
        conv3x3_stats_kernel,
        grid=(n,),
        in_specs=[
            pl.BlockSpec((None, h + 2, w + 2, cin), lambda i: (i, 0, 0, 0)),
            pl.BlockSpec((9, cin, cp_), lambda i: (0, 0, 0)),
        ],
        out_specs=(
            pl.BlockSpec((None, h, w, cp_), lambda i: (i, 0, 0, 0)),
            pl.BlockSpec((None, 1, cp_), lambda i: (i, 0, 0)),
            pl.BlockSpec((None, 1, cp_), lambda i: (i, 0, 0)),
        ),
        out_shape=(
            jax.ShapeDtypeStruct((n, h, w, cp_), jnp.float32),
            jax.ShapeDtypeStruct((n, 1, cp_), jnp.float32),
            jax.ShapeDtypeStruct((n, 1, cp_), jnp.float32),
        ),
        compiler_params=cparams,
    )(x_sp, w1)

    g1 = _pad_last(params["g1"].reshape(1, cout), cp_)
    be1 = _pad_last(params["be1"].reshape(1, cout), cp_)
    sc1, sh1 = _bn_scale_shift(s1, q1, m, g1, be1)

    # ---- BN1 + ReLU + conv2 (+ BN2 stats) -----------------------------------
    w2 = jnp.transpose(params["w2"], (2, 3, 1, 0)).reshape(9, cout, cout)
    w2 = jnp.pad(w2, ((0, 0), (0, cp_ - cout), (0, cp_ - cout)))
    y2, s2, q2 = pl.pallas_call(
        bn_relu_conv3x3_stats_kernel,
        grid=(n,),
        in_specs=[
            pl.BlockSpec((None, h, w, cp_), lambda i: (i, 0, 0, 0)),
            pl.BlockSpec((1, cp_), lambda i: (0, 0)),
            pl.BlockSpec((1, cp_), lambda i: (0, 0)),
            pl.BlockSpec((9, cp_, cp_), lambda i: (0, 0, 0)),
        ],
        out_specs=(
            pl.BlockSpec((None, h, w, cp_), lambda i: (i, 0, 0, 0)),
            pl.BlockSpec((None, 1, cp_), lambda i: (i, 0, 0)),
            pl.BlockSpec((None, 1, cp_), lambda i: (i, 0, 0)),
        ),
        out_shape=(
            jax.ShapeDtypeStruct((n, h, w, cp_), jnp.float32),
            jax.ShapeDtypeStruct((n, 1, cp_), jnp.float32),
            jax.ShapeDtypeStruct((n, 1, cp_), jnp.float32),
        ),
        scratch_shapes=[pltpu.VMEM((h + 2, w + 2, cp_), jnp.float32)],
        compiler_params=cparams,
    )(y1, sc1, sh1, w2)

    g2 = _pad_last(params["g2"].reshape(1, cout), cp_)
    be2 = _pad_last(params["be2"].reshape(1, cout), cp_)
    sc2, sh2 = _bn_scale_shift(s2, q2, m, g2, be2)

    # ---- BN2 + (fused 1x1 shortcut) + residual add + ReLU -------------------
    if "ws" in params:
        ws = _pad_last(params["ws"].reshape(cout, cin).T, cp_)   # (Cin, Cp)
        bs = _pad_last(params["bs"].reshape(1, cout), cp_)
        out = pl.pallas_call(
            bn_shortcut_add_relu_kernel,
            grid=(n,),
            in_specs=[
                pl.BlockSpec((None, h, w, cp_), lambda i: (i, 0, 0, 0)),
                pl.BlockSpec((1, cp_), lambda i: (0, 0)),
                pl.BlockSpec((1, cp_), lambda i: (0, 0)),
                pl.BlockSpec((None, h, w, cin), lambda i: (i, 0, 0, 0)),
                pl.BlockSpec((cin, cp_), lambda i: (0, 0)),
                pl.BlockSpec((1, cp_), lambda i: (0, 0)),
            ],
            out_specs=pl.BlockSpec((None, h, w, cp_), lambda i: (i, 0, 0, 0)),
            out_shape=jax.ShapeDtypeStruct((n, h, w, cp_), jnp.float32),
            compiler_params=cparams,
        )(y2, sc2, sh2, x, ws, bs)
    else:
        identity = _pad_last(x, cp_)
        out = pl.pallas_call(
            bn_add_relu_kernel,
            grid=(n,),
            in_specs=[
                pl.BlockSpec((None, h, w, cp_), lambda i: (i, 0, 0, 0)),
                pl.BlockSpec((1, cp_), lambda i: (0, 0)),
                pl.BlockSpec((1, cp_), lambda i: (0, 0)),
                pl.BlockSpec((None, h, w, cp_), lambda i: (i, 0, 0, 0)),
            ],
            out_specs=pl.BlockSpec((None, h, w, cp_), lambda i: (i, 0, 0, 0)),
            out_shape=jax.ShapeDtypeStruct((n, h, w, cp_), jnp.float32),
            compiler_params=cparams,
        )(y2, sc2, sh2, identity)

    out = out[:, :, :, :cout]                         # drop lane padding
    return jnp.transpose(out, (0, 3, 1, 2))           # back to NCHW


# ---------------------------------------------------------------------------
# Parameters + pure-JAX reference (mirrors the PyTorch forward)
# ---------------------------------------------------------------------------
def init_params(key, cin, cout):
    ks = jax.random.split(key, 11)
    p = {
        "w1": 0.1 * jax.random.normal(ks[0], (cout, cin, 3, 3), jnp.float32),
        "b1": 0.1 * jax.random.normal(ks[1], (cout,), jnp.float32),
        "g1": 1.0 + 0.1 * jax.random.normal(ks[2], (cout,), jnp.float32),
        "be1": 0.1 * jax.random.normal(ks[3], (cout,), jnp.float32),
        "w2": 0.1 * jax.random.normal(ks[4], (cout, cout, 3, 3), jnp.float32),
        "b2": 0.1 * jax.random.normal(ks[5], (cout,), jnp.float32),
        "g2": 1.0 + 0.1 * jax.random.normal(ks[6], (cout,), jnp.float32),
        "be2": 0.1 * jax.random.normal(ks[7], (cout,), jnp.float32),
    }
    if cin != cout:
        p["ws"] = 0.1 * jax.random.normal(ks[8], (cout, cin, 1, 1), jnp.float32)
        p["bs"] = 0.1 * jax.random.normal(ks[9], (cout,), jnp.float32)
    return p


def ref_forward(params, x):
    def conv(x, w, b, pad):
        y = jax.lax.conv_general_dilated(
            x, w, (1, 1), [(pad, pad), (pad, pad)],
            dimension_numbers=("NCHW", "OIHW", "NCHW"),
        )
        return y + b[None, :, None, None]

    def bn(y, g, be):
        mean = y.mean(axis=(0, 2, 3), keepdims=True)
        var = jnp.square(y - mean).mean(axis=(0, 2, 3), keepdims=True)
        return (y - mean) / jnp.sqrt(var + EPS) * g[None, :, None, None] + be[
            None, :, None, None
        ]

    out = jax.nn.relu(bn(conv(x, params["w1"], params["b1"], 1),
                         params["g1"], params["be1"]))
    out = bn(conv(out, params["w2"], params["b2"], 1), params["g2"], params["be2"])
    identity = conv(x, params["ws"], params["bs"], 0) if "ws" in params else x
    return jax.nn.relu(out + identity)


if __name__ == "__main__":
    key = jax.random.PRNGKey(0)
    k_param, k_param2, k_x, k_x2 = jax.random.split(key, 4)

    fwd = jax.jit(resblock_forward)

    # Case 1: in_channels != out_channels (1x1-conv shortcut path).
    N, CIN, COUT, H, W = 2, 4, 8, 16, 16
    params = init_params(k_param, CIN, COUT)
    x = jax.random.normal(k_x, (N, CIN, H, W), jnp.float32)
    out = jax.block_until_ready(fwd(params, x))
    ref = jax.block_until_ready(ref_forward(params, x))
    assert out.shape == (N, COUT, H, W)
    assert jnp.allclose(out, ref, atol=2e-4, rtol=2e-4), (
        f"shortcut case: max abs err {jnp.max(jnp.abs(out - ref))}")

    # Case 2: in_channels == out_channels (identity shortcut path).
    params2 = init_params(k_param2, COUT, COUT)
    x2 = jax.random.normal(k_x2, (N, COUT, H, W), jnp.float32)
    out2 = jax.block_until_ready(fwd(params2, x2))
    ref2 = jax.block_until_ready(ref_forward(params2, x2))
    assert out2.shape == (N, COUT, H, W)
    assert jnp.allclose(out2, ref2, atol=2e-4, rtol=2e-4), (
        f"identity case: max abs err {jnp.max(jnp.abs(out2 - ref2))}")

    print("KERNEL_OK")
</pallas_src>

<mosaic_0001>
module attributes {stable_mosaic.version = 11 : i64} {
  func.func @conv3x3_stats_kernel(%arg0: i32, %arg1: memref<1x18x18x4xf32, #tpu.memory_space<vmem>>, %arg2: memref<9x4x128xf32, #tpu.memory_space<vmem>>, %arg3: memref<1x16x16x128xf32, #tpu.memory_space<vmem>>, %arg4: memref<1x1x128xf32, #tpu.memory_space<vmem>>, %arg5: memref<1x1x128xf32, #tpu.memory_space<vmem>>) attributes {dimension_semantics = [#tpu.dimension_semantics<parallel>], iteration_bounds = array<i64: 2>, scalar_prefetch = 0 : i64, scratch_operands = 0 : i64, tpu.core_type = #tpu.core_type<tc>, window_params = [{transform_indices = @transform_0, window_bounds = array<i64: 1, 18, 18, 4>}, {pipeline_mode = #tpu.pipeline_mode<synchronous>, transform_indices = @transform_1, window_bounds = array<i64: 9, 4, 128>}, {transform_indices = @transform_2, window_bounds = array<i64: 1, 16, 16, 128>}, {transform_indices = @transform_3, window_bounds = array<i64: 1, 1, 128>}, {transform_indices = @transform_4, window_bounds = array<i64: 1, 1, 128>}]} {
    %cst = arith.constant 0.000000e+00 : f32
    %0 = vector.broadcast %cst : f32 to vector<256x128xf32>
    %c0 = arith.constant 0 : index
    %c0_0 = arith.constant 0 : index
    %c0_1 = arith.constant 0 : index
    %c0_2 = arith.constant 0 : index
    %1 = vector.load %arg1[%c0, %c0_0, %c0_1, %c0_2] : memref<1x18x18x4xf32, #tpu.memory_space<vmem>>, vector<1x16x16x4xf32>
    %2 = vector.shape_cast %1 : vector<1x16x16x4xf32> to vector<16x16x4xf32>
    %3 = vector.shape_cast %2 : vector<16x16x4xf32> to vector<256x4xf32>
    %c0_3 = arith.constant 0 : index
    %c0_4 = arith.constant 0 : index
    %c0_5 = arith.constant 0 : index
    %4 = vector.load %arg2[%c0_3, %c0_4, %c0_5] : memref<9x4x128xf32, #tpu.memory_space<vmem>>, vector<1x4x128xf32>
    %5 = vector.shape_cast %4 : vector<1x4x128xf32> to vector<4x128xf32>
    %cst_6 = arith.constant dense<0.000000e+00> : vector<256x128xf32>
    %6 = tpu.matmul %3, %5, %cst_6 {dimension_numbers = #tpu.dot_dimension_numbers<[1], [0], [0], [1], [0, 0, 1, 1], [], []>} : vector<256x4xf32>, vector<4x128xf32>, vector<256x128xf32> -> vector<256x128xf32>
    %7 = arith.addf %0, %6 : vector<256x128xf32>
    %c0_7 = arith.constant 0 : index
    %c0_8 = arith.constant 0 : index
    %c1 = arith.constant 1 : index
    %c0_9 = arith.constant 0 : index
    %8 = vector.load %arg1[%c0_7, %c0_8, %c1, %c0_9] : memref<1x18x18x4xf32, #tpu.memory_space<vmem>>, vector<1x16x16x4xf32>
    %9 = vector.shape_cast %8 : vector<1x16x16x4xf32> to vector<16x16x4xf32>
    %10 = vector.shape_cast %9 : vector<16x16x4xf32> to vector<256x4xf32>
    %c1_10 = arith.constant 1 : index
    %c0_11 = arith.constant 0 : index
    %c0_12 = arith.constant 0 : index
    %11 = vector.load %arg2[%c1_10, %c0_11, %c0_12] : memref<9x4x128xf32, #tpu.memory_space<vmem>>, vector<1x4x128xf32>
    %12 = vector.shape_cast %11 : vector<1x4x128xf32> to vector<4x128xf32>
    %cst_13 = arith.constant dense<0.000000e+00> : vector<256x128xf32>
    %13 = tpu.matmul %10, %12, %cst_13 {dimension_numbers = #tpu.dot_dimension_numbers<[1], [0], [0], [1], [0, 0, 1, 1], [], []>} : vector<256x4xf32>, vector<4x128xf32>, vector<256x128xf32> -> vector<256x128xf32>
    %14 = arith.addf %7, %13 : vector<256x128xf32>
    %c0_14 = arith.constant 0 : index
    %c0_15 = arith.constant 0 : index
    %c2 = arith.constant 2 : index
    %c0_16 = arith.constant 0 : index
    %15 = vector.load %arg1[%c0_14, %c0_15, %c2, %c0_16] : memref<1x18x18x4xf32, #tpu.memory_space<vmem>>, vector<1x16x16x4xf32>
    %16 = vector.shape_cast %15 : vector<1x16x16x4xf32> to vector<16x16x4xf32>
    %17 = vector.shape_cast %16 : vector<16x16x4xf32> to vector<256x4xf32>
    %c2_17 = arith.constant 2 : index
    %c0_18 = arith.constant 0 : index
    %c0_19 = arith.constant 0 : index
    %18 = vector.load %arg2[%c2_17, %c0_18, %c0_19] : memref<9x4x128xf32, #tpu.memory_space<vmem>>, vector<1x4x128xf32>
    %19 = vector.shape_cast %18 : vector<1x4x128xf32> to vector<4x128xf32>
    %cst_20 = arith.constant dense<0.000000e+00> : vector<256x128xf32>
    %20 = tpu.matmul %17, %19, %cst_20 {dimension_numbers = #tpu.dot_dimension_numbers<[1], [0], [0], [1], [0, 0, 1, 1], [], []>} : vector<256x4xf32>, vector<4x128xf32>, vector<256x128xf32> -> vector<256x128xf32>
    %21 = arith.addf %14, %20 : vector<256x128xf32>
    %c0_21 = arith.constant 0 : index
    %c1_22 = arith.constant 1 : index
    %c0_23 = arith.constant 0 : index
    %c0_24 = arith.constant 0 : index
    %22 = vector.load %arg1[%c0_21, %c1_22, %c0_23, %c0_24] : memref<1x18x18x4xf32, #tpu.memory_space<vmem>>, vector<1x16x16x4xf32>
    %23 = vector.shape_cast %22 : vector<1x16x16x4xf32> to vector<16x16x4xf32>
    %24 = vector.shape_cast %23 : vector<16x16x4xf32> to vector<256x4xf32>
    %c3 = arith.constant 3 : index
    %c0_25 = arith.constant 0 : index
    %c0_26 = arith.constant 0 : index
    %25 = vector.load %arg2[%c3, %c0_25, %c0_26] : memref<9x4x128xf32, #tpu.memory_space<vmem>>, vector<1x4x128xf32>
    %26 = vector.shape_cast %25 : vector<1x4x128xf32> to vector<4x128xf32>
    %cst_27 = arith.constant dense<0.000000e+00> : vector<256x128xf32>
    %27 = tpu.matmul %24, %26, %cst_27 {dimension_numbers = #tpu.dot_dimension_numbers<[1], [0], [0], [1], [0, 0, 1, 1], [], []>} : vector<256x4xf32>, vector<4x128xf32>, vector<256x128xf32> -> vector<256x128xf32>
    %28 = arith.addf %21, %27 : vector<256x128xf32>
    %c0_28 = arith.constant 0 : index
    %c1_29 = arith.constant 1 : index
    %c1_30 = arith.constant 1 : index
    %c0_31 = arith.constant 0 : index
    %29 = vector.load %arg1[%c0_28, %c1_29, %c1_30, %c0_31] : memref<1x18x18x4xf32, #tpu.memory_space<vmem>>, vector<1x16x16x4xf32>
    %30 = vector.shape_cast %29 : vector<1x16x16x4xf32> to vector<16x16x4xf32>
    %31 = vector.shape_cast %30 : vector<16x16x4xf32> to vector<256x4xf32>
    %c4 = arith.constant 4 : index
    %c0_32 = arith.constant 0 : index
    %c0_33 = arith.constant 0 : index
    %32 = vector.load %arg2[%c4, %c0_32, %c0_33] : memref<9x4x128xf32, #tpu.memory_space<vmem>>, vector<1x4x128xf32>
    %33 = vector.shape_cast %32 : vector<1x4x128xf32> to vector<4x128xf32>
    %cst_34 = arith.constant dense<0.000000e+00> : vector<256x128xf32>
    %34 = tpu.matmul %31, %33, %cst_34 {dimension_numbers = #tpu.dot_dimension_numbers<[1], [0], [0], [1], [0, 0, 1, 1], [], []>} : vector<256x4xf32>, vector<4x128xf32>, vector<256x128xf32> -> vector<256x128xf32>
    %35 = arith.addf %28, %34 : vector<256x128xf32>
    %c0_35 = arith.constant 0 : index
    %c1_36 = arith.constant 1 : index
    %c2_37 = arith.constant 2 : index
    %c0_38 = arith.constant 0 : index
    %36 = vector.load %arg1[%c0_35, %c1_36, %c2_37, %c0_38] : memref<1x18x18x4xf32, #tpu.memory_space<vmem>>, vector<1x16x16x4xf32>
    %37 = vector.shape_cast %36 : vector<1x16x16x4xf32> to vector<16x16x4xf32>
    %38 = vector.shape_cast %37 : vector<16x16x4xf32> to vector<256x4xf32>
    %c5 = arith.constant 5 : index
    %c0_39 = arith.constant 0 : index
    %c0_40 = arith.constant 0 : index
    %39 = vector.load %arg2[%c5, %c0_39, %c0_40] : memref<9x4x128xf32, #tpu.memory_space<vmem>>, vector<1x4x128xf32>
    %40 = vector.shape_cast %39 : vector<1x4x128xf32> to vector<4x128xf32>
    %cst_41 = arith.constant dense<0.000000e+00> : vector<256x128xf32>
    %41 = tpu.matmul %38, %40, %cst_41 {dimension_numbers = #tpu.dot_dimension_numbers<[1], [0], [0], [1], [0, 0, 1, 1], [], []>} : vector<256x4xf32>, vector<4x128xf32>, vector<256x128xf32> -> vector<256x128xf32>
    %42 = arith.addf %35, %41 : vector<256x128xf32>
    %c0_42 = arith.constant 0 : index
    %c2_43 = arith.constant 2 : index
    %c0_44 = arith.constant 0 : index
    %c0_45 = arith.constant 0 : index
    %43 = vector.load %arg1[%c0_42, %c2_43, %c0_44, %c0_45] : memref<1x18x18x4xf32, #tpu.memory_space<vmem>>, vector<1x16x16x4xf32>
    %44 = vector.shape_cast %43 : vector<1x16x16x4xf32> to vector<16x16x4xf32>
    %45 = vector.shape_cast %44 : vector<16x16x4xf32> to vector<256x4xf32>
    %c6 = arith.constant 6 : index
    %c0_46 = arith.constant 0 : index
    %c0_47 = arith.constant 0 : index
    %46 = vector.load %arg2[%c6, %c0_46, %c0_47] : memref<9x4x128xf32, #tpu.memory_space<vmem>>, vector<1x4x128xf32>
    %47 = vector.shape_cast %46 : vector<1x4x128xf32> to vector<4x128xf32>
    %cst_48 = arith.constant dense<0.000000e+00> : vector<256x128xf32>
    %48 = tpu.matmul %45, %47, %cst_48 {dimension_numbers = #tpu.dot_dimension_numbers<[1], [0], [0], [1], [0, 0, 1, 1], [], []>} : vector<256x4xf32>, vector<4x128xf32>, vector<256x128xf32> -> vector<256x128xf32>
    %49 = arith.addf %42, %48 : vector<256x128xf32>
    %c0_49 = arith.constant 0 : index
    %c2_50 = arith.constant 2 : index
    %c1_51 = arith.constant 1 : index
    %c0_52 = arith.constant 0 : index
    %50 = vector.load %arg1[%c0_49, %c2_50, %c1_51, %c0_52] : memref<1x18x18x4xf32, #tpu.memory_space<vmem>>, vector<1x16x16x4xf32>
    %51 = vector.shape_cast %50 : vector<1x16x16x4xf32> to vector<16x16x4xf32>
    %52 = vector.shape_cast %51 : vector<16x16x4xf32> to vector<256x4xf32>
    %c7 = arith.constant 7 : index
    %c0_53 = arith.constant 0 : index
    %c0_54 = arith.constant 0 : index
    %53 = vector.load %arg2[%c7, %c0_53, %c0_54] : memref<9x4x128xf32, #tpu.memory_space<vmem>>, vector<1x4x128xf32>
    %54 = vector.shape_cast %53 : vector<1x4x128xf32> to vector<4x128xf32>
    %cst_55 = arith.constant dense<0.000000e+00> : vector<256x128xf32>
    %55 = tpu.matmul %52, %54, %cst_55 {dimension_numbers = #tpu.dot_dimension_numbers<[1], [0], [0], [1], [0, 0, 1, 1], [], []>} : vector<256x4xf32>, vector<4x128xf32>, vector<256x128xf32> -> vector<256x128xf32>
    %56 = arith.addf %49, %55 : vector<256x128xf32>
    %c0_56 = arith.constant 0 : index
    %c2_57 = arith.constant 2 : index
    %c2_58 = arith.constant 2 : index
    %c0_59 = arith.constant 0 : index
    %57 = vector.load %arg1[%c0_56, %c2_57, %c2_58, %c0_59] : memref<1x18x18x4xf32, #tpu.memory_space<vmem>>, vector<1x16x16x4xf32>
    %58 = vector.shape_cast %57 : vector<1x16x16x4xf32> to vector<16x16x4xf32>
    %59 = vector.shape_cast %58 : vector<16x16x4xf32> to vector<256x4xf32>
    %c8 = arith.constant 8 : index
    %c0_60 = arith.constant 0 : index
    %c0_61 = arith.constant 0 : index
    %60 = vector.load %arg2[%c8, %c0_60, %c0_61] : memref<9x4x128xf32, #tpu.memory_space<vmem>>, vector<1x4x128xf32>
    %61 = vector.shape_cast %60 : vector<1x4x128xf32> to vector<4x128xf32>
    %cst_62 = arith.constant dense<0.000000e+00> : vector<256x128xf32>
    %62 = tpu.matmul %59, %61, %cst_62 {dimension_numbers = #tpu.dot_dimension_numbers<[1], [0], [0], [1], [0, 0, 1, 1], [], []>} : vector<256x4xf32>, vector<4x128xf32>, vector<256x128xf32> -> vector<256x128xf32>
    %63 = arith.addf %56, %62 : vector<256x128xf32>
    %64 = vector.shape_cast %63 : vector<256x128xf32> to vector<16x16x128xf32>
    %c0_63 = arith.constant 0 : index
    %c0_64 = arith.constant 0 : index
    %c0_65 = arith.constant 0 : index
    %c0_66 = arith.constant 0 : index
    %65 = vector.load %arg3[%c0_63, %c0_64, %c0_65, %c0_66] : memref<1x16x16x128xf32, #tpu.memory_space<vmem>>, vector<1x16x16x128xf32>
    %66 = vector.shape_cast %65 : vector<1x16x16x128xf32> to vector<16x16x128xf32>
    %67 = vector.shape_cast %64 : vector<16x16x128xf32> to vector<1x16x16x128xf32>
    tpu.vector_store %arg3[%c0_63, %c0_64, %c0_65, %c0_66], %67 {strides = array<i32>} : memref<1x16x16x128xf32, #tpu.memory_space<vmem>>, vector<1x16x16x128xf32>,
    %cst_67 = arith.constant dense<0.000000e+00> : vector<128xf32>
    %68 = vector.multi_reduction <add>, %63, %cst_67 [0] : vector<256x128xf32> to vector<128xf32>
    %69 = vector.shape_cast %68 : vector<128xf32> to vector<1x128xf32>
    %c0_68 = arith.constant 0 : index
    %c0_69 = arith.constant 0 : index
    %c0_70 = arith.constant 0 : index
    %70 = vector.load %arg4[%c0_68, %c0_69, %c0_70] : memref<1x1x128xf32, #tpu.memory_space<vmem>>, vector<1x1x128xf32>
    %71 = vector.shape_cast %70 : vector<1x1x128xf32> to vector<1x128xf32>
    %72 = vector.shape_cast %69 : vector<1x128xf32> to vector<1x1x128xf32>
    tpu.vector_store %arg4[%c0_68, %c0_69, %c0_70], %72 {strides = array<i32>} : memref<1x1x128xf32, #tpu.memory_space<vmem>>, vector<1x1x128xf32>,
    %73 = arith.mulf %63, %63 : vector<256x128xf32>
    %cst_71 = arith.constant dense<0.000000e+00> : vector<128xf32>
    %74 = vector.multi_reduction <add>, %73, %cst_71 [0] : vector<256x128xf32> to vector<128xf32>
    %75 = vector.shape_cast %74 : vector<128xf32> to vector<1x128xf32>
    %c0_72 = arith.constant 0 : index
    %c0_73 = arith.constant 0 : index
    %c0_74 = arith.constant 0 : index
    %76 = vector.load %arg5[%c0_72, %c0_73, %c0_74] : memref<1x1x128xf32, #tpu.memory_space<vmem>>, vector<1x1x128xf32>
    %77 = vector.shape_cast %76 : vector<1x1x128xf32> to vector<1x128xf32>
    %78 = vector.shape_cast %75 : vector<1x128xf32> to vector<1x1x128xf32>
    tpu.vector_store %arg5[%c0_72, %c0_73, %c0_74], %78 {strides = array<i32>} : memref<1x1x128xf32, #tpu.memory_space<vmem>>, vector<1x1x128xf32>,
    return
  }
  func.func @transform_0(%arg0: i32) -> (i32, i32, i32, i32) {
    %c0_i32 = arith.constant 0 : i32
    %c0_i32_0 = arith.constant 0 : i32
    %c0_i32_1 = arith.constant 0 : i32
    %c0_i32_2 = arith.constant 0 : i32
    return %arg0, %c0_i32, %c0_i32_0, %c0_i32_1 : i32, i32, i32, i32
  }
  func.func @transform_1(%arg0: i32) -> (i32, i32, i32) {
    %c0_i32 = arith.constant 0 : i32
    %c0_i32_0 = arith.constant 0 : i32
    %c0_i32_1 = arith.constant 0 : i32
    %c0_i32_2 = arith.constant 0 : i32
    return %c0_i32, %c0_i32_0, %c0_i32_1 : i32, i32, i32
  }
  func.func @transform_2(%arg0: i32) -> (i32, i32, i32, i32) {
    %c0_i32 = arith.constant 0 : i32
    %c0_i32_0 = arith.constant 0 : i32
    %c0_i32_1 = arith.constant 0 : i32
    %c0_i32_2 = arith.constant 0 : i32
    return %arg0, %c0_i32, %c0_i32_0, %c0_i32_1 : i32, i32, i32, i32
  }
  func.func @transform_3(%arg0: i32) -> (i32, i32, i32) {
    %c0_i32 = arith.constant 0 : i32
    %c0_i32_0 = arith.constant 0 : i32
    %c0_i32_1 = arith.constant 0 : i32
    return %arg0, %c0_i32, %c0_i32_0 : i32, i32, i32
  }
  func.func @transform_4(%arg0: i32) -> (i32, i32, i32) {
    %c0_i32 = arith.constant 0 : i32
    %c0_i32_0 = arith.constant 0 : i32
    %c0_i32_1 = arith.constant 0 : i32
    return %arg0, %c0_i32, %c0_i32_0 : i32, i32, i32
  }
}

module attributes {stable_mosaic.version = 11 : i64} {
  func.func @bn_relu_conv3x3_stats_kernel(%arg0: i32, %arg1: memref<1x16x16x128xf32, #tpu.memory_space<vmem>>, %arg2: memref<1x128xf32, #tpu.memory_space<vmem>>, %arg3: memref<1x128xf32, #tpu.memory_space<vmem>>, %arg4: memref<9x128x128xf32, #tpu.memory_space<vmem>>, %arg5: memref<1x16x16x128xf32, #tpu.memory_space<vmem>>, %arg6: memref<1x1x128xf32, #tpu.memory_space<vmem>>, %arg7: memref<1x1x128xf32, #tpu.memory_space<vmem>>, %arg8: memref<18x18x128xf32, #tpu.memory_space<vmem>>) attributes {dimension_semantics = [#tpu.dimension_semantics<parallel>], iteration_bounds = array<i64: 2>, scalar_prefetch = 0 : i64, scratch_operands = 1 : i64, tpu.core_type = #tpu.core_type<tc>, window_params = [{transform_indices = @transform_0, window_bounds = array<i64: 1, 16, 16, 128>}, {pipeline_mode = #tpu.pipeline_mode<synchronous>, transform_indices = @transform_1, window_bounds = array<i64: 1, 128>}, {pipeline_mode = #tpu.pipeline_mode<synchronous>, transform_indices = @transform_2, window_bounds = array<i64: 1, 128>}, {pipeline_mode = #tpu.pipeline_mode<synchronous>, transform_indices = @transform_3, window_bounds = array<i64: 9, 128, 128>}, {transform_indices = @transform_4, window_bounds = array<i64: 1, 16, 16, 128>}, {transform_indices = @transform_5, window_bounds = array<i64: 1, 1, 128>}, {transform_indices = @transform_6, window_bounds = array<i64: 1, 1, 128>}]} {
    %c0 = arith.constant 0 : index
    %c0_0 = arith.constant 0 : index
    %c0_1 = arith.constant 0 : index
    %c0_2 = arith.constant 0 : index
    %0 = vector.load %arg1[%c0, %c0_0, %c0_1, %c0_2] : memref<1x16x16x128xf32, #tpu.memory_space<vmem>>, vector<1x16x16x128xf32>
    %1 = vector.shape_cast %0 : vector<1x16x16x128xf32> to vector<16x16x128xf32>
    %c0_3 = arith.constant 0 : index
    %c0_4 = arith.constant 0 : index
    %2 = vector.load %arg2[%c0_3, %c0_4] : memref<1x128xf32, #tpu.memory_space<vmem>>, vector<1x128xf32>
    %3 = vector.shape_cast %2 : vector<1x128xf32> to vector<1x1x128xf32>
    %4 = vector.broadcast %3 : vector<1x1x128xf32> to vector<16x16x128xf32>
    %5 = arith.mulf %1, %4 : vector<16x16x128xf32>
    %c0_5 = arith.constant 0 : index
    %c0_6 = arith.constant 0 : index
    %6 = vector.load %arg3[%c0_5, %c0_6] : memref<1x128xf32, #tpu.memory_space<vmem>>, vector<1x128xf32>
    %7 = vector.shape_cast %6 : vector<1x128xf32> to vector<1x1x128xf32>
    %8 = vector.broadcast %7 : vector<1x1x128xf32> to vector<16x16x128xf32>
    %9 = arith.addf %5, %8 : vector<16x16x128xf32>
    %cst = arith.constant 0.000000e+00 : f32
    %10 = vector.broadcast %cst : f32 to vector<16x16x128xf32>
    %11 = arith.maximumf %9, %10 : vector<16x16x128xf32>
    %cst_7 = arith.constant 0.000000e+00 : f32
    %12 = vector.broadcast %cst_7 : f32 to vector<18x18x128xf32>
    %c0_8 = arith.constant 0 : index
    %c0_9 = arith.constant 0 : index
    %c0_10 = arith.constant 0 : index
    %13 = vector.load %arg8[%c0_8, %c0_9, %c0_10] : memref<18x18x128xf32, #tpu.memory_space<vmem>>, vector<18x18x128xf32>
    tpu.vector_store %arg8[%c0_8, %c0_9, %c0_10], %12 {strides = array<i32>} : memref<18x18x128xf32, #tpu.memory_space<vmem>>, vector<18x18x128xf32>,
    %c1 = arith.constant 1 : index
    %c1_11 = arith.constant 1 : index
    %c0_12 = arith.constant 0 : index
    %14 = vector.load %arg8[%c1, %c1_11, %c0_12] : memref<18x18x128xf32, #tpu.memory_space<vmem>>, vector<16x16x128xf32>
    tpu.vector_store %arg8[%c1, %c1_11, %c0_12], %11 {strides = array<i32>} : memref<18x18x128xf32, #tpu.memory_space<vmem>>, vector<16x16x128xf32>,
    %cst_13 = arith.constant 0.000000e+00 : f32
    %15 = vector.broadcast %cst_13 : f32 to vector<256x128xf32>
    %c0_14 = arith.constant 0 : index
    %c0_15 = arith.constant 0 : index
    %c0_16 = arith.constant 0 : index
    %16 = vector.load %arg8[%c0_14, %c0_15, %c0_16] : memref<18x18x128xf32, #tpu.memory_space<vmem>>, vector<16x16x128xf32>
    %17 = vector.shape_cast %16 : vector<16x16x128xf32> to vector<256x128xf32>
    %c0_17 = arith.constant 0 : index
    %c0_18 = arith.constant 0 : index
    %c0_19 = arith.constant 0 : index
    %18 = vector.load %arg4[%c0_17, %c0_18, %c0_19] : memref<9x128x128xf32, #tpu.memory_space<vmem>>, vector<1x128x128xf32>
    %19 = vector.shape_cast %18 : vector<1x128x128xf32> to vector<128x128xf32>
    %cst_20 = arith.constant dense<0.000000e+00> : vector<256x128xf32>
    %20 = tpu.matmul %17, %19, %cst_20 {dimension_numbers = #tpu.dot_dimension_numbers<[1], [0], [0], [1], [0, 0, 1, 1], [], []>} : vector<256x128xf32>, vector<128x128xf32>, vector<256x128xf32> -> vector<256x128xf32>
    %21 = arith.addf %15, %20 : vector<256x128xf32>
    %c0_21 = arith.constant 0 : index
    %c1_22 = arith.constant 1 : index
    %c0_23 = arith.constant 0 : index
    %22 = vector.load %arg8[%c0_21, %c1_22, %c0_23] : memref<18x18x128xf32, #tpu.memory_space<vmem>>, vector<16x16x128xf32>
    %23 = vector.shape_cast %22 : vector<16x16x128xf32> to vector<256x128xf32>
    %c1_24 = arith.constant 1 : index
    %c0_25 = arith.constant 0 : index
    %c0_26 = arith.constant 0 : index
    %24 = vector.load %arg4[%c1_24, %c0_25, %c0_26] : memref<9x128x128xf32, #tpu.memory_space<vmem>>, vector<1x128x128xf32>
    %25 = vector.shape_cast %24 : vector<1x128x128xf32> to vector<128x128xf32>
    %cst_27 = arith.constant dense<0.000000e+00> : vector<256x128xf32>
    %26 = tpu.matmul %23, %25, %cst_27 {dimension_numbers = #tpu.dot_dimension_numbers<[1], [0], [0], [1], [0, 0, 1, 1], [], []>} : vector<256x128xf32>, vector<128x128xf32>, vector<256x128xf32> -> vector<256x128xf32>
    %27 = arith.addf %21, %26 : vector<256x128xf32>
    %c0_28 = arith.constant 0 : index
    %c2 = arith.constant 2 : index
    %c0_29 = arith.constant 0 : index
    %28 = vector.load %arg8[%c0_28, %c2, %c0_29] : memref<18x18x128xf32, #tpu.memory_space<vmem>>, vector<16x16x128xf32>
    %29 = vector.shape_cast %28 : vector<16x16x128xf32> to vector<256x128xf32>
    %c2_30 = arith.constant 2 : index
    %c0_31 = arith.constant 0 : index
    %c0_32 = arith.constant 0 : index
    %30 = vector.load %arg4[%c2_30, %c0_31, %c0_32] : memref<9x128x128xf32, #tpu.memory_space<vmem>>, vector<1x128x128xf32>
    %31 = vector.shape_cast %30 : vector<1x128x128xf32> to vector<128x128xf32>
    %cst_33 = arith.constant dense<0.000000e+00> : vector<256x128xf32>
    %32 = tpu.matmul %29, %31, %cst_33 {dimension_numbers = #tpu.dot_dimension_numbers<[1], [0], [0], [1], [0, 0, 1, 1], [], []>} : vector<256x128xf32>, vector<128x128xf32>, vector<256x128xf32> -> vector<256x128xf32>
    %33 = arith.addf %27, %32 : vector<256x128xf32>
    %c1_34 = arith.constant 1 : index
    %c0_35 = arith.constant 0 : index
    %c0_36 = arith.constant 0 : index
    %34 = vector.load %arg8[%c1_34, %c0_35, %c0_36] : memref<18x18x128xf32, #tpu.memory_space<vmem>>, vector<16x16x128xf32>
    %35 = vector.shape_cast %34 : vector<16x16x128xf32> to vector<256x128xf32>
    %c3 = arith.constant 3 : index
    %c0_37 = arith.constant 0 : index
    %c0_38 = arith.constant 0 : index
    %36 = vector.load %arg4[%c3, %c0_37, %c0_38] : memref<9x128x128xf32, #tpu.memory_space<vmem>>, vector<1x128x128xf32>
    %37 = vector.shape_cast %36 : vector<1x128x128xf32> to vector<128x128xf32>
    %cst_39 = arith.constant dense<0.000000e+00> : vector<256x128xf32>
    %38 = tpu.matmul %35, %37, %cst_39 {dimension_numbers = #tpu.dot_dimension_numbers<[1], [0], [0], [1], [0, 0, 1, 1], [], []>} : vector<256x128xf32>, vector<128x128xf32>, vector<256x128xf32> -> vector<256x128xf32>
    %39 = arith.addf %33, %38 : vector<256x128xf32>
    %c1_40 = arith.constant 1 : index
    %c1_41 = arith.constant 1 : index
    %c0_42 = arith.constant 0 : index
    %40 = vector.load %arg8[%c1_40, %c1_41, %c0_42] : memref<18x18x128xf32, #tpu.memory_space<vmem>>, vector<16x16x128xf32>
    %41 = vector.shape_cast %40 : vector<16x16x128xf32> to vector<256x128xf32>
    %c4 = arith.constant 4 : index
    %c0_43 = arith.constant 0 : index
    %c0_44 = arith.constant 0 : index
    %42 = vector.load %arg4[%c4, %c0_43, %c0_44] : memref<9x128x128xf32, #tpu.memory_space<vmem>>, vector<1x128x128xf32>
    %43 = vector.shape_cast %42 : vector<1x128x128xf32> to vector<128x128xf32>
    %cst_45 = arith.constant dense<0.000000e+00> : vector<256x128xf32>
    %44 = tpu.matmul %41, %43, %cst_45 {dimension_numbers = #tpu.dot_dimension_numbers<[1], [0], [0], [1], [0, 0, 1, 1], [], []>} : vector<256x128xf32>, vector<128x128xf32>, vector<256x128xf32> -> vector<256x128xf32>
    %45 = arith.addf %39, %44 : vector<256x128xf32>
    %c1_46 = arith.constant 1 : index
    %c2_47 = arith.constant 2 : index
    %c0_48 = arith.constant 0 : index
    %46 = vector.load %arg8[%c1_46, %c2_47, %c0_48] : memref<18x18x128xf32, #tpu.memory_space<vmem>>, vector<16x16x128xf32>
    %47 = vector.shape_cast %46 : vector<16x16x128xf32> to vector<256x128xf32>
    %c5 = arith.constant 5 : index
    %c0_49 = arith.constant 0 : index
    %c0_50 = arith.constant 0 : index
    %48 = vector.load %arg4[%c5, %c0_49, %c0_50] : memref<9x128x128xf32, #tpu.memory_space<vmem>>, vector<1x128x128xf32>
    %49 = vector.shape_cast %48 : vector<1x128x128xf32> to vector<128x128xf32>
    %cst_51 = arith.constant dense<0.000000e+00> : vector<256x128xf32>
    %50 = tpu.matmul %47, %49, %cst_51 {dimension_numbers = #tpu.dot_dimension_numbers<[1], [0], [0], [1], [0, 0, 1, 1], [], []>} : vector<256x128xf32>, vector<128x128xf32>, vector<256x128xf32> -> vector<256x128xf32>
    %51 = arith.addf %45, %50 : vector<256x128xf32>
    %c2_52 = arith.constant 2 : index
    %c0_53 = arith.constant 0 : index
    %c0_54 = arith.constant 0 : index
    %52 = vector.load %arg8[%c2_52, %c0_53, %c0_54] : memref<18x18x128xf32, #tpu.memory_space<vmem>>, vector<16x16x128xf32>
    %53 = vector.shape_cast %52 : vector<16x16x128xf32> to vector<256x128xf32>
    %c6 = arith.constant 6 : index
    %c0_55 = arith.constant 0 : index
    %c0_56 = arith.constant 0 : index
    %54 = vector.load %arg4[%c6, %c0_55, %c0_56] : memref<9x128x128xf32, #tpu.memory_space<vmem>>, vector<1x128x128xf32>
    %55 = vector.shape_cast %54 : vector<1x128x128xf32> to vector<128x128xf32>
    %cst_57 = arith.constant dense<0.000000e+00> : vector<256x128xf32>
    %56 = tpu.matmul %53, %55, %cst_57 {dimension_numbers = #tpu.dot_dimension_numbers<[1], [0], [0], [1], [0, 0, 1, 1], [], []>} : vector<256x128xf32>, vector<128x128xf32>, vector<256x128xf32> -> vector<256x128xf32>
    %57 = arith.addf %51, %56 : vector<256x128xf32>
    %c2_58 = arith.constant 2 : index
    %c1_59 = arith.constant 1 : index
    %c0_60 = arith.constant 0 : index
    %58 = vector.load %arg8[%c2_58, %c1_59, %c0_60] : memref<18x18x128xf32, #tpu.memory_space<vmem>>, vector<16x16x128xf32>
    %59 = vector.shape_cast %58 : vector<16x16x128xf32> to vector<256x128xf32>
    %c7 = arith.constant 7 : index
    %c0_61 = arith.constant 0 : index
    %c0_62 = arith.constant 0 : index
    %60 = vector.load %arg4[%c7, %c0_61, %c0_62] : memref<9x128x128xf32, #tpu.memory_space<vmem>>, vector<1x128x128xf32>
    %61 = vector.shape_cast %60 : vector<1x128x128xf32> to vector<128x128xf32>
    %cst_63 = arith.constant dense<0.000000e+00> : vector<256x128xf32>
    %62 = tpu.matmul %59, %61, %cst_63 {dimension_numbers = #tpu.dot_dimension_numbers<[1], [0], [0], [1], [0, 0, 1, 1], [], []>} : vector<256x128xf32>, vector<128x128xf32>, vector<256x128xf32> -> vector<256x128xf32>
    %63 = arith.addf %57, %62 : vector<256x128xf32>
    %c2_64 = arith.constant 2 : index
    %c2_65 = arith.constant 2 : index
    %c0_66 = arith.constant 0 : index
    %64 = vector.load %arg8[%c2_64, %c2_65, %c0_66] : memref<18x18x128xf32, #tpu.memory_space<vmem>>, vector<16x16x128xf32>
    %65 = vector.shape_cast %64 : vector<16x16x128xf32> to vector<256x128xf32>
    %c8 = arith.constant 8 : index
    %c0_67 = arith.constant 0 : index
    %c0_68 = arith.constant 0 : index
    %66 = vector.load %arg4[%c8, %c0_67, %c0_68] : memref<9x128x128xf32, #tpu.memory_space<vmem>>, vector<1x128x128xf32>
    %67 = vector.shape_cast %66 : vector<1x128x128xf32> to vector<128x128xf32>
    %cst_69 = arith.constant dense<0.000000e+00> : vector<256x128xf32>
    %68 = tpu.matmul %65, %67, %cst_69 {dimension_numbers = #tpu.dot_dimension_numbers<[1], [0], [0], [1], [0, 0, 1, 1], [], []>} : vector<256x128xf32>, vector<128x128xf32>, vector<256x128xf32> -> vector<256x128xf32>
    %69 = arith.addf %63, %68 : vector<256x128xf32>
    %70 = vector.shape_cast %69 : vector<256x128xf32> to vector<16x16x128xf32>
    %c0_70 = arith.constant 0 : index
    %c0_71 = arith.constant 0 : index
    %c0_72 = arith.constant 0 : index
    %c0_73 = arith.constant 0 : index
    %71 = vector.load %arg5[%c0_70, %c0_71, %c0_72, %c0_73] : memref<1x16x16x128xf32, #tpu.memory_space<vmem>>, vector<1x16x16x128xf32>
    %72 = vector.shape_cast %71 : vector<1x16x16x128xf32> to vector<16x16x128xf32>
    %73 = vector.shape_cast %70 : vector<16x16x128xf32> to vector<1x16x16x128xf32>
    tpu.vector_store %arg5[%c0_70, %c0_71, %c0_72, %c0_73], %73 {strides = array<i32>} : memref<1x16x16x128xf32, #tpu.memory_space<vmem>>, vector<1x16x16x128xf32>,
    %cst_74 = arith.constant dense<0.000000e+00> : vector<128xf32>
    %74 = vector.multi_reduction <add>, %69, %cst_74 [0] : vector<256x128xf32> to vector<128xf32>
    %75 = vector.shape_cast %74 : vector<128xf32> to vector<1x128xf32>
    %c0_75 = arith.constant 0 : index
    %c0_76 = arith.constant 0 : index
    %c0_77 = arith.constant 0 : index
    %76 = vector.load %arg6[%c0_75, %c0_76, %c0_77] : memref<1x1x128xf32, #tpu.memory_space<vmem>>, vector<1x1x128xf32>
    %77 = vector.shape_cast %76 : vector<1x1x128xf32> to vector<1x128xf32>
    %78 = vector.shape_cast %75 : vector<1x128xf32> to vector<1x1x128xf32>
    tpu.vector_store %arg6[%c0_75, %c0_76, %c0_77], %78 {strides = array<i32>} : memref<1x1x128xf32, #tpu.memory_space<vmem>>, vector<1x1x128xf32>,
    %79 = arith.mulf %69, %69 : vector<256x128xf32>
    %cst_78 = arith.constant dense<0.000000e+00> : vector<128xf32>
    %80 = vector.multi_reduction <add>, %79, %cst_78 [0] : vector<256x128xf32> to vector<128xf32>
    %81 = vector.shape_cast %80 : vector<128xf32> to vector<1x128xf32>
    %c0_79 = arith.constant 0 : index
    %c0_80 = arith.constant 0 : index
    %c0_81 = arith.constant 0 : index
    %82 = vector.load %arg7[%c0_79, %c0_80, %c0_81] : memref<1x1x128xf32, #tpu.memory_space<vmem>>, vector<1x1x128xf32>
    %83 = vector.shape_cast %82 : vector<1x1x128xf32> to vector<1x128xf32>
    %84 = vector.shape_cast %81 : vector<1x128xf32> to vector<1x1x128xf32>
    tpu.vector_store %arg7[%c0_79, %c0_80, %c0_81], %84 {strides = array<i32>} : memref<1x1x128xf32, #tpu.memory_space<vmem>>, vector<1x1x128xf32>,
    return
  }
  func.func @transform_0(%arg0: i32) -> (i32, i32, i32, i32) {
    %c0_i32 = arith.constant 0 : i32
    %c0_i32_0 = arith.constant 0 : i32
    %c0_i32_1 = arith.constant 0 : i32
    %c0_i32_2 = arith.constant 0 : i32
    return %arg0, %c0_i32, %c0_i32_0, %c0_i32_1 : i32, i32, i32, i32
  }
  func.func @transform_1(%arg0: i32) -> (i32, i32) {
    %c0_i32 = arith.constant 0 : i32
    %c0_i32_0 = arith.constant 0 : i32
    %c0_i32_1 = arith.constant 0 : i32
    return %c0_i32, %c0_i32_0 : i32, i32
  }
  func.func @transform_2(%arg0: i32) -> (i32, i32) {
    %c0_i32 = arith.constant 0 : i32
    %c0_i32_0 = arith.constant 0 : i32
    %c0_i32_1 = arith.constant 0 : i32
    return %c0_i32, %c0_i32_0 : i32, i32
  }
  func.func @transform_3(%arg0: i32) -> (i32, i32, i32) {
    %c0_i32 = arith.constant 0 : i32
    %c0_i32_0 = arith.constant 0 : i32
    %c0_i32_1 = arith.constant 0 : i32
    %c0_i32_2 = arith.constant 0 : i32
    return %c0_i32, %c0_i32_0, %c0_i32_1 : i32, i32, i32
  }
  func.func @transform_4(%arg0: i32) -> (i32, i32, i32, i32) {
    %c0_i32 = arith.constant 0 : i32
    %c0_i32_0 = arith.constant 0 : i32
    %c0_i32_1 = arith.constant 0 : i32
    %c0_i32_2 = arith.constant 0 : i32
    return %arg0, %c0_i32, %c0_i32_0, %c0_i32_1 : i32, i32, i32, i32
  }
  func.func @transform_5(%arg0: i32) -> (i32, i32, i32) {
    %c0_i32 = arith.constant 0 : i32
    %c0_i32_0 = arith.constant 0 : i32
    %c0_i32_1 = arith.constant 0 : i32
    return %arg0, %c0_i32, %c0_i32_0 : i32, i32, i32
  }
  func.func @transform_6(%arg0: i32) -> (i32, i32, i32) {
    %c0_i32 = arith.constant 0 : i32
    %c0_i32_0 = arith.constant 0 : i32
    %c0_i32_1 = arith.constant 0 : i32
    return %arg0, %c0_i32, %c0_i32_0 : i32, i32, i32
  }
}

module attributes {stable_mosaic.version = 11 : i64} {
  func.func @bn_shortcut_add_relu_kernel(%arg0: i32, %arg1: memref<1x16x16x128xf32, #tpu.memory_space<vmem>>, %arg2: memref<1x128xf32, #tpu.memory_space<vmem>>, %arg3: memref<1x128xf32, #tpu.memory_space<vmem>>, %arg4: memref<1x16x16x4xf32, #tpu.memory_space<vmem>>, %arg5: memref<4x128xf32, #tpu.memory_space<vmem>>, %arg6: memref<1x128xf32, #tpu.memory_space<vmem>>, %arg7: memref<1x16x16x128xf32, #tpu.memory_space<vmem>>) attributes {dimension_semantics = [#tpu.dimension_semantics<parallel>], iteration_bounds = array<i64: 2>, scalar_prefetch = 0 : i64, scratch_operands = 0 : i64, tpu.core_type = #tpu.core_type<tc>, window_params = [{transform_indices = @transform_0, window_bounds = array<i64: 1, 16, 16, 128>}, {pipeline_mode = #tpu.pipeline_mode<synchronous>, transform_indices = @transform_1, window_bounds = array<i64: 1, 128>}, {pipeline_mode = #tpu.pipeline_mode<synchronous>, transform_indices = @transform_2, window_bounds = array<i64: 1, 128>}, {transform_indices = @transform_3, window_bounds = array<i64: 1, 16, 16, 4>}, {pipeline_mode = #tpu.pipeline_mode<synchronous>, transform_indices = @transform_4, window_bounds = array<i64: 4, 128>}, {pipeline_mode = #tpu.pipeline_mode<synchronous>, transform_indices = @transform_5, window_bounds = array<i64: 1, 128>}, {transform_indices = @transform_6, window_bounds = array<i64: 1, 16, 16, 128>}]} {
    %c0 = arith.constant 0 : index
    %c0_0 = arith.constant 0 : index
    %c0_1 = arith.constant 0 : index
    %c0_2 = arith.constant 0 : index
    %0 = vector.load %arg1[%c0, %c0_0, %c0_1, %c0_2] : memref<1x16x16x128xf32, #tpu.memory_space<vmem>>, vector<1x16x16x128xf32>
    %1 = vector.shape_cast %0 : vector<1x16x16x128xf32> to vector<16x16x128xf32>
    %c0_3 = arith.constant 0 : index
    %c0_4 = arith.constant 0 : index
    %2 = vector.load %arg2[%c0_3, %c0_4] : memref<1x128xf32, #tpu.memory_space<vmem>>, vector<1x128xf32>
    %3 = vector.shape_cast %2 : vector<1x128xf32> to vector<1x1x128xf32>
    %4 = vector.broadcast %3 : vector<1x1x128xf32> to vector<16x16x128xf32>
    %5 = arith.mulf %1, %4 : vector<16x16x128xf32>
    %c0_5 = arith.constant 0 : index
    %c0_6 = arith.constant 0 : index
    %6 = vector.load %arg3[%c0_5, %c0_6] : memref<1x128xf32, #tpu.memory_space<vmem>>, vector<1x128xf32>
    %7 = vector.shape_cast %6 : vector<1x128xf32> to vector<1x1x128xf32>
    %8 = vector.broadcast %7 : vector<1x1x128xf32> to vector<16x16x128xf32>
    %9 = arith.addf %5, %8 : vector<16x16x128xf32>
    %c0_7 = arith.constant 0 : index
    %c0_8 = arith.constant 0 : index
    %c0_9 = arith.constant 0 : index
    %c0_10 = arith.constant 0 : index
    %10 = vector.load %arg4[%c0_7, %c0_8, %c0_9, %c0_10] : memref<1x16x16x4xf32, #tpu.memory_space<vmem>>, vector<1x16x16x4xf32>
    %11 = vector.shape_cast %10 : vector<1x16x16x4xf32> to vector<16x16x4xf32>
    %12 = vector.shape_cast %11 : vector<16x16x4xf32> to vector<256x4xf32>
    %c0_11 = arith.constant 0 : index
    %c0_12 = arith.constant 0 : index
    %13 = vector.load %arg5[%c0_11, %c0_12] : memref<4x128xf32, #tpu.memory_space<vmem>>, vector<4x128xf32>
    %cst = arith.constant dense<0.000000e+00> : vector<256x128xf32>
    %14 = tpu.matmul %12, %13, %cst {dimension_numbers = #tpu.dot_dimension_numbers<[1], [0], [0], [1], [0, 0, 1, 1], [], []>} : vector<256x4xf32>, vector<4x128xf32>, vector<256x128xf32> -> vector<256x128xf32>
    %c0_13 = arith.constant 0 : index
    %c0_14 = arith.constant 0 : index
    %15 = vector.load %arg6[%c0_13, %c0_14] : memref<1x128xf32, #tpu.memory_space<vmem>>, vector<1x128xf32>
    %16 = vector.broadcast %15 : vector<1x128xf32> to vector<256x128xf32>
    %17 = arith.addf %14, %16 : vector<256x128xf32>
    %18 = vector.shape_cast %17 : vector<256x128xf32> to vector<16x16x128xf32>
    %19 = arith.addf %9, %18 : vector<16x16x128xf32>
    %cst_15 = arith.constant 0.000000e+00 : f32
    %20 = vector.broadcast %cst_15 : f32 to vector<16x16x128xf32>
    %21 = arith.maximumf %19, %20 : vector<16x16x128xf32>
    %c0_16 = arith.constant 0 : index
    %c0_17 = arith.constant 0 : index
    %c0_18 = arith.constant 0 : index
    %c0_19 = arith.constant 0 : index
    %22 = vector.load %arg7[%c0_16, %c0_17, %c0_18, %c0_19] : memref<1x16x16x128xf32, #tpu.memory_space<vmem>>, vector<1x16x16x128xf32>
    %23 = vector.shape_cast %22 : vector<1x16x16x128xf32> to vector<16x16x128xf32>
    %24 = vector.shape_cast %21 : vector<16x16x128xf32> to vector<1x16x16x128xf32>
    tpu.vector_store %arg7[%c0_16, %c0_17, %c0_18, %c0_19], %24 {strides = array<i32>} : memref<1x16x16x128xf32, #tpu.memory_space<vmem>>, vector<1x16x16x128xf32>,
    return
  }
  func.func @transform_0(%arg0: i32) -> (i32, i32, i32, i32) {
    %c0_i32 = arith.constant 0 : i32
    %c0_i32_0 = arith.constant 0 : i32
    %c0_i32_1 = arith.constant 0 : i32
    %c0_i32_2 = arith.constant 0 : i32
    return %arg0, %c0_i32, %c0_i32_0, %c0_i32_1 : i32, i32, i32, i32
  }
  func.func @transform_1(%arg0: i32) -> (i32, i32) {
    %c0_i32 = arith.constant 0 : i32
    %c0_i32_0 = arith.constant 0 : i32
    %c0_i32_1 = arith.constant 0 : i32
    return %c0_i32, %c0_i32_0 : i32, i32
  }
  func.func @transform_2(%arg0: i32) -> (i32, i32) {
    %c0_i32 = arith.constant 0 : i32
    %c0_i32_0 = arith.constant 0 : i32
    %c0_i32_1 = arith.constant 0 : i32
    return %c0_i32, %c0_i32_0 : i32, i32
  }
  func.func @transform_3(%arg0: i32) -> (i32, i32, i32, i32) {
    %c0_i32 = arith.constant 0 : i32
    %c0_i32_0 = arith.constant 0 : i32
    %c0_i32_1 = arith.constant 0 : i32
    %c0_i32_2 = arith.constant 0 : i32
    return %arg0, %c0_i32, %c0_i32_0, %c0_i32_1 : i32, i32, i32, i32
  }
  func.func @transform_4(%arg0: i32) -> (i32, i32) {
    %c0_i32 = arith.constant 0 : i32
    %c0_i32_0 = arith.constant 0 : i32
    %c0_i32_1 = arith.constant 0 : i32
    return %c0_i32, %c0_i32_0 : i32, i32
  }
  func.func @transform_5(%arg0: i32) -> (i32, i32) {
    %c0_i32 = arith.constant 0 : i32
    %c0_i32_0 = arith.constant 0 : i32
    %c0_i32_1 = arith.constant 0 : i32
    return %c0_i32, %c0_i32_0 : i32, i32
  }
  func.func @transform_6(%arg0: i32) -> (i32, i32, i32, i32) {
    %c0_i32 = arith.constant 0 : i32
    %c0_i32_0 = arith.constant 0 : i32
    %c0_i32_1 = arith.constant 0 : i32
    %c0_i32_2 = arith.constant 0 : i32
    return %arg0, %c0_i32, %c0_i32_0, %c0_i32_1 : i32, i32, i32, i32
  }
}

</mosaic_0001>

<llo_original>
// kernel: resblock_forward.5
$region0: #{resblock_forward.5}
  #allocation0 [shape = 'u32[]', space=smem, size = 0x4, offset = 0x4, fixed_abs, tag = 'smem constant byte address 0x4 - core index']
  #allocation1 [shape = 'u32[144,128]{1,0:T(1,128)}', space=vmem, size = 0x12000, scoped, tag = 'internal scratch']
  %s0 = inlined_call_operand.vmem [shape: f32[2,16,16,128], index: 0, kind: input, shape index: {}]
  %s1 = inlined_call_operand.vmem [shape: f32[1,128], index: 1, kind: input, shape index: {}]
  %s2 = inlined_call_operand.vmem [shape: f32[1,128], index: 2, kind: input, shape index: {}]
  %s3 = inlined_call_operand.vmem [shape: f32[2,16,16,4], index: 3, kind: input, shape index: {}]
  %s4 = inlined_call_operand.vmem [shape: f32[4,128], index: 4, kind: input, shape index: {}]
  %s5 = inlined_call_operand.vmem [shape: f32[1,128], index: 5, kind: input, shape index: {}]
  %s6 = inlined_call_operand.vmem [shape: f32[2,16,16,128], index: 6, kind: output, shape index: {}]
  %s7 = sld [smem:[#allocation0]]
  $region57: #{resblock_forward.5} parent=0
    _
  %s9 = ssub.s32 1, %s7
  %s10 = scalar_select 0, %s9, %s7
  loop: start=0, step=1, limit=4
  $region2: #{resblock_forward.5} parent=0 // loop_pre_header
    _
  $region3: #{resblock_forward.5} parent=0 // loop_header
    %s12 = sphi 0, %s16
    %p13 = scmp.ge.s32.totalorder %s12, 4
    %s22 = sphi 0, %s24
    %s25 = sphi 0, %s22
    %s26 = sphi 0, %s25
    %s42 = sphi 0, %s26
    %s46 = sphi 0, %s46
    %s48 = sphi 0, %s46
    %s49 = sphi 0, %s48
    %s63 = sphi 0, %s49
    %s67 = sphi 0, %s67
    %s69 = sphi 0, %s67
    %s70 = sphi 0, %s69
    %s84 = sphi 0, %s70
    %s90 = sphi 0, %s92
    %s93 = sphi 0, %s90
    %s94 = sphi 0, %s93
    %s110 = sphi 0, %s94
    %s114 = sphi 0, %s114
    %s116 = sphi 0, %s114
    %s117 = sphi 0, %s116
    %s131 = sphi 0, %s117
    %s135 = sphi 0, %s135
    %s137 = sphi 0, %s135
    %s138 = sphi 0, %s137
    %s152 = sphi 0, %s138
    %s158 = sphi 0, %s160
    %s161 = sphi 0, %s158
    %s162 = sphi 0, %s161
    %s178 = sphi 0, %s162
  $region4: #{resblock_forward.5} parent=0 // loop_header_branch
    %15 = sbr.rel (%p13) target = $region8
  $region5: #{resblock_forward.5} parent=0 // loop_body
    %s17 = ssub.s32 %s12, 1
    %s18 = ssub.s32 %s12, 2
    %s19 = sadd.s32 %s12, 1
    %s20 = ssub.s32 %s12, %s19
    %p21 = scmp.eq.s32.totalorder %s20, 0
    %s23 = sadd.s32 %s22, 1
    %s24 = scalar_select %p21, %s22, %s23
    %p27 = pneg %p21
    %p28 = scmp.eq.s32.totalorder %s12, 1
    %p29 = por %p27, %p28
    %p30 = scmp.ne.s32.totalorder %s22, %s25
    %p31 = scmp.eq.s32.totalorder %s12, 0
    %p32 = por %p30, %p31
    %p33 = scmp.ne.s32.totalorder %s22, %s25
    %p34 = scmp.eq.s32.totalorder %s17, 1
    %p35 = por %p33, %p34
    %p36 = scmp.ne.s32.totalorder %s25, %s26
    %p37 = scmp.eq.s32.totalorder %s17, 0
    %p38 = por %p36, %p37
    %p39 = scmp.ne.s32.totalorder %s25, %s26
    %p40 = scmp.eq.s32.totalorder %s18, 1
    %p41 = por %p39, %p40
    %p43 = scmp.ne.s32.totalorder %s26, %s42
    %p44 = scmp.eq.s32.totalorder %s18, 0
    %p45 = por %p43, %p44
    %s47 = sadd.s32 %s46, 1
    %p50 = scmp.eq.s32.totalorder %s12, 1
    %p51 = scmp.ne.s32.totalorder %s46, %s48
    %p52 = scmp.eq.s32.totalorder %s12, 0
    %p53 = por %p51, %p52
    %p54 = scmp.ne.s32.totalorder %s46, %s48
    %p55 = scmp.eq.s32.totalorder %s17, 1
    %p56 = por %p54, %p55
    %p57 = scmp.ne.s32.totalorder %s48, %s49
    %p58 = scmp.eq.s32.totalorder %s17, 0
    %p59 = por %p57, %p58
    %p60 = scmp.ne.s32.totalorder %s48, %s49
    %p61 = scmp.eq.s32.totalorder %s18, 1
    %p62 = por %p60, %p61
    %p64 = scmp.ne.s32.totalorder %s49, %s63
    %p65 = scmp.eq.s32.totalorder %s18, 0
    %p66 = por %p64, %p65
    %s68 = sadd.s32 %s67, 1
    %p71 = scmp.eq.s32.totalorder %s12, 1
    %p72 = scmp.ne.s32.totalorder %s67, %s69
    %p73 = scmp.eq.s32.totalorder %s12, 0
    %p74 = por %p72, %p73
    %p75 = scmp.ne.s32.totalorder %s67, %s69
    %p76 = scmp.eq.s32.totalorder %s17, 1
    %p77 = por %p75, %p76
    %p78 = scmp.ne.s32.totalorder %s69, %s70
    %p79 = scmp.eq.s32.totalorder %s17, 0
    %p80 = por %p78, %p79
    %p81 = scmp.ne.s32.totalorder %s69, %s70
    %p82 = scmp.eq.s32.totalorder %s18, 1
    %p83 = por %p81, %p82
    %p85 = scmp.ne.s32.totalorder %s70, %s84
    %p86 = scmp.eq.s32.totalorder %s18, 0
    %p87 = por %p85, %p86
    %s88 = ssub.s32 %s12, %s19
    %p89 = scmp.eq.s32.totalorder %s88, 0
    %s91 = sadd.s32 %s90, 1
    %s92 = scalar_select %p89, %s90, %s91
    %p95 = pneg %p89
    %p96 = scmp.eq.s32.totalorder %s12, 1
    %p97 = por %p95, %p96
    %p98 = scmp.ne.s32.totalorder %s90, %s93
    %p99 = scmp.eq.s32.totalorder %s12, 0
    %p100 = por %p98, %p99
    %p101 = scmp.ne.s32.totalorder %s90, %s93
    %p102 = scmp.eq.s32.totalorder %s17, 1
    %p103 = por %p101, %p102
    %p104 = scmp.ne.s32.totalorder %s93, %s94
    %p105 = scmp.eq.s32.totalorder %s17, 0
    %p106 = por %p104, %p105
    %p107 = scmp.ne.s32.totalorder %s93, %s94
    %p108 = scmp.eq.s32.totalorder %s18, 1
    %p109 = por %p107, %p108
    %p111 = scmp.ne.s32.totalorder %s94, %s110
    %p112 = scmp.eq.s32.totalorder %s18, 0
    %p113 = por %p111, %p112
    %s115 = sadd.s32 %s114, 1
    %p118 = scmp.eq.s32.totalorder %s12, 1
    %p119 = scmp.ne.s32.totalorder %s114, %s116
    %p120 = scmp.eq.s32.totalorder %s12, 0
    %p121 = por %p119, %p120
    %p122 = scmp.ne.s32.totalorder %s114, %s116
    %p123 = scmp.eq.s32.totalorder %s17, 1
    %p124 = por %p122, %p123
    %p125 = scmp.ne.s32.totalorder %s116, %s117
    %p126 = scmp.eq.s32.totalorder %s17, 0
    %p127 = por %p125, %p126
    %p128 = scmp.ne.s32.totalorder %s116, %s117
    %p129 = scmp.eq.s32.totalorder %s18, 1
    %p130 = por %p128, %p129
    %p132 = scmp.ne.s32.totalorder %s117, %s131
    %p133 = scmp.eq.s32.totalorder %s18, 0
    %p134 = por %p132, %p133
    %s136 = sadd.s32 %s135, 1
    %p139 = scmp.eq.s32.totalorder %s12, 1
    %p140 = scmp.ne.s32.totalorder %s135, %s137
    %p141 = scmp.eq.s32.totalorder %s12, 0
    %p142 = por %p140, %p141
    %p143 = scmp.ne.s32.totalorder %s135, %s137
    %p144 = scmp.eq.s32.totalorder %s17, 1
    %p145 = por %p143, %p144
    %p146 = scmp.ne.s32.totalorder %s137, %s138
    %p147 = scmp.eq.s32.totalorder %s17, 0
    %p148 = por %p146, %p147
    %p149 = scmp.ne.s32.totalorder %s137, %s138
    %p150 = scmp.eq.s32.totalorder %s18, 1
    %p151 = por %p149, %p150
    %p153 = scmp.ne.s32.totalorder %s138, %s152
    %p154 = scmp.eq.s32.totalorder %s18, 0
    %p155 = por %p153, %p154
    %s156 = ssub.s32 %s12, %s19
    %p157 = scmp.eq.s32.totalorder %s156, 0
    %s159 = sadd.s32 %s158, 1
    %s160 = scalar_select %p157, %s158, %s159
    %p163 = pneg %p157
    %p164 = scmp.eq.s32.totalorder %s12, 1
    %p165 = por %p163, %p164
    %p166 = scmp.ne.s32.totalorder %s158, %s161
    %p167 = scmp.eq.s32.totalorder %s12, 0
    %p168 = por %p166, %p167
    %p169 = scmp.ne.s32.totalorder %s158, %s161
    %p170 = scmp.eq.s32.totalorder %s17, 1
    %p171 = por %p169, %p170
    %p172 = scmp.ne.s32.totalorder %s161, %s162
    %p173 = scmp.eq.s32.totalorder %s17, 0
    %p174 = por %p172, %p173
    %p175 = scmp.ne.s32.totalorder %s161, %s162
    %p176 = scmp.eq.s32.totalorder %s18, 1
    %p177 = por %p175, %p176
    %p179 = scmp.ne.s32.totalorder %s162, %s178
    %p180 = scmp.eq.s32.totalorder %s18, 0
    %p181 = por %p179, %p180
    %p182 = scmp.le.s32.totalorder 1, %s12
    %p183 = scmp.lt.s32.totalorder %s12, 3
    %p184 = pnand %p182, %p183
    %p185 = pneg %p184
    // Predicated region
    $region9: #{resblock_forward.5} parent=5 // pred_check
      _
    $region10: #{resblock_forward.5} parent=5 // pred_check_branch
      %187 = sbr.rel (%p184) target = $region12
    $region11: #{resblock_forward.5} parent=5 // pred_region
      %s188 = ssub.s32 %s12, 1
      // Predicated region
      $region13: #{resblock_forward.5} parent=11 // pred_check
        %p189 = pneg %p59
      $region14: #{resblock_forward.5} parent=11 // pred_check_branch
        %191 = sbr.rel (%p189) target = $region16
      $region15: #{resblock_forward.5} parent=11 // pred_region
        _
      $region16: #{resblock_forward.5} parent=11 // pred_fallthru
        _
      // Predicated region
      $region17: #{resblock_forward.5} parent=11 // pred_check
        %p192 = pneg %p80
      $region18: #{resblock_forward.5} parent=11 // pred_check_branch
        %194 = sbr.rel (%p192) target = $region20
      $region19: #{resblock_forward.5} parent=11 // pred_region
        _
      $region20: #{resblock_forward.5} parent=11 // pred_fallthru
        _
      // Predicated region
      $region21: #{resblock_forward.5} parent=11 // pred_check
        %p195 = pneg %p127
      $region22: #{resblock_forward.5} parent=11 // pred_check_branch
        %197 = sbr.rel (%p195) target = $region24
      $region23: #{resblock_forward.5} parent=11 // pred_region
        _
      $region24: #{resblock_forward.5} parent=11 // pred_fallthru
        _
      // Predicated region
      $region25: #{resblock_forward.5} parent=11 // pred_check
        %p198 = pneg %p148
      $region26: #{resblock_forward.5} parent=11 // pred_check_branch
        %200 = sbr.rel (%p198) target = $region28
      $region27: #{resblock_forward.5} parent=11 // pred_region
        _
      $region28: #{resblock_forward.5} parent=11 // pred_fallthru
        _
    $region12: #{resblock_forward.5} parent=5 // pred_fallthru
      _
    %p201 = scmp.lt.s32.totalorder %s12, 2
    // Predicated region
    $region29: #{resblock_forward.5} parent=5 // pred_check
      %p202 = pneg %p201
    $region30: #{resblock_forward.5} parent=5 // pred_check_branch
      %204 = sbr.rel (%p202) target = $region32
    $region31: #{resblock_forward.5} parent=5 // pred_region
      // Predicated region
      $region33: #{resblock_forward.5} parent=31 // pred_check
        %p205 = pneg %p32
      $region34: #{resblock_forward.5} parent=31 // pred_check_branch
        %207 = sbr.rel (%p205) target = $region36
      $region35: #{resblock_forward.5} parent=31 // pred_region
        %p208 = scmp.lt.s32.totalorder %s12, 1
        %s209 = scalar_select %p208, %s12, 1
        %s210 = smul.addr %s209, 32
        %s211 = smul.addr %s210, 8
        %s212 = scalar_lea.vmem %s0, %s211
      $region36: #{resblock_forward.5} parent=31 // pred_fallthru
        _
      // Predicated region
      $region37: #{resblock_forward.5} parent=31 // pred_check
        %p213 = pneg %p100
      $region38: #{resblock_forward.5} parent=31 // pred_check_branch
        %215 = sbr.rel (%p213) target = $region40
      $region39: #{resblock_forward.5} parent=31 // pred_region
        %p216 = scmp.lt.s32.totalorder %s12, 1
        %s217 = scalar_select %p216, %s12, 1
        %s218 = smul.addr %s217, 32
        %s219 = smul.addr %s218, 8
        %s220 = scalar_lea.vmem %s3, %s219
      $region40: #{resblock_forward.5} parent=31 // pred_fallthru
        _
    $region32: #{resblock_forward.5} parent=5 // pred_fallthru
      _
    %p221 = scmp.le.s32.totalorder 1, %s12
    %p222 = scmp.lt.s32.totalorder %s12, 3
    %p223 = pnand %p221, %p222
    %p224 = pneg %p223
    // Predicated region
    $region41: #{resblock_forward.5} parent=5 // pred_check
      _
    $region42: #{resblock_forward.5} parent=5 // pred_check_branch
      %226 = sbr.rel (%p223) target = $region44
    $region43: #{resblock_forward.5} parent=5 // pred_region
      %s227 = ssub.s32 %s12, 1
      %p228 = scmp.lt.s32.totalorder %s17, 1
      %s229 = scalar_select %p228, %s17, 1
      %s230 = smul.addr %s229, 32
      %s231 = smul.addr %s230, 8
      %s232 = scalar_lea.vmem %s0, %s231
      %p233 = pneg %p38
      %p234 = pneg %p35
      %p235 = pneg %p59
      %p236 = pneg %p56
      %p237 = pneg %p80
      %p238 = pneg %p77
      %p239 = scmp.lt.s32.totalorder %s17, 1
      %s240 = scalar_select %p239, %s17, 1
      %s241 = smul.addr %s240, 32
      %s242 = smul.addr %s241, 8
      %s243 = scalar_lea.vmem %s3, %s242
      %p244 = pneg %p106
      %p245 = pneg %p103
      %p246 = pneg %p127
      %p247 = pneg %p124
      %p248 = pneg %p148
      %p249 = pneg %p145
      %p250 = pneg %p174
      %p251 = pneg %p171
      %p252 = scmp.lt.s32.totalorder %s17, 1
      %s253 = scalar_select %p252, %s17, 1
      %s254 = smul.addr %s253, 32
      %s255 = smul.addr %s254, 8
      %s256 = scalar_lea.vmem %s6, %s255
      %p257 = scmp.lt.s32.totalorder %s17, 1
      %s258 = scalar_select %p257, %s17, 1
      %s259 = smul.addr %s258, 32
      %s260 = smul.addr %s259, 8
      %s261 = scalar_lea.vmem %s0, %s260
      %p262 = scmp.lt.s32.totalorder %s17, 1
      %s263 = scalar_select %p262, %s17, 1
      %s264 = smul.addr %s263, 32
      %s265 = smul.addr %s264, 8
      %s266 = scalar_lea.vmem %s3, %s265
      %p267 = scmp.lt.s32.totalorder %s17, 1
      %s268 = scalar_select %p267, %s17, 1
      %s269 = smul.addr %s268, 32
      %s270 = smul.addr %s269, 8
      %s271 = scalar_lea.vmem %s6, %s270
      %v272 = vld [vmem:[%s261] sm:$0xff]
      %v273 = vld [vmem:[%s261 + $0x8] sm:$0xff]
      %v274 = vld [vmem:[%s261 + $0x10] sm:$0xff]
      %v275 = vld [vmem:[%s261 + $0x18] sm:$0xff]
      %v276 = vld [vmem:[%s261 + $0x20] sm:$0xff]
      %v277 = vld [vmem:[%s261 + $0x28] sm:$0xff]
      %v278 = vld [vmem:[%s261 + $0x30] sm:$0xff]
      %v279 = vld [vmem:[%s261 + $0x38] sm:$0xff]
      %v280 = vld [vmem:[%s261 + $0x40] sm:$0xff]
      %v281 = vld [vmem:[%s261 + $0x48] sm:$0xff]
      %v282 = vld [vmem:[%s261 + $0x50] sm:$0xff]
      %v283 = vld [vmem:[%s261 + $0x58] sm:$0xff]
      %v284 = vld [vmem:[%s261 + $0x60] sm:$0xff]
      %v285 = vld [vmem:[%s261 + $0x68] sm:$0xff]
      %v286 = vld [vmem:[%s261 + $0x70] sm:$0xff]
      %v287 = vld [vmem:[%s261 + $0x78] sm:$0xff]
      %v288 = vld [vmem:[%s261 + $0x80] sm:$0xff]
      %v289 = vld [vmem:[%s261 + $0x88] sm:$0xff]
      %v290 = vld [vmem:[%s261 + $0x90] sm:$0xff]
      %v291 = vld [vmem:[%s261 + $0x98] sm:$0xff]
      %v292 = vld [vmem:[%s261 + $0xa0] sm:$0xff]
      %v293 = vld [vmem:[%s261 + $0xa8] sm:$0xff]
      %v294 = vld [vmem:[%s261 + $0xb0] sm:$0xff]
      %v295 = vld [vmem:[%s261 + $0xb8] sm:$0xff]
      %v296 = vld [vmem:[%s261 + $0xc0] sm:$0xff]
      %v297 = vld [vmem:[%s261 + $0xc8] sm:$0xff]
      %v298 = vld [vmem:[%s261 + $0xd0] sm:$0xff]
      %v299 = vld [vmem:[%s261 + $0xd8] sm:$0xff]
      %v300 = vld [vmem:[%s261 + $0xe0] sm:$0xff]
      %v301 = vld [vmem:[%s261 + $0xe8] sm:$0xff]
      %v302 = vld [vmem:[%s261 + $0xf0] sm:$0xff]
      %v303 = vld [vmem:[%s261 + $0xf8] sm:$0xff]
      %v304 = vld [vmem:[%s1] sm:$0x1]
      %v306 = vlaneseq
      %v307 = vshrl.u32 %v306, 7
      %v308 = vsub.s32 0, %v307
      %v309 = vrot.slane %v304, %v308
      %v311 = vmul.f32 %v272, %v309
      %v312 = vmul.f32 %v273, %v309
      %v313 = vmul.f32 %v274, %v309
      %v314 = vmul.f32 %v275, %v309
      %v315 = vmul.f32 %v276, %v309
      %v316 = vmul.f32 %v277, %v309
      %v317 = vmul.f32 %v278, %v309
      %v318 = vmul.f32 %v279, %v309
      %v319 = vmul.f32 %v280, %v309
      %v320 = vmul.f32 %v281, %v309
      %v321 = vmul.f32 %v282, %v309
      %v322 = vmul.f32 %v283, %v309
      %v323 = vmul.f32 %v284, %v309
      %v324 = vmul.f32 %v285, %v309
      %v325 = vmul.f32 %v286, %v309
      %v326 = vmul.f32 %v287, %v309
      %v327 = vmul.f32 %v288, %v309
      %v328 = vmul.f32 %v289, %v309
      %v329 = vmul.f32 %v290, %v309
      %v330 = vmul.f32 %v291, %v309
      %v331 = vmul.f32 %v292, %v309
      %v332 = vmul.f32 %v293, %v309
      %v333 = vmul.f32 %v294, %v309
      %v334 = vmul.f32 %v295, %v309
      %v335 = vmul.f32 %v296, %v309
      %v336 = vmul.f32 %v297, %v309
      %v337 = vmul.f32 %v298, %v309
      %v338 = vmul.f32 %v299, %v309
      %v339 = vmul.f32 %v300, %v309
      %v340 = vmul.f32 %v301, %v309
      %v341 = vmul.f32 %v302, %v309
      %v342 = vmul.f32 %v303, %v309
      %v343 = vld [vmem:[%s2] sm:$0x1]
      %v345 = vlaneseq
      %v346 = vshrl.u32 %v345, 7
      %v347 = vsub.s32 0, %v346
      %v348 = vrot.slane %v343, %v347
      %v350 = vadd.f32 %v311, %v348
      %v351 = vadd.f32 %v312, %v348
      %v352 = vadd.f32 %v313, %v348
      %v353 = vadd.f32 %v314, %v348
      %v354 = vadd.f32 %v315, %v348
      %v355 = vadd.f32 %v316, %v348
      %v356 = vadd.f32 %v317, %v348
      %v357 = vadd.f32 %v318, %v348
      %v358 = vadd.f32 %v319, %v348
      %v359 = vadd.f32 %v320, %v348
      %v360 = vadd.f32 %v321, %v348
      %v361 = vadd.f32 %v322, %v348
      %v362 = vadd.f32 %v323, %v348
      %v363 = vadd.f32 %v324, %v348
      %v364 = vadd.f32 %v325, %v348
      %v365 = vadd.f32 %v326, %v348
      %v366 = vadd.f32 %v327, %v348
      %v367 = vadd.f32 %v328, %v348
      %v368 = vadd.f32 %v329, %v348
      %v369 = vadd.f32 %v330, %v348
      %v370 = vadd.f32 %v331, %v348
      %v371 = vadd.f32 %v332, %v348
      %v372 = vadd.f32 %v333, %v348
      %v373 = vadd.f32 %v334, %v348
      %v374 = vadd.f32 %v335, %v348
      %v375 = vadd.f32 %v336, %v348
      %v376 = vadd.f32 %v337, %v348
      %v377 = vadd.f32 %v338, %v348
      %v378 = vadd.f32 %v339, %v348
      %v379 = vadd.f32 %v340, %v348
      %v380 = vadd.f32 %v341, %v348
      %v381 = vadd.f32 %v342, %v348
      %v382 = vld [vmem:[%s266] sm:$0xff]
      %v383 = vld [vmem:[%s266 + $0x8] sm:$0xff]
      %v384 = vld [vmem:[%s266 + $0x10] sm:$0xff]
      %v385 = vld [vmem:[%s266 + $0x18] sm:$0xff]
      %v386 = vld [vmem:[%s266 + $0x20] sm:$0xff]
      %v387 = vld [vmem:[%s266 + $0x28] sm:$0xff]
      %v388 = vld [vmem:[%s266 + $0x30] sm:$0xff]
      %v389 = vld [vmem:[%s266 + $0x38] sm:$0xff]
      %v390 = vld [vmem:[%s266 + $0x40] sm:$0xff]
      %v391 = vld [vmem:[%s266 + $0x48] sm:$0xff]
      %v392 = vld [vmem:[%s266 + $0x50] sm:$0xff]
      %v393 = vld [vmem:[%s266 + $0x58] sm:$0xff]
      %v394 = vld [vmem:[%s266 + $0x60] sm:$0xff]
      %v395 = vld [vmem:[%s266 + $0x68] sm:$0xff]
      %v396 = vld [vmem:[%s266 + $0x70] sm:$0xff]
      %v397 = vld [vmem:[%s266 + $0x78] sm:$0xff]
      %v398 = vld [vmem:[%s266 + $0x80] sm:$0xff]
      %v399 = vld [vmem:[%s266 + $0x88] sm:$0xff]
      %v400 = vld [vmem:[%s266 + $0x90] sm:$0xff]
      %v401 = vld [vmem:[%s266 + $0x98] sm:$0xff]
      %v402 = vld [vmem:[%s266 + $0xa0] sm:$0xff]
      %v403 = vld [vmem:[%s266 + $0xa8] sm:$0xff]
      %v404 = vld [vmem:[%s266 + $0xb0] sm:$0xff]
      %v405 = vld [vmem:[%s266 + $0xb8] sm:$0xff]
      %v406 = vld [vmem:[%s266 + $0xc0] sm:$0xff]
      %v407 = vld [vmem:[%s266 + $0xc8] sm:$0xff]
      %v408 = vld [vmem:[%s266 + $0xd0] sm:$0xff]
      %v409 = vld [vmem:[%s266 + $0xd8] sm:$0xff]
      %v410 = vld [vmem:[%s266 + $0xe0] sm:$0xff]
      %v411 = vld [vmem:[%s266 + $0xe8] sm:$0xff]
      %v412 = vld [vmem:[%s266 + $0xf0] sm:$0xff]
      %v413 = vld [vmem:[%s266 + $0xf8] sm:$0xff]
      %v414 = vld [vmem:[%s4] sm:$0xf]
      %v415 = vld [vmem:[%s5] sm:$0x1]
      %v417 = vlaneseq
      %v418 = vshrl.u32 %v417, 7
      %v419 = vsub.s32 0, %v418
      %v420 = vrot.slane %v415, %v419
      %vm422 = vcmask 31744
      %v424 = vsel %vm422, %v382, 0
      %v427 = vsel %vm422, %v383, 0
      %v430 = vsel %vm422, %v384, 0
      %v433 = vsel %vm422, %v385, 0
      %v436 = vsel %vm422, %v386, 0
      %v439 = vsel %vm422, %v387, 0
      %v442 = vsel %vm422, %v388, 0
      %v445 = vsel %vm422, %v389, 0
      %v448 = vsel %vm422, %v390, 0
      %v451 = vsel %vm422, %v391, 0
      %v454 = vsel %vm422, %v392, 0
      %v457 = vsel %vm422, %v393, 0
      %v460 = vsel %vm422, %v394, 0
      %v463 = vsel %vm422, %v395, 0
      %v466 = vsel %vm422, %v396, 0
      %v469 = vsel %vm422, %v397, 0
      %v472 = vsel %vm422, %v398, 0
      %v475 = vsel %vm422, %v399, 0
      %v478 = vsel %vm422, %v400, 0
      %v481 = vsel %vm422, %v401, 0
      %v484 = vsel %vm422, %v402, 0
      %v487 = vsel %vm422, %v403, 0
      %v490 = vsel %vm422, %v404, 0
      %v493 = vsel %vm422, %v405, 0
      %v496 = vsel %vm422, %v406, 0
      %v499 = vsel %vm422, %v407, 0
      %v502 = vsel %vm422, %v408, 0
      %v505 = vsel %vm422, %v409, 0
      %v508 = vsel %vm422, %v410, 0
      %v511 = vsel %vm422, %v411, 0
      %v514 = vsel %vm422, %v412, 0
      %v517 = vsel %vm422, %v413, 0
      %vm519 = vcmask 1043456
      %v521 = vsel %vm519, %v414, 0
      %523 = vmatprep.subr.mxu0 0.0
      %524 = vmatpush1.msra.mxu0 0.0
      %525 = vmatprep.subr.mxu0 0.0
      %526 = vmatpush1.msra.mxu0 0.0
      %527 = vmatprep.subr.mxu0 0.0
      %528 = vmatpush1.msra.mxu0 0.0
      %529 = vmatprep.subr.mxu0 0.0
      %530 = vmatpush1.msra.mxu0 0.0
      %531 = vmatprep.subr.mxu0 0.0
      %532 = vmatpush1.msra.mxu0 0.0
      %533 = vmatprep.subr.mxu0 0.0
      %534 = vmatpush1.msra.mxu0 0.0
      %535 = vmatprep.subr.mxu0 0.0
      %536 = vmatpush1.msra.mxu0 0.0
      %537 = vmatprep.subr.mxu0 0.0
      %538 = vmatpush1.msra.mxu0 0.0
      %539 = vmatprep.subr.mxu0 0.0
      %540 = vmatpush1.msra.mxu0 0.0
      %541 = vmatprep.subr.mxu0 0.0
      %542 = vmatpush1.msra.mxu0 0.0
      %543 = vmatprep.subr.mxu0 0.0
      %544 = vmatpush1.msra.mxu0 0.0
      %545 = vmatprep.subr.mxu0 0.0
      %546 = vmatpush1.msra.mxu0 0.0
      %547 = vmatprep.subr.mxu0 0.0
      %548 = vmatpush1.msra.mxu0 0.0
      %549 = vmatprep.subr.mxu0 0.0
      %550 = vmatpush1.msra.mxu0 0.0
      %551 = vmatprep.subr.mxu0 0.0
      %552 = vmatpush1.msra.mxu0 0.0
      %553 = vmatprep.subr.mxu0 0.0
      %554 = vmatpush1.msra.mxu0 %v521
      %555 = vmatprep.subr.mxu0 0.0
      %556 = vmatpush2.msra.mxu0 0.0
      %557 = vmatprep.subr.mxu0 0.0
      %558 = vmatpush2.msra.mxu0 0.0
      %559 = vmatprep.subr.mxu0 0.0
      %560 = vmatpush2.msra.mxu0 0.0
      %561 = vmatprep.subr.mxu0 0.0
      %562 = vmatpush2.msra.mxu0 0.0
      %563 = vmatprep.subr.mxu0 0.0
      %564 = vmatpush2.msra.mxu0 0.0
      %565 = vmatprep.subr.mxu0 0.0
      %566 = vmatpush2.msra.mxu0 0.0
      %567 = vmatprep.subr.mxu0 0.0
      %568 = vmatpush2.msra.mxu0 0.0
      %569 = vmatprep.subr.mxu0 0.0
      %570 = vmatpush2.msra.mxu0 0.0
      %571 = vmatprep.subr.mxu0 0.0
      %572 = vmatpush2.msra.mxu0 0.0
      %573 = vmatprep.subr.mxu0 0.0
      %574 = vmatpush2.msra.mxu0 0.0
      %575 = vmatprep.subr.mxu0 0.0
      %576 = vmatpush2.msra.mxu0 0.0
      %577 = vmatprep.subr.mxu0 0.0
      %578 = vmatpush2.msra.mxu0 0.0
      %579 = vmatprep.subr.mxu0 0.0
      %580 = vmatpush2.msra.mxu0 0.0
      %581 = vmatprep.subr.mxu0 0.0
      %582 = vmatpush2.msra.mxu0 0.0
      %583 = vmatprep.subr.mxu0 0.0
      %584 = vmatpush2.msra.mxu0 0.0
      %585 = vmatprep.subr.mxu0 0.0
      %586 = vmatpush2.msra.mxu0 0.0
      %587 = vmatprep.mubr.f32.mxu0 0.0
      %588 = vmatmul.mubr.f32.gmra.mxu0 %v424
      %v589 = vpop.f32.mrf.mxu0
      %v590 = vadd.f32 %v420, %v589
      %v591 = vpop.f32.mrf.mxu0
      %592 = vmatprep.mubr.f32.mxu0 0.0
      %593 = vmatmul.mubr.f32.gmra.mxu0 %v427
      %v594 = vpop.f32.mrf.mxu0
      %v595 = vadd.f32 %v420, %v594
      %v596 = vpop.f32.mrf.mxu0
      %597 = vmatprep.mubr.f32.mxu0 0.0
      %598 = vmatmul.mubr.f32.gmra.mxu0 %v430
      %v599 = vpop.f32.mrf.mxu0
      %v600 = vadd.f32 %v420, %v599
      %v601 = vpop.f32.mrf.mxu0
      %602 = vmatprep.mubr.f32.mxu0 0.0
      %603 = vmatmul.mubr.f32.gmra.mxu0 %v433
      %v604 = vpop.f32.mrf.mxu0
      %v605 = vadd.f32 %v420, %v604
      %v606 = vpop.f32.mrf.mxu0
      %607 = vmatprep.mubr.f32.mxu0 0.0
      %608 = vmatmul.mubr.f32.gmra.mxu0 %v436
      %v609 = vpop.f32.mrf.mxu0
      %v610 = vadd.f32 %v420, %v609
      %v611 = vpop.f32.mrf.mxu0
      %612 = vmatprep.mubr.f32.mxu0 0.0
      %613 = vmatmul.mubr.f32.gmra.mxu0 %v439
      %v614 = vpop.f32.mrf.mxu0
      %v615 = vadd.f32 %v420, %v614
      %v616 = vpop.f32.mrf.mxu0
      %617 = vmatprep.mubr.f32.mxu0 0.0
      %618 = vmatmul.mubr.f32.gmra.mxu0 %v442
      %v619 = vpop.f32.mrf.mxu0
      %v620 = vadd.f32 %v420, %v619
      %v621 = vpop.f32.mrf.mxu0
      %622 = vmatprep.mubr.f32.mxu0 0.0
      %623 = vmatmul.mubr.f32.gmra.mxu0 %v445
      %v624 = vpop.f32.mrf.mxu0
      %v625 = vadd.f32 %v420, %v624
      %v626 = vpop.f32.mrf.mxu0
      %627 = vmatprep.mubr.f32.mxu0 0.0
      %628 = vmatmul.mubr.f32.gmra.mxu0 %v448
      %v629 = vpop.f32.mrf.mxu0
      %v630 = vadd.f32 %v420, %v629
      %v631 = vpop.f32.mrf.mxu0
      %632 = vmatprep.mubr.f32.mxu0 0.0
      %633 = vmatmul.mubr.f32.gmra.mxu0 %v451
      %v634 = vpop.f32.mrf.mxu0
      %v635 = vadd.f32 %v420, %v634
      %v636 = vpop.f32.mrf.mxu0
      %637 = vmatprep.mubr.f32.mxu0 0.0
      %638 = vmatmul.mubr.f32.gmra.mxu0 %v454
      %v639 = vpop.f32.mrf.mxu0
      %v640 = vadd.f32 %v420, %v639
      %v641 = vpop.f32.mrf.mxu0
      %642 = vmatprep.mubr.f32.mxu0 0.0
      %643 = vmatmul.mubr.f32.gmra.mxu0 %v457
      %v644 = vpop.f32.mrf.mxu0
      %v645 = vadd.f32 %v420, %v644
      %v646 = vpop.f32.mrf.mxu0
      %647 = vmatprep.mubr.f32.mxu0 0.0
      %648 = vmatmul.mubr.f32.gmra.mxu0 %v460
      %v649 = vpop.f32.mrf.mxu0
      %v650 = vadd.f32 %v420, %v649
      %v651 = vpop.f32.mrf.mxu0
      %652 = vmatprep.mubr.f32.mxu0 0.0
      %653 = vmatmul.mubr.f32.gmra.mxu0 %v463
      %v654 = vpop.f32.mrf.mxu0
      %v655 = vadd.f32 %v420, %v654
      %v656 = vpop.f32.mrf.mxu0
      %657 = vmatprep.mubr.f32.mxu0 0.0
      %658 = vmatmul.mubr.f32.gmra.mxu0 %v466
      %v659 = vpop.f32.mrf.mxu0
      %v660 = vadd.f32 %v420, %v659
      %v661 = vpop.f32.mrf.mxu0
      %662 = vmatprep.mubr.f32.mxu0 0.0
      %663 = vmatmul.mubr.f32.gmra.mxu0 %v469
      %v664 = vpop.f32.mrf.mxu0
      %v665 = vadd.f32 %v420, %v664
      %v666 = vpop.f32.mrf.mxu0
      %667 = vmatprep.mubr.f32.mxu0 0.0
      %668 = vmatmul.mubr.f32.gmra.mxu0 %v472
      %v669 = vpop.f32.mrf.mxu0
      %v670 = vadd.f32 %v420, %v669
      %v671 = vpop.f32.mrf.mxu0
      %672 = vmatprep.mubr.f32.mxu0 0.0
      %673 = vmatmul.mubr.f32.gmra.mxu0 %v475
      %v674 = vpop.f32.mrf.mxu0
      %v675 = vadd.f32 %v420, %v674
      %v676 = vpop.f32.mrf.mxu0
      %677 = vmatprep.mubr.f32.mxu0 0.0
      %678 = vmatmul.mubr.f32.gmra.mxu0 %v478
      %v679 = vpop.f32.mrf.mxu0
      %v680 = vadd.f32 %v420, %v679
      %v681 = vpop.f32.mrf.mxu0
      %682 = vmatprep.mubr.f32.mxu0 0.0
      %683 = vmatmul.mubr.f32.gmra.mxu0 %v481
      %v684 = vpop.f32.mrf.mxu0
      %v685 = vadd.f32 %v420, %v684
      %v686 = vpop.f32.mrf.mxu0
      %687 = vmatprep.mubr.f32.mxu0 0.0
      %688 = vmatmul.mubr.f32.gmra.mxu0 %v484
      %v689 = vpop.f32.mrf.mxu0
      %v690 = vadd.f32 %v420, %v689
      %v691 = vpop.f32.mrf.mxu0
      %692 = vmatprep.mubr.f32.mxu0 0.0
      %693 = vmatmul.mubr.f32.gmra.mxu0 %v487
      %v694 = vpop.f32.mrf.mxu0
      %v695 = vadd.f32 %v420, %v694
      %v696 = vpop.f32.mrf.mxu0
      %697 = vmatprep.mubr.f32.mxu0 0.0
      %698 = vmatmul.mubr.f32.gmra.mxu0 %v490
      %v699 = vpop.f32.mrf.mxu0
      %v700 = vadd.f32 %v420, %v699
      %v701 = vpop.f32.mrf.mxu0
      %702 = vmatprep.mubr.f32.mxu0 0.0
      %703 = vmatmul.mubr.f32.gmra.mxu0 %v493
      %v704 = vpop.f32.mrf.mxu0
      %v705 = vadd.f32 %v420, %v704
      %v706 = vpop.f32.mrf.mxu0
      %707 = vmatprep.mubr.f32.mxu0 0.0
      %708 = vmatmul.mubr.f32.gmra.mxu0 %v496
      %v709 = vpop.f32.mrf.mxu0
      %v710 = vadd.f32 %v420, %v709
      %v711 = vpop.f32.mrf.mxu0
      %712 = vmatprep.mubr.f32.mxu0 0.0
      %713 = vmatmul.mubr.f32.gmra.mxu0 %v499
      %v714 = vpop.f32.mrf.mxu0
      %v715 = vadd.f32 %v420, %v714
      %v716 = vpop.f32.mrf.mxu0
      %717 = vmatprep.mubr.f32.mxu0 0.0
      %718 = vmatmul.mubr.f32.gmra.mxu0 %v502
      %v719 = vpop.f32.mrf.mxu0
      %v720 = vadd.f32 %v420, %v719
      %v721 = vpop.f32.mrf.mxu0
      %722 = vmatprep.mubr.f32.mxu0 0.0
      %723 = vmatmul.mubr.f32.gmra.mxu0 %v505
      %v724 = vpop.f32.mrf.mxu0
      %v725 = vadd.f32 %v420, %v724
      %v726 = vpop.f32.mrf.mxu0
      %727 = vmatprep.mubr.f32.mxu0 0.0
      %728 = vmatmul.mubr.f32.gmra.mxu0 %v508
      %v729 = vpop.f32.mrf.mxu0
      %v730 = vadd.f32 %v420, %v729
      %v731 = vpop.f32.mrf.mxu0
      %732 = vmatprep.mubr.f32.mxu0 0.0
      %733 = vmatmul.mubr.f32.gmra.mxu0 %v511
      %v734 = vpop.f32.mrf.mxu0
      %v735 = vadd.f32 %v420, %v734
      %v736 = vpop.f32.mrf.mxu0
      %737 = vmatprep.mubr.f32.mxu0 0.0
      %738 = vmatmul.mubr.f32.gmra.mxu0 %v514
      %v739 = vpop.f32.mrf.mxu0
      %v740 = vadd.f32 %v420, %v739
      %v741 = vpop.f32.mrf.mxu0
      %742 = vmatprep.mubr.f32.mxu0 0.0
      %743 = vmatmul.mubr.f32.gmra.mxu0 %v517
      %v744 = vpop.f32.mrf.mxu0
      %v745 = vadd.f32 %v420, %v744
      %v746 = vpop.f32.mrf.mxu0
      %747 = vdwg.mxu0
      %v748 = vadd.f32 %v350, %v590
      %v749 = vadd.f32 %v351, %v595
      %v750 = vadd.f32 %v352, %v600
      %v751 = vadd.f32 %v353, %v605
      %v752 = vadd.f32 %v354, %v610
      %v753 = vadd.f32 %v355, %v615
      %v754 = vadd.f32 %v356, %v620
      %v755 = vadd.f32 %v357, %v625
      %v756 = vadd.f32 %v358, %v630
      %v757 = vadd.f32 %v359, %v635
      %v758 = vadd.f32 %v360, %v640
      %v759 = vadd.f32 %v361, %v645
      %v760 = vadd.f32 %v362, %v650
      %v761 = vadd.f32 %v363, %v655
      %v762 = vadd.f32 %v364, %v660
      %v763 = vadd.f32 %v365, %v665
      %v764 = vadd.f32 %v366, %v670
      %v765 = vadd.f32 %v367, %v675
      %v766 = vadd.f32 %v368, %v680
      %v767 = vadd.f32 %v369, %v685
      %v768 = vadd.f32 %v370, %v690
      %v769 = vadd.f32 %v371, %v695
      %v770 = vadd.f32 %v372, %v700
      %v771 = vadd.f32 %v373, %v705
      %v772 = vadd.f32 %v374, %v710
      %v773 = vadd.f32 %v375, %v715
      %v774 = vadd.f32 %v376, %v720
      %v775 = vadd.f32 %v377, %v725
      %v776 = vadd.f32 %v378, %v730
      %v777 = vadd.f32 %v379, %v735
      %v778 = vadd.f32 %v380, %v740
      %v779 = vadd.f32 %v381, %v745
      %v780 = vmax.f32 %v748, 0.0
      %v781 = vmax.f32 %v749, 0.0
      %v782 = vmax.f32 %v750, 0.0
      %v783 = vmax.f32 %v751, 0.0
      %v784 = vmax.f32 %v752, 0.0
      %v785 = vmax.f32 %v753, 0.0
      %v786 = vmax.f32 %v754, 0.0
      %v787 = vmax.f32 %v755, 0.0
      %v788 = vmax.f32 %v756, 0.0
      %v789 = vmax.f32 %v757, 0.0
      %v790 = vmax.f32 %v758, 0.0
      %v791 = vmax.f32 %v759, 0.0
      %v792 = vmax.f32 %v760, 0.0
      %v793 = vmax.f32 %v761, 0.0
      %v794 = vmax.f32 %v762, 0.0
      %v795 = vmax.f32 %v763, 0.0
      %v796 = vmax.f32 %v764, 0.0
      %v797 = vmax.f32 %v765, 0.0
      %v798 = vmax.f32 %v766, 0.0
      %v799 = vmax.f32 %v767, 0.0
      %v800 = vmax.f32 %v768, 0.0
      %v801 = vmax.f32 %v769, 0.0
      %v802 = vmax.f32 %v770, 0.0
      %v803 = vmax.f32 %v771, 0.0
      %v804 = vmax.f32 %v772, 0.0
      %v805 = vmax.f32 %v773, 0.0
      %v806 = vmax.f32 %v774, 0.0
      %v807 = vmax.f32 %v775, 0.0
      %v808 = vmax.f32 %v776, 0.0
      %v809 = vmax.f32 %v777, 0.0
      %v810 = vmax.f32 %v778, 0.0
      %v811 = vmax.f32 %v779, 0.0
      %812 = vst [vmem:[%s271] sm:$0xff] %v780
      %813 = vst [vmem:[%s271 + $0x8] sm:$0xff] %v781
      %814 = vst [vmem:[%s271 + $0x10] sm:$0xff] %v782
      %815 = vst [vmem:[%s271 + $0x18] sm:$0xff] %v783
      %816 = vst [vmem:[%s271 + $0x20] sm:$0xff] %v784
      %817 = vst [vmem:[%s271 + $0x28] sm:$0xff] %v785
      %818 = vst [vmem:[%s271 + $0x30] sm:$0xff] %v786
      %819 = vst [vmem:[%s271 + $0x38] sm:$0xff] %v787
      %820 = vst [vmem:[%s271 + $0x40] sm:$0xff] %v788
      %821 = vst [vmem:[%s271 + $0x48] sm:$0xff] %v789
      %822 = vst [vmem:[%s271 + $0x50] sm:$0xff] %v790
      %823 = vst [vmem:[%s271 + $0x58] sm:$0xff] %v791
      %824 = vst [vmem:[%s271 + $0x60] sm:$0xff] %v792
      %825 = vst [vmem:[%s271 + $0x68] sm:$0xff] %v793
      %826 = vst [vmem:[%s271 + $0x70] sm:$0xff] %v794
      %827 = vst [vmem:[%s271 + $0x78] sm:$0xff] %v795
      %828 = vst [vmem:[%s271 + $0x80] sm:$0xff] %v796
      %829 = vst [vmem:[%s271 + $0x88] sm:$0xff] %v797
      %830 = vst [vmem:[%s271 + $0x90] sm:$0xff] %v798
      %831 = vst [vmem:[%s271 + $0x98] sm:$0xff] %v799
      %832 = vst [vmem:[%s271 + $0xa0] sm:$0xff] %v800
      %833 = vst [vmem:[%s271 + $0xa8] sm:$0xff] %v801
      %834 = vst [vmem:[%s271 + $0xb0] sm:$0xff] %v802
      %835 = vst [vmem:[%s271 + $0xb8] sm:$0xff] %v803
      %836 = vst [vmem:[%s271 + $0xc0] sm:$0xff] %v804
      %837 = vst [vmem:[%s271 + $0xc8] sm:$0xff] %v805
      %838 = vst [vmem:[%s271 + $0xd0] sm:$0xff] %v806
      %839 = vst [vmem:[%s271 + $0xd8] sm:$0xff] %v807
      %840 = vst [vmem:[%s271 + $0xe0] sm:$0xff] %v808
      %841 = vst [vmem:[%s271 + $0xe8] sm:$0xff] %v809
      %842 = vst [vmem:[%s271 + $0xf0] sm:$0xff] %v810
      %843 = vst [vmem:[%s271 + $0xf8] sm:$0xff] %v811
      %p844 = scmp.lt.s32.totalorder %s17, 1
      %s845 = scalar_select %p844, %s17, 1
      %s846 = smul.addr %s845, 32
      %s847 = smul.addr %s846, 8
      %s848 = scalar_lea.vmem %s6, %s847
      // Predicated region
      $region45: #{resblock_forward.5} parent=43 // pred_check
        %p849 = pneg %p171
      $region46: #{resblock_forward.5} parent=43 // pred_check_branch
        %851 = sbr.rel (%p849) target = $region48
      $region47: #{resblock_forward.5} parent=43 // pred_region
        _
      $region48: #{resblock_forward.5} parent=43 // pred_fallthru
        _
    $region44: #{resblock_forward.5} parent=5 // pred_fallthru
      _
    %p852 = scmp.le.s32.totalorder 2, %s12
    // Predicated region
    $region49: #{resblock_forward.5} parent=5 // pred_check
      %p853 = pneg %p852
    $region50: #{resblock_forward.5} parent=5 // pred_check_branch
      %855 = sbr.rel (%p853) target = $region52
    $region51: #{resblock_forward.5} parent=5 // pred_region
      %s856 = ssub.s32 %s12, 2
      // Predicated region
      $region53: #{resblock_forward.5} parent=51 // pred_check
        %p857 = pneg %p177
      $region54: #{resblock_forward.5} parent=51 // pred_check_branch
        %859 = sbr.rel (%p857) target = $region56
      $region55: #{resblock_forward.5} parent=51 // pred_region
        %p860 = scmp.lt.s32.totalorder %s18, 1
        %s861 = scalar_select %p860, %s18, 1
        %s862 = smul.addr %s861, 32
        %s863 = smul.addr %s862, 8
        %s864 = scalar_lea.vmem %s6, %s863
      $region56: #{resblock_forward.5} parent=51 // pred_fallthru
        _
    $region52: #{resblock_forward.5} parent=5 // pred_fallthru
      _
  $region6: #{resblock_forward.5} parent=0 // loop_footer
    %s16 = sadd.s32 1, %s12
  $region7: #{resblock_forward.5} parent=0 // loop_footer_branch
    %11 = sbr.rel target = $region3
  $region8: #{resblock_forward.5} parent=0 // loop_exit
    _

// kernel: resblock_forward.3
$region0: #{resblock_forward.3}
  #allocation0 [shape = 'u32[]', space=smem, size = 0x4, offset = 0x4, fixed_abs, tag = 'smem constant byte address 0x4 - core index']
  #allocation1 [shape = 'u32[144,128]{1,0:T(1,128)}', space=vmem, size = 0x12000, scoped, tag = 'internal scratch']
  %s0 = inlined_call_operand.vmem [shape: f32[2,18,18,4], index: 0, kind: input, shape index: {}]
  %s1 = inlined_call_operand.vmem [shape: f32[9,4,128], index: 1, kind: input, shape index: {}]
  %s2 = inlined_call_operand.vmem [shape: f32[2,16,16,128], index: 2, kind: output, shape index: {0}]
  %s3 = inlined_call_operand.vmem [shape: f32[2,1,128], index: 3, kind: output, shape index: {1}]
  %s4 = inlined_call_operand.vmem [shape: f32[2,1,128], index: 4, kind: output, shape index: {2}]
  %5 = xla_tuple %s2, %s3, %s4
  %s6 = sld [smem:[#allocation0]]
  $region57: #{resblock_forward.3} parent=0
    _
  %s8 = ssub.s32 1, %s6
  %s9 = scalar_select 0, %s8, %s6
  loop: start=0, step=1, limit=4
  $region2: #{resblock_forward.3} parent=0 // loop_pre_header
    _
  $region3: #{resblock_forward.3} parent=0 // loop_header
    %s11 = sphi 0, %s15
    %p12 = scmp.ge.s32.totalorder %s11, 4
    %s21 = sphi 0, %s23
    %s24 = sphi 0, %s21
    %s25 = sphi 0, %s24
    %s41 = sphi 0, %s25
    %s45 = sphi 0, %s45
    %s47 = sphi 0, %s45
    %s48 = sphi 0, %s47
    %s62 = sphi 0, %s48
    %s68 = sphi 0, %s70
    %s71 = sphi 0, %s68
    %s72 = sphi 0, %s71
    %s88 = sphi 0, %s72
    %s94 = sphi 0, %s96
    %s97 = sphi 0, %s94
    %s98 = sphi 0, %s97
    %s114 = sphi 0, %s98
    %s120 = sphi 0, %s122
    %s123 = sphi 0, %s120
    %s124 = sphi 0, %s123
    %s140 = sphi 0, %s124
  $region4: #{resblock_forward.3} parent=0 // loop_header_branch
    %14 = sbr.rel (%p12) target = $region8
  $region5: #{resblock_forward.3} parent=0 // loop_body
    %s16 = ssub.s32 %s11, 1
    %s17 = ssub.s32 %s11, 2
    %s18 = sadd.s32 %s11, 1
    %s19 = ssub.s32 %s11, %s18
    %p20 = scmp.eq.s32.totalorder %s19, 0
    %s22 = sadd.s32 %s21, 1
    %s23 = scalar_select %p20, %s21, %s22
    %p26 = pneg %p20
    %p27 = scmp.eq.s32.totalorder %s11, 1
    %p28 = por %p26, %p27
    %p29 = scmp.ne.s32.totalorder %s21, %s24
    %p30 = scmp.eq.s32.totalorder %s11, 0
    %p31 = por %p29, %p30
    %p32 = scmp.ne.s32.totalorder %s21, %s24
    %p33 = scmp.eq.s32.totalorder %s16, 1
    %p34 = por %p32, %p33
    %p35 = scmp.ne.s32.totalorder %s24, %s25
    %p36 = scmp.eq.s32.totalorder %s16, 0
    %p37 = por %p35, %p36
    %p38 = scmp.ne.s32.totalorder %s24, %s25
    %p39 = scmp.eq.s32.totalorder %s17, 1
    %p40 = por %p38, %p39
    %p42 = scmp.ne.s32.totalorder %s25, %s41
    %p43 = scmp.eq.s32.totalorder %s17, 0
    %p44 = por %p42, %p43
    %s46 = sadd.s32 %s45, 1
    %p49 = scmp.eq.s32.totalorder %s11, 1
    %p50 = scmp.ne.s32.totalorder %s45, %s47
    %p51 = scmp.eq.s32.totalorder %s11, 0
    %p52 = por %p50, %p51
    %p53 = scmp.ne.s32.totalorder %s45, %s47
    %p54 = scmp.eq.s32.totalorder %s16, 1
    %p55 = por %p53, %p54
    %p56 = scmp.ne.s32.totalorder %s47, %s48
    %p57 = scmp.eq.s32.totalorder %s16, 0
    %p58 = por %p56, %p57
    %p59 = scmp.ne.s32.totalorder %s47, %s48
    %p60 = scmp.eq.s32.totalorder %s17, 1
    %p61 = por %p59, %p60
    %p63 = scmp.ne.s32.totalorder %s48, %s62
    %p64 = scmp.eq.s32.totalorder %s17, 0
    %p65 = por %p63, %p64
    %s66 = ssub.s32 %s11, %s18
    %p67 = scmp.eq.s32.totalorder %s66, 0
    %s69 = sadd.s32 %s68, 1
    %s70 = scalar_select %p67, %s68, %s69
    %p73 = pneg %p67
    %p74 = scmp.eq.s32.totalorder %s11, 1
    %p75 = por %p73, %p74
    %p76 = scmp.ne.s32.totalorder %s68, %s71
    %p77 = scmp.eq.s32.totalorder %s11, 0
    %p78 = por %p76, %p77
    %p79 = scmp.ne.s32.totalorder %s68, %s71
    %p80 = scmp.eq.s32.totalorder %s16, 1
    %p81 = por %p79, %p80
    %p82 = scmp.ne.s32.totalorder %s71, %s72
    %p83 = scmp.eq.s32.totalorder %s16, 0
    %p84 = por %p82, %p83
    %p85 = scmp.ne.s32.totalorder %s71, %s72
    %p86 = scmp.eq.s32.totalorder %s17, 1
    %p87 = por %p85, %p86
    %p89 = scmp.ne.s32.totalorder %s72, %s88
    %p90 = scmp.eq.s32.totalorder %s17, 0
    %p91 = por %p89, %p90
    %s92 = ssub.s32 %s11, %s18
    %p93 = scmp.eq.s32.totalorder %s92, 0
    %s95 = sadd.s32 %s94, 1
    %s96 = scalar_select %p93, %s94, %s95
    %p99 = pneg %p93
    %p100 = scmp.eq.s32.totalorder %s11, 1
    %p101 = por %p99, %p100
    %p102 = scmp.ne.s32.totalorder %s94, %s97
    %p103 = scmp.eq.s32.totalorder %s11, 0
    %p104 = por %p102, %p103
    %p105 = scmp.ne.s32.totalorder %s94, %s97
    %p106 = scmp.eq.s32.totalorder %s16, 1
    %p107 = por %p105, %p106
    %p108 = scmp.ne.s32.totalorder %s97, %s98
    %p109 = scmp.eq.s32.totalorder %s16, 0
    %p110 = por %p108, %p109
    %p111 = scmp.ne.s32.totalorder %s97, %s98
    %p112 = scmp.eq.s32.totalorder %s17, 1
    %p113 = por %p111, %p112
    %p115 = scmp.ne.s32.totalorder %s98, %s114
    %p116 = scmp.eq.s32.totalorder %s17, 0
    %p117 = por %p115, %p116
    %s118 = ssub.s32 %s11, %s18
    %p119 = scmp.eq.s32.totalorder %s118, 0
    %s121 = sadd.s32 %s120, 1
    %s122 = scalar_select %p119, %s120, %s121
    %p125 = pneg %p119
    %p126 = scmp.eq.s32.totalorder %s11, 1
    %p127 = por %p125, %p126
    %p128 = scmp.ne.s32.totalorder %s120, %s123
    %p129 = scmp.eq.s32.totalorder %s11, 0
    %p130 = por %p128, %p129
    %p131 = scmp.ne.s32.totalorder %s120, %s123
    %p132 = scmp.eq.s32.totalorder %s16, 1
    %p133 = por %p131, %p132
    %p134 = scmp.ne.s32.totalorder %s123, %s124
    %p135 = scmp.eq.s32.totalorder %s16, 0
    %p136 = por %p134, %p135
    %p137 = scmp.ne.s32.totalorder %s123, %s124
    %p138 = scmp.eq.s32.totalorder %s17, 1
    %p139 = por %p137, %p138
    %p141 = scmp.ne.s32.totalorder %s124, %s140
    %p142 = scmp.eq.s32.totalorder %s17, 0
    %p143 = por %p141, %p142
    %p144 = scmp.le.s32.totalorder 1, %s11
    %p145 = scmp.lt.s32.totalorder %s11, 3
    %p146 = pnand %p144, %p145
    %p147 = pneg %p146
    // Predicated region
    $region9: #{resblock_forward.3} parent=5 // pred_check
      _
    $region10: #{resblock_forward.3} parent=5 // pred_check_branch
      %149 = sbr.rel (%p146) target = $region12
    $region11: #{resblock_forward.3} parent=5 // pred_region
      %s150 = ssub.s32 %s11, 1
      // Predicated region
      $region13: #{resblock_forward.3} parent=11 // pred_check
        %p151 = pneg %p58
      $region14: #{resblock_forward.3} parent=11 // pred_check_branch
        %153 = sbr.rel (%p151) target = $region16
      $region15: #{resblock_forward.3} parent=11 // pred_region
        _
      $region16: #{resblock_forward.3} parent=11 // pred_fallthru
        _
    $region12: #{resblock_forward.3} parent=5 // pred_fallthru
      _
    %p154 = scmp.lt.s32.totalorder %s11, 2
    // Predicated region
    $region17: #{resblock_forward.3} parent=5 // pred_check
      %p155 = pneg %p154
    $region18: #{resblock_forward.3} parent=5 // pred_check_branch
      %157 = sbr.rel (%p155) target = $region20
    $region19: #{resblock_forward.3} parent=5 // pred_region
      // Predicated region
      $region21: #{resblock_forward.3} parent=19 // pred_check
        %p158 = pneg %p31
      $region22: #{resblock_forward.3} parent=19 // pred_check_branch
        %160 = sbr.rel (%p158) target = $region24
      $region23: #{resblock_forward.3} parent=19 // pred_region
        %p161 = scmp.lt.s32.totalorder %s11, 1
        %s162 = scalar_select %p161, %s11, 1
        %s163 = smul.addr %s162, 54
        %s164 = smul.addr %s163, 8
        %s165 = scalar_lea.vmem %s0, %s164
      $region24: #{resblock_forward.3} parent=19 // pred_fallthru
        _
    $region20: #{resblock_forward.3} parent=5 // pred_fallthru
      _
    %p166 = scmp.le.s32.totalorder 1, %s11
    %p167 = scmp.lt.s32.totalorder %s11, 3
    %p168 = pnand %p166, %p167
    %p169 = pneg %p168
    // Predicated region
    $region25: #{resblock_forward.3} parent=5 // pred_check
      _
    $region26: #{resblock_forward.3} parent=5 // pred_check_branch
      %171 = sbr.rel (%p168) target = $region28
    $region27: #{resblock_forward.3} parent=5 // pred_region
      %s172 = ssub.s32 %s11, 1
      %p173 = scmp.lt.s32.totalorder %s16, 1
      %s174 = scalar_select %p173, %s16, 1
      %s175 = smul.addr %s174, 54
      %s176 = smul.addr %s175, 8
      %s177 = scalar_lea.vmem %s0, %s176
      %p178 = pneg %p37
      %p179 = pneg %p34
      %p180 = pneg %p58
      %p181 = pneg %p55
      %p182 = pneg %p84
      %p183 = pneg %p81
      %p184 = scmp.lt.s32.totalorder %s16, 1
      %s185 = scalar_select %p184, %s16, 1
      %s186 = smul.addr %s185, 32
      %s187 = smul.addr %s186, 8
      %s188 = scalar_lea.vmem %s2, %s187
      %p189 = pneg %p110
      %p190 = pneg %p107
      %p191 = scmp.lt.s32.totalorder %s16, 1
      %s192 = scalar_select %p191, %s16, 1
      %s193 = scalar_lea.vmem %s3, %s192
      %p194 = pneg %p136
      %p195 = pneg %p133
      %p196 = scmp.lt.s32.totalorder %s16, 1
      %s197 = scalar_select %p196, %s16, 1
      %s198 = scalar_lea.vmem %s4, %s197
      %p199 = scmp.lt.s32.totalorder %s16, 1
      %s200 = scalar_select %p199, %s16, 1
      %s201 = smul.addr %s200, 54
      %s202 = smul.addr %s201, 8
      %s203 = scalar_lea.vmem %s0, %s202
      %p204 = scmp.lt.s32.totalorder %s16, 1
      %s205 = scalar_select %p204, %s16, 1
      %s206 = smul.addr %s205, 32
      %s207 = smul.addr %s206, 8
      %s208 = scalar_lea.vmem %s2, %s207
      %p209 = scmp.lt.s32.totalorder %s16, 1
      %s210 = scalar_select %p209, %s16, 1
      %s211 = scalar_lea.vmem %s3, %s210
      %p212 = scmp.lt.s32.totalorder %s16, 1
      %s213 = scalar_select %p212, %s16, 1
      %s214 = scalar_lea.vmem %s4, %s213
      %v215 = vld [vmem:[%s203] sm:$0xff]
      %v216 = vld [vmem:[%s203 + $0x8] sm:$0xff]
      %v217 = vld [vmem:[%s203 + $0x18] sm:$0xff]
      %v218 = vld [vmem:[%s203 + $0x20] sm:$0xff]
      %v219 = vld [vmem:[%s203 + $0x30] sm:$0xff]
      %v220 = vld [vmem:[%s203 + $0x38] sm:$0xff]
      %v221 = vld [vmem:[%s203 + $0x48] sm:$0xff]
      %v222 = vld [vmem:[%s203 + $0x50] sm:$0xff]
      %v223 = vld [vmem:[%s203 + $0x60] sm:$0xff]
      %v224 = vld [vmem:[%s203 + $0x68] sm:$0xff]
      %v225 = vld [vmem:[%s203 + $0x78] sm:$0xff]
      %v226 = vld [vmem:[%s203 + $0x80] sm:$0xff]
      %v227 = vld [vmem:[%s203 + $0x90] sm:$0xff]
      %v228 = vld [vmem:[%s203 + $0x98] sm:$0xff]
      %v229 = vld [vmem:[%s203 + $0xa8] sm:$0xff]
      %v230 = vld [vmem:[%s203 + $0xb0] sm:$0xff]
      %v231 = vld [vmem:[%s203 + $0xc0] sm:$0xff]
      %v232 = vld [vmem:[%s203 + $0xc8] sm:$0xff]
      %v233 = vld [vmem:[%s203 + $0xd8] sm:$0xff]
      %v234 = vld [vmem:[%s203 + $0xe0] sm:$0xff]
      %v235 = vld [vmem:[%s203 + $0xf0] sm:$0xff]
      %v236 = vld [vmem:[%s203 + $0xf8] sm:$0xff]
      %v237 = vld [vmem:[%s203 + $0x108] sm:$0xff]
      %v238 = vld [vmem:[%s203 + $0x110] sm:$0xff]
      %v239 = vld [vmem:[%s203 + $0x120] sm:$0xff]
      %v240 = vld [vmem:[%s203 + $0x128] sm:$0xff]
      %v241 = vld [vmem:[%s203 + $0x138] sm:$0xff]
      %v242 = vld [vmem:[%s203 + $0x140] sm:$0xff]
      %v243 = vld [vmem:[%s203 + $0x150] sm:$0xff]
      %v244 = vld [vmem:[%s203 + $0x158] sm:$0xff]
      %v245 = vld [vmem:[%s203 + $0x168] sm:$0xff]
      %v246 = vld [vmem:[%s203 + $0x170] sm:$0xff]
      %v247 = vld [vmem:[%s1] sm:$0xf]
      %v248 = vld [vmem:[%s203 + $0x1] sm:$0xff]
      %v249 = vld [vmem:[%s203 + $0x9] sm:$0xff]
      %v250 = vld [vmem:[%s203 + $0x19] sm:$0xff]
      %v251 = vld [vmem:[%s203 + $0x21] sm:$0xff]
      %v252 = vld [vmem:[%s203 + $0x31] sm:$0xff]
      %v253 = vld [vmem:[%s203 + $0x39] sm:$0xff]
      %v254 = vld [vmem:[%s203 + $0x49] sm:$0xff]
      %v255 = vld [vmem:[%s203 + $0x51] sm:$0xff]
      %v256 = vld [vmem:[%s203 + $0x61] sm:$0xff]
      %v257 = vld [vmem:[%s203 + $0x69] sm:$0xff]
      %v258 = vld [vmem:[%s203 + $0x79] sm:$0xff]
      %v259 = vld [vmem:[%s203 + $0x81] sm:$0xff]
      %v260 = vld [vmem:[%s203 + $0x91] sm:$0xff]
      %v261 = vld [vmem:[%s203 + $0x99] sm:$0xff]
      %v262 = vld [vmem:[%s203 + $0xa9] sm:$0xff]
      %v263 = vld [vmem:[%s203 + $0xb1] sm:$0xff]
      %v264 = vld [vmem:[%s203 + $0xc1] sm:$0xff]
      %v265 = vld [vmem:[%s203 + $0xc9] sm:$0xff]
      %v266 = vld [vmem:[%s203 + $0xd9] sm:$0xff]
      %v267 = vld [vmem:[%s203 + $0xe1] sm:$0xff]
      %v268 = vld [vmem:[%s203 + $0xf1] sm:$0xff]
      %v269 = vld [vmem:[%s203 + $0xf9] sm:$0xff]
      %v270 = vld [vmem:[%s203 + $0x109] sm:$0xff]
      %v271 = vld [vmem:[%s203 + $0x111] sm:$0xff]
      %v272 = vld [vmem:[%s203 + $0x121] sm:$0xff]
      %v273 = vld [vmem:[%s203 + $0x129] sm:$0xff]
      %v274 = vld [vmem:[%s203 + $0x139] sm:$0xff]
      %v275 = vld [vmem:[%s203 + $0x141] sm:$0xff]
      %v276 = vld [vmem:[%s203 + $0x151] sm:$0xff]
      %v277 = vld [vmem:[%s203 + $0x159] sm:$0xff]
      %v278 = vld [vmem:[%s203 + $0x169] sm:$0xff]
      %v279 = vld [vmem:[%s203 + $0x171] sm:$0xff]
      %s280 = scalar_lea.vmem %s1, 4
      %v281 = vld [vmem:[%s280] sm:$0xf]
      %vm282 = vcmask 31744
      %v284 = vsel %vm282, %v248, 0
      %v287 = vsel %vm282, %v249, 0
      %v290 = vsel %vm282, %v250, 0
      %v293 = vsel %vm282, %v251, 0
      %v296 = vsel %vm282, %v252, 0
      %v299 = vsel %vm282, %v253, 0
      %v302 = vsel %vm282, %v254, 0
      %v305 = vsel %vm282, %v255, 0
      %v308 = vsel %vm282, %v256, 0
      %v311 = vsel %vm282, %v257, 0
      %v314 = vsel %vm282, %v258, 0
      %v317 = vsel %vm282, %v259, 0
      %v320 = vsel %vm282, %v260, 0
      %v323 = vsel %vm282, %v261, 0
      %v326 = vsel %vm282, %v262, 0
      %v329 = vsel %vm282, %v263, 0
      %v332 = vsel %vm282, %v264, 0
      %v335 = vsel %vm282, %v265, 0
      %v338 = vsel %vm282, %v266, 0
      %v341 = vsel %vm282, %v267, 0
      %v344 = vsel %vm282, %v268, 0
      %v347 = vsel %vm282, %v269, 0
      %v350 = vsel %vm282, %v270, 0
      %v353 = vsel %vm282, %v271, 0
      %v356 = vsel %vm282, %v272, 0
      %v359 = vsel %vm282, %v273, 0
      %v362 = vsel %vm282, %v274, 0
      %v365 = vsel %vm282, %v275, 0
      %v368 = vsel %vm282, %v276, 0
      %v371 = vsel %vm282, %v277, 0
      %v374 = vsel %vm282, %v278, 0
      %v377 = vsel %vm282, %v279, 0
      %vm379 = vcmask 1043456
      %v381 = vsel %vm379, %v281, 0
      %383 = vmatprep.subr.mxu0 0.0
      %384 = vmatpush1.msra.mxu0 0.0
      %385 = vmatprep.subr.mxu0 0.0
      %386 = vmatpush1.msra.mxu0 0.0
      %387 = vmatprep.subr.mxu0 0.0
      %388 = vmatpush1.msra.mxu0 0.0
      %389 = vmatprep.subr.mxu0 0.0
      %390 = vmatpush1.msra.mxu0 0.0
      %391 = vmatprep.subr.mxu0 0.0
      %392 = vmatpush1.msra.mxu0 0.0
      %393 = vmatprep.subr.mxu0 0.0
      %394 = vmatpush1.msra.mxu0 0.0
      %395 = vmatprep.subr.mxu0 0.0
      %396 = vmatpush1.msra.mxu0 0.0
      %397 = vmatprep.subr.mxu0 0.0
      %398 = vmatpush1.msra.mxu0 0.0
      %399 = vmatprep.subr.mxu0 0.0
      %400 = vmatpush1.msra.mxu0 0.0
      %401 = vmatprep.subr.mxu0 0.0
      %402 = vmatpush1.msra.mxu0 0.0
      %403 = vmatprep.subr.mxu0 0.0
      %404 = vmatpush1.msra.mxu0 0.0
      %405 = vmatprep.subr.mxu0 0.0
      %406 = vmatpush1.msra.mxu0 0.0
      %407 = vmatprep.subr.mxu0 0.0
      %408 = vmatpush1.msra.mxu0 0.0
      %409 = vmatprep.subr.mxu0 0.0
      %410 = vmatpush1.msra.mxu0 0.0
      %411 = vmatprep.subr.mxu0 0.0
      %412 = vmatpush1.msra.mxu0 0.0
      %413 = vmatprep.subr.mxu0 0.0
      %414 = vmatpush1.msra.mxu0 %v381
      %415 = vmatprep.subr.mxu0 0.0
      %416 = vmatpush2.msra.mxu0 0.0
      %417 = vmatprep.subr.mxu0 0.0
      %418 = vmatpush2.msra.mxu0 0.0
      %419 = vmatprep.subr.mxu0 0.0
      %420 = vmatpush2.msra.mxu0 0.0
      %421 = vmatprep.subr.mxu0 0.0
      %422 = vmatpush2.msra.mxu0 0.0
      %423 = vmatprep.subr.mxu0 0.0
      %424 = vmatpush2.msra.mxu0 0.0
      %425 = vmatprep.subr.mxu0 0.0
      %426 = vmatpush2.msra.mxu0 0.0
      %427 = vmatprep.subr.mxu0 0.0
      %428 = vmatpush2.msra.mxu0 0.0
      %429 = vmatprep.subr.mxu0 0.0
      %430 = vmatpush2.msra.mxu0 0.0
      %431 = vmatprep.subr.mxu0 0.0
      %432 = vmatpush2.msra.mxu0 0.0
      %433 = vmatprep.subr.mxu0 0.0
      %434 = vmatpush2.msra.mxu0 0.0
      %435 = vmatprep.subr.mxu0 0.0
      %436 = vmatpush2.msra.mxu0 0.0
      %437 = vmatprep.subr.mxu0 0.0
      %438 = vmatpush2.msra.mxu0 0.0
      %439 = vmatprep.subr.mxu0 0.0
      %440 = vmatpush2.msra.mxu0 0.0
      %441 = vmatprep.subr.mxu0 0.0
      %442 = vmatpush2.msra.mxu0 0.0
      %443 = vmatprep.subr.mxu0 0.0
      %444 = vmatpush2.msra.mxu0 0.0
      %445 = vmatprep.subr.mxu0 0.0
      %446 = vmatpush2.msra.mxu0 0.0
      %447 = vmatprep.mubr.f32.mxu0 0.0
      %448 = vmatmul.mubr.f32.gmra.mxu0 %v284
      %v449 = vpop.f32.mrf.mxu0
      %v450 = vadd.f32 0.0, %v449
      %v451 = vpop.f32.mrf.mxu0
      %452 = vmatprep.mubr.f32.mxu0 0.0
      %453 = vmatmul.mubr.f32.gmra.mxu0 %v287
      %v454 = vpop.f32.mrf.mxu0
      %v455 = vadd.f32 0.0, %v454
      %v456 = vpop.f32.mrf.mxu0
      %457 = vmatprep.mubr.f32.mxu0 0.0
      %458 = vmatmul.mubr.f32.gmra.mxu0 %v290
      %v459 = vpop.f32.mrf.mxu0
      %v460 = vadd.f32 0.0, %v459
      %v461 = vpop.f32.mrf.mxu0
      %462 = vmatprep.mubr.f32.mxu0 0.0
      %463 = vmatmul.mubr.f32.gmra.mxu0 %v293
      %v464 = vpop.f32.mrf.mxu0
      %v465 = vadd.f32 0.0, %v464
      %v466 = vpop.f32.mrf.mxu0
      %467 = vmatprep.mubr.f32.mxu0 0.0
      %468 = vmatmul.mubr.f32.gmra.mxu0 %v296
      %v469 = vpop.f32.mrf.mxu0
      %v470 = vadd.f32 0.0, %v469
      %v471 = vpop.f32.mrf.mxu0
      %472 = vmatprep.mubr.f32.mxu0 0.0
      %473 = vmatmul.mubr.f32.gmra.mxu0 %v299
      %v474 = vpop.f32.mrf.mxu0
      %v475 = vadd.f32 0.0, %v474
      %v476 = vpop.f32.mrf.mxu0
      %477 = vmatprep.mubr.f32.mxu0 0.0
      %478 = vmatmul.mubr.f32.gmra.mxu0 %v302
      %v479 = vpop.f32.mrf.mxu0
      %v480 = vadd.f32 0.0, %v479
      %v481 = vpop.f32.mrf.mxu0
      %482 = vmatprep.mubr.f32.mxu0 0.0
      %483 = vmatmul.mubr.f32.gmra.mxu0 %v305
      %v484 = vpop.f32.mrf.mxu0
      %v485 = vadd.f32 0.0, %v484
      %v486 = vpop.f32.mrf.mxu0
      %487 = vmatprep.mubr.f32.mxu0 0.0
      %488 = vmatmul.mubr.f32.gmra.mxu0 %v308
      %v489 = vpop.f32.mrf.mxu0
      %v490 = vadd.f32 0.0, %v489
      %v491 = vpop.f32.mrf.mxu0
      %492 = vmatprep.mubr.f32.mxu0 0.0
      %493 = vmatmul.mubr.f32.gmra.mxu0 %v311
      %v494 = vpop.f32.mrf.mxu0
      %v495 = vadd.f32 0.0, %v494
      %v496 = vpop.f32.mrf.mxu0
      %497 = vmatprep.mubr.f32.mxu0 0.0
      %498 = vmatmul.mubr.f32.gmra.mxu0 %v314
      %v499 = vpop.f32.mrf.mxu0
      %v500 = vadd.f32 0.0, %v499
      %v501 = vpop.f32.mrf.mxu0
      %502 = vmatprep.mubr.f32.mxu0 0.0
      %503 = vmatmul.mubr.f32.gmra.mxu0 %v317
      %v504 = vpop.f32.mrf.mxu0
      %v505 = vadd.f32 0.0, %v504
      %v506 = vpop.f32.mrf.mxu0
      %507 = vmatprep.mubr.f32.mxu0 0.0
      %508 = vmatmul.mubr.f32.gmra.mxu0 %v320
      %v509 = vpop.f32.mrf.mxu0
      %v510 = vadd.f32 0.0, %v509
      %v511 = vpop.f32.mrf.mxu0
      %512 = vmatprep.mubr.f32.mxu0 0.0
      %513 = vmatmul.mubr.f32.gmra.mxu0 %v323
      %v514 = vpop.f32.mrf.mxu0
      %v515 = vadd.f32 0.0, %v514
      %v516 = vpop.f32.mrf.mxu0
      %517 = vmatprep.mubr.f32.mxu0 0.0
      %518 = vmatmul.mubr.f32.gmra.mxu0 %v326
      %v519 = vpop.f32.mrf.mxu0
      %v520 = vadd.f32 0.0, %v519
      %v521 = vpop.f32.mrf.mxu0
      %522 = vmatprep.mubr.f32.mxu0 0.0
      %523 = vmatmul.mubr.f32.gmra.mxu0 %v329
      %v524 = vpop.f32.mrf.mxu0
      %v525 = vadd.f32 0.0, %v524
      %v526 = vpop.f32.mrf.mxu0
      %527 = vmatprep.mubr.f32.mxu0 0.0
      %528 = vmatmul.mubr.f32.gmra.mxu0 %v332
      %v529 = vpop.f32.mrf.mxu0
      %v530 = vadd.f32 0.0, %v529
      %v531 = vpop.f32.mrf.mxu0
      %532 = vmatprep.mubr.f32.mxu0 0.0
      %533 = vmatmul.mubr.f32.gmra.mxu0 %v335
      %v534 = vpop.f32.mrf.mxu0
      %v535 = vadd.f32 0.0, %v534
      %v536 = vpop.f32.mrf.mxu0
      %537 = vmatprep.mubr.f32.mxu0 0.0
      %538 = vmatmul.mubr.f32.gmra.mxu0 %v338
      %v539 = vpop.f32.mrf.mxu0
      %v540 = vadd.f32 0.0, %v539
      %v541 = vpop.f32.mrf.mxu0
      %542 = vmatprep.mubr.f32.mxu0 0.0
      %543 = vmatmul.mubr.f32.gmra.mxu0 %v341
      %v544 = vpop.f32.mrf.mxu0
      %v545 = vadd.f32 0.0, %v544
      %v546 = vpop.f32.mrf.mxu0
      %547 = vmatprep.mubr.f32.mxu0 0.0
      %548 = vmatmul.mubr.f32.gmra.mxu0 %v344
      %v549 = vpop.f32.mrf.mxu0
      %v550 = vadd.f32 0.0, %v549
      %v551 = vpop.f32.mrf.mxu0
      %552 = vmatprep.mubr.f32.mxu0 0.0
      %553 = vmatmul.mubr.f32.gmra.mxu0 %v347
      %v554 = vpop.f32.mrf.mxu0
      %v555 = vadd.f32 0.0, %v554
      %v556 = vpop.f32.mrf.mxu0
      %557 = vmatprep.mubr.f32.mxu0 0.0
      %558 = vmatmul.mubr.f32.gmra.mxu0 %v350
      %v559 = vpop.f32.mrf.mxu0
      %v560 = vadd.f32 0.0, %v559
      %v561 = vpop.f32.mrf.mxu0
      %562 = vmatprep.mubr.f32.mxu0 0.0
      %563 = vmatmul.mubr.f32.gmra.mxu0 %v353
      %v564 = vpop.f32.mrf.mxu0
      %v565 = vadd.f32 0.0, %v564
      %v566 = vpop.f32.mrf.mxu0
      %567 = vmatprep.mubr.f32.mxu0 0.0
      %568 = vmatmul.mubr.f32.gmra.mxu0 %v356
      %v569 = vpop.f32.mrf.mxu0
      %v570 = vadd.f32 0.0, %v569
      %v571 = vpop.f32.mrf.mxu0
      %572 = vmatprep.mubr.f32.mxu0 0.0
      %573 = vmatmul.mubr.f32.gmra.mxu0 %v359
      %v574 = vpop.f32.mrf.mxu0
      %v575 = vadd.f32 0.0, %v574
      %v576 = vpop.f32.mrf.mxu0
      %577 = vmatprep.mubr.f32.mxu0 0.0
      %578 = vmatmul.mubr.f32.gmra.mxu0 %v362
      %v579 = vpop.f32.mrf.mxu0
      %v580 = vadd.f32 0.0, %v579
      %v581 = vpop.f32.mrf.mxu0
      %582 = vmatprep.mubr.f32.mxu0 0.0
      %583 = vmatmul.mubr.f32.gmra.mxu0 %v365
      %v584 = vpop.f32.mrf.mxu0
      %v585 = vadd.f32 0.0, %v584
      %v586 = vpop.f32.mrf.mxu0
      %587 = vmatprep.mubr.f32.mxu0 0.0
      %588 = vmatmul.mubr.f32.gmra.mxu0 %v368
      %v589 = vpop.f32.mrf.mxu0
      %v590 = vadd.f32 0.0, %v589
      %v591 = vpop.f32.mrf.mxu0
      %592 = vmatprep.mubr.f32.mxu0 0.0
      %593 = vmatmul.mubr.f32.gmra.mxu0 %v371
      %v594 = vpop.f32.mrf.mxu0
      %v595 = vadd.f32 0.0, %v594
      %v596 = vpop.f32.mrf.mxu0
      %597 = vmatprep.mubr.f32.mxu0 0.0
      %598 = vmatmul.mubr.f32.gmra.mxu0 %v374
      %v599 = vpop.f32.mrf.mxu0
      %v600 = vadd.f32 0.0, %v599
      %v601 = vpop.f32.mrf.mxu0
      %602 = vmatprep.mubr.f32.mxu0 0.0
      %603 = vmatmul.mubr.f32.gmra.mxu0 %v377
      %v604 = vpop.f32.mrf.mxu0
      %v605 = vadd.f32 0.0, %v604
      %v606 = vpop.f32.mrf.mxu0
      %607 = vdwg.mxu0
      %v609 = vsel %vm282, %v215, 0
      %v612 = vsel %vm282, %v216, 0
      %v615 = vsel %vm282, %v217, 0
      %v618 = vsel %vm282, %v218, 0
      %v621 = vsel %vm282, %v219, 0
      %v624 = vsel %vm282, %v220, 0
      %v627 = vsel %vm282, %v221, 0
      %v630 = vsel %vm282, %v222, 0
      %v633 = vsel %vm282, %v223, 0
      %v636 = vsel %vm282, %v224, 0
      %v639 = vsel %vm282, %v225, 0
      %v642 = vsel %vm282, %v226, 0
      %v645 = vsel %vm282, %v227, 0
      %v648 = vsel %vm282, %v228, 0
      %v651 = vsel %vm282, %v229, 0
      %v654 = vsel %vm282, %v230, 0
      %v657 = vsel %vm282, %v231, 0
      %v660 = vsel %vm282, %v232, 0
      %v663 = vsel %vm282, %v233, 0
      %v666 = vsel %vm282, %v234, 0
      %v669 = vsel %vm282, %v235, 0
      %v672 = vsel %vm282, %v236, 0
      %v675 = vsel %vm282, %v237, 0
      %v678 = vsel %vm282, %v238, 0
      %v681 = vsel %vm282, %v239, 0
      %v684 = vsel %vm282, %v240, 0
      %v687 = vsel %vm282, %v241, 0
      %v690 = vsel %vm282, %v242, 0
      %v693 = vsel %vm282, %v243, 0
      %v696 = vsel %vm282, %v244, 0
      %v699 = vsel %vm282, %v245, 0
      %v702 = vsel %vm282, %v246, 0
      %v705 = vsel %vm379, %v247, 0
      %707 = vmatprep.subr.mxu0 0.0
      %708 = vmatpush1.msra.mxu0 0.0
      %709 = vmatprep.subr.mxu0 0.0
      %710 = vmatpush1.msra.mxu0 0.0
      %711 = vmatprep.subr.mxu0 0.0
      %712 = vmatpush1.msra.mxu0 0.0
      %713 = vmatprep.subr.mxu0 0.0
      %714 = vmatpush1.msra.mxu0 0.0
      %715 = vmatprep.subr.mxu0 0.0
      %716 = vmatpush1.msra.mxu0 0.0
      %717 = vmatprep.subr.mxu0 0.0
      %718 = vmatpush1.msra.mxu0 0.0
      %719 = vmatprep.subr.mxu0 0.0
      %720 = vmatpush1.msra.mxu0 0.0
      %721 = vmatprep.subr.mxu0 0.0
      %722 = vmatpush1.msra.mxu0 0.0
      %723 = vmatprep.subr.mxu0 0.0
      %724 = vmatpush1.msra.mxu0 0.0
      %725 = vmatprep.subr.mxu0 0.0
      %726 = vmatpush1.msra.mxu0 0.0
      %727 = vmatprep.subr.mxu0 0.0
      %728 = vmatpush1.msra.mxu0 0.0
      %729 = vmatprep.subr.mxu0 0.0
      %730 = vmatpush1.msra.mxu0 0.0
      %731 = vmatprep.subr.mxu0 0.0
      %732 = vmatpush1.msra.mxu0 0.0
      %733 = vmatprep.subr.mxu0 0.0
      %734 = vmatpush1.msra.mxu0 0.0
      %735 = vmatprep.subr.mxu0 0.0
      %736 = vmatpush1.msra.mxu0 0.0
      %737 = vmatprep.subr.mxu0 0.0
      %738 = vmatpush1.msra.mxu0 %v705
      %739 = vmatprep.subr.mxu0 0.0
      %740 = vmatpush2.msra.mxu0 0.0
      %741 = vmatprep.subr.mxu0 0.0
      %742 = vmatpush2.msra.mxu0 0.0
      %743 = vmatprep.subr.mxu0 0.0
      %744 = vmatpush2.msra.mxu0 0.0
      %745 = vmatprep.subr.mxu0 0.0
      %746 = vmatpush2.msra.mxu0 0.0
      %747 = vmatprep.subr.mxu0 0.0
      %748 = vmatpush2.msra.mxu0 0.0
      %749 = vmatprep.subr.mxu0 0.0
      %750 = vmatpush2.msra.mxu0 0.0
      %751 = vmatprep.subr.mxu0 0.0
      %752 = vmatpush2.msra.mxu0 0.0
      %753 = vmatprep.subr.mxu0 0.0
      %754 = vmatpush2.msra.mxu0 0.0
      %755 = vmatprep.subr.mxu0 0.0
      %756 = vmatpush2.msra.mxu0 0.0
      %757 = vmatprep.subr.mxu0 0.0
      %758 = vmatpush2.msra.mxu0 0.0
      %759 = vmatprep.subr.mxu0 0.0
      %760 = vmatpush2.msra.mxu0 0.0
      %761 = vmatprep.subr.mxu0 0.0
      %762 = vmatpush2.msra.mxu0 0.0
      %763 = vmatprep.subr.mxu0 0.0
      %764 = vmatpush2.msra.mxu0 0.0
      %765 = vmatprep.subr.mxu0 0.0
      %766 = vmatpush2.msra.mxu0 0.0
      %767 = vmatprep.subr.mxu0 0.0
      %768 = vmatpush2.msra.mxu0 0.0
      %769 = vmatprep.subr.mxu0 0.0
      %770 = vmatpush2.msra.mxu0 0.0
      %771 = vmatprep.mubr.f32.mxu0 0.0
      %772 = vmatmul.mubr.f32.gmra.mxu0 %v609
      %v773 = vpop.f32.mrf.mxu0
      %v774 = vadd.f32 %v450, %v773
      %v775 = vpop.f32.mrf.mxu0
      %776 = vmatprep.mubr.f32.mxu0 0.0
      %777 = vmatmul.mubr.f32.gmra.mxu0 %v612
      %v778 = vpop.f32.mrf.mxu0
      %v779 = vadd.f32 %v455, %v778
      %v780 = vpop.f32.mrf.mxu0
      %781 = vmatprep.mubr.f32.mxu0 0.0
      %782 = vmatmul.mubr.f32.gmra.mxu0 %v615
      %v783 = vpop.f32.mrf.mxu0
      %v784 = vadd.f32 %v460, %v783
      %v785 = vpop.f32.mrf.mxu0
      %786 = vmatprep.mubr.f32.mxu0 0.0
      %787 = vmatmul.mubr.f32.gmra.mxu0 %v618
      %v788 = vpop.f32.mrf.mxu0
      %v789 = vadd.f32 %v465, %v788
      %v790 = vpop.f32.mrf.mxu0
      %791 = vmatprep.mubr.f32.mxu0 0.0
      %792 = vmatmul.mubr.f32.gmra.mxu0 %v621
      %v793 = vpop.f32.mrf.mxu0
      %v794 = vadd.f32 %v470, %v793
      %v795 = vpop.f32.mrf.mxu0
      %796 = vmatprep.mubr.f32.mxu0 0.0
      %797 = vmatmul.mubr.f32.gmra.mxu0 %v624
      %v798 = vpop.f32.mrf.mxu0
      %v799 = vadd.f32 %v475, %v798
      %v800 = vpop.f32.mrf.mxu0
      %801 = vmatprep.mubr.f32.mxu0 0.0
      %802 = vmatmul.mubr.f32.gmra.mxu0 %v627
      %v803 = vpop.f32.mrf.mxu0
      %v804 = vadd.f32 %v480, %v803
      %v805 = vpop.f32.mrf.mxu0
      %806 = vmatprep.mubr.f32.mxu0 0.0
      %807 = vmatmul.mubr.f32.gmra.mxu0 %v630
      %v808 = vpop.f32.mrf.mxu0
      %v809 = vadd.f32 %v485, %v808
      %v810 = vpop.f32.mrf.mxu0
      %811 = vmatprep.mubr.f32.mxu0 0.0
      %812 = vmatmul.mubr.f32.gmra.mxu0 %v633
      %v813 = vpop.f32.mrf.mxu0
      %v814 = vadd.f32 %v490, %v813
      %v815 = vpop.f32.mrf.mxu0
      %816 = vmatprep.mubr.f32.mxu0 0.0
      %817 = vmatmul.mubr.f32.gmra.mxu0 %v636
      %v818 = vpop.f32.mrf.mxu0
      %v819 = vadd.f32 %v495, %v818
      %v820 = vpop.f32.mrf.mxu0
      %821 = vmatprep.mubr.f32.mxu0 0.0
      %822 = vmatmul.mubr.f32.gmra.mxu0 %v639
      %v823 = vpop.f32.mrf.mxu0
      %v824 = vadd.f32 %v500, %v823
      %v825 = vpop.f32.mrf.mxu0
      %826 = vmatprep.mubr.f32.mxu0 0.0
      %827 = vmatmul.mubr.f32.gmra.mxu0 %v642
      %v828 = vpop.f32.mrf.mxu0
      %v829 = vadd.f32 %v505, %v828
      %v830 = vpop.f32.mrf.mxu0
      %831 = vmatprep.mubr.f32.mxu0 0.0
      %832 = vmatmul.mubr.f32.gmra.mxu0 %v645
      %v833 = vpop.f32.mrf.mxu0
      %v834 = vadd.f32 %v510, %v833
      %v835 = vpop.f32.mrf.mxu0
      %836 = vmatprep.mubr.f32.mxu0 0.0
      %837 = vmatmul.mubr.f32.gmra.mxu0 %v648
      %v838 = vpop.f32.mrf.mxu0
      %v839 = vadd.f32 %v515, %v838
      %v840 = vpop.f32.mrf.mxu0
      %841 = vmatprep.mubr.f32.mxu0 0.0
      %842 = vmatmul.mubr.f32.gmra.mxu0 %v651
      %v843 = vpop.f32.mrf.mxu0
      %v844 = vadd.f32 %v520, %v843
      %v845 = vpop.f32.mrf.mxu0
      %846 = vmatprep.mubr.f32.mxu0 0.0
      %847 = vmatmul.mubr.f32.gmra.mxu0 %v654
      %v848 = vpop.f32.mrf.mxu0
      %v849 = vadd.f32 %v525, %v848
      %v850 = vpop.f32.mrf.mxu0
      %851 = vmatprep.mubr.f32.mxu0 0.0
      %852 = vmatmul.mubr.f32.gmra.mxu0 %v657
      %v853 = vpop.f32.mrf.mxu0
      %v854 = vadd.f32 %v530, %v853
      %v855 = vpop.f32.mrf.mxu0
      %856 = vmatprep.mubr.f32.mxu0 0.0
      %857 = vmatmul.mubr.f32.gmra.mxu0 %v660
      %v858 = vpop.f32.mrf.mxu0
      %v859 = vadd.f32 %v535, %v858
      %v860 = vpop.f32.mrf.mxu0
      %861 = vmatprep.mubr.f32.mxu0 0.0
      %862 = vmatmul.mubr.f32.gmra.mxu0 %v663
      %v863 = vpop.f32.mrf.mxu0
      %v864 = vadd.f32 %v540, %v863
      %v865 = vpop.f32.mrf.mxu0
      %866 = vmatprep.mubr.f32.mxu0 0.0
      %867 = vmatmul.mubr.f32.gmra.mxu0 %v666
      %v868 = vpop.f32.mrf.mxu0
      %v869 = vadd.f32 %v545, %v868
      %v870 = vpop.f32.mrf.mxu0
      %871 = vmatprep.mubr.f32.mxu0 0.0
      %872 = vmatmul.mubr.f32.gmra.mxu0 %v669
      %v873 = vpop.f32.mrf.mxu0
      %v874 = vadd.f32 %v550, %v873
      %v875 = vpop.f32.mrf.mxu0
      %876 = vmatprep.mubr.f32.mxu0 0.0
      %877 = vmatmul.mubr.f32.gmra.mxu0 %v672
      %v878 = vpop.f32.mrf.mxu0
      %v879 = vadd.f32 %v555, %v878
      %v880 = vpop.f32.mrf.mxu0
      %881 = vmatprep.mubr.f32.mxu0 0.0
      %882 = vmatmul.mubr.f32.gmra.mxu0 %v675
      %v883 = vpop.f32.mrf.mxu0
      %v884 = vadd.f32 %v560, %v883
      %v885 = vpop.f32.mrf.mxu0
      %886 = vmatprep.mubr.f32.mxu0 0.0
      %887 = vmatmul.mubr.f32.gmra.mxu0 %v678
      %v888 = vpop.f32.mrf.mxu0
      %v889 = vadd.f32 %v565, %v888
      %v890 = vpop.f32.mrf.mxu0
      %891 = vmatprep.mubr.f32.mxu0 0.0
      %892 = vmatmul.mubr.f32.gmra.mxu0 %v681
      %v893 = vpop.f32.mrf.mxu0
      %v894 = vadd.f32 %v570, %v893
      %v895 = vpop.f32.mrf.mxu0
      %896 = vmatprep.mubr.f32.mxu0 0.0
      %897 = vmatmul.mubr.f32.gmra.mxu0 %v684
      %v898 = vpop.f32.mrf.mxu0
      %v899 = vadd.f32 %v575, %v898
      %v900 = vpop.f32.mrf.mxu0
      %901 = vmatprep.mubr.f32.mxu0 0.0
      %902 = vmatmul.mubr.f32.gmra.mxu0 %v687
      %v903 = vpop.f32.mrf.mxu0
      %v904 = vadd.f32 %v580, %v903
      %v905 = vpop.f32.mrf.mxu0
      %906 = vmatprep.mubr.f32.mxu0 0.0
      %907 = vmatmul.mubr.f32.gmra.mxu0 %v690
      %v908 = vpop.f32.mrf.mxu0
      %v909 = vadd.f32 %v585, %v908
      %v910 = vpop.f32.mrf.mxu0
      %911 = vmatprep.mubr.f32.mxu0 0.0
      %912 = vmatmul.mubr.f32.gmra.mxu0 %v693
      %v913 = vpop.f32.mrf.mxu0
      %v914 = vadd.f32 %v590, %v913
      %v915 = vpop.f32.mrf.mxu0
      %916 = vmatprep.mubr.f32.mxu0 0.0
      %917 = vmatmul.mubr.f32.gmra.mxu0 %v696
      %v918 = vpop.f32.mrf.mxu0
      %v919 = vadd.f32 %v595, %v918
      %v920 = vpop.f32.mrf.mxu0
      %921 = vmatprep.mubr.f32.mxu0 0.0
      %922 = vmatmul.mubr.f32.gmra.mxu0 %v699
      %v923 = vpop.f32.mrf.mxu0
      %v924 = vadd.f32 %v600, %v923
      %v925 = vpop.f32.mrf.mxu0
      %926 = vmatprep.mubr.f32.mxu0 0.0
      %927 = vmatmul.mubr.f32.gmra.mxu0 %v702
      %v928 = vpop.f32.mrf.mxu0
      %v929 = vadd.f32 %v605, %v928
      %v930 = vpop.f32.mrf.mxu0
      %931 = vdwg.mxu0
      %v932 = vld [vmem:[%s203 + $0x2] sm:$0xff]
      %v933 = vld [vmem:[%s203 + $0xa] sm:$0xff]
      %v934 = vld [vmem:[%s203 + $0x1a] sm:$0xff]
      %v935 = vld [vmem:[%s203 + $0x22] sm:$0xff]
      %v936 = vld [vmem:[%s203 + $0x32] sm:$0xff]
      %v937 = vld [vmem:[%s203 + $0x3a] sm:$0xff]
      %v938 = vld [vmem:[%s203 + $0x4a] sm:$0xff]
      %v939 = vld [vmem:[%s203 + $0x52] sm:$0xff]
      %v940 = vld [vmem:[%s203 + $0x62] sm:$0xff]
      %v941 = vld [vmem:[%s203 + $0x6a] sm:$0xff]
      %v942 = vld [vmem:[%s203 + $0x7a] sm:$0xff]
      %v943 = vld [vmem:[%s203 + $0x82] sm:$0xff]
      %v944 = vld [vmem:[%s203 + $0x92] sm:$0xff]
      %v945 = vld [vmem:[%s203 + $0x9a] sm:$0xff]
      %v946 = vld [vmem:[%s203 + $0xaa] sm:$0xff]
      %v947 = vld [vmem:[%s203 + $0xb2] sm:$0xff]
      %v948 = vld [vmem:[%s203 + $0xc2] sm:$0xff]
      %v949 = vld [vmem:[%s203 + $0xca] sm:$0xff]
      %v950 = vld [vmem:[%s203 + $0xda] sm:$0xff]
      %v951 = vld [vmem:[%s203 + $0xe2] sm:$0xff]
      %v952 = vld [vmem:[%s203 + $0xf2] sm:$0xff]
      %v953 = vld [vmem:[%s203 + $0xfa] sm:$0xff]
      %v954 = vld [vmem:[%s203 + $0x10a] sm:$0xff]
      %v955 = vld [vmem:[%s203 + $0x112] sm:$0xff]
      %v956 = vld [vmem:[%s203 + $0x122] sm:$0xff]
      %v957 = vld [vmem:[%s203 + $0x12a] sm:$0xff]
      %v958 = vld [vmem:[%s203 + $0x13a] sm:$0xff]
      %v959 = vld [vmem:[%s203 + $0x142] sm:$0xff]
      %v960 = vld [vmem:[%s203 + $0x152] sm:$0xff]
      %v961 = vld [vmem:[%s203 + $0x15a] sm:$0xff]
      %v962 = vld [vmem:[%s203 + $0x16a] sm:$0xff]
      %v963 = vld [vmem:[%s203 + $0x172] sm:$0xff]
      %s964 = scalar_lea.vmem %s1, 8
      %v965 = vld [vmem:[%s964] sm:$0xf]
      %v967 = vsel %vm282, %v932, 0
      %v970 = vsel %vm282, %v933, 0
      %v973 = vsel %vm282, %v934, 0
      %v976 = vsel %vm282, %v935, 0
      %v979 = vsel %vm282, %v936, 0
      %v982 = vsel %vm282, %v937, 0
      %v985 = vsel %vm282, %v938, 0
      %v988 = vsel %vm282, %v939, 0
      %v991 = vsel %vm282, %v940, 0
      %v994 = vsel %vm282, %v941, 0
      %v997 = vsel %vm282, %v942, 0
      %v1000 = vsel %vm282, %v943, 0
      %v1003 = vsel %vm282, %v944, 0
      %v1006 = vsel %vm282, %v945, 0
      %v1009 = vsel %vm282, %v946, 0
      %v1012 = vsel %vm282, %v947, 0
      %v1015 = vsel %vm282, %v948, 0
      %v1018 = vsel %vm282, %v949, 0
      %v1021 = vsel %vm282, %v950, 0
      %v1024 = vsel %vm282, %v951, 0
      %v1027 = vsel %vm282, %v952, 0
      %v1030 = vsel %vm282, %v953, 0
      %v1033 = vsel %vm282, %v954, 0
      %v1036 = vsel %vm282, %v955, 0
      %v1039 = vsel %vm282, %v956, 0
      %v1042 = vsel %vm282, %v957, 0
      %v1045 = vsel %vm282, %v958, 0
      %v1048 = vsel %vm282, %v959, 0
      %v1051 = vsel %vm282, %v960, 0
      %v1054 = vsel %vm282, %v961, 0
      %v1057 = vsel %vm282, %v962, 0
      %v1060 = vsel %vm282, %v963, 0
      %v1063 = vsel %vm379, %v965, 0
      %1065 = vmatprep.subr.mxu0 0.0
      %1066 = vmatpush1.msra.mxu0 0.0
      %1067 = vmatprep.subr.mxu0 0.0
      %1068 = vmatpush1.msra.mxu0 0.0
      %1069 = vmatprep.subr.mxu0 0.0
      %1070 = vmatpush1.msra.mxu0 0.0
      %1071 = vmatprep.subr.mxu0 0.0
      %1072 = vmatpush1.msra.mxu0 0.0
      %1073 = vmatprep.subr.mxu0 0.0
      %1074 = vmatpush1.msra.mxu0 0.0
      %1075 = vmatprep.subr.mxu0 0.0
      %1076 = vmatpush1.msra.mxu0 0.0
      %1077 = vmatprep.subr.mxu0 0.0
      %1078 = vmatpush1.msra.mxu0 0.0
      %1079 = vmatprep.subr.mxu0 0.0
      %1080 = vmatpush1.msra.mxu0 0.0
      %1081 = vmatprep.subr.mxu0 0.0
      %1082 = vmatpush1.msra.mxu0 0.0
      %1083 = vmatprep.subr.mxu0 0.0
      %1084 = vmatpush1.msra.mxu0 0.0
      %1085 = vmatprep.subr.mxu0 0.0
      %1086 = vmatpush1.msra.mxu0 0.0
      %1087 = vmatprep.subr.mxu0 0.0
      %1088 = vmatpush1.msra.mxu0 0.0
      %1089 = vmatprep.subr.mxu0 0.0
      %1090 = vmatpush1.msra.mxu0 0.0
      %1091 = vmatprep.subr.mxu0 0.0
      %1092 = vmatpush1.msra.mxu0 0.0
      %1093 = vmatprep.subr.mxu0 0.0
      %1094 = vmatpush1.msra.mxu0 0.0
      %1095 = vmatprep.subr.mxu0 0.0
      %1096 = vmatpush1.msra.mxu0 %v1063
      %1097 = vmatprep.subr.mxu0 0.0
      %1098 = vmatpush2.msra.mxu0 0.0
      %1099 = vmatprep.subr.mxu0 0.0
      %1100 = vmatpush2.msra.mxu0 0.0
      %1101 = vmatprep.subr.mxu0 0.0
      %1102 = vmatpush2.msra.mxu0 0.0
      %1103 = vmatprep.subr.mxu0 0.0
      %1104 = vmatpush2.msra.mxu0 0.0
      %1105 = vmatprep.subr.mxu0 0.0
      %1106 = vmatpush2.msra.mxu0 0.0
      %1107 = vmatprep.subr.mxu0 0.0
      %1108 = vmatpush2.msra.mxu0 0.0
      %1109 = vmatprep.subr.mxu0 0.0
      %1110 = vmatpush2.msra.mxu0 0.0
      %1111 = vmatprep.subr.mxu0 0.0
      %1112 = vmatpush2.msra.mxu0 0.0
      %1113 = vmatprep.subr.mxu0 0.0
      %1114 = vmatpush2.msra.mxu0 0.0
      %1115 = vmatprep.subr.mxu0 0.0
      %1116 = vmatpush2.msra.mxu0 0.0
      %1117 = vmatprep.subr.mxu0 0.0
      %1118 = vmatpush2.msra.mxu0 0.0
      %1119 = vmatprep.subr.mxu0 0.0
      %1120 = vmatpush2.msra.mxu0 0.0
      %1121 = vmatprep.subr.mxu0 0.0
      %1122 = vmatpush2.msra.mxu0 0.0
      %1123 = vmatprep.subr.mxu0 0.0
      %1124 = vmatpush2.msra.mxu0 0.0
      %1125 = vmatprep.subr.mxu0 0.0
      %1126 = vmatpush2.msra.mxu0 0.0
      %1127 = vmatprep.subr.mxu0 0.0
      %1128 = vmatpush2.msra.mxu0 0.0
      %1129 = vmatprep.mubr.f32.mxu0 0.0
      %1130 = vmatmul.mubr.f32.gmra.mxu0 %v967
      %v1131 = vpop.f32.mrf.mxu0
      %v1132 = vadd.f32 0.0, %v1131
      %v1133 = vpop.f32.mrf.mxu0
      %1134 = vmatprep.mubr.f32.mxu0 0.0
      %1135 = vmatmul.mubr.f32.gmra.mxu0 %v970
      %v1136 = vpop.f32.mrf.mxu0
      %v1137 = vadd.f32 0.0, %v1136
      %v1138 = vpop.f32.mrf.mxu0
      %1139 = vmatprep.mubr.f32.mxu0 0.0
      %1140 = vmatmul.mubr.f32.gmra.mxu0 %v973
      %v1141 = vpop.f32.mrf.mxu0
      %v1142 = vadd.f32 0.0, %v1141
      %v1143 = vpop.f32.mrf.mxu0
      %1144 = vmatprep.mubr.f32.mxu0 0.0
      %1145 = vmatmul.mubr.f32.gmra.mxu0 %v976
      %v1146 = vpop.f32.mrf.mxu0
      %v1147 = vadd.f32 0.0, %v1146
      %v1148 = vpop.f32.mrf.mxu0
      %1149 = vmatprep.mubr.f32.mxu0 0.0
      %1150 = vmatmul.mubr.f32.gmra.mxu0 %v979
      %v1151 = vpop.f32.mrf.mxu0
      %v1152 = vadd.f32 0.0, %v1151
      %v1153 = vpop.f32.mrf.mxu0
      %1154 = vmatprep.mubr.f32.mxu0 0.0
      %1155 = vmatmul.mubr.f32.gmra.mxu0 %v982
      %v1156 = vpop.f32.mrf.mxu0
      %v1157 = vadd.f32 0.0, %v1156
      %v1158 = vpop.f32.mrf.mxu0
      %1159 = vmatprep.mubr.f32.mxu0 0.0
      %1160 = vmatmul.mubr.f32.gmra.mxu0 %v985
      %v1161 = vpop.f32.mrf.mxu0
      %v1162 = vadd.f32 0.0, %v1161
      %v1163 = vpop.f32.mrf.mxu0
      %1164 = vmatprep.mubr.f32.mxu0 0.0
      %1165 = vmatmul.mubr.f32.gmra.mxu0 %v988
      %v1166 = vpop.f32.mrf.mxu0
      %v1167 = vadd.f32 0.0, %v1166
      %v1168 = vpop.f32.mrf.mxu0
      %1169 = vmatprep.mubr.f32.mxu0 0.0
      %1170 = vmatmul.mubr.f32.gmra.mxu0 %v991
      %v1171 = vpop.f32.mrf.mxu0
      %v1172 = vadd.f32 0.0, %v1171
      %v1173 = vpop.f32.mrf.mxu0
      %1174 = vmatprep.mubr.f32.mxu0 0.0
      %1175 = vmatmul.mubr.f32.gmra.mxu0 %v994
      %v1176 = vpop.f32.mrf.mxu0
      %v1177 = vadd.f32 0.0, %v1176
      %v1178 = vpop.f32.mrf.mxu0
      %1179 = vmatprep.mubr.f32.mxu0 0.0
      %1180 = vmatmul.mubr.f32.gmra.mxu0 %v997
      %v1181 = vpop.f32.mrf.mxu0
      %v1182 = vadd.f32 0.0, %v1181
      %v1183 = vpop.f32.mrf.mxu0
      %1184 = vmatprep.mubr.f32.mxu0 0.0
      %1185 = vmatmul.mubr.f32.gmra.mxu0 %v1000
      %v1186 = vpop.f32.mrf.mxu0
      %v1187 = vadd.f32 0.0, %v1186
      %v1188 = vpop.f32.mrf.mxu0
      %1189 = vmatprep.mubr.f32.mxu0 0.0
      %1190 = vmatmul.mubr.f32.gmra.mxu0 %v1003
      %v1191 = vpop.f32.mrf.mxu0
      %v1192 = vadd.f32 0.0, %v1191
      %v1193 = vpop.f32.mrf.mxu0
      %1194 = vmatprep.mubr.f32.mxu0 0.0
      %1195 = vmatmul.mubr.f32.gmra.mxu0 %v1006
      %v1196 = vpop.f32.mrf.mxu0
      %v1197 = vadd.f32 0.0, %v1196
      %v1198 = vpop.f32.mrf.mxu0
      %1199 = vmatprep.mubr.f32.mxu0 0.0
      %1200 = vmatmul.mubr.f32.gmra.mxu0 %v1009
      %v1201 = vpop.f32.mrf.mxu0
      %v1202 = vadd.f32 0.0, %v1201
      %v1203 = vpop.f32.mrf.mxu0
      %1204 = vmatprep.mubr.f32.mxu0 0.0
      %1205 = vmatmul.mubr.f32.gmra.mxu0 %v1012
      %v1206 = vpop.f32.mrf.mxu0
      %v1207 = vadd.f32 0.0, %v1206
      %v1208 = vpop.f32.mrf.mxu0
      %1209 = vmatprep.mubr.f32.mxu0 0.0
      %1210 = vmatmul.mubr.f32.gmra.mxu0 %v1015
      %v1211 = vpop.f32.mrf.mxu0
      %v1212 = vadd.f32 0.0, %v1211
      %v1213 = vpop.f32.mrf.mxu0
      %1214 = vmatprep.mubr.f32.mxu0 0.0
      %1215 = vmatmul.mubr.f32.gmra.mxu0 %v1018
      %v1216 = vpop.f32.mrf.mxu0
      %v1217 = vadd.f32 0.0, %v1216
      %v1218 = vpop.f32.mrf.mxu0
      %1219 = vmatprep.mubr.f32.mxu0 0.0
      %1220 = vmatmul.mubr.f32.gmra.mxu0 %v1021
      %v1221 = vpop.f32.mrf.mxu0
      %v1222 = vadd.f32 0.0, %v1221
      %v1223 = vpop.f32.mrf.mxu0
      %1224 = vmatprep.mubr.f32.mxu0 0.0
      %1225 = vmatmul.mubr.f32.gmra.mxu0 %v1024
      %v1226 = vpop.f32.mrf.mxu0
      %v1227 = vadd.f32 0.0, %v1226
      %v1228 = vpop.f32.mrf.mxu0
      %1229 = vmatprep.mubr.f32.mxu0 0.0
      %1230 = vmatmul.mubr.f32.gmra.mxu0 %v1027
      %v1231 = vpop.f32.mrf.mxu0
      %v1232 = vadd.f32 0.0, %v1231
      %v1233 = vpop.f32.mrf.mxu0
      %1234 = vmatprep.mubr.f32.mxu0 0.0
      %1235 = vmatmul.mubr.f32.gmra.mxu0 %v1030
      %v1236 = vpop.f32.mrf.mxu0
      %v1237 = vadd.f32 0.0, %v1236
      %v1238 = vpop.f32.mrf.mxu0
      %1239 = vmatprep.mubr.f32.mxu0 0.0
      %1240 = vmatmul.mubr.f32.gmra.mxu0 %v1033
      %v1241 = vpop.f32.mrf.mxu0
      %v1242 = vadd.f32 0.0, %v1241
      %v1243 = vpop.f32.mrf.mxu0
      %1244 = vmatprep.mubr.f32.mxu0 0.0
      %1245 = vmatmul.mubr.f32.gmra.mxu0 %v1036
      %v1246 = vpop.f32.mrf.mxu0
      %v1247 = vadd.f32 0.0, %v1246
      %v1248 = vpop.f32.mrf.mxu0
      %1249 = vmatprep.mubr.f32.mxu0 0.0
      %1250 = vmatmul.mubr.f32.gmra.mxu0 %v1039
      %v1251 = vpop.f32.mrf.mxu0
      %v1252 = vadd.f32 0.0, %v1251
      %v1253 = vpop.f32.mrf.mxu0
      %1254 = vmatprep.mubr.f32.mxu0 0.0
      %1255 = vmatmul.mubr.f32.gmra.mxu0 %v1042
      %v1256 = vpop.f32.mrf.mxu0
      %v1257 = vadd.f32 0.0, %v1256
      %v1258 = vpop.f32.mrf.mxu0
      %1259 = vmatprep.mubr.f32.mxu0 0.0
      %1260 = vmatmul.mubr.f32.gmra.mxu0 %v1045
      %v1261 = vpop.f32.mrf.mxu0
      %v1262 = vadd.f32 0.0, %v1261
      %v1263 = vpop.f32.mrf.mxu0
      %1264 = vmatprep.mubr.f32.mxu0 0.0
      %1265 = vmatmul.mubr.f32.gmra.mxu0 %v1048
      %v1266 = vpop.f32.mrf.mxu0
      %v1267 = vadd.f32 0.0, %v1266
      %v1268 = vpop.f32.mrf.mxu0
      %1269 = vmatprep.mubr.f32.mxu0 0.0
      %1270 = vmatmul.mubr.f32.gmra.mxu0 %v1051
      %v1271 = vpop.f32.mrf.mxu0
      %v1272 = vadd.f32 0.0, %v1271
      %v1273 = vpop.f32.mrf.mxu0
      %1274 = vmatprep.mubr.f32.mxu0 0.0
      %1275 = vmatmul.mubr.f32.gmra.mxu0 %v1054
      %v1276 = vpop.f32.mrf.mxu0
      %v1277 = vadd.f32 0.0, %v1276
      %v1278 = vpop.f32.mrf.mxu0
      %1279 = vmatprep.mubr.f32.mxu0 0.0
      %1280 = vmatmul.mubr.f32.gmra.mxu0 %v1057
      %v1281 = vpop.f32.mrf.mxu0
      %v1282 = vadd.f32 0.0, %v1281
      %v1283 = vpop.f32.mrf.mxu0
      %1284 = vmatprep.mubr.f32.mxu0 0.0
      %1285 = vmatmul.mubr.f32.gmra.mxu0 %v1060
      %v1286 = vpop.f32.mrf.mxu0
      %v1287 = vadd.f32 0.0, %v1286
      %v1288 = vpop.f32.mrf.mxu0
      %1289 = vdwg.mxu0
      %v1290 = vadd.f32 %v774, %v1132
      %v1291 = vadd.f32 %v779, %v1137
      %v1292 = vadd.f32 %v784, %v1142
      %v1293 = vadd.f32 %v789, %v1147
      %v1294 = vadd.f32 %v794, %v1152
      %v1295 = vadd.f32 %v799, %v1157
      %v1296 = vadd.f32 %v804, %v1162
      %v1297 = vadd.f32 %v809, %v1167
      %v1298 = vadd.f32 %v814, %v1172
      %v1299 = vadd.f32 %v819, %v1177
      %v1300 = vadd.f32 %v824, %v1182
      %v1301 = vadd.f32 %v829, %v1187
      %v1302 = vadd.f32 %v834, %v1192
      %v1303 = vadd.f32 %v839, %v1197
      %v1304 = vadd.f32 %v844, %v1202
      %v1305 = vadd.f32 %v849, %v1207
      %v1306 = vadd.f32 %v854, %v1212
      %v1307 = vadd.f32 %v859, %v1217
      %v1308 = vadd.f32 %v864, %v1222
      %v1309 = vadd.f32 %v869, %v1227
      %v1310 = vadd.f32 %v874, %v1232
      %v1311 = vadd.f32 %v879, %v1237
      %v1312 = vadd.f32 %v884, %v1242
      %v1313 = vadd.f32 %v889, %v1247
      %v1314 = vadd.f32 %v894, %v1252
      %v1315 = vadd.f32 %v899, %v1257
      %v1316 = vadd.f32 %v904, %v1262
      %v1317 = vadd.f32 %v909, %v1267
      %v1318 = vadd.f32 %v914, %v1272
      %v1319 = vadd.f32 %v919, %v1277
      %v1320 = vadd.f32 %v924, %v1282
      %v1321 = vadd.f32 %v929, %v1287
      %s1322 = scalar_lea.vmem %s203, 24
      %v1323 = vld [vmem:[%s1322] sm:$0xff]
      %v1324 = vld [vmem:[%s1322 + $0x8] sm:$0xff]
      %v1325 = vld [vmem:[%s1322 + $0x18] sm:$0xff]
      %v1326 = vld [vmem:[%s1322 + $0x20] sm:$0xff]
      %v1327 = vld [vmem:[%s1322 + $0x30] sm:$0xff]
      %v1328 = vld [vmem:[%s1322 + $0x38] sm:$0xff]
      %v1329 = vld [vmem:[%s1322 + $0x48] sm:$0xff]
      %v1330 = vld [vmem:[%s1322 + $0x50] sm:$0xff]
      %v1331 = vld [vmem:[%s1322 + $0x60] sm:$0xff]
      %v1332 = vld [vmem:[%s1322 + $0x68] sm:$0xff]
      %v1333 = vld [vmem:[%s1322 + $0x78] sm:$0xff]
      %v1334 = vld [vmem:[%s1322 + $0x80] sm:$0xff]
      %v1335 = vld [vmem:[%s1322 + $0x90] sm:$0xff]
      %v1336 = vld [vmem:[%s1322 + $0x98] sm:$0xff]
      %v1337 = vld [vmem:[%s1322 + $0xa8] sm:$0xff]
      %v1338 = vld [vmem:[%s1322 + $0xb0] sm:$0xff]
      %v1339 = vld [vmem:[%s1322 + $0xc0] sm:$0xff]
      %v1340 = vld [vmem:[%s1322 + $0xc8] sm:$0xff]
      %v1341 = vld [vmem:[%s1322 + $0xd8] sm:$0xff]
      %v1342 = vld [vmem:[%s1322 + $0xe0] sm:$0xff]
      %v1343 = vld [vmem:[%s1322 + $0xf0] sm:$0xff]
      %v1344 = vld [vmem:[%s1322 + $0xf8] sm:$0xff]
      %v1345 = vld [vmem:[%s1322 + $0x108] sm:$0xff]
      %v1346 = vld [vmem:[%s1322 + $0x110] sm:$0xff]
      %v1347 = vld [vmem:[%s1322 + $0x120] sm:$0xff]
      %v1348 = vld [vmem:[%s1322 + $0x128] sm:$0xff]
      %v1349 = vld [vmem:[%s1322 + $0x138] sm:$0xff]
      %v1350 = vld [vmem:[%s1322 + $0x140] sm:$0xff]
      %v1351 = vld [vmem:[%s1322 + $0x150] sm:$0xff]
      %v1352 = vld [vmem:[%s1322 + $0x158] sm:$0xff]
      %v1353 = vld [vmem:[%s1322 + $0x168] sm:$0xff]
      %v1354 = vld [vmem:[%s1322 + $0x170] sm:$0xff]
      %s1355 = scalar_lea.vmem %s1, 12
      %v1356 = vld [vmem:[%s1355] sm:$0xf]
      %v1358 = vsel %vm282, %v1323, 0
      %v1361 = vsel %vm282, %v1324, 0
      %v1364 = vsel %vm282, %v1325, 0
      %v1367 = vsel %vm282, %v1326, 0
      %v1370 = vsel %vm282, %v1327, 0
      %v1373 = vsel %vm282, %v1328, 0
      %v1376 = vsel %vm282, %v1329, 0
      %v1379 = vsel %vm282, %v1330, 0
      %v1382 = vsel %vm282, %v1331, 0
      %v1385 = vsel %vm282, %v1332, 0
      %v1388 = vsel %vm282, %v1333, 0
      %v1391 = vsel %vm282, %v1334, 0
      %v1394 = vsel %vm282, %v1335, 0
      %v1397 = vsel %vm282, %v1336, 0
      %v1400 = vsel %vm282, %v1337, 0
      %v1403 = vsel %vm282, %v1338, 0
      %v1406 = vsel %vm282, %v1339, 0
      %v1409 = vsel %vm282, %v1340, 0
      %v1412 = vsel %vm282, %v1341, 0
      %v1415 = vsel %vm282, %v1342, 0
      %v1418 = vsel %vm282, %v1343, 0
      %v1421 = vsel %vm282, %v1344, 0
      %v1424 = vsel %vm282, %v1345, 0
      %v1427 = vsel %vm282, %v1346, 0
      %v1430 = vsel %vm282, %v1347, 0
      %v1433 = vsel %vm282, %v1348, 0
      %v1436 = vsel %vm282, %v1349, 0
      %v1439 = vsel %vm282, %v1350, 0
      %v1442 = vsel %vm282, %v1351, 0
      %v1445 = vsel %vm282, %v1352, 0
      %v1448 = vsel %vm282, %v1353, 0
      %v1451 = vsel %vm282, %v1354, 0
      %v1454 = vsel %vm379, %v1356, 0
      %1456 = vmatprep.subr.mxu0 0.0
      %1457 = vmatpush1.msra.mxu0 0.0
      %1458 = vmatprep.subr.mxu0 0.0
      %1459 = vmatpush1.msra.mxu0 0.0
      %1460 = vmatprep.subr.mxu0 0.0
      %1461 = vmatpush1.msra.mxu0 0.0
      %1462 = vmatprep.subr.mxu0 0.0
      %1463 = vmatpush1.msra.mxu0 0.0
      %1464 = vmatprep.subr.mxu0 0.0
      %1465 = vmatpush1.msra.mxu0 0.0
      %1466 = vmatprep.subr.mxu0 0.0
      %1467 = vmatpush1.msra.mxu0 0.0
      %1468 = vmatprep.subr.mxu0 0.0
      %1469 = vmatpush1.msra.mxu0 0.0
      %1470 = vmatprep.subr.mxu0 0.0
      %1471 = vmatpush1.msra.mxu0 0.0
      %1472 = vmatprep.subr.mxu0 0.0
      %1473 = vmatpush1.msra.mxu0 0.0
      %1474 = vmatprep.subr.mxu0 0.0
      %1475 = vmatpush1.msra.mxu0 0.0
      %1476 = vmatprep.subr.mxu0 0.0
      %1477 = vmatpush1.msra.mxu0 0.0
      %1478 = vmatprep.subr.mxu0 0.0
      %1479 = vmatpush1.msra.mxu0 0.0
      %1480 = vmatprep.subr.mxu0 0.0
      %1481 = vmatpush1.msra.mxu0 0.0
      %1482 = vmatprep.subr.mxu0 0.0
      %1483 = vmatpush1.msra.mxu0 0.0
      %1484 = vmatprep.subr.mxu0 0.0
      %1485 = vmatpush1.msra.mxu0 0.0
      %1486 = vmatprep.subr.mxu0 0.0
      %1487 = vmatpush1.msra.mxu0 %v1454
      %1488 = vmatprep.subr.mxu0 0.0
      %1489 = vmatpush2.msra.mxu0 0.0
      %1490 = vmatprep.subr.mxu0 0.0
      %1491 = vmatpush2.msra.mxu0 0.0
      %1492 = vmatprep.subr.mxu0 0.0
      %1493 = vmatpush2.msra.mxu0 0.0
      %1494 = vmatprep.subr.mxu0 0.0
      %1495 = vmatpush2.msra.mxu0 0.0
      %1496 = vmatprep.subr.mxu0 0.0
      %1497 = vmatpush2.msra.mxu0 0.0
      %1498 = vmatprep.subr.mxu0 0.0
      %1499 = vmatpush2.msra.mxu0 0.0
      %1500 = vmatprep.subr.mxu0 0.0
      %1501 = vmatpush2.msra.mxu0 0.0
      %1502 = vmatprep.subr.mxu0 0.0
      %1503 = vmatpush2.msra.mxu0 0.0
      %1504 = vmatprep.subr.mxu0 0.0
      %1505 = vmatpush2.msra.mxu0 0.0
      %1506 = vmatprep.subr.mxu0 0.0
      %1507 = vmatpush2.msra.mxu0 0.0
      %1508 = vmatprep.subr.mxu0 0.0
      %1509 = vmatpush2.msra.mxu0 0.0
      %1510 = vmatprep.subr.mxu0 0.0
      %1511 = vmatpush2.msra.mxu0 0.0
      %1512 = vmatprep.subr.mxu0 0.0
      %1513 = vmatpush2.msra.mxu0 0.0
      %1514 = vmatprep.subr.mxu0 0.0
      %1515 = vmatpush2.msra.mxu0 0.0
      %1516 = vmatprep.subr.mxu0 0.0
      %1517 = vmatpush2.msra.mxu0 0.0
      %1518 = vmatprep.subr.mxu0 0.0
      %1519 = vmatpush2.msra.mxu0 0.0
      %1520 = vmatprep.mubr.f32.mxu0 0.0
      %1521 = vmatmul.mubr.f32.gmra.mxu0 %v1358
      %v1522 = vpop.f32.mrf.mxu0
      %v1523 = vadd.f32 0.0, %v1522
      %v1524 = vpop.f32.mrf.mxu0
      %1525 = vmatprep.mubr.f32.mxu0 0.0
      %1526 = vmatmul.mubr.f32.gmra.mxu0 %v1361
      %v1527 = vpop.f32.mrf.mxu0
      %v1528 = vadd.f32 0.0, %v1527
      %v1529 = vpop.f32.mrf.mxu0
      %1530 = vmatprep.mubr.f32.mxu0 0.0
      %1531 = vmatmul.mubr.f32.gmra.mxu0 %v1364
      %v1532 = vpop.f32.mrf.mxu0
      %v1533 = vadd.f32 0.0, %v1532
      %v1534 = vpop.f32.mrf.mxu0
      %1535 = vmatprep.mubr.f32.mxu0 0.0
      %1536 = vmatmul.mubr.f32.gmra.mxu0 %v1367
      %v1537 = vpop.f32.mrf.mxu0
      %v1538 = vadd.f32 0.0, %v1537
      %v1539 = vpop.f32.mrf.mxu0
      %1540 = vmatprep.mubr.f32.mxu0 0.0
      %1541 = vmatmul.mubr.f32.gmra.mxu0 %v1370
      %v1542 = vpop.f32.mrf.mxu0
      %v1543 = vadd.f32 0.0, %v1542
      %v1544 = vpop.f32.mrf.mxu0
      %1545 = vmatprep.mubr.f32.mxu0 0.0
      %1546 = vmatmul.mubr.f32.gmra.mxu0 %v1373
      %v1547 = vpop.f32.mrf.mxu0
      %v1548 = vadd.f32 0.0, %v1547
      %v1549 = vpop.f32.mrf.mxu0
      %1550 = vmatprep.mubr.f32.mxu0 0.0
      %1551 = vmatmul.mubr.f32.gmra.mxu0 %v1376
      %v1552 = vpop.f32.mrf.mxu0
      %v1553 = vadd.f32 0.0, %v1552
      %v1554 = vpop.f32.mrf.mxu0
      %1555 = vmatprep.mubr.f32.mxu0 0.0
      %1556 = vmatmul.mubr.f32.gmra.mxu0 %v1379
      %v1557 = vpop.f32.mrf.mxu0
      %v1558 = vadd.f32 0.0, %v1557
      %v1559 = vpop.f32.mrf.mxu0
      %1560 = vmatprep.mubr.f32.mxu0 0.0
      %1561 = vmatmul.mubr.f32.gmra.mxu0 %v1382
      %v1562 = vpop.f32.mrf.mxu0
      %v1563 = vadd.f32 0.0, %v1562
      %v1564 = vpop.f32.mrf.mxu0
      %1565 = vmatprep.mubr.f32.mxu0 0.0
      %1566 = vmatmul.mubr.f32.gmra.mxu0 %v1385
      %v1567 = vpop.f32.mrf.mxu0
      %v1568 = vadd.f32 0.0, %v1567
      %v1569 = vpop.f32.mrf.mxu0
      %1570 = vmatprep.mubr.f32.mxu0 0.0
      %1571 = vmatmul.mubr.f32.gmra.mxu0 %v1388
      %v1572 = vpop.f32.mrf.mxu0
      %v1573 = vadd.f32 0.0, %v1572
      %v1574 = vpop.f32.mrf.mxu0
      %1575 = vmatprep.mubr.f32.mxu0 0.0
      %1576 = vmatmul.mubr.f32.gmra.mxu0 %v1391
      %v1577 = vpop.f32.mrf.mxu0
      %v1578 = vadd.f32 0.0, %v1577
      %v1579 = vpop.f32.mrf.mxu0
      %1580 = vmatprep.mubr.f32.mxu0 0.0
      %1581 = vmatmul.mubr.f32.gmra.mxu0 %v1394
      %v1582 = vpop.f32.mrf.mxu0
      %v1583 = vadd.f32 0.0, %v1582
      %v1584 = vpop.f32.mrf.mxu0
      %1585 = vmatprep.mubr.f32.mxu0 0.0
      %1586 = vmatmul.mubr.f32.gmra.mxu0 %v1397
      %v1587 = vpop.f32.mrf.mxu0
      %v1588 = vadd.f32 0.0, %v1587
      %v1589 = vpop.f32.mrf.mxu0
      %1590 = vmatprep.mubr.f32.mxu0 0.0
      %1591 = vmatmul.mubr.f32.gmra.mxu0 %v1400
      %v1592 = vpop.f32.mrf.mxu0
      %v1593 = vadd.f32 0.0, %v1592
      %v1594 = vpop.f32.mrf.mxu0
      %1595 = vmatprep.mubr.f32.mxu0 0.0
      %1596 = vmatmul.mubr.f32.gmra.mxu0 %v1403
      %v1597 = vpop.f32.mrf.mxu0
      %v1598 = vadd.f32 0.0, %v1597
      %v1599 = vpop.f32.mrf.mxu0
      %1600 = vmatprep.mubr.f32.mxu0 0.0
      %1601 = vmatmul.mubr.f32.gmra.mxu0 %v1406
      %v1602 = vpop.f32.mrf.mxu0
      %v1603 = vadd.f32 0.0, %v1602
      %v1604 = vpop.f32.mrf.mxu0
      %1605 = vmatprep.mubr.f32.mxu0 0.0
      %1606 = vmatmul.mubr.f32.gmra.mxu0 %v1409
      %v1607 = vpop.f32.mrf.mxu0
      %v1608 = vadd.f32 0.0, %v1607
      %v1609 = vpop.f32.mrf.mxu0
      %1610 = vmatprep.mubr.f32.mxu0 0.0
      %1611 = vmatmul.mubr.f32.gmra.mxu0 %v1412
      %v1612 = vpop.f32.mrf.mxu0
      %v1613 = vadd.f32 0.0, %v1612
      %v1614 = vpop.f32.mrf.mxu0
      %1615 = vmatprep.mubr.f32.mxu0 0.0
      %1616 = vmatmul.mubr.f32.gmra.mxu0 %v1415
      %v1617 = vpop.f32.mrf.mxu0
      %v1618 = vadd.f32 0.0, %v1617
      %v1619 = vpop.f32.mrf.mxu0
      %1620 = vmatprep.mubr.f32.mxu0 0.0
      %1621 = vmatmul.mubr.f32.gmra.mxu0 %v1418
      %v1622 = vpop.f32.mrf.mxu0
      %v1623 = vadd.f32 0.0, %v1622
      %v1624 = vpop.f32.mrf.mxu0
      %1625 = vmatprep.mubr.f32.mxu0 0.0
      %1626 = vmatmul.mubr.f32.gmra.mxu0 %v1421
      %v1627 = vpop.f32.mrf.mxu0
      %v1628 = vadd.f32 0.0, %v1627
      %v1629 = vpop.f32.mrf.mxu0
      %1630 = vmatprep.mubr.f32.mxu0 0.0
      %1631 = vmatmul.mubr.f32.gmra.mxu0 %v1424
      %v1632 = vpop.f32.mrf.mxu0
      %v1633 = vadd.f32 0.0, %v1632
      %v1634 = vpop.f32.mrf.mxu0
      %1635 = vmatprep.mubr.f32.mxu0 0.0
      %1636 = vmatmul.mubr.f32.gmra.mxu0 %v1427
      %v1637 = vpop.f32.mrf.mxu0
      %v1638 = vadd.f32 0.0, %v1637
      %v1639 = vpop.f32.mrf.mxu0
      %1640 = vmatprep.mubr.f32.mxu0 0.0
      %1641 = vmatmul.mubr.f32.gmra.mxu0 %v1430
      %v1642 = vpop.f32.mrf.mxu0
      %v1643 = vadd.f32 0.0, %v1642
      %v1644 = vpop.f32.mrf.mxu0
      %1645 = vmatprep.mubr.f32.mxu0 0.0
      %1646 = vmatmul.mubr.f32.gmra.mxu0 %v1433
      %v1647 = vpop.f32.mrf.mxu0
      %v1648 = vadd.f32 0.0, %v1647
      %v1649 = vpop.f32.mrf.mxu0
      %1650 = vmatprep.mubr.f32.mxu0 0.0
      %1651 = vmatmul.mubr.f32.gmra.mxu0 %v1436
      %v1652 = vpop.f32.mrf.mxu0
      %v1653 = vadd.f32 0.0, %v1652
      %v1654 = vpop.f32.mrf.mxu0
      %1655 = vmatprep.mubr.f32.mxu0 0.0
      %1656 = vmatmul.mubr.f32.gmra.mxu0 %v1439
      %v1657 = vpop.f32.mrf.mxu0
      %v1658 = vadd.f32 0.0, %v1657
      %v1659 = vpop.f32.mrf.mxu0
      %1660 = vmatprep.mubr.f32.mxu0 0.0
      %1661 = vmatmul.mubr.f32.gmra.mxu0 %v1442
      %v1662 = vpop.f32.mrf.mxu0
      %v1663 = vadd.f32 0.0, %v1662
      %v1664 = vpop.f32.mrf.mxu0
      %1665 = vmatprep.mubr.f32.mxu0 0.0
      %1666 = vmatmul.mubr.f32.gmra.mxu0 %v1445
      %v1667 = vpop.f32.mrf.mxu0
      %v1668 = vadd.f32 0.0, %v1667
      %v1669 = vpop.f32.mrf.mxu0
      %1670 = vmatprep.mubr.f32.mxu0 0.0
      %1671 = vmatmul.mubr.f32.gmra.mxu0 %v1448
      %v1672 = vpop.f32.mrf.mxu0
      %v1673 = vadd.f32 0.0, %v1672
      %v1674 = vpop.f32.mrf.mxu0
      %1675 = vmatprep.mubr.f32.mxu0 0.0
      %1676 = vmatmul.mubr.f32.gmra.mxu0 %v1451
      %v1677 = vpop.f32.mrf.mxu0
      %v1678 = vadd.f32 0.0, %v1677
      %v1679 = vpop.f32.mrf.mxu0
      %1680 = vdwg.mxu0
      %v1681 = vadd.f32 %v1290, %v1523
      %v1682 = vadd.f32 %v1291, %v1528
      %v1683 = vadd.f32 %v1292, %v1533
      %v1684 = vadd.f32 %v1293, %v1538
      %v1685 = vadd.f32 %v1294, %v1543
      %v1686 = vadd.f32 %v1295, %v1548
      %v1687 = vadd.f32 %v1296, %v1553
      %v1688 = vadd.f32 %v1297, %v1558
      %v1689 = vadd.f32 %v1298, %v1563
      %v1690 = vadd.f32 %v1299, %v1568
      %v1691 = vadd.f32 %v1300, %v1573
      %v1692 = vadd.f32 %v1301, %v1578
      %v1693 = vadd.f32 %v1302, %v1583
      %v1694 = vadd.f32 %v1303, %v1588
      %v1695 = vadd.f32 %v1304, %v1593
      %v1696 = vadd.f32 %v1305, %v1598
      %v1697 = vadd.f32 %v1306, %v1603
      %v1698 = vadd.f32 %v1307, %v1608
      %v1699 = vadd.f32 %v1308, %v1613
      %v1700 = vadd.f32 %v1309, %v1618
      %v1701 = vadd.f32 %v1310, %v1623
      %v1702 = vadd.f32 %v1311, %v1628
      %v1703 = vadd.f32 %v1312, %v1633
      %v1704 = vadd.f32 %v1313, %v1638
      %v1705 = vadd.f32 %v1314, %v1643
      %v1706 = vadd.f32 %v1315, %v1648
      %v1707 = vadd.f32 %v1316, %v1653
      %v1708 = vadd.f32 %v1317, %v1658
      %v1709 = vadd.f32 %v1318, %v1663
      %v1710 = vadd.f32 %v1319, %v1668
      %v1711 = vadd.f32 %v1320, %v1673
      %v1712 = vadd.f32 %v1321, %v1678
      %v1713 = vld [vmem:[%s1322 + $0x1] sm:$0xff]
      %v1714 = vld [vmem:[%s1322 + $0x9] sm:$0xff]
      %v1715 = vld [vmem:[%s1322 + $0x19] sm:$0xff]
      %v1716 = vld [vmem:[%s1322 + $0x21] sm:$0xff]
      %v1717 = vld [vmem:[%s1322 + $0x31] sm:$0xff]
      %v1718 = vld [vmem:[%s1322 + $0x39] sm:$0xff]
      %v1719 = vld [vmem:[%s1322 + $0x49] sm:$0xff]
      %v1720 = vld [vmem:[%s1322 + $0x51] sm:$0xff]
      %v1721 = vld [vmem:[%s1322 + $0x61] sm:$0xff]
      %v1722 = vld [vmem:[%s1322 + $0x69] sm:$0xff]
      %v1723 = vld [vmem:[%s1322 + $0x79] sm:$0xff]
      %v1724 = vld [vmem:[%s1322 + $0x81] sm:$0xff]
      %v1725 = vld [vmem:[%s1322 + $0x91] sm:$0xff]
      %v1726 = vld [vmem:[%s1322 + $0x99] sm:$0xff]
      %v1727 = vld [vmem:[%s1322 + $0xa9] sm:$0xff]
      %v1728 = vld [vmem:[%s1322 + $0xb1] sm:$0xff]
      %v1729 = vld [vmem:[%s1322 + $0xc1] sm:$0xff]
      %v1730 = vld [vmem:[%s1322 + $0xc9] sm:$0xff]
      %v1731 = vld [vmem:[%s1322 + $0xd9] sm:$0xff]
      %v1732 = vld [vmem:[%s1322 + $0xe1] sm:$0xff]
      %v1733 = vld [vmem:[%s1322 + $0xf1] sm:$0xff]
      %v1734 = vld [vmem:[%s1322 + $0xf9] sm:$0xff]
      %v1735 = vld [vmem:[%s1322 + $0x109] sm:$0xff]
      %v1736 = vld [vmem:[%s1322 + $0x111] sm:$0xff]
      %v1737 = vld [vmem:[%s1322 + $0x121] sm:$0xff]
      %v1738 = vld [vmem:[%s1322 + $0x129] sm:$0xff]
      %v1739 = vld [vmem:[%s1322 + $0x139] sm:$0xff]
      %v1740 = vld [vmem:[%s1322 + $0x141] sm:$0xff]
      %v1741 = vld [vmem:[%s1322 + $0x151] sm:$0xff]
      %v1742 = vld [vmem:[%s1322 + $0x159] sm:$0xff]
      %v1743 = vld [vmem:[%s1322 + $0x169] sm:$0xff]
      %v1744 = vld [vmem:[%s1322 + $0x171] sm:$0xff]
      %s1745 = scalar_lea.vmem %s1, 16
      %v1746 = vld [vmem:[%s1745] sm:$0xf]
      %v1748 = vsel %vm282, %v1713, 0
      %v1751 = vsel %vm282, %v1714, 0
      %v1754 = vsel %vm282, %v1715, 0
      %v1757 = vsel %vm282, %v1716, 0
      %v1760 = vsel %vm282, %v1717, 0
      %v1763 = vsel %vm282, %v1718, 0
      %v1766 = vsel %vm282, %v1719, 0
      %v1769 = vsel %vm282, %v1720, 0
      %v1772 = vsel %vm282, %v1721, 0
      %v1775 = vsel %vm282, %v1722, 0
      %v1778 = vsel %vm282, %v1723, 0
      %v1781 = vsel %vm282, %v1724, 0
      %v1784 = vsel %vm282, %v1725, 0
      %v1787 = vsel %vm282, %v1726, 0
      %v1790 = vsel %vm282, %v1727, 0
      %v1793 = vsel %vm282, %v1728, 0
      %v1796 = vsel %vm282, %v1729, 0
      %v1799 = vsel %vm282, %v1730, 0
      %v1802 = vsel %vm282, %v1731, 0
      %v1805 = vsel %vm282, %v1732, 0
      %v1808 = vsel %vm282, %v1733, 0
      %v1811 = vsel %vm282, %v1734, 0
      %v1814 = vsel %vm282, %v1735, 0
      %v1817 = vsel %vm282, %v1736, 0
      %v1820 = vsel %vm282, %v1737, 0
      %v1823 = vsel %vm282, %v1738, 0
      %v1826 = vsel %vm282, %v1739, 0
      %v1829 = vsel %vm282, %v1740, 0
      %v1832 = vsel %vm282, %v1741, 0
      %v1835 = vsel %vm282, %v1742, 0
      %v1838 = vsel %vm282, %v1743, 0
      %v1841 = vsel %vm282, %v1744, 0
      %v1844 = vsel %vm379, %v1746, 0
      %1846 = vmatprep.subr.mxu0 0.0
      %1847 = vmatpush1.msra.mxu0 0.0
      %1848 = vmatprep.subr.mxu0 0.0
      %1849 = vmatpush1.msra.mxu0 0.0
      %1850 = vmatprep.subr.mxu0 0.0
      %1851 = vmatpush1.msra.mxu0 0.0
      %1852 = vmatprep.subr.mxu0 0.0
      %1853 = vmatpush1.msra.mxu0 0.0
      %1854 = vmatprep.subr.mxu0 0.0
      %1855 = vmatpush1.msra.mxu0 0.0
      %1856 = vmatprep.subr.mxu0 0.0
      %1857 = vmatpush1.msra.mxu0 0.0
      %1858 = vmatprep.subr.mxu0 0.0
      %1859 = vmatpush1.msra.mxu0 0.0
      %1860 = vmatprep.subr.mxu0 0.0
      %1861 = vmatpush1.msra.mxu0 0.0
      %1862 = vmatprep.subr.mxu0 0.0
      %1863 = vmatpush1.msra.mxu0 0.0
      %1864 = vmatprep.subr.mxu0 0.0
      %1865 = vmatpush1.msra.mxu0 0.0
      %1866 = vmatprep.subr.mxu0 0.0
      %1867 = vmatpush1.msra.mxu0 0.0
      %1868 = vmatprep.subr.mxu0 0.0
      %1869 = vmatpush1.msra.mxu0 0.0
      %1870 = vmatprep.subr.mxu0 0.0
      %1871 = vmatpush1.msra.mxu0 0.0
      %1872 = vmatprep.subr.mxu0 0.0
      %1873 = vmatpush1.msra.mxu0 0.0
      %1874 = vmatprep.subr.mxu0 0.0
      %1875 = vmatpush1.msra.mxu0 0.0
      %1876 = vmatprep.subr.mxu0 0.0
      %1877 = vmatpush1.msra.mxu0 %v1844
      %1878 = vmatprep.subr.mxu0 0.0
      %1879 = vmatpush2.msra.mxu0 0.0
      %1880 = vmatprep.subr.mxu0 0.0
      %1881 = vmatpush2.msra.mxu0 0.0
      %1882 = vmatprep.subr.mxu0 0.0
      %1883 = vmatpush2.msra.mxu0 0.0
      %1884 = vmatprep.subr.mxu0 0.0
      %1885 = vmatpush2.msra.mxu0 0.0
      %1886 = vmatprep.subr.mxu0 0.0
      %1887 = vmatpush2.msra.mxu0 0.0
      %1888 = vmatprep.subr.mxu0 0.0
      %1889 = vmatpush2.msra.mxu0 0.0
      %1890 = vmatprep.subr.mxu0 0.0
      %1891 = vmatpush2.msra.mxu0 0.0
      %1892 = vmatprep.subr.mxu0 0.0
      %1893 = vmatpush2.msra.mxu0 0.0
      %1894 = vmatprep.subr.mxu0 0.0
      %1895 = vmatpush2.msra.mxu0 0.0
      %1896 = vmatprep.subr.mxu0 0.0
      %1897 = vmatpush2.msra.mxu0 0.0
      %1898 = vmatprep.subr.mxu0 0.0
      %1899 = vmatpush2.msra.mxu0 0.0
      %1900 = vmatprep.subr.mxu0 0.0
      %1901 = vmatpush2.msra.mxu0 0.0
      %1902 = vmatprep.subr.mxu0 0.0
      %1903 = vmatpush2.msra.mxu0 0.0
      %1904 = vmatprep.subr.mxu0 0.0
      %1905 = vmatpush2.msra.mxu0 0.0
      %1906 = vmatprep.subr.mxu0 0.0
      %1907 = vmatpush2.msra.mxu0 0.0
      %1908 = vmatprep.subr.mxu0 0.0
      %1909 = vmatpush2.msra.mxu0 0.0
      %1910 = vmatprep.mubr.f32.mxu0 0.0
      %1911 = vmatmul.mubr.f32.gmra.mxu0 %v1748
      %v1912 = vpop.f32.mrf.mxu0
      %v1913 = vadd.f32 0.0, %v1912
      %v1914 = vpop.f32.mrf.mxu0
      %1915 = vmatprep.mubr.f32.mxu0 0.0
      %1916 = vmatmul.mubr.f32.gmra.mxu0 %v1751
      %v1917 = vpop.f32.mrf.mxu0
      %v1918 = vadd.f32 0.0, %v1917
      %v1919 = vpop.f32.mrf.mxu0
      %1920 = vmatprep.mubr.f32.mxu0 0.0
      %1921 = vmatmul.mubr.f32.gmra.mxu0 %v1754
      %v1922 = vpop.f32.mrf.mxu0
      %v1923 = vadd.f32 0.0, %v1922
      %v1924 = vpop.f32.mrf.mxu0
      %1925 = vmatprep.mubr.f32.mxu0 0.0
      %1926 = vmatmul.mubr.f32.gmra.mxu0 %v1757
      %v1927 = vpop.f32.mrf.mxu0
      %v1928 = vadd.f32 0.0, %v1927
      %v1929 = vpop.f32.mrf.mxu0
      %1930 = vmatprep.mubr.f32.mxu0 0.0
      %1931 = vmatmul.mubr.f32.gmra.mxu0 %v1760
      %v1932 = vpop.f32.mrf.mxu0
      %v1933 = vadd.f32 0.0, %v1932
      %v1934 = vpop.f32.mrf.mxu0
      %1935 = vmatprep.mubr.f32.mxu0 0.0
      %1936 = vmatmul.mubr.f32.gmra.mxu0 %v1763
      %v1937 = vpop.f32.mrf.mxu0
      %v1938 = vadd.f32 0.0, %v1937
      %v1939 = vpop.f32.mrf.mxu0
      %1940 = vmatprep.mubr.f32.mxu0 0.0
      %1941 = vmatmul.mubr.f32.gmra.mxu0 %v1766
      %v1942 = vpop.f32.mrf.mxu0
      %v1943 = vadd.f32 0.0, %v1942
      %v1944 = vpop.f32.mrf.mxu0
      %1945 = vmatprep.mubr.f32.mxu0 0.0
      %1946 = vmatmul.mubr.f32.gmra.mxu0 %v1769
      %v1947 = vpop.f32.mrf.mxu0
      %v1948 = vadd.f32 0.0, %v1947
      %v1949 = vpop.f32.mrf.mxu0
      %1950 = vmatprep.mubr.f32.mxu0 0.0
      %1951 = vmatmul.mubr.f32.gmra.mxu0 %v1772
      %v1952 = vpop.f32.mrf.mxu0
      %v1953 = vadd.f32 0.0, %v1952
      %v1954 = vpop.f32.mrf.mxu0
      %1955 = vmatprep.mubr.f32.mxu0 0.0
      %1956 = vmatmul.mubr.f32.gmra.mxu0 %v1775
      %v1957 = vpop.f32.mrf.mxu0
      %v1958 = vadd.f32 0.0, %v1957
      %v1959 = vpop.f32.mrf.mxu0
      %1960 = vmatprep.mubr.f32.mxu0 0.0
      %1961 = vmatmul.mubr.f32.gmra.mxu0 %v1778
      %v1962 = vpop.f32.mrf.mxu0
      %v1963 = vadd.f32 0.0, %v1962
      %v1964 = vpop.f32.mrf.mxu0
      %1965 = vmatprep.mubr.f32.mxu0 0.0
      %1966 = vmatmul.mubr.f32.gmra.mxu0 %v1781
      %v1967 = vpop.f32.mrf.mxu0
      %v1968 = vadd.f32 0.0, %v1967
      %v1969 = vpop.f32.mrf.mxu0
      %1970 = vmatprep.mubr.f32.mxu0 0.0
      %1971 = vmatmul.mubr.f32.gmra.mxu0 %v1784
      %v1972 = vpop.f32.mrf.mxu0
      %v1973 = vadd.f32 0.0, %v1972
      %v1974 = vpop.f32.mrf.mxu0
      %1975 = vmatprep.mubr.f32.mxu0 0.0
      %1976 = vmatmul.mubr.f32.gmra.mxu0 %v1787
      %v1977 = vpop.f32.mrf.mxu0
      %v1978 = vadd.f32 0.0, %v1977
      %v1979 = vpop.f32.mrf.mxu0
      %1980 = vmatprep.mubr.f32.mxu0 0.0
      %1981 = vmatmul.mubr.f32.gmra.mxu0 %v1790
      %v1982 = vpop.f32.mrf.mxu0
      %v1983 = vadd.f32 0.0, %v1982
      %v1984 = vpop.f32.mrf.mxu0
      %1985 = vmatprep.mubr.f32.mxu0 0.0
      %1986 = vmatmul.mubr.f32.gmra.mxu0 %v1793
      %v1987 = vpop.f32.mrf.mxu0
      %v1988 = vadd.f32 0.0, %v1987
      %v1989 = vpop.f32.mrf.mxu0
      %1990 = vmatprep.mubr.f32.mxu0 0.0
      %1991 = vmatmul.mubr.f32.gmra.mxu0 %v1796
      %v1992 = vpop.f32.mrf.mxu0
      %v1993 = vadd.f32 0.0, %v1992
      %v1994 = vpop.f32.mrf.mxu0
      %1995 = vmatprep.mubr.f32.mxu0 0.0
      %1996 = vmatmul.mubr.f32.gmra.mxu0 %v1799
      %v1997 = vpop.f32.mrf.mxu0
      %v1998 = vadd.f32 0.0, %v1997
      %v1999 = vpop.f32.mrf.mxu0
      %2000 = vmatprep.mubr.f32.mxu0 0.0
      %2001 = vmatmul.mubr.f32.gmra.mxu0 %v1802
      %v2002 = vpop.f32.mrf.mxu0
      %v2003 = vadd.f32 0.0, %v2002
      %v2004 = vpop.f32.mrf.mxu0
      %2005 = vmatprep.mubr.f32.mxu0 0.0
      %2006 = vmatmul.mubr.f32.gmra.mxu0 %v1805
      %v2007 = vpop.f32.mrf.mxu0
      %v2008 = vadd.f32 0.0, %v2007
      %v2009 = vpop.f32.mrf.mxu0
      %2010 = vmatprep.mubr.f32.mxu0 0.0
      %2011 = vmatmul.mubr.f32.gmra.mxu0 %v1808
      %v2012 = vpop.f32.mrf.mxu0
      %v2013 = vadd.f32 0.0, %v2012
      %v2014 = vpop.f32.mrf.mxu0
      %2015 = vmatprep.mubr.f32.mxu0 0.0
      %2016 = vmatmul.mubr.f32.gmra.mxu0 %v1811
      %v2017 = vpop.f32.mrf.mxu0
      %v2018 = vadd.f32 0.0, %v2017
      %v2019 = vpop.f32.mrf.mxu0
      %2020 = vmatprep.mubr.f32.mxu0 0.0
      %2021 = vmatmul.mubr.f32.gmra.mxu0 %v1814
      %v2022 = vpop.f32.mrf.mxu0
      %v2023 = vadd.f32 0.0, %v2022
      %v2024 = vpop.f32.mrf.mxu0
      %2025 = vmatprep.mubr.f32.mxu0 0.0
      %2026 = vmatmul.mubr.f32.gmra.mxu0 %v1817
      %v2027 = vpop.f32.mrf.mxu0
      %v2028 = vadd.f32 0.0, %v2027
      %v2029 = vpop.f32.mrf.mxu0
      %2030 = vmatprep.mubr.f32.mxu0 0.0
      %2031 = vmatmul.mubr.f32.gmra.mxu0 %v1820
      %v2032 = vpop.f32.mrf.mxu0
      %v2033 = vadd.f32 0.0, %v2032
      %v2034 = vpop.f32.mrf.mxu0
      %2035 = vmatprep.mubr.f32.mxu0 0.0
      %2036 = vmatmul.mubr.f32.gmra.mxu0 %v1823
      %v2037 = vpop.f32.mrf.mxu0
      %v2038 = vadd.f32 0.0, %v2037
      %v2039 = vpop.f32.mrf.mxu0
      %2040 = vmatprep.mubr.f32.mxu0 0.0
      %2041 = vmatmul.mubr.f32.gmra.mxu0 %v1826
      %v2042 = vpop.f32.mrf.mxu0
      %v2043 = vadd.f32 0.0, %v2042
      %v2044 = vpop.f32.mrf.mxu0
      %2045 = vmatprep.mubr.f32.mxu0 0.0
      %2046 = vmatmul.mubr.f32.gmra.mxu0 %v1829
      %v2047 = vpop.f32.mrf.mxu0
      %v2048 = vadd.f32 0.0, %v2047
      %v2049 = vpop.f32.mrf.mxu0
      %2050 = vmatprep.mubr.f32.mxu0 0.0
      %2051 = vmatmul.mubr.f32.gmra.mxu0 %v1832
      %v2052 = vpop.f32.mrf.mxu0
      %v2053 = vadd.f32 0.0, %v2052
      %v2054 = vpop.f32.mrf.mxu0
      %2055 = vmatprep.mubr.f32.mxu0 0.0
      %2056 = vmatmul.mubr.f32.gmra.mxu0 %v1835
      %v2057 = vpop.f32.mrf.mxu0
      %v2058 = vadd.f32 0.0, %v2057
      %v2059 = vpop.f32.mrf.mxu0
      %2060 = vmatprep.mubr.f32.mxu0 0.0
      %2061 = vmatmul.mubr.f32.gmra.mxu0 %v1838
      %v2062 = vpop.f32.mrf.mxu0
      %v2063 = vadd.f32 0.0, %v2062
      %v2064 = vpop.f32.mrf.mxu0
      %2065 = vmatprep.mubr.f32.mxu0 0.0
      %2066 = vmatmul.mubr.f32.gmra.mxu0 %v1841
      %v2067 = vpop.f32.mrf.mxu0
      %v2068 = vadd.f32 0.0, %v2067
      %v2069 = vpop.f32.mrf.mxu0
      %2070 = vdwg.mxu0
      %v2071 = vadd.f32 %v1681, %v1913
      %v2072 = vadd.f32 %v1682, %v1918
      %v2073 = vadd.f32 %v1683, %v1923
      %v2074 = vadd.f32 %v1684, %v1928
      %v2075 = vadd.f32 %v1685, %v1933
      %v2076 = vadd.f32 %v1686, %v1938
      %v2077 = vadd.f32 %v1687, %v1943
      %v2078 = vadd.f32 %v1688, %v1948
      %v2079 = vadd.f32 %v1689, %v1953
      %v2080 = vadd.f32 %v1690, %v1958
      %v2081 = vadd.f32 %v1691, %v1963
      %v2082 = vadd.f32 %v1692, %v1968
      %v2083 = vadd.f32 %v1693, %v1973
      %v2084 = vadd.f32 %v1694, %v1978
      %v2085 = vadd.f32 %v1695, %v1983
      %v2086 = vadd.f32 %v1696, %v1988
      %v2087 = vadd.f32 %v1697, %v1993
      %v2088 = vadd.f32 %v1698, %v1998
      %v2089 = vadd.f32 %v1699, %v2003
      %v2090 = vadd.f32 %v1700, %v2008
      %v2091 = vadd.f32 %v1701, %v2013
      %v2092 = vadd.f32 %v1702, %v2018
      %v2093 = vadd.f32 %v1703, %v2023
      %v2094 = vadd.f32 %v1704, %v2028
      %v2095 = vadd.f32 %v1705, %v2033
      %v2096 = vadd.f32 %v1706, %v2038
      %v2097 = vadd.f32 %v1707, %v2043
      %v2098 = vadd.f32 %v1708, %v2048
      %v2099 = vadd.f32 %v1709, %v2053
      %v2100 = vadd.f32 %v1710, %v2058
      %v2101 = vadd.f32 %v1711, %v2063
      %v2102 = vadd.f32 %v1712, %v2068
      %v2103 = vld [vmem:[%s1322 + $0x2] sm:$0xff]
      %v2104 = vld [vmem:[%s1322 + $0xa] sm:$0xff]
      %v2105 = vld [vmem:[%s1322 + $0x1a] sm:$0xff]
      %v2106 = vld [vmem:[%s1322 + $0x22] sm:$0xff]
      %v2107 = vld [vmem:[%s1322 + $0x32] sm:$0xff]
      %v2108 = vld [vmem:[%s1322 + $0x3a] sm:$0xff]
      %v2109 = vld [vmem:[%s1322 + $0x4a] sm:$0xff]
      %v2110 = vld [vmem:[%s1322 + $0x52] sm:$0xff]
      %v2111 = vld [vmem:[%s1322 + $0x62] sm:$0xff]
      %v2112 = vld [vmem:[%s1322 + $0x6a] sm:$0xff]
      %v2113 = vld [vmem:[%s1322 + $0x7a] sm:$0xff]
      %v2114 = vld [vmem:[%s1322 + $0x82] sm:$0xff]
      %v2115 = vld [vmem:[%s1322 + $0x92] sm:$0xff]
      %v2116 = vld [vmem:[%s1322 + $0x9a] sm:$0xff]
      %v2117 = vld [vmem:[%s1322 + $0xaa] sm:$0xff]
      %v2118 = vld [vmem:[%s1322 + $0xb2] sm:$0xff]
      %v2119 = vld [vmem:[%s1322 + $0xc2] sm:$0xff]
      %v2120 = vld [vmem:[%s1322 + $0xca] sm:$0xff]
      %v2121 = vld [vmem:[%s1322 + $0xda] sm:$0xff]
      %v2122 = vld [vmem:[%s1322 + $0xe2] sm:$0xff]
      %v2123 = vld [vmem:[%s1322 + $0xf2] sm:$0xff]
      %v2124 = vld [vmem:[%s1322 + $0xfa] sm:$0xff]
      %v2125 = vld [vmem:[%s1322 + $0x10a] sm:$0xff]
      %v2126 = vld [vmem:[%s1322 + $0x112] sm:$0xff]
      %v2127 = vld [vmem:[%s1322 + $0x122] sm:$0xff]
      %v2128 = vld [vmem:[%s1322 + $0x12a] sm:$0xff]
      %v2129 = vld [vmem:[%s1322 + $0x13a] sm:$0xff]
      %v2130 = vld [vmem:[%s1322 + $0x142] sm:$0xff]
      %v2131 = vld [vmem:[%s1322 + $0x152] sm:$0xff]
      %v2132 = vld [vmem:[%s1322 + $0x15a] sm:$0xff]
      %v2133 = vld [vmem:[%s1322 + $0x16a] sm:$0xff]
      %v2134 = vld [vmem:[%s1322 + $0x172] sm:$0xff]
      %s2135 = scalar_lea.vmem %s1, 20
      %v2136 = vld [vmem:[%s2135] sm:$0xf]
      %v2138 = vsel %vm282, %v2103, 0
      %v2141 = vsel %vm282, %v2104, 0
      %v2144 = vsel %vm282, %v2105, 0
      %v2147 = vsel %vm282, %v2106, 0
      %v2150 = vsel %vm282, %v2107, 0
      %v2153 = vsel %vm282, %v2108, 0
      %v2156 = vsel %vm282, %v2109, 0
      %v2159 = vsel %vm282, %v2110, 0
      %v2162 = vsel %vm282, %v2111, 0
      %v2165 = vsel %vm282, %v2112, 0
      %v2168 = vsel %vm282, %v2113, 0
      %v2171 = vsel %vm282, %v2114, 0
      %v2174 = vsel %vm282, %v2115, 0
      %v2177 = vsel %vm282, %v2116, 0
      %v2180 = vsel %vm282, %v2117, 0
      %v2183 = vsel %vm282, %v2118, 0
      %v2186 = vsel %vm282, %v2119, 0
      %v2189 = vsel %vm282, %v2120, 0
      %v2192 = vsel %vm282, %v2121, 0
      %v2195 = vsel %vm282, %v2122, 0
      %v2198 = vsel %vm282, %v2123, 0
      %v2201 = vsel %vm282, %v2124, 0
      %v2204 = vsel %vm282, %v2125, 0
      %v2207 = vsel %vm282, %v2126, 0
      %v2210 = vsel %vm282, %v2127, 0
      %v2213 = vsel %vm282, %v2128, 0
      %v2216 = vsel %vm282, %v2129, 0
      %v2219 = vsel %vm282, %v2130, 0
      %v2222 = vsel %vm282, %v2131, 0
      %v2225 = vsel %vm282, %v2132, 0
      %v2228 = vsel %vm282, %v2133, 0
      %v2231 = vsel %vm282, %v2134, 0
      %v2234 = vsel %vm379, %v2136, 0
      %2236 = vmatprep.subr.mxu0 0.0
      %2237 = vmatpush1.msra.mxu0 0.0
      %2238 = vmatprep.subr.mxu0 0.0
      %2239 = vmatpush1.msra.mxu0 0.0
      %2240 = vmatprep.subr.mxu0 0.0
      %2241 = vmatpush1.msra.mxu0 0.0
      %2242 = vmatprep.subr.mxu0 0.0
      %2243 = vmatpush1.msra.mxu0 0.0
      %2244 = vmatprep.subr.mxu0 0.0
      %2245 = vmatpush1.msra.mxu0 0.0
      %2246 = vmatprep.subr.mxu0 0.0
      %2247 = vmatpush1.msra.mxu0 0.0
      %2248 = vmatprep.subr.mxu0 0.0
      %2249 = vmatpush1.msra.mxu0 0.0
      %2250 = vmatprep.subr.mxu0 0.0
      %2251 = vmatpush1.msra.mxu0 0.0
      %2252 = vmatprep.subr.mxu0 0.0
      %2253 = vmatpush1.msra.mxu0 0.0
      %2254 = vmatprep.subr.mxu0 0.0
      %2255 = vmatpush1.msra.mxu0 0.0
      %2256 = vmatprep.subr.mxu0 0.0
      %2257 = vmatpush1.msra.mxu0 0.0
      %2258 = vmatprep.subr.mxu0 0.0
      %2259 = vmatpush1.msra.mxu0 0.0
      %2260 = vmatprep.subr.mxu0 0.0
      %2261 = vmatpush1.msra.mxu0 0.0
      %2262 = vmatprep.subr.mxu0 0.0
      %2263 = vmatpush1.msra.mxu0 0.0
      %2264 = vmatprep.subr.mxu0 0.0
      %2265 = vmatpush1.msra.mxu0 0.0
      %2266 = vmatprep.subr.mxu0 0.0
      %2267 = vmatpush1.msra.mxu0 %v2234
      %2268 = vmatprep.subr.mxu0 0.0
      %2269 = vmatpush2.msra.mxu0 0.0
      %2270 = vmatprep.subr.mxu0 0.0
      %2271 = vmatpush2.msra.mxu0 0.0
      %2272 = vmatprep.subr.mxu0 0.0
      %2273 = vmatpush2.msra.mxu0 0.0
      %2274 = vmatprep.subr.mxu0 0.0
      %2275 = vmatpush2.msra.mxu0 0.0
      %2276 = vmatprep.subr.mxu0 0.0
      %2277 = vmatpush2.msra.mxu0 0.0
      %2278 = vmatprep.subr.mxu0 0.0
      %2279 = vmatpush2.msra.mxu0 0.0
      %2280 = vmatprep.subr.mxu0 0.0
      %2281 = vmatpush2.msra.mxu0 0.0
      %2282 = vmatprep.subr.mxu0 0.0
      %2283 = vmatpush2.msra.mxu0 0.0
      %2284 = vmatprep.subr.mxu0 0.0
      %2285 = vmatpush2.msra.mxu0 0.0
      %2286 = vmatprep.subr.mxu0 0.0
      %2287 = vmatpush2.msra.mxu0 0.0
      %2288 = vmatprep.subr.mxu0 0.0
      %2289 = vmatpush2.msra.mxu0 0.0
      %2290 = vmatprep.subr.mxu0 0.0
      %2291 = vmatpush2.msra.mxu0 0.0
      %2292 = vmatprep.subr.mxu0 0.0
      %2293 = vmatpush2.msra.mxu0 0.0
      %2294 = vmatprep.subr.mxu0 0.0
      %2295 = vmatpush2.msra.mxu0 0.0
      %2296 = vmatprep.subr.mxu0 0.0
      %2297 = vmatpush2.msra.mxu0 0.0
      %2298 = vmatprep.subr.mxu0 0.0
      %2299 = vmatpush2.msra.mxu0 0.0
      %2300 = vmatprep.mubr.f32.mxu0 0.0
      %2301 = vmatmul.mubr.f32.gmra.mxu0 %v2138
      %v2302 = vpop.f32.mrf.mxu0
      %v2303 = vadd.f32 0.0, %v2302
      %v2304 = vpop.f32.mrf.mxu0
      %2305 = vmatprep.mubr.f32.mxu0 0.0
      %2306 = vmatmul.mubr.f32.gmra.mxu0 %v2141
      %v2307 = vpop.f32.mrf.mxu0
      %v2308 = vadd.f32 0.0, %v2307
      %v2309 = vpop.f32.mrf.mxu0
      %2310 = vmatprep.mubr.f32.mxu0 0.0
      %2311 = vmatmul.mubr.f32.gmra.mxu0 %v2144
      %v2312 = vpop.f32.mrf.mxu0
      %v2313 = vadd.f32 0.0, %v2312
      %v2314 = vpop.f32.mrf.mxu0
      %2315 = vmatprep.mubr.f32.mxu0 0.0
      %2316 = vmatmul.mubr.f32.gmra.mxu0 %v2147
      %v2317 = vpop.f32.mrf.mxu0
      %v2318 = vadd.f32 0.0, %v2317
      %v2319 = vpop.f32.mrf.mxu0
      %2320 = vmatprep.mubr.f32.mxu0 0.0
      %2321 = vmatmul.mubr.f32.gmra.mxu0 %v2150
      %v2322 = vpop.f32.mrf.mxu0
      %v2323 = vadd.f32 0.0, %v2322
      %v2324 = vpop.f32.mrf.mxu0
      %2325 = vmatprep.mubr.f32.mxu0 0.0
      %2326 = vmatmul.mubr.f32.gmra.mxu0 %v2153
      %v2327 = vpop.f32.mrf.mxu0
      %v2328 = vadd.f32 0.0, %v2327
      %v2329 = vpop.f32.mrf.mxu0
      %2330 = vmatprep.mubr.f32.mxu0 0.0
      %2331 = vmatmul.mubr.f32.gmra.mxu0 %v2156
      %v2332 = vpop.f32.mrf.mxu0
      %v2333 = vadd.f32 0.0, %v2332
      %v2334 = vpop.f32.mrf.mxu0
      %2335 = vmatprep.mubr.f32.mxu0 0.0
      %2336 = vmatmul.mubr.f32.gmra.mxu0 %v2159
      %v2337 = vpop.f32.mrf.mxu0
      %v2338 = vadd.f32 0.0, %v2337
      %v2339 = vpop.f32.mrf.mxu0
      %2340 = vmatprep.mubr.f32.mxu0 0.0
      %2341 = vmatmul.mubr.f32.gmra.mxu0 %v2162
      %v2342 = vpop.f32.mrf.mxu0
      %v2343 = vadd.f32 0.0, %v2342
      %v2344 = vpop.f32.mrf.mxu0
      %2345 = vmatprep.mubr.f32.mxu0 0.0
      %2346 = vmatmul.mubr.f32.gmra.mxu0 %v2165
      %v2347 = vpop.f32.mrf.mxu0
      %v2348 = vadd.f32 0.0, %v2347
      %v2349 = vpop.f32.mrf.mxu0
      %2350 = vmatprep.mubr.f32.mxu0 0.0
      %2351 = vmatmul.mubr.f32.gmra.mxu0 %v2168
      %v2352 = vpop.f32.mrf.mxu0
      %v2353 = vadd.f32 0.0, %v2352
      %v2354 = vpop.f32.mrf.mxu0
      %2355 = vmatprep.mubr.f32.mxu0 0.0
      %2356 = vmatmul.mubr.f32.gmra.mxu0 %v2171
      %v2357 = vpop.f32.mrf.mxu0
      %v2358 = vadd.f32 0.0, %v2357
      %v2359 = vpop.f32.mrf.mxu0
      %2360 = vmatprep.mubr.f32.mxu0 0.0
      %2361 = vmatmul.mubr.f32.gmra.mxu0 %v2174
      %v2362 = vpop.f32.mrf.mxu0
      %v2363 = vadd.f32 0.0, %v2362
      %v2364 = vpop.f32.mrf.mxu0
      %2365 = vmatprep.mubr.f32.mxu0 0.0
      %2366 = vmatmul.mubr.f32.gmra.mxu0 %v2177
      %v2367 = vpop.f32.mrf.mxu0
      %v2368 = vadd.f32 0.0, %v2367
      %v2369 = vpop.f32.mrf.mxu0
      %2370 = vmatprep.mubr.f32.mxu0 0.0
      %2371 = vmatmul.mubr.f32.gmra.mxu0 %v2180
      %v2372 = vpop.f32.mrf.mxu0
      %v2373 = vadd.f32 0.0, %v2372
      %v2374 = vpop.f32.mrf.mxu0
      %2375 = vmatprep.mubr.f32.mxu0 0.0
      %2376 = vmatmul.mubr.f32.gmra.mxu0 %v2183
      %v2377 = vpop.f32.mrf.mxu0
      %v2378 = vadd.f32 0.0, %v2377
      %v2379 = vpop.f32.mrf.mxu0
      %2380 = vmatprep.mubr.f32.mxu0 0.0
      %2381 = vmatmul.mubr.f32.gmra.mxu0 %v2186
      %v2382 = vpop.f32.mrf.mxu0
      %v2383 = vadd.f32 0.0, %v2382
      %v2384 = vpop.f32.mrf.mxu0
      %2385 = vmatprep.mubr.f32.mxu0 0.0
      %2386 = vmatmul.mubr.f32.gmra.mxu0 %v2189
      %v2387 = vpop.f32.mrf.mxu0
      %v2388 = vadd.f32 0.0, %v2387
      %v2389 = vpop.f32.mrf.mxu0
      %2390 = vmatprep.mubr.f32.mxu0 0.0
      %2391 = vmatmul.mubr.f32.gmra.mxu0 %v2192
      %v2392 = vpop.f32.mrf.mxu0
      %v2393 = vadd.f32 0.0, %v2392
      %v2394 = vpop.f32.mrf.mxu0
      %2395 = vmatprep.mubr.f32.mxu0 0.0
      %2396 = vmatmul.mubr.f32.gmra.mxu0 %v2195
      %v2397 = vpop.f32.mrf.mxu0
      %v2398 = vadd.f32 0.0, %v2397
      %v2399 = vpop.f32.mrf.mxu0
      %2400 = vmatprep.mubr.f32.mxu0 0.0
      %2401 = vmatmul.mubr.f32.gmra.mxu0 %v2198
      %v2402 = vpop.f32.mrf.mxu0
      %v2403 = vadd.f32 0.0, %v2402
      %v2404 = vpop.f32.mrf.mxu0
      %2405 = vmatprep.mubr.f32.mxu0 0.0
      %2406 = vmatmul.mubr.f32.gmra.mxu0 %v2201
      %v2407 = vpop.f32.mrf.mxu0
      %v2408 = vadd.f32 0.0, %v2407
      %v2409 = vpop.f32.mrf.mxu0
      %2410 = vmatprep.mubr.f32.mxu0 0.0
      %2411 = vmatmul.mubr.f32.gmra.mxu0 %v2204
      %v2412 = vpop.f32.mrf.mxu0
      %v2413 = vadd.f32 0.0, %v2412
      %v2414 = vpop.f32.mrf.mxu0
      %2415 = vmatprep.mubr.f32.mxu0 0.0
      %2416 = vmatmul.mubr.f32.gmra.mxu0 %v2207
      %v2417 = vpop.f32.mrf.mxu0
      %v2418 = vadd.f32 0.0, %v2417
      %v2419 = vpop.f32.mrf.mxu0
      %2420 = vmatprep.mubr.f32.mxu0 0.0
      %2421 = vmatmul.mubr.f32.gmra.mxu0 %v2210
      %v2422 = vpop.f32.mrf.mxu0
      %v2423 = vadd.f32 0.0, %v2422
      %v2424 = vpop.f32.mrf.mxu0
      %2425 = vmatprep.mubr.f32.mxu0 0.0
      %2426 = vmatmul.mubr.f32.gmra.mxu0 %v2213
      %v2427 = vpop.f32.mrf.mxu0
      %v2428 = vadd.f32 0.0, %v2427
      %v2429 = vpop.f32.mrf.mxu0
      %2430 = vmatprep.mubr.f32.mxu0 0.0
      %2431 = vmatmul.mubr.f32.gmra.mxu0 %v2216
      %v2432 = vpop.f32.mrf.mxu0
      %v2433 = vadd.f32 0.0, %v2432
      %v2434 = vpop.f32.mrf.mxu0
      %2435 = vmatprep.mubr.f32.mxu0 0.0
      %2436 = vmatmul.mubr.f32.gmra.mxu0 %v2219
      %v2437 = vpop.f32.mrf.mxu0
      %v2438 = vadd.f32 0.0, %v2437
      %v2439 = vpop.f32.mrf.mxu0
      %2440 = vmatprep.mubr.f32.mxu0 0.0
      %2441 = vmatmul.mubr.f32.gmra.mxu0 %v2222
      %v2442 = vpop.f32.mrf.mxu0
      %v2443 = vadd.f32 0.0, %v2442
      %v2444 = vpop.f32.mrf.mxu0
      %2445 = vmatprep.mubr.f32.mxu0 0.0
      %2446 = vmatmul.mubr.f32.gmra.mxu0 %v2225
      %v2447 = vpop.f32.mrf.mxu0
      %v2448 = vadd.f32 0.0, %v2447
      %v2449 = vpop.f32.mrf.mxu0
      %2450 = vmatprep.mubr.f32.mxu0 0.0
      %2451 = vmatmul.mubr.f32.gmra.mxu0 %v2228
      %v2452 = vpop.f32.mrf.mxu0
      %v2453 = vadd.f32 0.0, %v2452
      %v2454 = vpop.f32.mrf.mxu0
      %2455 = vmatprep.mubr.f32.mxu0 0.0
      %2456 = vmatmul.mubr.f32.gmra.mxu0 %v2231
      %v2457 = vpop.f32.mrf.mxu0
      %v2458 = vadd.f32 0.0, %v2457
      %v2459 = vpop.f32.mrf.mxu0
      %2460 = vdwg.mxu0
      %v2461 = vadd.f32 %v2071, %v2303
      %v2462 = vadd.f32 %v2072, %v2308
      %v2463 = vadd.f32 %v2073, %v2313
      %v2464 = vadd.f32 %v2074, %v2318
      %v2465 = vadd.f32 %v2075, %v2323
      %v2466 = vadd.f32 %v2076, %v2328
      %v2467 = vadd.f32 %v2077, %v2333
      %v2468 = vadd.f32 %v2078, %v2338
      %v2469 = vadd.f32 %v2079, %v2343
      %v2470 = vadd.f32 %v2080, %v2348
      %v2471 = vadd.f32 %v2081, %v2353
      %v2472 = vadd.f32 %v2082, %v2358
      %v2473 = vadd.f32 %v2083, %v2363
      %v2474 = vadd.f32 %v2084, %v2368
      %v2475 = vadd.f32 %v2085, %v2373
      %v2476 = vadd.f32 %v2086, %v2378
      %v2477 = vadd.f32 %v2087, %v2383
      %v2478 = vadd.f32 %v2088, %v2388
      %v2479 = vadd.f32 %v2089, %v2393
      %v2480 = vadd.f32 %v2090, %v2398
      %v2481 = vadd.f32 %v2091, %v2403
      %v2482 = vadd.f32 %v2092, %v2408
      %v2483 = vadd.f32 %v2093, %v2413
      %v2484 = vadd.f32 %v2094, %v2418
      %v2485 = vadd.f32 %v2095, %v2423
      %v2486 = vadd.f32 %v2096, %v2428
      %v2487 = vadd.f32 %v2097, %v2433
      %v2488 = vadd.f32 %v2098, %v2438
      %v2489 = vadd.f32 %v2099, %v2443
      %v2490 = vadd.f32 %v2100, %v2448
      %v2491 = vadd.f32 %v2101, %v2453
      %v2492 = vadd.f32 %v2102, %v2458
      %s2493 = scalar_lea.vmem %s203, 48
      %v2494 = vld [vmem:[%s2493] sm:$0xff]
      %v2495 = vld [vmem:[%s2493 + $0x8] sm:$0xff]
      %v2496 = vld [vmem:[%s2493 + $0x18] sm:$0xff]
      %v2497 = vld [vmem:[%s2493 + $0x20] sm:$0xff]
      %v2498 = vld [vmem:[%s2493 + $0x30] sm:$0xff]
      %v2499 = vld [vmem:[%s2493 + $0x38] sm:$0xff]
      %v2500 = vld [vmem:[%s2493 + $0x48] sm:$0xff]
      %v2501 = vld [vmem:[%s2493 + $0x50] sm:$0xff]
      %v2502 = vld [vmem:[%s2493 + $0x60] sm:$0xff]
      %v2503 = vld [vmem:[%s2493 + $0x68] sm:$0xff]
      %v2504 = vld [vmem:[%s2493 + $0x78] sm:$0xff]
      %v2505 = vld [vmem:[%s2493 + $0x80] sm:$0xff]
      %v2506 = vld [vmem:[%s2493 + $0x90] sm:$0xff]
      %v2507 = vld [vmem:[%s2493 + $0x98] sm:$0xff]
      %v2508 = vld [vmem:[%s2493 + $0xa8] sm:$0xff]
      %v2509 = vld [vmem:[%s2493 + $0xb0] sm:$0xff]
      %v2510 = vld [vmem:[%s2493 + $0xc0] sm:$0xff]
      %v2511 = vld [vmem:[%s2493 + $0xc8] sm:$0xff]
      %v2512 = vld [vmem:[%s2493 + $0xd8] sm:$0xff]
      %v2513 = vld [vmem:[%s2493 + $0xe0] sm:$0xff]
      %v2514 = vld [vmem:[%s2493 + $0xf0] sm:$0xff]
      %v2515 = vld [vmem:[%s2493 + $0xf8] sm:$0xff]
      %v2516 = vld [vmem:[%s2493 + $0x108] sm:$0xff]
      %v2517 = vld [vmem:[%s2493 + $0x110] sm:$0xff]
      %v2518 = vld [vmem:[%s2493 + $0x120] sm:$0xff]
      %v2519 = vld [vmem:[%s2493 + $0x128] sm:$0xff]
      %v2520 = vld [vmem:[%s2493 + $0x138] sm:$0xff]
      %v2521 = vld [vmem:[%s2493 + $0x140] sm:$0xff]
      %v2522 = vld [vmem:[%s2493 + $0x150] sm:$0xff]
      %v2523 = vld [vmem:[%s2493 + $0x158] sm:$0xff]
      %v2524 = vld [vmem:[%s2493 + $0x168] sm:$0xff]
      %v2525 = vld [vmem:[%s2493 + $0x170] sm:$0xff]
      %s2526 = scalar_lea.vmem %s1, 24
      %v2527 = vld [vmem:[%s2526] sm:$0xf]
      %v2529 = vsel %vm282, %v2494, 0
      %v2532 = vsel %vm282, %v2495, 0
      %v2535 = vsel %vm282, %v2496, 0
      %v2538 = vsel %vm282, %v2497, 0
      %v2541 = vsel %vm282, %v2498, 0
      %v2544 = vsel %vm282, %v2499, 0
      %v2547 = vsel %vm282, %v2500, 0
      %v2550 = vsel %vm282, %v2501, 0
      %v2553 = vsel %vm282, %v2502, 0
      %v2556 = vsel %vm282, %v2503, 0
      %v2559 = vsel %vm282, %v2504, 0
      %v2562 = vsel %vm282, %v2505, 0
      %v2565 = vsel %vm282, %v2506, 0
      %v2568 = vsel %vm282, %v2507, 0
      %v2571 = vsel %vm282, %v2508, 0
      %v2574 = vsel %vm282, %v2509, 0
      %v2577 = vsel %vm282, %v2510, 0
      %v2580 = vsel %vm282, %v2511, 0
      %v2583 = vsel %vm282, %v2512, 0
      %v2586 = vsel %vm282, %v2513, 0
      %v2589 = vsel %vm282, %v2514, 0
      %v2592 = vsel %vm282, %v2515, 0
      %v2595 = vsel %vm282, %v2516, 0
      %v2598 = vsel %vm282, %v2517, 0
      %v2601 = vsel %vm282, %v2518, 0
      %v2604 = vsel %vm282, %v2519, 0
      %v2607 = vsel %vm282, %v2520, 0
      %v2610 = vsel %vm282, %v2521, 0
      %v2613 = vsel %vm282, %v2522, 0
      %v2616 = vsel %vm282, %v2523, 0
      %v2619 = vsel %vm282, %v2524, 0
      %v2622 = vsel %vm282, %v2525, 0
      %v2625 = vsel %vm379, %v2527, 0
      %2627 = vmatprep.subr.mxu0 0.0
      %2628 = vmatpush1.msra.mxu0 0.0
      %2629 = vmatprep.subr.mxu0 0.0
      %2630 = vmatpush1.msra.mxu0 0.0
      %2631 = vmatprep.subr.mxu0 0.0
      %2632 = vmatpush1.msra.mxu0 0.0
      %2633 = vmatprep.subr.mxu0 0.0
      %2634 = vmatpush1.msra.mxu0 0.0
      %2635 = vmatprep.subr.mxu0 0.0
      %2636 = vmatpush1.msra.mxu0 0.0
      %2637 = vmatprep.subr.mxu0 0.0
      %2638 = vmatpush1.msra.mxu0 0.0
      %2639 = vmatprep.subr.mxu0 0.0
      %2640 = vmatpush1.msra.mxu0 0.0
      %2641 = vmatprep.subr.mxu0 0.0
      %2642 = vmatpush1.msra.mxu0 0.0
      %2643 = vmatprep.subr.mxu0 0.0
      %2644 = vmatpush1.msra.mxu0 0.0
      %2645 = vmatprep.subr.mxu0 0.0
      %2646 = vmatpush1.msra.mxu0 0.0
      %2647 = vmatprep.subr.mxu0 0.0
      %2648 = vmatpush1.msra.mxu0 0.0
      %2649 = vmatprep.subr.mxu0 0.0
      %2650 = vmatpush1.msra.mxu0 0.0
      %2651 = vmatprep.subr.mxu0 0.0
      %2652 = vmatpush1.msra.mxu0 0.0
      %2653 = vmatprep.subr.mxu0 0.0
      %2654 = vmatpush1.msra.mxu0 0.0
      %2655 = vmatprep.subr.mxu0 0.0
      %2656 = vmatpush1.msra.mxu0 0.0
      %2657 = vmatprep.subr.mxu0 0.0
      %2658 = vmatpush1.msra.mxu0 %v2625
      %2659 = vmatprep.subr.mxu0 0.0
      %2660 = vmatpush2.msra.mxu0 0.0
      %2661 = vmatprep.subr.mxu0 0.0
      %2662 = vmatpush2.msra.mxu0 0.0
      %2663 = vmatprep.subr.mxu0 0.0
      %2664 = vmatpush2.msra.mxu0 0.0
      %2665 = vmatprep.subr.mxu0 0.0
      %2666 = vmatpush2.msra.mxu0 0.0
      %2667 = vmatprep.subr.mxu0 0.0
      %2668 = vmatpush2.msra.mxu0 0.0
      %2669 = vmatprep.subr.mxu0 0.0
      %2670 = vmatpush2.msra.mxu0 0.0
      %2671 = vmatprep.subr.mxu0 0.0
      %2672 = vmatpush2.msra.mxu0 0.0
      %2673 = vmatprep.subr.mxu0 0.0
      %2674 = vmatpush2.msra.mxu0 0.0
      %2675 = vmatprep.subr.mxu0 0.0
      %2676 = vmatpush2.msra.mxu0 0.0
      %2677 = vmatprep.subr.mxu0 0.0
      %2678 = vmatpush2.msra.mxu0 0.0
      %2679 = vmatprep.subr.mxu0 0.0
      %2680 = vmatpush2.msra.mxu0 0.0
      %2681 = vmatprep.subr.mxu0 0.0
      %2682 = vmatpush2.msra.mxu0 0.0
      %2683 = vmatprep.subr.mxu0 0.0
      %2684 = vmatpush2.msra.mxu0 0.0
      %2685 = vmatprep.subr.mxu0 0.0
      %2686 = vmatpush2.msra.mxu0 0.0
      %2687 = vmatprep.subr.mxu0 0.0
      %2688 = vmatpush2.msra.mxu0 0.0
      %2689 = vmatprep.subr.mxu0 0.0
      %2690 = vmatpush2.msra.mxu0 0.0
      %2691 = vmatprep.mubr.f32.mxu0 0.0
      %2692 = vmatmul.mubr.f32.gmra.mxu0 %v2529
      %v2693 = vpop.f32.mrf.mxu0
      %v2694 = vadd.f32 0.0, %v2693
      %v2695 = vpop.f32.mrf.mxu0
      %2696 = vmatprep.mubr.f32.mxu0 0.0
      %2697 = vmatmul.mubr.f32.gmra.mxu0 %v2532
      %v2698 = vpop.f32.mrf.mxu0
      %v2699 = vadd.f32 0.0, %v2698
      %v2700 = vpop.f32.mrf.mxu0
      %2701 = vmatprep.mubr.f32.mxu0 0.0
      %2702 = vmatmul.mubr.f32.gmra.mxu0 %v2535
      %v2703 = vpop.f32.mrf.mxu0
      %v2704 = vadd.f32 0.0, %v2703
      %v2705 = vpop.f32.mrf.mxu0
      %2706 = vmatprep.mubr.f32.mxu0 0.0
      %2707 = vmatmul.mubr.f32.gmra.mxu0 %v2538
      %v2708 = vpop.f32.mrf.mxu0
      %v2709 = vadd.f32 0.0, %v2708
      %v2710 = vpop.f32.mrf.mxu0
      %2711 = vmatprep.mubr.f32.mxu0 0.0
      %2712 = vmatmul.mubr.f32.gmra.mxu0 %v2541
      %v2713 = vpop.f32.mrf.mxu0
      %v2714 = vadd.f32 0.0, %v2713
      %v2715 = vpop.f32.mrf.mxu0
      %2716 = vmatprep.mubr.f32.mxu0 0.0
      %2717 = vmatmul.mubr.f32.gmra.mxu0 %v2544
      %v2718 = vpop.f32.mrf.mxu0
      %v2719 = vadd.f32 0.0, %v2718
      %v2720 = vpop.f32.mrf.mxu0
      %2721 = vmatprep.mubr.f32.mxu0 0.0
      %2722 = vmatmul.mubr.f32.gmra.mxu0 %v2547
      %v2723 = vpop.f32.mrf.mxu0
      %v2724 = vadd.f32 0.0, %v2723
      %v2725 = vpop.f32.mrf.mxu0
      %2726 = vmatprep.mubr.f32.mxu0 0.0
      %2727 = vmatmul.mubr.f32.gmra.mxu0 %v2550
      %v2728 = vpop.f32.mrf.mxu0
      %v2729 = vadd.f32 0.0, %v2728
      %v2730 = vpop.f32.mrf.mxu0
      %2731 = vmatprep.mubr.f32.mxu0 0.0
      %2732 = vmatmul.mubr.f32.gmra.mxu0 %v2553
      %v2733 = vpop.f32.mrf.mxu0
      %v2734 = vadd.f32 0.0, %v2733
      %v2735 = vpop.f32.mrf.mxu0
      %2736 = vmatprep.mubr.f32.mxu0 0.0
      %2737 = vmatmul.mubr.f32.gmra.mxu0 %v2556
      %v2738 = vpop.f32.mrf.mxu0
      %v2739 = vadd.f32 0.0, %v2738
      %v2740 = vpop.f32.mrf.mxu0
      %2741 = vmatprep.mubr.f32.mxu0 0.0
      %2742 = vmatmul.mubr.f32.gmra.mxu0 %v2559
      %v2743 = vpop.f32.mrf.mxu0
      %v2744 = vadd.f32 0.0, %v2743
      %v2745 = vpop.f32.mrf.mxu0
      %2746 = vmatprep.mubr.f32.mxu0 0.0
      %2747 = vmatmul.mubr.f32.gmra.mxu0 %v2562
      %v2748 = vpop.f32.mrf.mxu0
      %v2749 = vadd.f32 0.0, %v2748
      %v2750 = vpop.f32.mrf.mxu0
      %2751 = vmatprep.mubr.f32.mxu0 0.0
      %2752 = vmatmul.mubr.f32.gmra.mxu0 %v2565
      %v2753 = vpop.f32.mrf.mxu0
      %v2754 = vadd.f32 0.0, %v2753
      %v2755 = vpop.f32.mrf.mxu0
      %2756 = vmatprep.mubr.f32.mxu0 0.0
      %2757 = vmatmul.mubr.f32.gmra.mxu0 %v2568
      %v2758 = vpop.f32.mrf.mxu0
      %v2759 = vadd.f32 0.0, %v2758
      %v2760 = vpop.f32.mrf.mxu0
      %2761 = vmatprep.mubr.f32.mxu0 0.0
      %2762 = vmatmul.mubr.f32.gmra.mxu0 %v2571
      %v2763 = vpop.f32.mrf.mxu0
      %v2764 = vadd.f32 0.0, %v2763
      %v2765 = vpop.f32.mrf.mxu0
      %2766 = vmatprep.mubr.f32.mxu0 0.0
      %2767 = vmatmul.mubr.f32.gmra.mxu0 %v2574
      %v2768 = vpop.f32.mrf.mxu0
      %v2769 = vadd.f32 0.0, %v2768
      %v2770 = vpop.f32.mrf.mxu0
      %2771 = vmatprep.mubr.f32.mxu0 0.0
      %2772 = vmatmul.mubr.f32.gmra.mxu0 %v2577
      %v2773 = vpop.f32.mrf.mxu0
      %v2774 = vadd.f32 0.0, %v2773
      %v2775 = vpop.f32.mrf.mxu0
      %2776 = vmatprep.mubr.f32.mxu0 0.0
      %2777 = vmatmul.mubr.f32.gmra.mxu0 %v2580
      %v2778 = vpop.f32.mrf.mxu0
      %v2779 = vadd.f32 0.0, %v2778
      %v2780 = vpop.f32.mrf.mxu0
      %2781 = vmatprep.mubr.f32.mxu0 0.0
      %2782 = vmatmul.mubr.f32.gmra.mxu0 %v2583
      %v2783 = vpop.f32.mrf.mxu0
      %v2784 = vadd.f32 0.0, %v2783
      %v2785 = vpop.f32.mrf.mxu0
      %2786 = vmatprep.mubr.f32.mxu0 0.0
      %2787 = vmatmul.mubr.f32.gmra.mxu0 %v2586
      %v2788 = vpop.f32.mrf.mxu0
      %v2789 = vadd.f32 0.0, %v2788
      %v2790 = vpop.f32.mrf.mxu0
      %2791 = vmatprep.mubr.f32.mxu0 0.0
      %2792 = vmatmul.mubr.f32.gmra.mxu0 %v2589
      %v2793 = vpop.f32.mrf.mxu0
      %v2794 = vadd.f32 0.0, %v2793
      %v2795 = vpop.f32.mrf.mxu0
      %2796 = vmatprep.mubr.f32.mxu0 0.0
      %2797 = vmatmul.mubr.f32.gmra.mxu0 %v2592
      %v2798 = vpop.f32.mrf.mxu0
      %v2799 = vadd.f32 0.0, %v2798
      %v2800 = vpop.f32.mrf.mxu0
      %2801 = vmatprep.mubr.f32.mxu0 0.0
      %2802 = vmatmul.mubr.f32.gmra.mxu0 %v2595
      %v2803 = vpop.f32.mrf.mxu0
      %v2804 = vadd.f32 0.0, %v2803
      %v2805 = vpop.f32.mrf.mxu0
      %2806 = vmatprep.mubr.f32.mxu0 0.0
      %2807 = vmatmul.mubr.f32.gmra.mxu0 %v2598
      %v2808 = vpop.f32.mrf.mxu0
      %v2809 = vadd.f32 0.0, %v2808
      %v2810 = vpop.f32.mrf.mxu0
      %2811 = vmatprep.mubr.f32.mxu0 0.0
      %2812 = vmatmul.mubr.f32.gmra.mxu0 %v2601
      %v2813 = vpop.f32.mrf.mxu0
      %v2814 = vadd.f32 0.0, %v2813
      %v2815 = vpop.f32.mrf.mxu0
      %2816 = vmatprep.mubr.f32.mxu0 0.0
      %2817 = vmatmul.mubr.f32.gmra.mxu0 %v2604
      %v2818 = vpop.f32.mrf.mxu0
      %v2819 = vadd.f32 0.0, %v2818
      %v2820 = vpop.f32.mrf.mxu0
      %2821 = vmatprep.mubr.f32.mxu0 0.0
      %2822 = vmatmul.mubr.f32.gmra.mxu0 %v2607
      %v2823 = vpop.f32.mrf.mxu0
      %v2824 = vadd.f32 0.0, %v2823
      %v2825 = vpop.f32.mrf.mxu0
      %2826 = vmatprep.mubr.f32.mxu0 0.0
      %2827 = vmatmul.mubr.f32.gmra.mxu0 %v2610
      %v2828 = vpop.f32.mrf.mxu0
      %v2829 = vadd.f32 0.0, %v2828
      %v2830 = vpop.f32.mrf.mxu0
      %2831 = vmatprep.mubr.f32.mxu0 0.0
      %2832 = vmatmul.mubr.f32.gmra.mxu0 %v2613
      %v2833 = vpop.f32.mrf.mxu0
      %v2834 = vadd.f32 0.0, %v2833
      %v2835 = vpop.f32.mrf.mxu0
      %2836 = vmatprep.mubr.f32.mxu0 0.0
      %2837 = vmatmul.mubr.f32.gmra.mxu0 %v2616
      %v2838 = vpop.f32.mrf.mxu0
      %v2839 = vadd.f32 0.0, %v2838
      %v2840 = vpop.f32.mrf.mxu0
      %2841 = vmatprep.mubr.f32.mxu0 0.0
      %2842 = vmatmul.mubr.f32.gmra.mxu0 %v2619
      %v2843 = vpop.f32.mrf.mxu0
      %v2844 = vadd.f32 0.0, %v2843
      %v2845 = vpop.f32.mrf.mxu0
      %2846 = vmatprep.mubr.f32.mxu0 0.0
      %2847 = vmatmul.mubr.f32.gmra.mxu0 %v2622
      %v2848 = vpop.f32.mrf.mxu0
      %v2849 = vadd.f32 0.0, %v2848
      %v2850 = vpop.f32.mrf.mxu0
      %2851 = vdwg.mxu0
      %v2852 = vadd.f32 %v2461, %v2694
      %v2853 = vadd.f32 %v2462, %v2699
      %v2854 = vadd.f32 %v2463, %v2704
      %v2855 = vadd.f32 %v2464, %v2709
      %v2856 = vadd.f32 %v2465, %v2714
      %v2857 = vadd.f32 %v2466, %v2719
      %v2858 = vadd.f32 %v2467, %v2724
      %v2859 = vadd.f32 %v2468, %v2729
      %v2860 = vadd.f32 %v2469, %v2734
      %v2861 = vadd.f32 %v2470, %v2739
      %v2862 = vadd.f32 %v2471, %v2744
      %v2863 = vadd.f32 %v2472, %v2749
      %v2864 = vadd.f32 %v2473, %v2754
      %v2865 = vadd.f32 %v2474, %v2759
      %v2866 = vadd.f32 %v2475, %v2764
      %v2867 = vadd.f32 %v2476, %v2769
      %v2868 = vadd.f32 %v2477, %v2774
      %v2869 = vadd.f32 %v2478, %v2779
      %v2870 = vadd.f32 %v2479, %v2784
      %v2871 = vadd.f32 %v2480, %v2789
      %v2872 = vadd.f32 %v2481, %v2794
      %v2873 = vadd.f32 %v2482, %v2799
      %v2874 = vadd.f32 %v2483, %v2804
      %v2875 = vadd.f32 %v2484, %v2809
      %v2876 = vadd.f32 %v2485, %v2814
      %v2877 = vadd.f32 %v2486, %v2819
      %v2878 = vadd.f32 %v2487, %v2824
      %v2879 = vadd.f32 %v2488, %v2829
      %v2880 = vadd.f32 %v2489, %v2834
      %v2881 = vadd.f32 %v2490, %v2839
      %v2882 = vadd.f32 %v2491, %v2844
      %v2883 = vadd.f32 %v2492, %v2849
      %v2884 = vld [vmem:[%s2493 + $0x1] sm:$0xff]
      %v2885 = vld [vmem:[%s2493 + $0x9] sm:$0xff]
      %v2886 = vld [vmem:[%s2493 + $0x19] sm:$0xff]
      %v2887 = vld [vmem:[%s2493 + $0x21] sm:$0xff]
      %v2888 = vld [vmem:[%s2493 + $0x31] sm:$0xff]
      %v2889 = vld [vmem:[%s2493 + $0x39] sm:$0xff]
      %v2890 = vld [vmem:[%s2493 + $0x49] sm:$0xff]
      %v2891 = vld [vmem:[%s2493 + $0x51] sm:$0xff]
      %v2892 = vld [vmem:[%s2493 + $0x61] sm:$0xff]
      %v2893 = vld [vmem:[%s2493 + $0x69] sm:$0xff]
      %v2894 = vld [vmem:[%s2493 + $0x79] sm:$0xff]
      %v2895 = vld [vmem:[%s2493 + $0x81] sm:$0xff]
      %v2896 = vld [vmem:[%s2493 + $0x91] sm:$0xff]
      %v2897 = vld [vmem:[%s2493 + $0x99] sm:$0xff]
      %v2898 = vld [vmem:[%s2493 + $0xa9] sm:$0xff]
      %v2899 = vld [vmem:[%s2493 + $0xb1] sm:$0xff]
      %v2900 = vld [vmem:[%s2493 + $0xc1] sm:$0xff]
      %v2901 = vld [vmem:[%s2493 + $0xc9] sm:$0xff]
      %v2902 = vld [vmem:[%s2493 + $0xd9] sm:$0xff]
      %v2903 = vld [vmem:[%s2493 + $0xe1] sm:$0xff]
      %v2904 = vld [vmem:[%s2493 + $0xf1] sm:$0xff]
      %v2905 = vld [vmem:[%s2493 + $0xf9] sm:$0xff]
      %v2906 = vld [vmem:[%s2493 + $0x109] sm:$0xff]
      %v2907 = vld [vmem:[%s2493 + $0x111] sm:$0xff]
      %v2908 = vld [vmem:[%s2493 + $0x121] sm:$0xff]
      %v2909 = vld [vmem:[%s2493 + $0x129] sm:$0xff]
      %v2910 = vld [vmem:[%s2493 + $0x139] sm:$0xff]
      %v2911 = vld [vmem:[%s2493 + $0x141] sm:$0xff]
      %v2912 = vld [vmem:[%s2493 + $0x151] sm:$0xff]
      %v2913 = vld [vmem:[%s2493 + $0x159] sm:$0xff]
      %v2914 = vld [vmem:[%s2493 + $0x169] sm:$0xff]
      %v2915 = vld [vmem:[%s2493 + $0x171] sm:$0xff]
      %s2916 = scalar_lea.vmem %s1, 28
      %v2917 = vld [vmem:[%s2916] sm:$0xf]
      %v2919 = vsel %vm282, %v2884, 0
      %v2922 = vsel %vm282, %v2885, 0
      %v2925 = vsel %vm282, %v2886, 0
      %v2928 = vsel %vm282, %v2887, 0
      %v2931 = vsel %vm282, %v2888, 0
      %v2934 = vsel %vm282, %v2889, 0
      %v2937 = vsel %vm282, %v2890, 0
      %v2940 = vsel %vm282, %v2891, 0
      %v2943 = vsel %vm282, %v2892, 0
      %v2946 = vsel %vm282, %v2893, 0
      %v2949 = vsel %vm282, %v2894, 0
      %v2952 = vsel %vm282, %v2895, 0
      %v2955 = vsel %vm282, %v2896, 0
      %v2958 = vsel %vm282, %v2897, 0
      %v2961 = vsel %vm282, %v2898, 0
      %v2964 = vsel %vm282, %v2899, 0
      %v2967 = vsel %vm282, %v2900, 0
      %v2970 = vsel %vm282, %v2901, 0
      %v2973 = vsel %vm282, %v2902, 0
      %v2976 = vsel %vm282, %v2903, 0
      %v2979 = vsel %vm282, %v2904, 0
      %v2982 = vsel %vm282, %v2905, 0
      %v2985 = vsel %vm282, %v2906, 0
      %v2988 = vsel %vm282, %v2907, 0
      %v2991 = vsel %vm282, %v2908, 0
      %v2994 = vsel %vm282, %v2909, 0
      %v2997 = vsel %vm282, %v2910, 0
      %v3000 = vsel %vm282, %v2911, 0
      %v3003 = vsel %vm282, %v2912, 0
      %v3006 = vsel %vm282, %v2913, 0
      %v3009 = vsel %vm282, %v2914, 0
      %v3012 = vsel %vm282, %v2915, 0
      %v3015 = vsel %vm379, %v2917, 0
      %3017 = vmatprep.subr.mxu0 0.0
      %3018 = vmatpush1.msra.mxu0 0.0
      %3019 = vmatprep.subr.mxu0 0.0
      %3020 = vmatpush1.msra.mxu0 0.0
      %3021 = vmatprep.subr.mxu0 0.0
      %3022 = vmatpush1.msra.mxu0 0.0
      %3023 = vmatprep.subr.mxu0 0.0
      %3024 = vmatpush1.msra.mxu0 0.0
      %3025 = vmatprep.subr.mxu0 0.0
      %3026 = vmatpush1.msra.mxu0 0.0
      %3027 = vmatprep.subr.mxu0 0.0
      %3028 = vmatpush1.msra.mxu0 0.0
      %3029 = vmatprep.subr.mxu0 0.0
      %3030 = vmatpush1.msra.mxu0 0.0
      %3031 = vmatprep.subr.mxu0 0.0
      %3032 = vmatpush1.msra.mxu0 0.0
      %3033 = vmatprep.subr.mxu0 0.0
      %3034 = vmatpush1.msra.mxu0 0.0
      %3035 = vmatprep.subr.mxu0 0.0
      %3036 = vmatpush1.msra.mxu0 0.0
      %3037 = vmatprep.subr.mxu0 0.0
      %3038 = vmatpush1.msra.mxu0 0.0
      %3039 = vmatprep.subr.mxu0 0.0
      %3040 = vmatpush1.msra.mxu0 0.0
      %3041 = vmatprep.subr.mxu0 0.0
      %3042 = vmatpush1.msra.mxu0 0.0
      %3043 = vmatprep.subr.mxu0 0.0
      %3044 = vmatpush1.msra.mxu0 0.0
      %3045 = vmatprep.subr.mxu0 0.0
      %3046 = vmatpush1.msra.mxu0 0.0
      %3047 = vmatprep.subr.mxu0 0.0
      %3048 = vmatpush1.msra.mxu0 %v3015
      %3049 = vmatprep.subr.mxu0 0.0
      %3050 = vmatpush2.msra.mxu0 0.0
      %3051 = vmatprep.subr.mxu0 0.0
      %3052 = vmatpush2.msra.mxu0 0.0
      %3053 = vmatprep.subr.mxu0 0.0
      %3054 = vmatpush2.msra.mxu0 0.0
      %3055 = vmatprep.subr.mxu0 0.0
      %3056 = vmatpush2.msra.mxu0 0.0
      %3057 = vmatprep.subr.mxu0 0.0
      %3058 = vmatpush2.msra.mxu0 0.0
      %3059 = vmatprep.subr.mxu0 0.0
      %3060 = vmatpush2.msra.mxu0 0.0
      %3061 = vmatprep.subr.mxu0 0.0
      %3062 = vmatpush2.msra.mxu0 0.0
      %3063 = vmatprep.subr.mxu0 0.0
      %3064 = vmatpush2.msra.mxu0 0.0
      %3065 = vmatprep.subr.mxu0 0.0
      %3066 = vmatpush2.msra.mxu0 0.0
      %3067 = vmatprep.subr.mxu0 0.0
      %3068 = vmatpush2.msra.mxu0 0.0
      %3069 = vmatprep.subr.mxu0 0.0
      %3070 = vmatpush2.msra.mxu0 0.0
      %3071 = vmatprep.subr.mxu0 0.0
      %3072 = vmatpush2.msra.mxu0 0.0
      %3073 = vmatprep.subr.mxu0 0.0
      %3074 = vmatpush2.msra.mxu0 0.0
      %3075 = vmatprep.subr.mxu0 0.0
      %3076 = vmatpush2.msra.mxu0 0.0
      %3077 = vmatprep.subr.mxu0 0.0
      %3078 = vmatpush2.msra.mxu0 0.0
      %3079 = vmatprep.subr.mxu0 0.0
      %3080 = vmatpush2.msra.mxu0 0.0
      %3081 = vmatprep.mubr.f32.mxu0 0.0
      %3082 = vmatmul.mubr.f32.gmra.mxu0 %v2919
      %v3083 = vpop.f32.mrf.mxu0
      %v3084 = vadd.f32 0.0, %v3083
      %v3085 = vpop.f32.mrf.mxu0
      %3086 = vmatprep.mubr.f32.mxu0 0.0
      %3087 = vmatmul.mubr.f32.gmra.mxu0 %v2922
      %v3088 = vpop.f32.mrf.mxu0
      %v3089 = vadd.f32 0.0, %v3088
      %v3090 = vpop.f32.mrf.mxu0
      %3091 = vmatprep.mubr.f32.mxu0 0.0
      %3092 = vmatmul.mubr.f32.gmra.mxu0 %v2925
      %v3093 = vpop.f32.mrf.mxu0
      %v3094 = vadd.f32 0.0, %v3093
      %v3095 = vpop.f32.mrf.mxu0
      %3096 = vmatprep.mubr.f32.mxu0 0.0
      %3097 = vmatmul.mubr.f32.gmra.mxu0 %v2928
      %v3098 = vpop.f32.mrf.mxu0
      %v3099 = vadd.f32 0.0, %v3098
      %v3100 = vpop.f32.mrf.mxu0
      %3101 = vmatprep.mubr.f32.mxu0 0.0
      %3102 = vmatmul.mubr.f32.gmra.mxu0 %v2931
      %v3103 = vpop.f32.mrf.mxu0
      %v3104 = vadd.f32 0.0, %v3103
      %v3105 = vpop.f32.mrf.mxu0
      %3106 = vmatprep.mubr.f32.mxu0 0.0
      %3107 = vmatmul.mubr.f32.gmra.mxu0 %v2934
      %v3108 = vpop.f32.mrf.mxu0
      %v3109 = vadd.f32 0.0, %v3108
      %v3110 = vpop.f32.mrf.mxu0
      %3111 = vmatprep.mubr.f32.mxu0 0.0
      %3112 = vmatmul.mubr.f32.gmra.mxu0 %v2937
      %v3113 = vpop.f32.mrf.mxu0
      %v3114 = vadd.f32 0.0, %v3113
      %v3115 = vpop.f32.mrf.mxu0
      %3116 = vmatprep.mubr.f32.mxu0 0.0
      %3117 = vmatmul.mubr.f32.gmra.mxu0 %v2940
      %v3118 = vpop.f32.mrf.mxu0
      %v3119 = vadd.f32 0.0, %v3118
      %v3120 = vpop.f32.mrf.mxu0
      %3121 = vmatprep.mubr.f32.mxu0 0.0
      %3122 = vmatmul.mubr.f32.gmra.mxu0 %v2943
      %v3123 = vpop.f32.mrf.mxu0
      %v3124 = vadd.f32 0.0, %v3123
      %v3125 = vpop.f32.mrf.mxu0
      %3126 = vmatprep.mubr.f32.mxu0 0.0
      %3127 = vmatmul.mubr.f32.gmra.mxu0 %v2946
      %v3128 = vpop.f32.mrf.mxu0
      %v3129 = vadd.f32 0.0, %v3128
      %v3130 = vpop.f32.mrf.mxu0
      %3131 = vmatprep.mubr.f32.mxu0 0.0
      %3132 = vmatmul.mubr.f32.gmra.mxu0 %v2949
      %v3133 = vpop.f32.mrf.mxu0
      %v3134 = vadd.f32 0.0, %v3133
      %v3135 = vpop.f32.mrf.mxu0
      %3136 = vmatprep.mubr.f32.mxu0 0.0
      %3137 = vmatmul.mubr.f32.gmra.mxu0 %v2952
      %v3138 = vpop.f32.mrf.mxu0
      %v3139 = vadd.f32 0.0, %v3138
      %v3140 = vpop.f32.mrf.mxu0
      %3141 = vmatprep.mubr.f32.mxu0 0.0
      %3142 = vmatmul.mubr.f32.gmra.mxu0 %v2955
      %v3143 = vpop.f32.mrf.mxu0
      %v3144 = vadd.f32 0.0, %v3143
      %v3145 = vpop.f32.mrf.mxu0
      %3146 = vmatprep.mubr.f32.mxu0 0.0
      %3147 = vmatmul.mubr.f32.gmra.mxu0 %v2958
      %v3148 = vpop.f32.mrf.mxu0
      %v3149 = vadd.f32 0.0, %v3148
      %v3150 = vpop.f32.mrf.mxu0
      %3151 = vmatprep.mubr.f32.mxu0 0.0
      %3152 = vmatmul.mubr.f32.gmra.mxu0 %v2961
      %v3153 = vpop.f32.mrf.mxu0
      %v3154 = vadd.f32 0.0, %v3153
      %v3155 = vpop.f32.mrf.mxu0
      %3156 = vmatprep.mubr.f32.mxu0 0.0
      %3157 = vmatmul.mubr.f32.gmra.mxu0 %v2964
      %v3158 = vpop.f32.mrf.mxu0
      %v3159 = vadd.f32 0.0, %v3158
      %v3160 = vpop.f32.mrf.mxu0
      %3161 = vmatprep.mubr.f32.mxu0 0.0
      %3162 = vmatmul.mubr.f32.gmra.mxu0 %v2967
      %v3163 = vpop.f32.mrf.mxu0
      %v3164 = vadd.f32 0.0, %v3163
      %v3165 = vpop.f32.mrf.mxu0
      %3166 = vmatprep.mubr.f32.mxu0 0.0
      %3167 = vmatmul.mubr.f32.gmra.mxu0 %v2970
      %v3168 = vpop.f32.mrf.mxu0
      %v3169 = vadd.f32 0.0, %v3168
      %v3170 = vpop.f32.mrf.mxu0
      %3171 = vmatprep.mubr.f32.mxu0 0.0
      %3172 = vmatmul.mubr.f32.gmra.mxu0 %v2973
      %v3173 = vpop.f32.mrf.mxu0
      %v3174 = vadd.f32 0.0, %v3173
      %v3175 = vpop.f32.mrf.mxu0
      %3176 = vmatprep.mubr.f32.mxu0 0.0
      %3177 = vmatmul.mubr.f32.gmra.mxu0 %v2976
      %v3178 = vpop.f32.mrf.mxu0
      %v3179 = vadd.f32 0.0, %v3178
      %v3180 = vpop.f32.mrf.mxu0
      %3181 = vmatprep.mubr.f32.mxu0 0.0
      %3182 = vmatmul.mubr.f32.gmra.mxu0 %v2979
      %v3183 = vpop.f32.mrf.mxu0
      %v3184 = vadd.f32 0.0, %v3183
      %v3185 = vpop.f32.mrf.mxu0
      %3186 = vmatprep.mubr.f32.mxu0 0.0
      %3187 = vmatmul.mubr.f32.gmra.mxu0 %v2982
      %v3188 = vpop.f32.mrf.mxu0
      %v3189 = vadd.f32 0.0, %v3188
      %v3190 = vpop.f32.mrf.mxu0
      %3191 = vmatprep.mubr.f32.mxu0 0.0
      %3192 = vmatmul.mubr.f32.gmra.mxu0 %v2985
      %v3193 = vpop.f32.mrf.mxu0
      %v3194 = vadd.f32 0.0, %v3193
      %v3195 = vpop.f32.mrf.mxu0
      %3196 = vmatprep.mubr.f32.mxu0 0.0
      %3197 = vmatmul.mubr.f32.gmra.mxu0 %v2988
      %v3198 = vpop.f32.mrf.mxu0
      %v3199 = vadd.f32 0.0, %v3198
      %v3200 = vpop.f32.mrf.mxu0
      %3201 = vmatprep.mubr.f32.mxu0 0.0
      %3202 = vmatmul.mubr.f32.gmra.mxu0 %v2991
      %v3203 = vpop.f32.mrf.mxu0
      %v3204 = vadd.f32 0.0, %v3203
      %v3205 = vpop.f32.mrf.mxu0
      %3206 = vmatprep.mubr.f32.mxu0 0.0
      %3207 = vmatmul.mubr.f32.gmra.mxu0 %v2994
      %v3208 = vpop.f32.mrf.mxu0
      %v3209 = vadd.f32 0.0, %v3208
      %v3210 = vpop.f32.mrf.mxu0
      %3211 = vmatprep.mubr.f32.mxu0 0.0
      %3212 = vmatmul.mubr.f32.gmra.mxu0 %v2997
      %v3213 = vpop.f32.mrf.mxu0
      %v3214 = vadd.f32 0.0, %v3213
      %v3215 = vpop.f32.mrf.mxu0
      %3216 = vmatprep.mubr.f32.mxu0 0.0
      %3217 = vmatmul.mubr.f32.gmra.mxu0 %v3000
      %v3218 = vpop.f32.mrf.mxu0
      %v3219 = vadd.f32 0.0, %v3218
      %v3220 = vpop.f32.mrf.mxu0
      %3221 = vmatprep.mubr.f32.mxu0 0.0
      %3222 = vmatmul.mubr.f32.gmra.mxu0 %v3003
      %v3223 = vpop.f32.mrf.mxu0
      %v3224 = vadd.f32 0.0, %v3223
      %v3225 = vpop.f32.mrf.mxu0
      %3226 = vmatprep.mubr.f32.mxu0 0.0
      %3227 = vmatmul.mubr.f32.gmra.mxu0 %v3006
      %v3228 = vpop.f32.mrf.mxu0
      %v3229 = vadd.f32 0.0, %v3228
      %v3230 = vpop.f32.mrf.mxu0
      %3231 = vmatprep.mubr.f32.mxu0 0.0
      %3232 = vmatmul.mubr.f32.gmra.mxu0 %v3009
      %v3233 = vpop.f32.mrf.mxu0
      %v3234 = vadd.f32 0.0, %v3233
      %v3235 = vpop.f32.mrf.mxu0
      %3236 = vmatprep.mubr.f32.mxu0 0.0
      %3237 = vmatmul.mubr.f32.gmra.mxu0 %v3012
      %v3238 = vpop.f32.mrf.mxu0
      %v3239 = vadd.f32 0.0, %v3238
      %v3240 = vpop.f32.mrf.mxu0
      %3241 = vdwg.mxu0
      %v3242 = vadd.f32 %v2852, %v3084
      %v3243 = vadd.f32 %v2853, %v3089
      %v3244 = vadd.f32 %v2854, %v3094
      %v3245 = vadd.f32 %v2855, %v3099
      %v3246 = vadd.f32 %v2856, %v3104
      %v3247 = vadd.f32 %v2857, %v3109
      %v3248 = vadd.f32 %v2858, %v3114
      %v3249 = vadd.f32 %v2859, %v3119
      %v3250 = vadd.f32 %v2860, %v3124
      %v3251 = vadd.f32 %v2861, %v3129
      %v3252 = vadd.f32 %v2862, %v3134
      %v3253 = vadd.f32 %v2863, %v3139
      %v3254 = vadd.f32 %v2864, %v3144
      %v3255 = vadd.f32 %v2865, %v3149
      %v3256 = vadd.f32 %v2866, %v3154
      %v3257 = vadd.f32 %v2867, %v3159
      %v3258 = vadd.f32 %v2868, %v3164
      %v3259 = vadd.f32 %v2869, %v3169
      %v3260 = vadd.f32 %v2870, %v3174
      %v3261 = vadd.f32 %v2871, %v3179
      %v3262 = vadd.f32 %v2872, %v3184
      %v3263 = vadd.f32 %v2873, %v3189
      %v3264 = vadd.f32 %v2874, %v3194
      %v3265 = vadd.f32 %v2875, %v3199
      %v3266 = vadd.f32 %v2876, %v3204
      %v3267 = vadd.f32 %v2877, %v3209
      %v3268 = vadd.f32 %v2878, %v3214
      %v3269 = vadd.f32 %v2879, %v3219
      %v3270 = vadd.f32 %v2880, %v3224
      %v3271 = vadd.f32 %v2881, %v3229
      %v3272 = vadd.f32 %v2882, %v3234
      %v3273 = vadd.f32 %v2883, %v3239
      %v3274 = vld [vmem:[%s2493 + $0x2] sm:$0xff]
      %v3275 = vld [vmem:[%s2493 + $0xa] sm:$0xff]
      %v3276 = vld [vmem:[%s2493 + $0x1a] sm:$0xff]
      %v3277 = vld [vmem:[%s2493 + $0x22] sm:$0xff]
      %v3278 = vld [vmem:[%s2493 + $0x32] sm:$0xff]
      %v3279 = vld [vmem:[%s2493 + $0x3a] sm:$0xff]
      %v3280 = vld [vmem:[%s2493 + $0x4a] sm:$0xff]
      %v3281 = vld [vmem:[%s2493 + $0x52] sm:$0xff]
      %v3282 = vld [vmem:[%s2493 + $0x62] sm:$0xff]
      %v3283 = vld [vmem:[%s2493 + $0x6a] sm:$0xff]
      %v3284 = vld [vmem:[%s2493 + $0x7a] sm:$0xff]
      %v3285 = vld [vmem:[%s2493 + $0x82] sm:$0xff]
      %v3286 = vld [vmem:[%s2493 + $0x92] sm:$0xff]
      %v3287 = vld [vmem:[%s2493 + $0x9a] sm:$0xff]
      %v3288 = vld [vmem:[%s2493 + $0xaa] sm:$0xff]
      %v3289 = vld [vmem:[%s2493 + $0xb2] sm:$0xff]
      %v3290 = vld [vmem:[%s2493 + $0xc2] sm:$0xff]
      %v3291 = vld [vmem:[%s2493 + $0xca] sm:$0xff]
      %v3292 = vld [vmem:[%s2493 + $0xda] sm:$0xff]
      %v3293 = vld [vmem:[%s2493 + $0xe2] sm:$0xff]
      %v3294 = vld [vmem:[%s2493 + $0xf2] sm:$0xff]
      %v3295 = vld [vmem:[%s2493 + $0xfa] sm:$0xff]
      %v3296 = vld [vmem:[%s2493 + $0x10a] sm:$0xff]
      %v3297 = vld [vmem:[%s2493 + $0x112] sm:$0xff]
      %v3298 = vld [vmem:[%s2493 + $0x122] sm:$0xff]
      %v3299 = vld [vmem:[%s2493 + $0x12a] sm:$0xff]
      %v3300 = vld [vmem:[%s2493 + $0x13a] sm:$0xff]
      %v3301 = vld [vmem:[%s2493 + $0x142] sm:$0xff]
      %v3302 = vld [vmem:[%s2493 + $0x152] sm:$0xff]
      %v3303 = vld [vmem:[%s2493 + $0x15a] sm:$0xff]
      %v3304 = vld [vmem:[%s2493 + $0x16a] sm:$0xff]
      %v3305 = vld [vmem:[%s2493 + $0x172] sm:$0xff]
      %s3306 = scalar_lea.vmem %s1, 32
      %v3307 = vld [vmem:[%s3306] sm:$0xf]
      %v3309 = vsel %vm282, %v3274, 0
      %v3312 = vsel %vm282, %v3275, 0
      %v3315 = vsel %vm282, %v3276, 0
      %v3318 = vsel %vm282, %v3277, 0
      %v3321 = vsel %vm282, %v3278, 0
      %v3324 = vsel %vm282, %v3279, 0
      %v3327 = vsel %vm282, %v3280, 0
      %v3330 = vsel %vm282, %v3281, 0
      %v3333 = vsel %vm282, %v3282, 0
      %v3336 = vsel %vm282, %v3283, 0
      %v3339 = vsel %vm282, %v3284, 0
      %v3342 = vsel %vm282, %v3285, 0
      %v3345 = vsel %vm282, %v3286, 0
      %v3348 = vsel %vm282, %v3287, 0
      %v3351 = vsel %vm282, %v3288, 0
      %v3354 = vsel %vm282, %v3289, 0
      %v3357 = vsel %vm282, %v3290, 0
      %v3360 = vsel %vm282, %v3291, 0
      %v3363 = vsel %vm282, %v3292, 0
      %v3366 = vsel %vm282, %v3293, 0
      %v3369 = vsel %vm282, %v3294, 0
      %v3372 = vsel %vm282, %v3295, 0
      %v3375 = vsel %vm282, %v3296, 0
      %v3378 = vsel %vm282, %v3297, 0
      %v3381 = vsel %vm282, %v3298, 0
      %v3384 = vsel %vm282, %v3299, 0
      %v3387 = vsel %vm282, %v3300, 0
      %v3390 = vsel %vm282, %v3301, 0
      %v3393 = vsel %vm282, %v3302, 0
      %v3396 = vsel %vm282, %v3303, 0
      %v3399 = vsel %vm282, %v3304, 0
      %v3402 = vsel %vm282, %v3305, 0
      %v3405 = vsel %vm379, %v3307, 0
      %3407 = vmatprep.subr.mxu0 0.0
      %3408 = vmatpush1.msra.mxu0 0.0
      %3409 = vmatprep.subr.mxu0 0.0
      %3410 = vmatpush1.msra.mxu0 0.0
      %3411 = vmatprep.subr.mxu0 0.0
      %3412 = vmatpush1.msra.mxu0 0.0
      %3413 = vmatprep.subr.mxu0 0.0
      %3414 = vmatpush1.msra.mxu0 0.0
      %3415 = vmatprep.subr.mxu0 0.0
      %3416 = vmatpush1.msra.mxu0 0.0
      %3417 = vmatprep.subr.mxu0 0.0
      %3418 = vmatpush1.msra.mxu0 0.0
      %3419 = vmatprep.subr.mxu0 0.0
      %3420 = vmatpush1.msra.mxu0 0.0
      %3421 = vmatprep.subr.mxu0 0.0
      %3422 = vmatpush1.msra.mxu0 0.0
      %3423 = vmatprep.subr.mxu0 0.0
      %3424 = vmatpush1.msra.mxu0 0.0
      %3425 = vmatprep.subr.mxu0 0.0
      %3426 = vmatpush1.msra.mxu0 0.0
      %3427 = vmatprep.subr.mxu0 0.0
      %3428 = vmatpush1.msra.mxu0 0.0
      %3429 = vmatprep.subr.mxu0 0.0
      %3430 = vmatpush1.msra.mxu0 0.0
      %3431 = vmatprep.subr.mxu0 0.0
      %3432 = vmatpush1.msra.mxu0 0.0
      %3433 = vmatprep.subr.mxu0 0.0
      %3434 = vmatpush1.msra.mxu0 0.0
      %3435 = vmatprep.subr.mxu0 0.0
      %3436 = vmatpush1.msra.mxu0 0.0
      %3437 = vmatprep.subr.mxu0 0.0
      %3438 = vmatpush1.msra.mxu0 %v3405
      %3439 = vmatprep.subr.mxu0 0.0
      %3440 = vmatpush2.msra.mxu0 0.0
      %3441 = vmatprep.subr.mxu0 0.0
      %3442 = vmatpush2.msra.mxu0 0.0
      %3443 = vmatprep.subr.mxu0 0.0
      %3444 = vmatpush2.msra.mxu0 0.0
      %3445 = vmatprep.subr.mxu0 0.0
      %3446 = vmatpush2.msra.mxu0 0.0
      %3447 = vmatprep.subr.mxu0 0.0
      %3448 = vmatpush2.msra.mxu0 0.0
      %3449 = vmatprep.subr.mxu0 0.0
      %3450 = vmatpush2.msra.mxu0 0.0
      %3451 = vmatprep.subr.mxu0 0.0
      %3452 = vmatpush2.msra.mxu0 0.0
      %3453 = vmatprep.subr.mxu0 0.0
      %3454 = vmatpush2.msra.mxu0 0.0
      %3455 = vmatprep.subr.mxu0 0.0
      %3456 = vmatpush2.msra.mxu0 0.0
      %3457 = vmatprep.subr.mxu0 0.0
      %3458 = vmatpush2.msra.mxu0 0.0
      %3459 = vmatprep.subr.mxu0 0.0
      %3460 = vmatpush2.msra.mxu0 0.0
      %3461 = vmatprep.subr.mxu0 0.0
      %3462 = vmatpush2.msra.mxu0 0.0
      %3463 = vmatprep.subr.mxu0 0.0
      %3464 = vmatpush2.msra.mxu0 0.0
      %3465 = vmatprep.subr.mxu0 0.0
      %3466 = vmatpush2.msra.mxu0 0.0
      %3467 = vmatprep.subr.mxu0 0.0
      %3468 = vmatpush2.msra.mxu0 0.0
      %3469 = vmatprep.subr.mxu0 0.0
      %3470 = vmatpush2.msra.mxu0 0.0
      %3471 = vmatprep.mubr.f32.mxu0 0.0
      %3472 = vmatmul.mubr.f32.gmra.mxu0 %v3309
      %v3473 = vpop.f32.mrf.mxu0
      %v3474 = vadd.f32 0.0, %v3473
      %v3475 = vpop.f32.mrf.mxu0
      %3476 = vmatprep.mubr.f32.mxu0 0.0
      %3477 = vmatmul.mubr.f32.gmra.mxu0 %v3312
      %v3478 = vpop.f32.mrf.mxu0
      %v3479 = vadd.f32 0.0, %v3478
      %v3480 = vpop.f32.mrf.mxu0
      %3481 = vmatprep.mubr.f32.mxu0 0.0
      %3482 = vmatmul.mubr.f32.gmra.mxu0 %v3315
      %v3483 = vpop.f32.mrf.mxu0
      %v3484 = vadd.f32 0.0, %v3483
      %v3485 = vpop.f32.mrf.mxu0
      %3486 = vmatprep.mubr.f32.mxu0 0.0
      %3487 = vmatmul.mubr.f32.gmra.mxu0 %v3318
      %v3488 = vpop.f32.mrf.mxu0
      %v3489 = vadd.f32 0.0, %v3488
      %v3490 = vpop.f32.mrf.mxu0
      %3491 = vmatprep.mubr.f32.mxu0 0.0
      %3492 = vmatmul.mubr.f32.gmra.mxu0 %v3321
      %v3493 = vpop.f32.mrf.mxu0
      %v3494 = vadd.f32 0.0, %v3493
      %v3495 = vpop.f32.mrf.mxu0
      %3496 = vmatprep.mubr.f32.mxu0 0.0
      %3497 = vmatmul.mubr.f32.gmra.mxu0 %v3324
      %v3498 = vpop.f32.mrf.mxu0
      %v3499 = vadd.f32 0.0, %v3498
      %v3500 = vpop.f32.mrf.mxu0
      %3501 = vmatprep.mubr.f32.mxu0 0.0
      %3502 = vmatmul.mubr.f32.gmra.mxu0 %v3327
      %v3503 = vpop.f32.mrf.mxu0
      %v3504 = vadd.f32 0.0, %v3503
      %v3505 = vpop.f32.mrf.mxu0
      %3506 = vmatprep.mubr.f32.mxu0 0.0
      %3507 = vmatmul.mubr.f32.gmra.mxu0 %v3330
      %v3508 = vpop.f32.mrf.mxu0
      %v3509 = vadd.f32 0.0, %v3508
      %v3510 = vpop.f32.mrf.mxu0
      %3511 = vmatprep.mubr.f32.mxu0 0.0
      %3512 = vmatmul.mubr.f32.gmra.mxu0 %v3333
      %v3513 = vpop.f32.mrf.mxu0
      %v3514 = vadd.f32 0.0, %v3513
      %v3515 = vpop.f32.mrf.mxu0
      %3516 = vmatprep.mubr.f32.mxu0 0.0
      %3517 = vmatmul.mubr.f32.gmra.mxu0 %v3336
      %v3518 = vpop.f32.mrf.mxu0
      %v3519 = vadd.f32 0.0, %v3518
      %v3520 = vpop.f32.mrf.mxu0
      %3521 = vmatprep.mubr.f32.mxu0 0.0
      %3522 = vmatmul.mubr.f32.gmra.mxu0 %v3339
      %v3523 = vpop.f32.mrf.mxu0
      %v3524 = vadd.f32 0.0, %v3523
      %v3525 = vpop.f32.mrf.mxu0
      %3526 = vmatprep.mubr.f32.mxu0 0.0
      %3527 = vmatmul.mubr.f32.gmra.mxu0 %v3342
      %v3528 = vpop.f32.mrf.mxu0
      %v3529 = vadd.f32 0.0, %v3528
      %v3530 = vpop.f32.mrf.mxu0
      %3531 = vmatprep.mubr.f32.mxu0 0.0
      %3532 = vmatmul.mubr.f32.gmra.mxu0 %v3345
      %v3533 = vpop.f32.mrf.mxu0
      %v3534 = vadd.f32 0.0, %v3533
      %v3535 = vpop.f32.mrf.mxu0
      %3536 = vmatprep.mubr.f32.mxu0 0.0
      %3537 = vmatmul.mubr.f32.gmra.mxu0 %v3348
      %v3538 = vpop.f32.mrf.mxu0
      %v3539 = vadd.f32 0.0, %v3538
      %v3540 = vpop.f32.mrf.mxu0
      %3541 = vmatprep.mubr.f32.mxu0 0.0
      %3542 = vmatmul.mubr.f32.gmra.mxu0 %v3351
      %v3543 = vpop.f32.mrf.mxu0
      %v3544 = vadd.f32 0.0, %v3543
      %v3545 = vpop.f32.mrf.mxu0
      %3546 = vmatprep.mubr.f32.mxu0 0.0
      %3547 = vmatmul.mubr.f32.gmra.mxu0 %v3354
      %v3548 = vpop.f32.mrf.mxu0
      %v3549 = vadd.f32 0.0, %v3548
      %v3550 = vpop.f32.mrf.mxu0
      %3551 = vmatprep.mubr.f32.mxu0 0.0
      %3552 = vmatmul.mubr.f32.gmra.mxu0 %v3357
      %v3553 = vpop.f32.mrf.mxu0
      %v3554 = vadd.f32 0.0, %v3553
      %v3555 = vpop.f32.mrf.mxu0
      %3556 = vmatprep.mubr.f32.mxu0 0.0
      %3557 = vmatmul.mubr.f32.gmra.mxu0 %v3360
      %v3558 = vpop.f32.mrf.mxu0
      %v3559 = vadd.f32 0.0, %v3558
      %v3560 = vpop.f32.mrf.mxu0
      %3561 = vmatprep.mubr.f32.mxu0 0.0
      %3562 = vmatmul.mubr.f32.gmra.mxu0 %v3363
      %v3563 = vpop.f32.mrf.mxu0
      %v3564 = vadd.f32 0.0, %v3563
      %v3565 = vpop.f32.mrf.mxu0
      %3566 = vmatprep.mubr.f32.mxu0 0.0
      %3567 = vmatmul.mubr.f32.gmra.mxu0 %v3366
      %v3568 = vpop.f32.mrf.mxu0
      %v3569 = vadd.f32 0.0, %v3568
      %v3570 = vpop.f32.mrf.mxu0
      %3571 = vmatprep.mubr.f32.mxu0 0.0
      %3572 = vmatmul.mubr.f32.gmra.mxu0 %v3369
      %v3573 = vpop.f32.mrf.mxu0
      %v3574 = vadd.f32 0.0, %v3573
      %v3575 = vpop.f32.mrf.mxu0
      %3576 = vmatprep.mubr.f32.mxu0 0.0
      %3577 = vmatmul.mubr.f32.gmra.mxu0 %v3372
      %v3578 = vpop.f32.mrf.mxu0
      %v3579 = vadd.f32 0.0, %v3578
      %v3580 = vpop.f32.mrf.mxu0
      %3581 = vmatprep.mubr.f32.mxu0 0.0
      %3582 = vmatmul.mubr.f32.gmra.mxu0 %v3375
      %v3583 = vpop.f32.mrf.mxu0
      %v3584 = vadd.f32 0.0, %v3583
      %v3585 = vpop.f32.mrf.mxu0
      %3586 = vmatprep.mubr.f32.mxu0 0.0
      %3587 = vmatmul.mubr.f32.gmra.mxu0 %v3378
      %v3588 = vpop.f32.mrf.mxu0
      %v3589 = vadd.f32 0.0, %v3588
      %v3590 = vpop.f32.mrf.mxu0
      %3591 = vmatprep.mubr.f32.mxu0 0.0
      %3592 = vmatmul.mubr.f32.gmra.mxu0 %v3381
      %v3593 = vpop.f32.mrf.mxu0
      %v3594 = vadd.f32 0.0, %v3593
      %v3595 = vpop.f32.mrf.mxu0
      %3596 = vmatprep.mubr.f32.mxu0 0.0
      %3597 = vmatmul.mubr.f32.gmra.mxu0 %v3384
      %v3598 = vpop.f32.mrf.mxu0
      %v3599 = vadd.f32 0.0, %v3598
      %v3600 = vpop.f32.mrf.mxu0
      %3601 = vmatprep.mubr.f32.mxu0 0.0
      %3602 = vmatmul.mubr.f32.gmra.mxu0 %v3387
      %v3603 = vpop.f32.mrf.mxu0
      %v3604 = vadd.f32 0.0, %v3603
      %v3605 = vpop.f32.mrf.mxu0
      %3606 = vmatprep.mubr.f32.mxu0 0.0
      %3607 = vmatmul.mubr.f32.gmra.mxu0 %v3390
      %v3608 = vpop.f32.mrf.mxu0
      %v3609 = vadd.f32 0.0, %v3608
      %v3610 = vpop.f32.mrf.mxu0
      %3611 = vmatprep.mubr.f32.mxu0 0.0
      %3612 = vmatmul.mubr.f32.gmra.mxu0 %v3393
      %v3613 = vpop.f32.mrf.mxu0
      %v3614 = vadd.f32 0.0, %v3613
      %v3615 = vpop.f32.mrf.mxu0
      %3616 = vmatprep.mubr.f32.mxu0 0.0
      %3617 = vmatmul.mubr.f32.gmra.mxu0 %v3396
      %v3618 = vpop.f32.mrf.mxu0
      %v3619 = vadd.f32 0.0, %v3618
      %v3620 = vpop.f32.mrf.mxu0
      %3621 = vmatprep.mubr.f32.mxu0 0.0
      %3622 = vmatmul.mubr.f32.gmra.mxu0 %v3399
      %v3623 = vpop.f32.mrf.mxu0
      %v3624 = vadd.f32 0.0, %v3623
      %v3625 = vpop.f32.mrf.mxu0
      %3626 = vmatprep.mubr.f32.mxu0 0.0
      %3627 = vmatmul.mubr.f32.gmra.mxu0 %v3402
      %v3628 = vpop.f32.mrf.mxu0
      %v3629 = vadd.f32 0.0, %v3628
      %v3630 = vpop.f32.mrf.mxu0
      %3631 = vdwg.mxu0
      %v3632 = vadd.f32 %v3242, %v3474
      %v3633 = vadd.f32 %v3243, %v3479
      %v3634 = vadd.f32 %v3244, %v3484
      %v3635 = vadd.f32 %v3245, %v3489
      %v3636 = vadd.f32 %v3246, %v3494
      %v3637 = vadd.f32 %v3247, %v3499
      %v3638 = vadd.f32 %v3248, %v3504
      %v3639 = vadd.f32 %v3249, %v3509
      %v3640 = vadd.f32 %v3250, %v3514
      %v3641 = vadd.f32 %v3251, %v3519
      %v3642 = vadd.f32 %v3252, %v3524
      %v3643 = vadd.f32 %v3253, %v3529
      %v3644 = vadd.f32 %v3254, %v3534
      %v3645 = vadd.f32 %v3255, %v3539
      %v3646 = vadd.f32 %v3256, %v3544
      %v3647 = vadd.f32 %v3257, %v3549
      %v3648 = vadd.f32 %v3258, %v3554
      %v3649 = vadd.f32 %v3259, %v3559
      %v3650 = vadd.f32 %v3260, %v3564
      %v3651 = vadd.f32 %v3261, %v3569
      %v3652 = vadd.f32 %v3262, %v3574
      %v3653 = vadd.f32 %v3263, %v3579
      %v3654 = vadd.f32 %v3264, %v3584
      %v3655 = vadd.f32 %v3265, %v3589
      %v3656 = vadd.f32 %v3266, %v3594
      %v3657 = vadd.f32 %v3267, %v3599
      %v3658 = vadd.f32 %v3268, %v3604
      %v3659 = vadd.f32 %v3269, %v3609
      %v3660 = vadd.f32 %v3270, %v3614
      %v3661 = vadd.f32 %v3271, %v3619
      %v3662 = vadd.f32 %v3272, %v3624
      %v3663 = vadd.f32 %v3273, %v3629
      %3664 = vst [vmem:[%s208] sm:$0xff] %v3632
      %3665 = vst [vmem:[%s208 + $0x8] sm:$0xff] %v3633
      %3666 = vst [vmem:[%s208 + $0x10] sm:$0xff] %v3634
      %3667 = vst [vmem:[%s208 + $0x18] sm:$0xff] %v3635
      %3668 = vst [vmem:[%s208 + $0x20] sm:$0xff] %v3636
      %3669 = vst [vmem:[%s208 + $0x28] sm:$0xff] %v3637
      %3670 = vst [vmem:[%s208 + $0x30] sm:$0xff] %v3638
      %3671 = vst [vmem:[%s208 + $0x38] sm:$0xff] %v3639
      %3672 = vst [vmem:[%s208 + $0x40] sm:$0xff] %v3640
      %3673 = vst [vmem:[%s208 + $0x48] sm:$0xff] %v3641
      %3674 = vst [vmem:[%s208 + $0x50] sm:$0xff] %v3642
      %3675 = vst [vmem:[%s208 + $0x58] sm:$0xff] %v3643
      %3676 = vst [vmem:[%s208 + $0x60] sm:$0xff] %v3644
      %3677 = vst [vmem:[%s208 + $0x68] sm:$0xff] %v3645
      %3678 = vst [vmem:[%s208 + $0x70] sm:$0xff] %v3646
      %3679 = vst [vmem:[%s208 + $0x78] sm:$0xff] %v3647
      %3680 = vst [vmem:[%s208 + $0x80] sm:$0xff] %v3648
      %3681 = vst [vmem:[%s208 + $0x88] sm:$0xff] %v3649
      %3682 = vst [vmem:[%s208 + $0x90] sm:$0xff] %v3650
      %3683 = vst [vmem:[%s208 + $0x98] sm:$0xff] %v3651
      %3684 = vst [vmem:[%s208 + $0xa0] sm:$0xff] %v3652
      %3685 = vst [vmem:[%s208 + $0xa8] sm:$0xff] %v3653
      %3686 = vst [vmem:[%s208 + $0xb0] sm:$0xff] %v3654
      %3687 = vst [vmem:[%s208 + $0xb8] sm:$0xff] %v3655
      %3688 = vst [vmem:[%s208 + $0xc0] sm:$0xff] %v3656
      %3689 = vst [vmem:[%s208 + $0xc8] sm:$0xff] %v3657
      %3690 = vst [vmem:[%s208 + $0xd0] sm:$0xff] %v3658
      %3691 = vst [vmem:[%s208 + $0xd8] sm:$0xff] %v3659
      %3692 = vst [vmem:[%s208 + $0xe0] sm:$0xff] %v3660
      %3693 = vst [vmem:[%s208 + $0xe8] sm:$0xff] %v3661
      %3694 = vst [vmem:[%s208 + $0xf0] sm:$0xff] %v3662
      %3695 = vst [vmem:[%s208 + $0xf8] sm:$0xff] %v3663
      %v3696 = vadd.f32 %v3632, %v3633
      %v3697 = vadd.f32 %v3696, %v3634
      %v3698 = vadd.f32 %v3697, %v3635
      %v3699 = vadd.f32 %v3698, %v3636
      %v3700 = vadd.f32 %v3699, %v3637
      %v3701 = vadd.f32 %v3700, %v3638
      %v3702 = vadd.f32 %v3701, %v3639
      %v3703 = vadd.f32 %v3702, %v3640
      %v3704 = vadd.f32 %v3703, %v3641
      %v3705 = vadd.f32 %v3704, %v3642
      %v3706 = vadd.f32 %v3705, %v3643
      %v3707 = vadd.f32 %v3706, %v3644
      %v3708 = vadd.f32 %v3707, %v3645
      %v3709 = vadd.f32 %v3708, %v3646
      %v3710 = vadd.f32 %v3709, %v3647
      %v3711 = vadd.f32 %v3710, %v3648
      %v3712 = vadd.f32 %v3711, %v3649
      %v3713 = vadd.f32 %v3712, %v3650
      %v3714 = vadd.f32 %v3713, %v3651
      %v3715 = vadd.f32 %v3714, %v3652
      %v3716 = vadd.f32 %v3715, %v3653
      %v3717 = vadd.f32 %v3716, %v3654
      %v3718 = vadd.f32 %v3717, %v3655
      %v3719 = vadd.f32 %v3718, %v3656
      %v3720 = vadd.f32 %v3719, %v3657
      %v3721 = vadd.f32 %v3720, %v3658
      %v3722 = vadd.f32 %v3721, %v3659
      %v3723 = vadd.f32 %v3722, %v3660
      %v3724 = vadd.f32 %v3723, %v3661
      %v3725 = vadd.f32 %v3724, %v3662
      %v3726 = vadd.f32 %v3725, %v3663
      %v3727 = vrot.slane %v3726, 4
      %v3728 = vadd.f32 %v3726, %v3727
      %v3729 = vrot.slane %v3728, 2
      %v3730 = vadd.f32 %v3728, %v3729
      %v3731 = vrot.slane %v3730, 1
      %v3732 = vadd.f32 %v3730, %v3731
      %3733 = vst [vmem:[%s211] sm:$0x1] %v3732
      %v3734 = vmul.f32 %v3632, %v3632
      %v3735 = vmul.f32 %v3633, %v3633
      %v3736 = vmul.f32 %v3634, %v3634
      %v3737 = vmul.f32 %v3635, %v3635
      %v3738 = vmul.f32 %v3636, %v3636
      %v3739 = vmul.f32 %v3637, %v3637
      %v3740 = vmul.f32 %v3638, %v3638
      %v3741 = vmul.f32 %v3639, %v3639
      %v3742 = vmul.f32 %v3640, %v3640
      %v3743 = vmul.f32 %v3641, %v3641
      %v3744 = vmul.f32 %v3642, %v3642
      %v3745 = vmul.f32 %v3643, %v3643
      %v3746 = vmul.f32 %v3644, %v3644
      %v3747 = vmul.f32 %v3645, %v3645
      %v3748 = vmul.f32 %v3646, %v3646
      %v3749 = vmul.f32 %v3647, %v3647
      %v3750 = vmul.f32 %v3648, %v3648
      %v3751 = vmul.f32 %v3649, %v3649
      %v3752 = vmul.f32 %v3650, %v3650
      %v3753 = vmul.f32 %v3651, %v3651
      %v3754 = vmul.f32 %v3652, %v3652
      %v3755 = vmul.f32 %v3653, %v3653
      %v3756 = vmul.f32 %v3654, %v3654
      %v3757 = vmul.f32 %v3655, %v3655
      %v3758 = vmul.f32 %v3656, %v3656
      %v3759 = vmul.f32 %v3657, %v3657
      %v3760 = vmul.f32 %v3658, %v3658
      %v3761 = vmul.f32 %v3659, %v3659
      %v3762 = vmul.f32 %v3660, %v3660
      %v3763 = vmul.f32 %v3661, %v3661
      %v3764 = vmul.f32 %v3662, %v3662
      %v3765 = vmul.f32 %v3663, %v3663
      %v3766 = vadd.f32 %v3734, %v3735
      %v3767 = vadd.f32 %v3766, %v3736
      %v3768 = vadd.f32 %v3767, %v3737
      %v3769 = vadd.f32 %v3768, %v3738
      %v3770 = vadd.f32 %v3769, %v3739
      %v3771 = vadd.f32 %v3770, %v3740
      %v3772 = vadd.f32 %v3771, %v3741
      %v3773 = vadd.f32 %v3772, %v3742
      %v3774 = vadd.f32 %v3773, %v3743
      %v3775 = vadd.f32 %v3774, %v3744
      %v3776 = vadd.f32 %v3775, %v3745
      %v3777 = vadd.f32 %v3776, %v3746
      %v3778 = vadd.f32 %v3777, %v3747
      %v3779 = vadd.f32 %v3778, %v3748
      %v3780 = vadd.f32 %v3779, %v3749
      %v3781 = vadd.f32 %v3780, %v3750
      %v3782 = vadd.f32 %v3781, %v3751
      %v3783 = vadd.f32 %v3782, %v3752
      %v3784 = vadd.f32 %v3783, %v3753
      %v3785 = vadd.f32 %v3784, %v3754
      %v3786 = vadd.f32 %v3785, %v3755
      %v3787 = vadd.f32 %v3786, %v3756
      %v3788 = vadd.f32 %v3787, %v3757
      %v3789 = vadd.f32 %v3788, %v3758
      %v3790 = vadd.f32 %v3789, %v3759
      %v3791 = vadd.f32 %v3790, %v3760
      %v3792 = vadd.f32 %v3791, %v3761
      %v3793 = vadd.f32 %v3792, %v3762
      %v3794 = vadd.f32 %v3793, %v3763
      %v3795 = vadd.f32 %v3794, %v3764
      %v3796 = vadd.f32 %v3795, %v3765
      %v3797 = vrot.slane %v3796, 4
      %v3798 = vadd.f32 %v3796, %v3797
      %v3799 = vrot.slane %v3798, 2
      %v3800 = vadd.f32 %v3798, %v3799
      %v3801 = vrot.slane %v3800, 1
      %v3802 = vadd.f32 %v3800, %v3801
      %3803 = vst [vmem:[%s214] sm:$0x1] %v3802
      %p3804 = scmp.lt.s32.totalorder %s16, 1
      %s3805 = scalar_select %p3804, %s16, 1
      %s3806 = smul.addr %s3805, 32
      %s3807 = smul.addr %s3806, 8
      %s3808 = scalar_lea.vmem %s2, %s3807
      %p3809 = scmp.lt.s32.totalorder %s16, 1
      %s3810 = scalar_select %p3809, %s16, 1
      %s3811 = scalar_lea.vmem %s3, %s3810
      %p3812 = scmp.lt.s32.totalorder %s16, 1
      %s3813 = scalar_select %p3812, %s16, 1
      %s3814 = scalar_lea.vmem %s4, %s3813
      // Predicated region
      $region29: #{resblock_forward.3} parent=27 // pred_check
        %p3815 = pneg %p81
      $region30: #{resblock_forward.3} parent=27 // pred_check_branch
        %3817 = sbr.rel (%p3815) target = $region32
      $region31: #{resblock_forward.3} parent=27 // pred_region
        _
      $region32: #{resblock_forward.3} parent=27 // pred_fallthru
        _
      // Predicated region
      $region33: #{resblock_forward.3} parent=27 // pred_check
        %p3818 = pneg %p107
      $region34: #{resblock_forward.3} parent=27 // pred_check_branch
        %3820 = sbr.rel (%p3818) target = $region36
      $region35: #{resblock_forward.3} parent=27 // pred_region
        _
      $region36: #{resblock_forward.3} parent=27 // pred_fallthru
        _
      // Predicated region
      $region37: #{resblock_forward.3} parent=27 // pred_check
        %p3821 = pneg %p133
      $region38: #{resblock_forward.3} parent=27 // pred_check_branch
        %3823 = sbr.rel (%p3821) target = $region40
      $region39: #{resblock_forward.3} parent=27 // pred_region
        _
      $region40: #{resblock_forward.3} parent=27 // pred_fallthru
        _
    $region28: #{resblock_forward.3} parent=5 // pred_fallthru
      _
    %p3824 = scmp.le.s32.totalorder 2, %s11
    // Predicated region
    $region41: #{resblock_forward.3} parent=5 // pred_check
      %p3825 = pneg %p3824
    $region42: #{resblock_forward.3} parent=5 // pred_check_branch
      %3827 = sbr.rel (%p3825) target = $region44
    $region43: #{resblock_forward.3} parent=5 // pred_region
      %s3828 = ssub.s32 %s11, 2
      // Predicated region
      $region45: #{resblock_forward.3} parent=43 // pred_check
        %p3829 = pneg %p87
      $region46: #{resblock_forward.3} parent=43 // pred_check_branch
        %3831 = sbr.rel (%p3829) target = $region48
      $region47: #{resblock_forward.3} parent=43 // pred_region
        %p3832 = scmp.lt.s32.totalorder %s17, 1
        %s3833 = scalar_select %p3832, %s17, 1
        %s3834 = smul.addr %s3833, 32
        %s3835 = smul.addr %s3834, 8
        %s3836 = scalar_lea.vmem %s2, %s3835
      $region48: #{resblock_forward.3} parent=43 // pred_fallthru
        _
      // Predicated region
      $region49: #{resblock_forward.3} parent=43 // pred_check
        %p3837 = pneg %p113
      $region50: #{resblock_forward.3} parent=43 // pred_check_branch
        %3839 = sbr.rel (%p3837) target = $region52
      $region51: #{resblock_forward.3} parent=43 // pred_region
        %p3840 = scmp.lt.s32.totalorder %s17, 1
        %s3841 = scalar_select %p3840, %s17, 1
        %s3842 = scalar_lea.vmem %s3, %s3841
      $region52: #{resblock_forward.3} parent=43 // pred_fallthru
        _
      // Predicated region
      $region53: #{resblock_forward.3} parent=43 // pred_check
        %p3843 = pneg %p139
      $region54: #{resblock_forward.3} parent=43 // pred_check_branch
        %3845 = sbr.rel (%p3843) target = $region56
      $region55: #{resblock_forward.3} parent=43 // pred_region
        %p3846 = scmp.lt.s32.totalorder %s17, 1
        %s3847 = scalar_select %p3846, %s17, 1
        %s3848 = scalar_lea.vmem %s4, %s3847
      $region56: #{resblock_forward.3} parent=43 // pred_fallthru
        _
    $region44: #{resblock_forward.3} parent=5 // pred_fallthru
      _
  $region6: #{resblock_forward.3} parent=0 // loop_footer
    %s15 = sadd.s32 1, %s11
  $region7: #{resblock_forward.3} parent=0 // loop_footer_branch
    %10 = sbr.rel target = $region3
  $region8: #{resblock_forward.3} parent=0 // loop_exit
    _

// kernel: resblock_forward.4
$region0: #{resblock_forward.4}
  #allocation0 [shape = 'u32[]', space=smem, size = 0x4, offset = 0x4, fixed_abs, tag = 'smem constant byte address 0x4 - core index']
  #allocation1 [shape = 'u32[144,128]{1,0:T(1,128)}', space=vmem, size = 0x12000, scoped, tag = 'internal scratch']
  #allocation2 [shape = 'f32[18,18,128]{2,1,0:T(8,128)}', space=vmem, size = 0x36000, scoped, tag = 'scratch operand']
  %s0 = inlined_call_operand.vmem [shape: f32[2,16,16,128], index: 0, kind: input, shape index: {}]
  %s1 = inlined_call_operand.vmem [shape: f32[1,128], index: 1, kind: input, shape index: {}]
  %s2 = inlined_call_operand.vmem [shape: f32[1,128], index: 2, kind: input, shape index: {}]
  %s3 = inlined_call_operand.vmem [shape: f32[9,128,128], index: 3, kind: input, shape index: {}]
  %s4 = inlined_call_operand.vmem [shape: f32[2,16,16,128], index: 4, kind: output, shape index: {0}]
  %s5 = inlined_call_operand.vmem [shape: f32[2,1,128], index: 5, kind: output, shape index: {1}]
  %s6 = inlined_call_operand.vmem [shape: f32[2,1,128], index: 6, kind: output, shape index: {2}]
  %7 = xla_tuple %s4, %s5, %s6
  %s8 = sld [smem:[#allocation0]]
  $region65: #{resblock_forward.4} parent=0
    _
  %s10 = ssub.s32 1, %s8
  %s11 = scalar_select 0, %s10, %s8
  loop: start=0, step=1, limit=4
  $region2: #{resblock_forward.4} parent=0 // loop_pre_header
    _
  $region3: #{resblock_forward.4} parent=0 // loop_header
    %s13 = sphi 0, %s17
    %p14 = scmp.ge.s32.totalorder %s13, 4
    %s23 = sphi 0, %s25
    %s26 = sphi 0, %s23
    %s27 = sphi 0, %s26
    %s43 = sphi 0, %s27
    %s47 = sphi 0, %s47
    %s49 = sphi 0, %s47
    %s50 = sphi 0, %s49
    %s64 = sphi 0, %s50
    %s68 = sphi 0, %s68
    %s70 = sphi 0, %s68
    %s71 = sphi 0, %s70
    %s85 = sphi 0, %s71
    %s89 = sphi 0, %s89
    %s91 = sphi 0, %s89
    %s92 = sphi 0, %s91
    %s106 = sphi 0, %s92
    %s112 = sphi 0, %s114
    %s115 = sphi 0, %s112
    %s116 = sphi 0, %s115
    %s132 = sphi 0, %s116
    %s138 = sphi 0, %s140
    %s141 = sphi 0, %s138
    %s142 = sphi 0, %s141
    %s158 = sphi 0, %s142
    %s164 = sphi 0, %s166
    %s167 = sphi 0, %s164
    %s168 = sphi 0, %s167
    %s184 = sphi 0, %s168
  $region4: #{resblock_forward.4} parent=0 // loop_header_branch
    %16 = sbr.rel (%p14) target = $region8
  $region5: #{resblock_forward.4} parent=0 // loop_body
    %s18 = ssub.s32 %s13, 1
    %s19 = ssub.s32 %s13, 2
    %s20 = sadd.s32 %s13, 1
    %s21 = ssub.s32 %s13, %s20
    %p22 = scmp.eq.s32.totalorder %s21, 0
    %s24 = sadd.s32 %s23, 1
    %s25 = scalar_select %p22, %s23, %s24
    %p28 = pneg %p22
    %p29 = scmp.eq.s32.totalorder %s13, 1
    %p30 = por %p28, %p29
    %p31 = scmp.ne.s32.totalorder %s23, %s26
    %p32 = scmp.eq.s32.totalorder %s13, 0
    %p33 = por %p31, %p32
    %p34 = scmp.ne.s32.totalorder %s23, %s26
    %p35 = scmp.eq.s32.totalorder %s18, 1
    %p36 = por %p34, %p35
    %p37 = scmp.ne.s32.totalorder %s26, %s27
    %p38 = scmp.eq.s32.totalorder %s18, 0
    %p39 = por %p37, %p38
    %p40 = scmp.ne.s32.totalorder %s26, %s27
    %p41 = scmp.eq.s32.totalorder %s19, 1
    %p42 = por %p40, %p41
    %p44 = scmp.ne.s32.totalorder %s27, %s43
    %p45 = scmp.eq.s32.totalorder %s19, 0
    %p46 = por %p44, %p45
    %s48 = sadd.s32 %s47, 1
    %p51 = scmp.eq.s32.totalorder %s13, 1
    %p52 = scmp.ne.s32.totalorder %s47, %s49
    %p53 = scmp.eq.s32.totalorder %s13, 0
    %p54 = por %p52, %p53
    %p55 = scmp.ne.s32.totalorder %s47, %s49
    %p56 = scmp.eq.s32.totalorder %s18, 1
    %p57 = por %p55, %p56
    %p58 = scmp.ne.s32.totalorder %s49, %s50
    %p59 = scmp.eq.s32.totalorder %s18, 0
    %p60 = por %p58, %p59
    %p61 = scmp.ne.s32.totalorder %s49, %s50
    %p62 = scmp.eq.s32.totalorder %s19, 1
    %p63 = por %p61, %p62
    %p65 = scmp.ne.s32.totalorder %s50, %s64
    %p66 = scmp.eq.s32.totalorder %s19, 0
    %p67 = por %p65, %p66
    %s69 = sadd.s32 %s68, 1
    %p72 = scmp.eq.s32.totalorder %s13, 1
    %p73 = scmp.ne.s32.totalorder %s68, %s70
    %p74 = scmp.eq.s32.totalorder %s13, 0
    %p75 = por %p73, %p74
    %p76 = scmp.ne.s32.totalorder %s68, %s70
    %p77 = scmp.eq.s32.totalorder %s18, 1
    %p78 = por %p76, %p77
    %p79 = scmp.ne.s32.totalorder %s70, %s71
    %p80 = scmp.eq.s32.totalorder %s18, 0
    %p81 = por %p79, %p80
    %p82 = scmp.ne.s32.totalorder %s70, %s71
    %p83 = scmp.eq.s32.totalorder %s19, 1
    %p84 = por %p82, %p83
    %p86 = scmp.ne.s32.totalorder %s71, %s85
    %p87 = scmp.eq.s32.totalorder %s19, 0
    %p88 = por %p86, %p87
    %s90 = sadd.s32 %s89, 1
    %p93 = scmp.eq.s32.totalorder %s13, 1
    %p94 = scmp.ne.s32.totalorder %s89, %s91
    %p95 = scmp.eq.s32.totalorder %s13, 0
    %p96 = por %p94, %p95
    %p97 = scmp.ne.s32.totalorder %s89, %s91
    %p98 = scmp.eq.s32.totalorder %s18, 1
    %p99 = por %p97, %p98
    %p100 = scmp.ne.s32.totalorder %s91, %s92
    %p101 = scmp.eq.s32.totalorder %s18, 0
    %p102 = por %p100, %p101
    %p103 = scmp.ne.s32.totalorder %s91, %s92
    %p104 = scmp.eq.s32.totalorder %s19, 1
    %p105 = por %p103, %p104
    %p107 = scmp.ne.s32.totalorder %s92, %s106
    %p108 = scmp.eq.s32.totalorder %s19, 0
    %p109 = por %p107, %p108
    %s110 = ssub.s32 %s13, %s20
    %p111 = scmp.eq.s32.totalorder %s110, 0
    %s113 = sadd.s32 %s112, 1
    %s114 = scalar_select %p111, %s112, %s113
    %p117 = pneg %p111
    %p118 = scmp.eq.s32.totalorder %s13, 1
    %p119 = por %p117, %p118
    %p120 = scmp.ne.s32.totalorder %s112, %s115
    %p121 = scmp.eq.s32.totalorder %s13, 0
    %p122 = por %p120, %p121
    %p123 = scmp.ne.s32.totalorder %s112, %s115
    %p124 = scmp.eq.s32.totalorder %s18, 1
    %p125 = por %p123, %p124
    %p126 = scmp.ne.s32.totalorder %s115, %s116
    %p127 = scmp.eq.s32.totalorder %s18, 0
    %p128 = por %p126, %p127
    %p129 = scmp.ne.s32.totalorder %s115, %s116
    %p130 = scmp.eq.s32.totalorder %s19, 1
    %p131 = por %p129, %p130
    %p133 = scmp.ne.s32.totalorder %s116, %s132
    %p134 = scmp.eq.s32.totalorder %s19, 0
    %p135 = por %p133, %p134
    %s136 = ssub.s32 %s13, %s20
    %p137 = scmp.eq.s32.totalorder %s136, 0
    %s139 = sadd.s32 %s138, 1
    %s140 = scalar_select %p137, %s138, %s139
    %p143 = pneg %p137
    %p144 = scmp.eq.s32.totalorder %s13, 1
    %p145 = por %p143, %p144
    %p146 = scmp.ne.s32.totalorder %s138, %s141
    %p147 = scmp.eq.s32.totalorder %s13, 0
    %p148 = por %p146, %p147
    %p149 = scmp.ne.s32.totalorder %s138, %s141
    %p150 = scmp.eq.s32.totalorder %s18, 1
    %p151 = por %p149, %p150
    %p152 = scmp.ne.s32.totalorder %s141, %s142
    %p153 = scmp.eq.s32.totalorder %s18, 0
    %p154 = por %p152, %p153
    %p155 = scmp.ne.s32.totalorder %s141, %s142
    %p156 = scmp.eq.s32.totalorder %s19, 1
    %p157 = por %p155, %p156
    %p159 = scmp.ne.s32.totalorder %s142, %s158
    %p160 = scmp.eq.s32.totalorder %s19, 0
    %p161 = por %p159, %p160
    %s162 = ssub.s32 %s13, %s20
    %p163 = scmp.eq.s32.totalorder %s162, 0
    %s165 = sadd.s32 %s164, 1
    %s166 = scalar_select %p163, %s164, %s165
    %p169 = pneg %p163
    %p170 = scmp.eq.s32.totalorder %s13, 1
    %p171 = por %p169, %p170
    %p172 = scmp.ne.s32.totalorder %s164, %s167
    %p173 = scmp.eq.s32.totalorder %s13, 0
    %p174 = por %p172, %p173
    %p175 = scmp.ne.s32.totalorder %s164, %s167
    %p176 = scmp.eq.s32.totalorder %s18, 1
    %p177 = por %p175, %p176
    %p178 = scmp.ne.s32.totalorder %s167, %s168
    %p179 = scmp.eq.s32.totalorder %s18, 0
    %p180 = por %p178, %p179
    %p181 = scmp.ne.s32.totalorder %s167, %s168
    %p182 = scmp.eq.s32.totalorder %s19, 1
    %p183 = por %p181, %p182
    %p185 = scmp.ne.s32.totalorder %s168, %s184
    %p186 = scmp.eq.s32.totalorder %s19, 0
    %p187 = por %p185, %p186
    %p188 = scmp.le.s32.totalorder 1, %s13
    %p189 = scmp.lt.s32.totalorder %s13, 3
    %p190 = pnand %p188, %p189
    %p191 = pneg %p190
    // Predicated region
    $region9: #{resblock_forward.4} parent=5 // pred_check
      _
    $region10: #{resblock_forward.4} parent=5 // pred_check_branch
      %193 = sbr.rel (%p190) target = $region12
    $region11: #{resblock_forward.4} parent=5 // pred_region
      %s194 = ssub.s32 %s13, 1
      // Predicated region
      $region13: #{resblock_forward.4} parent=11 // pred_check
        %p195 = pneg %p60
      $region14: #{resblock_forward.4} parent=11 // pred_check_branch
        %197 = sbr.rel (%p195) target = $region16
      $region15: #{resblock_forward.4} parent=11 // pred_region
        _
      $region16: #{resblock_forward.4} parent=11 // pred_fallthru
        _
      // Predicated region
      $region17: #{resblock_forward.4} parent=11 // pred_check
        %p198 = pneg %p81
      $region18: #{resblock_forward.4} parent=11 // pred_check_branch
        %200 = sbr.rel (%p198) target = $region20
      $region19: #{resblock_forward.4} parent=11 // pred_region
        _
      $region20: #{resblock_forward.4} parent=11 // pred_fallthru
        _
      // Predicated region
      $region21: #{resblock_forward.4} parent=11 // pred_check
        %p201 = pneg %p102
      $region22: #{resblock_forward.4} parent=11 // pred_check_branch
        %203 = sbr.rel (%p201) target = $region24
      $region23: #{resblock_forward.4} parent=11 // pred_region
        _
      $region24: #{resblock_forward.4} parent=11 // pred_fallthru
        _
    $region12: #{resblock_forward.4} parent=5 // pred_fallthru
      _
    %p204 = scmp.lt.s32.totalorder %s13, 2
    // Predicated region
    $region25: #{resblock_forward.4} parent=5 // pred_check
      %p205 = pneg %p204
    $region26: #{resblock_forward.4} parent=5 // pred_check_branch
      %207 = sbr.rel (%p205) target = $region28
    $region27: #{resblock_forward.4} parent=5 // pred_region
      // Predicated region
      $region29: #{resblock_forward.4} parent=27 // pred_check
        %p208 = pneg %p33
      $region30: #{resblock_forward.4} parent=27 // pred_check_branch
        %210 = sbr.rel (%p208) target = $region32
      $region31: #{resblock_forward.4} parent=27 // pred_region
        %p211 = scmp.lt.s32.totalorder %s13, 1
        %s212 = scalar_select %p211, %s13, 1
        %s213 = smul.addr %s212, 32
        %s214 = smul.addr %s213, 8
        %s215 = scalar_lea.vmem %s0, %s214
      $region32: #{resblock_forward.4} parent=27 // pred_fallthru
        _
    $region28: #{resblock_forward.4} parent=5 // pred_fallthru
      _
    %p216 = scmp.le.s32.totalorder 1, %s13
    %p217 = scmp.lt.s32.totalorder %s13, 3
    %p218 = pnand %p216, %p217
    %p219 = pneg %p218
    // Predicated region
    $region33: #{resblock_forward.4} parent=5 // pred_check
      _
    $region34: #{resblock_forward.4} parent=5 // pred_check_branch
      %221 = sbr.rel (%p218) target = $region36
    $region35: #{resblock_forward.4} parent=5 // pred_region
      %s222 = ssub.s32 %s13, 1
      %p223 = scmp.lt.s32.totalorder %s18, 1
      %s224 = scalar_select %p223, %s18, 1
      %s225 = smul.addr %s224, 32
      %s226 = smul.addr %s225, 8
      %s227 = scalar_lea.vmem %s0, %s226
      %p228 = pneg %p39
      %p229 = pneg %p36
      %p230 = pneg %p60
      %p231 = pneg %p57
      %p232 = pneg %p81
      %p233 = pneg %p78
      %p234 = pneg %p102
      %p235 = pneg %p99
      %p236 = pneg %p128
      %p237 = pneg %p125
      %p238 = scmp.lt.s32.totalorder %s18, 1
      %s239 = scalar_select %p238, %s18, 1
      %s240 = smul.addr %s239, 32
      %s241 = smul.addr %s240, 8
      %s242 = scalar_lea.vmem %s4, %s241
      %p243 = pneg %p154
      %p244 = pneg %p151
      %p245 = scmp.lt.s32.totalorder %s18, 1
      %s246 = scalar_select %p245, %s18, 1
      %s247 = scalar_lea.vmem %s5, %s246
      %p248 = pneg %p180
      %p249 = pneg %p177
      %p250 = scmp.lt.s32.totalorder %s18, 1
      %s251 = scalar_select %p250, %s18, 1
      %s252 = scalar_lea.vmem %s6, %s251
      %p253 = scmp.lt.s32.totalorder %s18, 1
      %s254 = scalar_select %p253, %s18, 1
      %s255 = smul.addr %s254, 32
      %s256 = smul.addr %s255, 8
      %s257 = scalar_lea.vmem %s0, %s256
      %p258 = scmp.lt.s32.totalorder %s18, 1
      %s259 = scalar_select %p258, %s18, 1
      %s260 = smul.addr %s259, 32
      %s261 = smul.addr %s260, 8
      %s262 = scalar_lea.vmem %s4, %s261
      %p263 = scmp.lt.s32.totalorder %s18, 1
      %s264 = scalar_select %p263, %s18, 1
      %s265 = scalar_lea.vmem %s5, %s264
      %p266 = scmp.lt.s32.totalorder %s18, 1
      %s267 = scalar_select %p266, %s18, 1
      %s268 = scalar_lea.vmem %s6, %s267
      %v269 = vld [vmem:[%s257] sm:$0xff]
      %v270 = vld [vmem:[%s257 + $0x8] sm:$0xff]
      %v271 = vld [vmem:[%s257 + $0x10] sm:$0xff]
      %v272 = vld [vmem:[%s257 + $0x18] sm:$0xff]
      %v273 = vld [vmem:[%s257 + $0x20] sm:$0xff]
      %v274 = vld [vmem:[%s257 + $0x28] sm:$0xff]
      %v275 = vld [vmem:[%s257 + $0x30] sm:$0xff]
      %v276 = vld [vmem:[%s257 + $0x38] sm:$0xff]
      %v277 = vld [vmem:[%s257 + $0x40] sm:$0xff]
      %v278 = vld [vmem:[%s257 + $0x48] sm:$0xff]
      %v279 = vld [vmem:[%s257 + $0x50] sm:$0xff]
      %v280 = vld [vmem:[%s257 + $0x58] sm:$0xff]
      %v281 = vld [vmem:[%s257 + $0x60] sm:$0xff]
      %v282 = vld [vmem:[%s257 + $0x68] sm:$0xff]
      %v283 = vld [vmem:[%s257 + $0x70] sm:$0xff]
      %v284 = vld [vmem:[%s257 + $0x78] sm:$0xff]
      %v285 = vld [vmem:[%s257 + $0x80] sm:$0xff]
      %v286 = vld [vmem:[%s257 + $0x88] sm:$0xff]
      %v287 = vld [vmem:[%s257 + $0x90] sm:$0xff]
      %v288 = vld [vmem:[%s257 + $0x98] sm:$0xff]
      %v289 = vld [vmem:[%s257 + $0xa0] sm:$0xff]
      %v290 = vld [vmem:[%s257 + $0xa8] sm:$0xff]
      %v291 = vld [vmem:[%s257 + $0xb0] sm:$0xff]
      %v292 = vld [vmem:[%s257 + $0xb8] sm:$0xff]
      %v293 = vld [vmem:[%s257 + $0xc0] sm:$0xff]
      %v294 = vld [vmem:[%s257 + $0xc8] sm:$0xff]
      %v295 = vld [vmem:[%s257 + $0xd0] sm:$0xff]
      %v296 = vld [vmem:[%s257 + $0xd8] sm:$0xff]
      %v297 = vld [vmem:[%s257 + $0xe0] sm:$0xff]
      %v298 = vld [vmem:[%s257 + $0xe8] sm:$0xff]
      %v299 = vld [vmem:[%s257 + $0xf0] sm:$0xff]
      %v300 = vld [vmem:[%s257 + $0xf8] sm:$0xff]
      %v301 = vld [vmem:[%s1] sm:$0x1]
      %v303 = vlaneseq
      %v304 = vshrl.u32 %v303, 7
      %v305 = vsub.s32 0, %v304
      %v306 = vrot.slane %v301, %v305
      %v308 = vmul.f32 %v269, %v306
      %v309 = vmul.f32 %v270, %v306
      %v310 = vmul.f32 %v271, %v306
      %v311 = vmul.f32 %v272, %v306
      %v312 = vmul.f32 %v273, %v306
      %v313 = vmul.f32 %v274, %v306
      %v314 = vmul.f32 %v275, %v306
      %v315 = vmul.f32 %v276, %v306
      %v316 = vmul.f32 %v277, %v306
      %v317 = vmul.f32 %v278, %v306
      %v318 = vmul.f32 %v279, %v306
      %v319 = vmul.f32 %v280, %v306
      %v320 = vmul.f32 %v281, %v306
      %v321 = vmul.f32 %v282, %v306
      %v322 = vmul.f32 %v283, %v306
      %v323 = vmul.f32 %v284, %v306
      %v324 = vmul.f32 %v285, %v306
      %v325 = vmul.f32 %v286, %v306
      %v326 = vmul.f32 %v287, %v306
      %v327 = vmul.f32 %v288, %v306
      %v328 = vmul.f32 %v289, %v306
      %v329 = vmul.f32 %v290, %v306
      %v330 = vmul.f32 %v291, %v306
      %v331 = vmul.f32 %v292, %v306
      %v332 = vmul.f32 %v293, %v306
      %v333 = vmul.f32 %v294, %v306
      %v334 = vmul.f32 %v295, %v306
      %v335 = vmul.f32 %v296, %v306
      %v336 = vmul.f32 %v297, %v306
      %v337 = vmul.f32 %v298, %v306
      %v338 = vmul.f32 %v299, %v306
      %v339 = vmul.f32 %v300, %v306
      %v340 = vld [vmem:[%s2] sm:$0x1]
      %v342 = vlaneseq
      %v343 = vshrl.u32 %v342, 7
      %v344 = vsub.s32 0, %v343
      %v345 = vrot.slane %v340, %v344
      %v347 = vadd.f32 %v308, %v345
      %v348 = vadd.f32 %v309, %v345
      %v349 = vadd.f32 %v310, %v345
      %v350 = vadd.f32 %v311, %v345
      %v351 = vadd.f32 %v312, %v345
      %v352 = vadd.f32 %v313, %v345
      %v353 = vadd.f32 %v314, %v345
      %v354 = vadd.f32 %v315, %v345
      %v355 = vadd.f32 %v316, %v345
      %v356 = vadd.f32 %v317, %v345
      %v357 = vadd.f32 %v318, %v345
      %v358 = vadd.f32 %v319, %v345
      %v359 = vadd.f32 %v320, %v345
      %v360 = vadd.f32 %v321, %v345
      %v361 = vadd.f32 %v322, %v345
      %v362 = vadd.f32 %v323, %v345
      %v363 = vadd.f32 %v324, %v345
      %v364 = vadd.f32 %v325, %v345
      %v365 = vadd.f32 %v326, %v345
      %v366 = vadd.f32 %v327, %v345
      %v367 = vadd.f32 %v328, %v345
      %v368 = vadd.f32 %v329, %v345
      %v369 = vadd.f32 %v330, %v345
      %v370 = vadd.f32 %v331, %v345
      %v371 = vadd.f32 %v332, %v345
      %v372 = vadd.f32 %v333, %v345
      %v373 = vadd.f32 %v334, %v345
      %v374 = vadd.f32 %v335, %v345
      %v375 = vadd.f32 %v336, %v345
      %v376 = vadd.f32 %v337, %v345
      %v377 = vadd.f32 %v338, %v345
      %v378 = vadd.f32 %v339, %v345
      %v379 = vmax.f32 %v347, 0.0
      %v380 = vmax.f32 %v348, 0.0
      %v381 = vmax.f32 %v349, 0.0
      %v382 = vmax.f32 %v350, 0.0
      %v383 = vmax.f32 %v351, 0.0
      %v384 = vmax.f32 %v352, 0.0
      %v385 = vmax.f32 %v353, 0.0
      %v386 = vmax.f32 %v354, 0.0
      %v387 = vmax.f32 %v355, 0.0
      %v388 = vmax.f32 %v356, 0.0
      %v389 = vmax.f32 %v357, 0.0
      %v390 = vmax.f32 %v358, 0.0
      %v391 = vmax.f32 %v359, 0.0
      %v392 = vmax.f32 %v360, 0.0
      %v393 = vmax.f32 %v361, 0.0
      %v394 = vmax.f32 %v362, 0.0
      %v395 = vmax.f32 %v363, 0.0
      %v396 = vmax.f32 %v364, 0.0
      %v397 = vmax.f32 %v365, 0.0
      %v398 = vmax.f32 %v366, 0.0
      %v399 = vmax.f32 %v367, 0.0
      %v400 = vmax.f32 %v368, 0.0
      %v401 = vmax.f32 %v369, 0.0
      %v402 = vmax.f32 %v370, 0.0
      %v403 = vmax.f32 %v371, 0.0
      %v404 = vmax.f32 %v372, 0.0
      %v405 = vmax.f32 %v373, 0.0
      %v406 = vmax.f32 %v374, 0.0
      %v407 = vmax.f32 %v375, 0.0
      %v408 = vmax.f32 %v376, 0.0
      %v409 = vmax.f32 %v377, 0.0
      %v410 = vmax.f32 %v378, 0.0
      %411 = vst [vmem:[#allocation2] sm:$0xff] 0.0
      %412 = vst [vmem:[#allocation2 + $0x8] sm:$0xff] 0.0
      %413 = vst [vmem:[#allocation2 + $0x10] sm:$0x3] 0.0
      %414 = vst [vmem:[#allocation2 + $0x18] sm:$0xff] 0.0
      %415 = vst [vmem:[#allocation2 + $0x20] sm:$0xff] 0.0
      %416 = vst [vmem:[#allocation2 + $0x28] sm:$0x3] 0.0
      %417 = vst [vmem:[#allocation2 + $0x30] sm:$0xff] 0.0
      %418 = vst [vmem:[#allocation2 + $0x38] sm:$0xff] 0.0
      %419 = vst [vmem:[#allocation2 + $0x40] sm:$0x3] 0.0
      %420 = vst [vmem:[#allocation2 + $0x48] sm:$0xff] 0.0
      %421 = vst [vmem:[#allocation2 + $0x50] sm:$0xff] 0.0
      %422 = vst [vmem:[#allocation2 + $0x58] sm:$0x3] 0.0
      %423 = vst [vmem:[#allocation2 + $0x60] sm:$0xff] 0.0
      %424 = vst [vmem:[#allocation2 + $0x68] sm:$0xff] 0.0
      %425 = vst [vmem:[#allocation2 + $0x70] sm:$0x3] 0.0
      %426 = vst [vmem:[#allocation2 + $0x78] sm:$0xff] 0.0
      %427 = vst [vmem:[#allocation2 + $0x80] sm:$0xff] 0.0
      %428 = vst [vmem:[#allocation2 + $0x88] sm:$0x3] 0.0
      %429 = vst [vmem:[#allocation2 + $0x90] sm:$0xff] 0.0
      %430 = vst [vmem:[#allocation2 + $0x98] sm:$0xff] 0.0
      %431 = vst [vmem:[#allocation2 + $0xa0] sm:$0x3] 0.0
      %432 = vst [vmem:[#allocation2 + $0xa8] sm:$0xff] 0.0
      %433 = vst [vmem:[#allocation2 + $0xb0] sm:$0xff] 0.0
      %434 = vst [vmem:[#allocation2 + $0xb8] sm:$0x3] 0.0
      %435 = vst [vmem:[#allocation2 + $0xc0] sm:$0xff] 0.0
      %436 = vst [vmem:[#allocation2 + $0xc8] sm:$0xff] 0.0
      %437 = vst [vmem:[#allocation2 + $0xd0] sm:$0x3] 0.0
      %438 = vst [vmem:[#allocation2 + $0xd8] sm:$0xff] 0.0
      %439 = vst [vmem:[#allocation2 + $0xe0] sm:$0xff] 0.0
      %440 = vst [vmem:[#allocation2 + $0xe8] sm:$0x3] 0.0
      %441 = vst [vmem:[#allocation2 + $0xf0] sm:$0xff] 0.0
      %442 = vst [vmem:[#allocation2 + $0xf8] sm:$0xff] 0.0
      %443 = vst [vmem:[#allocation2 + $0x100] sm:$0x3] 0.0
      %444 = vst [vmem:[#allocation2 + $0x108] sm:$0xff] 0.0
      %445 = vst [vmem:[#allocation2 + $0x110] sm:$0xff] 0.0
      %446 = vst [vmem:[#allocation2 + $0x118] sm:$0x3] 0.0
      %447 = vst [vmem:[#allocation2 + $0x120] sm:$0xff] 0.0
      %448 = vst [vmem:[#allocation2 + $0x128] sm:$0xff] 0.0
      %449 = vst [vmem:[#allocation2 + $0x130] sm:$0x3] 0.0
      %450 = vst [vmem:[#allocation2 + $0x138] sm:$0xff] 0.0
      %451 = vst [vmem:[#allocation2 + $0x140] sm:$0xff] 0.0
      %452 = vst [vmem:[#allocation2 + $0x148] sm:$0x3] 0.0
      %453 = vst [vmem:[#allocation2 + $0x150] sm:$0xff] 0.0
      %454 = vst [vmem:[#allocation2 + $0x158] sm:$0xff] 0.0
      %455 = vst [vmem:[#allocation2 + $0x160] sm:$0x3] 0.0
      %456 = vst [vmem:[#allocation2 + $0x168] sm:$0xff] 0.0
      %457 = vst [vmem:[#allocation2 + $0x170] sm:$0xff] 0.0
      %458 = vst [vmem:[#allocation2 + $0x178] sm:$0x3] 0.0
      %459 = vst [vmem:[#allocation2 + $0x180] sm:$0xff] 0.0
      %460 = vst [vmem:[#allocation2 + $0x188] sm:$0xff] 0.0
      %461 = vst [vmem:[#allocation2 + $0x190] sm:$0x3] 0.0
      %462 = vst [vmem:[#allocation2 + $0x198] sm:$0xff] 0.0
      %463 = vst [vmem:[#allocation2 + $0x1a0] sm:$0xff] 0.0
      %464 = vst [vmem:[#allocation2 + $0x1a8] sm:$0x3] 0.0
      %s465 = scalar_lea.vmem [#allocation2], 24
      %466 = vst [vmem:[%s465 + $0x1] sm:$0xff] %v379
      %467 = vst [vmem:[%s465 + $0x9] sm:$0xff] %v380
      %468 = vst [vmem:[%s465 + $0x19] sm:$0xff] %v381
      %469 = vst [vmem:[%s465 + $0x21] sm:$0xff] %v382
      %470 = vst [vmem:[%s465 + $0x31] sm:$0xff] %v383
      %471 = vst [vmem:[%s465 + $0x39] sm:$0xff] %v384
      %472 = vst [vmem:[%s465 + $0x49] sm:$0xff] %v385
      %473 = vst [vmem:[%s465 + $0x51] sm:$0xff] %v386
      %474 = vst [vmem:[%s465 + $0x61] sm:$0xff] %v387
      %475 = vst [vmem:[%s465 + $0x69] sm:$0xff] %v388
      %476 = vst [vmem:[%s465 + $0x79] sm:$0xff] %v389
      %477 = vst [vmem:[%s465 + $0x81] sm:$0xff] %v390
      %478 = vst [vmem:[%s465 + $0x91] sm:$0xff] %v391
      %479 = vst [vmem:[%s465 + $0x99] sm:$0xff] %v392
      %480 = vst [vmem:[%s465 + $0xa9] sm:$0xff] %v393
      %481 = vst [vmem:[%s465 + $0xb1] sm:$0xff] %v394
      %482 = vst [vmem:[%s465 + $0xc1] sm:$0xff] %v395
      %483 = vst [vmem:[%s465 + $0xc9] sm:$0xff] %v396
      %484 = vst [vmem:[%s465 + $0xd9] sm:$0xff] %v397
      %485 = vst [vmem:[%s465 + $0xe1] sm:$0xff] %v398
      %486 = vst [vmem:[%s465 + $0xf1] sm:$0xff] %v399
      %487 = vst [vmem:[%s465 + $0xf9] sm:$0xff] %v400
      %488 = vst [vmem:[%s465 + $0x109] sm:$0xff] %v401
      %489 = vst [vmem:[%s465 + $0x111] sm:$0xff] %v402
      %490 = vst [vmem:[%s465 + $0x121] sm:$0xff] %v403
      %491 = vst [vmem:[%s465 + $0x129] sm:$0xff] %v404
      %492 = vst [vmem:[%s465 + $0x139] sm:$0xff] %v405
      %493 = vst [vmem:[%s465 + $0x141] sm:$0xff] %v406
      %494 = vst [vmem:[%s465 + $0x151] sm:$0xff] %v407
      %495 = vst [vmem:[%s465 + $0x159] sm:$0xff] %v408
      %496 = vst [vmem:[%s465 + $0x169] sm:$0xff] %v409
      %497 = vst [vmem:[%s465 + $0x171] sm:$0xff] %v410
      %v498 = vld [vmem:[#allocation2] sm:$0xff]
      %v499 = vld [vmem:[#allocation2 + $0x8] sm:$0xff]
      %v500 = vld [vmem:[#allocation2 + $0x18] sm:$0xff]
      %v501 = vld [vmem:[#allocation2 + $0x20] sm:$0xff]
      %v502 = vld [vmem:[#allocation2 + $0x30] sm:$0xff]
      %v503 = vld [vmem:[#allocation2 + $0x38] sm:$0xff]
      %v504 = vld [vmem:[#allocation2 + $0x48] sm:$0xff]
      %v505 = vld [vmem:[#allocation2 + $0x50] sm:$0xff]
      %v506 = vld [vmem:[#allocation2 + $0x60] sm:$0xff]
      %v507 = vld [vmem:[#allocation2 + $0x68] sm:$0xff]
      %v508 = vld [vmem:[#allocation2 + $0x78] sm:$0xff]
      %v509 = vld [vmem:[#allocation2 + $0x80] sm:$0xff]
      %v510 = vld [vmem:[#allocation2 + $0x90] sm:$0xff]
      %v511 = vld [vmem:[#allocation2 + $0x98] sm:$0xff]
      %v512 = vld [vmem:[#allocation2 + $0xa8] sm:$0xff]
      %v513 = vld [vmem:[#allocation2 + $0xb0] sm:$0xff]
      %v514 = vld [vmem:[#allocation2 + $0xc0] sm:$0xff]
      %v515 = vld [vmem:[#allocation2 + $0xc8] sm:$0xff]
      %v516 = vld [vmem:[#allocation2 + $0xd8] sm:$0xff]
      %v517 = vld [vmem:[#allocation2 + $0xe0] sm:$0xff]
      %v518 = vld [vmem:[#allocation2 + $0xf0] sm:$0xff]
      %v519 = vld [vmem:[#allocation2 + $0xf8] sm:$0xff]
      %v520 = vld [vmem:[#allocation2 + $0x108] sm:$0xff]
      %v521 = vld [vmem:[#allocation2 + $0x110] sm:$0xff]
      %v522 = vld [vmem:[#allocation2 + $0x120] sm:$0xff]
      %v523 = vld [vmem:[#allocation2 + $0x128] sm:$0xff]
      %v524 = vld [vmem:[#allocation2 + $0x138] sm:$0xff]
      %v525 = vld [vmem:[#allocation2 + $0x140] sm:$0xff]
      %v526 = vld [vmem:[#allocation2 + $0x150] sm:$0xff]
      %v527 = vld [vmem:[#allocation2 + $0x158] sm:$0xff]
      %v528 = vld [vmem:[#allocation2 + $0x168] sm:$0xff]
      %v529 = vld [vmem:[#allocation2 + $0x170] sm:$0xff]
      %v530 = vld [vmem:[%s3] sm:$0xff]
      %v531 = vld [vmem:[%s3 + $0x8] sm:$0xff]
      %v532 = vld [vmem:[%s3 + $0x10] sm:$0xff]
      %v533 = vld [vmem:[%s3 + $0x18] sm:$0xff]
      %v534 = vld [vmem:[%s3 + $0x20] sm:$0xff]
      %v535 = vld [vmem:[%s3 + $0x28] sm:$0xff]
      %v536 = vld [vmem:[%s3 + $0x30] sm:$0xff]
      %v537 = vld [vmem:[%s3 + $0x38] sm:$0xff]
      %v538 = vld [vmem:[%s3 + $0x40] sm:$0xff]
      %v539 = vld [vmem:[%s3 + $0x48] sm:$0xff]
      %v540 = vld [vmem:[%s3 + $0x50] sm:$0xff]
      %v541 = vld [vmem:[%s3 + $0x58] sm:$0xff]
      %v542 = vld [vmem:[%s3 + $0x60] sm:$0xff]
      %v543 = vld [vmem:[%s3 + $0x68] sm:$0xff]
      %v544 = vld [vmem:[%s3 + $0x70] sm:$0xff]
      %v545 = vld [vmem:[%s3 + $0x78] sm:$0xff]
      %v546 = vld [vmem:[#allocation2 + $0x1] sm:$0xff]
      %v547 = vld [vmem:[#allocation2 + $0x9] sm:$0xff]
      %v548 = vld [vmem:[#allocation2 + $0x19] sm:$0xff]
      %v549 = vld [vmem:[#allocation2 + $0x21] sm:$0xff]
      %v550 = vld [vmem:[#allocation2 + $0x31] sm:$0xff]
      %v551 = vld [vmem:[#allocation2 + $0x39] sm:$0xff]
      %v552 = vld [vmem:[#allocation2 + $0x49] sm:$0xff]
      %v553 = vld [vmem:[#allocation2 + $0x51] sm:$0xff]
      %v554 = vld [vmem:[#allocation2 + $0x61] sm:$0xff]
      %v555 = vld [vmem:[#allocation2 + $0x69] sm:$0xff]
      %v556 = vld [vmem:[#allocation2 + $0x79] sm:$0xff]
      %v557 = vld [vmem:[#allocation2 + $0x81] sm:$0xff]
      %v558 = vld [vmem:[#allocation2 + $0x91] sm:$0xff]
      %v559 = vld [vmem:[#allocation2 + $0x99] sm:$0xff]
      %v560 = vld [vmem:[#allocation2 + $0xa9] sm:$0xff]
      %v561 = vld [vmem:[#allocation2 + $0xb1] sm:$0xff]
      %v562 = vld [vmem:[#allocation2 + $0xc1] sm:$0xff]
      %v563 = vld [vmem:[#allocation2 + $0xc9] sm:$0xff]
      %v564 = vld [vmem:[#allocation2 + $0xd9] sm:$0xff]
      %v565 = vld [vmem:[#allocation2 + $0xe1] sm:$0xff]
      %v566 = vld [vmem:[#allocation2 + $0xf1] sm:$0xff]
      %v567 = vld [vmem:[#allocation2 + $0xf9] sm:$0xff]
      %v568 = vld [vmem:[#allocation2 + $0x109] sm:$0xff]
      %v569 = vld [vmem:[#allocation2 + $0x111] sm:$0xff]
      %v570 = vld [vmem:[#allocation2 + $0x121] sm:$0xff]
      %v571 = vld [vmem:[#allocation2 + $0x129] sm:$0xff]
      %v572 = vld [vmem:[#allocation2 + $0x139] sm:$0xff]
      %v573 = vld [vmem:[#allocation2 + $0x141] sm:$0xff]
      %v574 = vld [vmem:[#allocation2 + $0x151] sm:$0xff]
      %v575 = vld [vmem:[#allocation2 + $0x159] sm:$0xff]
      %v576 = vld [vmem:[#allocation2 + $0x169] sm:$0xff]
      %v577 = vld [vmem:[#allocation2 + $0x171] sm:$0xff]
      %s578 = scalar_lea.vmem %s3, 128
      %v579 = vld [vmem:[%s578] sm:$0xff]
      %v580 = vld [vmem:[%s578 + $0x8] sm:$0xff]
      %v581 = vld [vmem:[%s578 + $0x10] sm:$0xff]
      %v582 = vld [vmem:[%s578 + $0x18] sm:$0xff]
      %v583 = vld [vmem:[%s578 + $0x20] sm:$0xff]
      %v584 = vld [vmem:[%s578 + $0x28] sm:$0xff]
      %v585 = vld [vmem:[%s578 + $0x30] sm:$0xff]
      %v586 = vld [vmem:[%s578 + $0x38] sm:$0xff]
      %v587 = vld [vmem:[%s578 + $0x40] sm:$0xff]
      %v588 = vld [vmem:[%s578 + $0x48] sm:$0xff]
      %v589 = vld [vmem:[%s578 + $0x50] sm:$0xff]
      %v590 = vld [vmem:[%s578 + $0x58] sm:$0xff]
      %v591 = vld [vmem:[%s578 + $0x60] sm:$0xff]
      %v592 = vld [vmem:[%s578 + $0x68] sm:$0xff]
      %v593 = vld [vmem:[%s578 + $0x70] sm:$0xff]
      %v594 = vld [vmem:[%s578 + $0x78] sm:$0xff]
      %595 = vmatprep.subr.mxu0 0.0
      %596 = vmatpush1.msra.mxu0 %v594
      %597 = vmatprep.subr.mxu0 0.0
      %598 = vmatpush1.msra.mxu0 %v593
      %599 = vmatprep.subr.mxu0 0.0
      %600 = vmatpush1.msra.mxu0 %v592
      %601 = vmatprep.subr.mxu0 0.0
      %602 = vmatpush1.msra.mxu0 %v591
      %603 = vmatprep.subr.mxu0 0.0
      %604 = vmatpush1.msra.mxu0 %v590
      %605 = vmatprep.subr.mxu0 0.0
      %606 = vmatpush1.msra.mxu0 %v589
      %607 = vmatprep.subr.mxu0 0.0
      %608 = vmatpush1.msra.mxu0 %v588
      %609 = vmatprep.subr.mxu0 0.0
      %610 = vmatpush1.msra.mxu0 %v587
      %611 = vmatprep.subr.mxu0 0.0
      %612 = vmatpush1.msra.mxu0 %v586
      %613 = vmatprep.subr.mxu0 0.0
      %614 = vmatpush1.msra.mxu0 %v585
      %615 = vmatprep.subr.mxu0 0.0
      %616 = vmatpush1.msra.mxu0 %v584
      %617 = vmatprep.subr.mxu0 0.0
      %618 = vmatpush1.msra.mxu0 %v583
      %619 = vmatprep.subr.mxu0 0.0
      %620 = vmatpush1.msra.mxu0 %v582
      %621 = vmatprep.subr.mxu0 0.0
      %622 = vmatpush1.msra.mxu0 %v581
      %623 = vmatprep.subr.mxu0 0.0
      %624 = vmatpush1.msra.mxu0 %v580
      %625 = vmatprep.subr.mxu0 0.0
      %626 = vmatpush1.msra.mxu0 %v579
      %627 = vmatprep.subr.mxu0 0.0
      %628 = vmatpush2.msra.mxu0 0.0
      %629 = vmatprep.subr.mxu0 0.0
      %630 = vmatpush2.msra.mxu0 0.0
      %631 = vmatprep.subr.mxu0 0.0
      %632 = vmatpush2.msra.mxu0 0.0
      %633 = vmatprep.subr.mxu0 0.0
      %634 = vmatpush2.msra.mxu0 0.0
      %635 = vmatprep.subr.mxu0 0.0
      %636 = vmatpush2.msra.mxu0 0.0
      %637 = vmatprep.subr.mxu0 0.0
      %638 = vmatpush2.msra.mxu0 0.0
      %639 = vmatprep.subr.mxu0 0.0
      %640 = vmatpush2.msra.mxu0 0.0
      %641 = vmatprep.subr.mxu0 0.0
      %642 = vmatpush2.msra.mxu0 0.0
      %643 = vmatprep.subr.mxu0 0.0
      %644 = vmatpush2.msra.mxu0 0.0
      %645 = vmatprep.subr.mxu0 0.0
      %646 = vmatpush2.msra.mxu0 0.0
      %647 = vmatprep.subr.mxu0 0.0
      %648 = vmatpush2.msra.mxu0 0.0
      %649 = vmatprep.subr.mxu0 0.0
      %650 = vmatpush2.msra.mxu0 0.0
      %651 = vmatprep.subr.mxu0 0.0
      %652 = vmatpush2.msra.mxu0 0.0
      %653 = vmatprep.subr.mxu0 0.0
      %654 = vmatpush2.msra.mxu0 0.0
      %655 = vmatprep.subr.mxu0 0.0
      %656 = vmatpush2.msra.mxu0 0.0
      %657 = vmatprep.subr.mxu0 0.0
      %658 = vmatpush2.msra.mxu0 0.0
      %659 = vmatprep.mubr.f32.mxu0 0.0
      %660 = vmatmul.mubr.f32.gmra.mxu0 %v546
      %v661 = vpop.f32.mrf.mxu0
      %v662 = vadd.f32 0.0, %v661
      %v663 = vpop.f32.mrf.mxu0
      %664 = vmatprep.mubr.f32.mxu0 0.0
      %665 = vmatmul.mubr.f32.gmra.mxu0 %v547
      %v666 = vpop.f32.mrf.mxu0
      %v667 = vadd.f32 0.0, %v666
      %v668 = vpop.f32.mrf.mxu0
      %669 = vmatprep.mubr.f32.mxu0 0.0
      %670 = vmatmul.mubr.f32.gmra.mxu0 %v548
      %v671 = vpop.f32.mrf.mxu0
      %v672 = vadd.f32 0.0, %v671
      %v673 = vpop.f32.mrf.mxu0
      %674 = vmatprep.mubr.f32.mxu0 0.0
      %675 = vmatmul.mubr.f32.gmra.mxu0 %v549
      %v676 = vpop.f32.mrf.mxu0
      %v677 = vadd.f32 0.0, %v676
      %v678 = vpop.f32.mrf.mxu0
      %679 = vmatprep.mubr.f32.mxu0 0.0
      %680 = vmatmul.mubr.f32.gmra.mxu0 %v550
      %v681 = vpop.f32.mrf.mxu0
      %v682 = vadd.f32 0.0, %v681
      %v683 = vpop.f32.mrf.mxu0
      %684 = vmatprep.mubr.f32.mxu0 0.0
      %685 = vmatmul.mubr.f32.gmra.mxu0 %v551
      %v686 = vpop.f32.mrf.mxu0
      %v687 = vadd.f32 0.0, %v686
      %v688 = vpop.f32.mrf.mxu0
      %689 = vmatprep.mubr.f32.mxu0 0.0
      %690 = vmatmul.mubr.f32.gmra.mxu0 %v552
      %v691 = vpop.f32.mrf.mxu0
      %v692 = vadd.f32 0.0, %v691
      %v693 = vpop.f32.mrf.mxu0
      %694 = vmatprep.mubr.f32.mxu0 0.0
      %695 = vmatmul.mubr.f32.gmra.mxu0 %v553
      %v696 = vpop.f32.mrf.mxu0
      %v697 = vadd.f32 0.0, %v696
      %v698 = vpop.f32.mrf.mxu0
      %699 = vmatprep.mubr.f32.mxu0 0.0
      %700 = vmatmul.mubr.f32.gmra.mxu0 %v554
      %v701 = vpop.f32.mrf.mxu0
      %v702 = vadd.f32 0.0, %v701
      %v703 = vpop.f32.mrf.mxu0
      %704 = vmatprep.mubr.f32.mxu0 0.0
      %705 = vmatmul.mubr.f32.gmra.mxu0 %v555
      %v706 = vpop.f32.mrf.mxu0
      %v707 = vadd.f32 0.0, %v706
      %v708 = vpop.f32.mrf.mxu0
      %709 = vmatprep.mubr.f32.mxu0 0.0
      %710 = vmatmul.mubr.f32.gmra.mxu0 %v556
      %v711 = vpop.f32.mrf.mxu0
      %v712 = vadd.f32 0.0, %v711
      %v713 = vpop.f32.mrf.mxu0
      %714 = vmatprep.mubr.f32.mxu0 0.0
      %715 = vmatmul.mubr.f32.gmra.mxu0 %v557
      %v716 = vpop.f32.mrf.mxu0
      %v717 = vadd.f32 0.0, %v716
      %v718 = vpop.f32.mrf.mxu0
      %719 = vmatprep.mubr.f32.mxu0 0.0
      %720 = vmatmul.mubr.f32.gmra.mxu0 %v558
      %v721 = vpop.f32.mrf.mxu0
      %v722 = vadd.f32 0.0, %v721
      %v723 = vpop.f32.mrf.mxu0
      %724 = vmatprep.mubr.f32.mxu0 0.0
      %725 = vmatmul.mubr.f32.gmra.mxu0 %v559
      %v726 = vpop.f32.mrf.mxu0
      %v727 = vadd.f32 0.0, %v726
      %v728 = vpop.f32.mrf.mxu0
      %729 = vmatprep.mubr.f32.mxu0 0.0
      %730 = vmatmul.mubr.f32.gmra.mxu0 %v560
      %v731 = vpop.f32.mrf.mxu0
      %v732 = vadd.f32 0.0, %v731
      %v733 = vpop.f32.mrf.mxu0
      %734 = vmatprep.mubr.f32.mxu0 0.0
      %735 = vmatmul.mubr.f32.gmra.mxu0 %v561
      %v736 = vpop.f32.mrf.mxu0
      %v737 = vadd.f32 0.0, %v736
      %v738 = vpop.f32.mrf.mxu0
      %739 = vmatprep.mubr.f32.mxu0 0.0
      %740 = vmatmul.mubr.f32.gmra.mxu0 %v562
      %v741 = vpop.f32.mrf.mxu0
      %v742 = vadd.f32 0.0, %v741
      %v743 = vpop.f32.mrf.mxu0
      %744 = vmatprep.mubr.f32.mxu0 0.0
      %745 = vmatmul.mubr.f32.gmra.mxu0 %v563
      %v746 = vpop.f32.mrf.mxu0
      %v747 = vadd.f32 0.0, %v746
      %v748 = vpop.f32.mrf.mxu0
      %749 = vmatprep.mubr.f32.mxu0 0.0
      %750 = vmatmul.mubr.f32.gmra.mxu0 %v564
      %v751 = vpop.f32.mrf.mxu0
      %v752 = vadd.f32 0.0, %v751
      %v753 = vpop.f32.mrf.mxu0
      %754 = vmatprep.mubr.f32.mxu0 0.0
      %755 = vmatmul.mubr.f32.gmra.mxu0 %v565
      %v756 = vpop.f32.mrf.mxu0
      %v757 = vadd.f32 0.0, %v756
      %v758 = vpop.f32.mrf.mxu0
      %759 = vmatprep.mubr.f32.mxu0 0.0
      %760 = vmatmul.mubr.f32.gmra.mxu0 %v566
      %v761 = vpop.f32.mrf.mxu0
      %v762 = vadd.f32 0.0, %v761
      %v763 = vpop.f32.mrf.mxu0
      %764 = vmatprep.mubr.f32.mxu0 0.0
      %765 = vmatmul.mubr.f32.gmra.mxu0 %v567
      %v766 = vpop.f32.mrf.mxu0
      %v767 = vadd.f32 0.0, %v766
      %v768 = vpop.f32.mrf.mxu0
      %769 = vmatprep.mubr.f32.mxu0 0.0
      %770 = vmatmul.mubr.f32.gmra.mxu0 %v568
      %v771 = vpop.f32.mrf.mxu0
      %v772 = vadd.f32 0.0, %v771
      %v773 = vpop.f32.mrf.mxu0
      %774 = vmatprep.mubr.f32.mxu0 0.0
      %775 = vmatmul.mubr.f32.gmra.mxu0 %v569
      %v776 = vpop.f32.mrf.mxu0
      %v777 = vadd.f32 0.0, %v776
      %v778 = vpop.f32.mrf.mxu0
      %779 = vmatprep.mubr.f32.mxu0 0.0
      %780 = vmatmul.mubr.f32.gmra.mxu0 %v570
      %v781 = vpop.f32.mrf.mxu0
      %v782 = vadd.f32 0.0, %v781
      %v783 = vpop.f32.mrf.mxu0
      %784 = vmatprep.mubr.f32.mxu0 0.0
      %785 = vmatmul.mubr.f32.gmra.mxu0 %v571
      %v786 = vpop.f32.mrf.mxu0
      %v787 = vadd.f32 0.0, %v786
      %v788 = vpop.f32.mrf.mxu0
      %789 = vmatprep.mubr.f32.mxu0 0.0
      %790 = vmatmul.mubr.f32.gmra.mxu0 %v572
      %v791 = vpop.f32.mrf.mxu0
      %v792 = vadd.f32 0.0, %v791
      %v793 = vpop.f32.mrf.mxu0
      %794 = vmatprep.mubr.f32.mxu0 0.0
      %795 = vmatmul.mubr.f32.gmra.mxu0 %v573
      %v796 = vpop.f32.mrf.mxu0
      %v797 = vadd.f32 0.0, %v796
      %v798 = vpop.f32.mrf.mxu0
      %799 = vmatprep.mubr.f32.mxu0 0.0
      %800 = vmatmul.mubr.f32.gmra.mxu0 %v574
      %v801 = vpop.f32.mrf.mxu0
      %v802 = vadd.f32 0.0, %v801
      %v803 = vpop.f32.mrf.mxu0
      %804 = vmatprep.mubr.f32.mxu0 0.0
      %805 = vmatmul.mubr.f32.gmra.mxu0 %v575
      %v806 = vpop.f32.mrf.mxu0
      %v807 = vadd.f32 0.0, %v806
      %v808 = vpop.f32.mrf.mxu0
      %809 = vmatprep.mubr.f32.mxu0 0.0
      %810 = vmatmul.mubr.f32.gmra.mxu0 %v576
      %v811 = vpop.f32.mrf.mxu0
      %v812 = vadd.f32 0.0, %v811
      %v813 = vpop.f32.mrf.mxu0
      %814 = vmatprep.mubr.f32.mxu0 0.0
      %815 = vmatmul.mubr.f32.gmra.mxu0 %v577
      %v816 = vpop.f32.mrf.mxu0
      %v817 = vadd.f32 0.0, %v816
      %v818 = vpop.f32.mrf.mxu0
      %819 = vdwg.mxu0
      %820 = vmatprep.subr.mxu0 0.0
      %821 = vmatpush1.msra.mxu0 %v545
      %822 = vmatprep.subr.mxu0 0.0
      %823 = vmatpush1.msra.mxu0 %v544
      %824 = vmatprep.subr.mxu0 0.0
      %825 = vmatpush1.msra.mxu0 %v543
      %826 = vmatprep.subr.mxu0 0.0
      %827 = vmatpush1.msra.mxu0 %v542
      %828 = vmatprep.subr.mxu0 0.0
      %829 = vmatpush1.msra.mxu0 %v541
      %830 = vmatprep.subr.mxu0 0.0
      %831 = vmatpush1.msra.mxu0 %v540
      %832 = vmatprep.subr.mxu0 0.0
      %833 = vmatpush1.msra.mxu0 %v539
      %834 = vmatprep.subr.mxu0 0.0
      %835 = vmatpush1.msra.mxu0 %v538
      %836 = vmatprep.subr.mxu0 0.0
      %837 = vmatpush1.msra.mxu0 %v537
      %838 = vmatprep.subr.mxu0 0.0
      %839 = vmatpush1.msra.mxu0 %v536
      %840 = vmatprep.subr.mxu0 0.0
      %841 = vmatpush1.msra.mxu0 %v535
      %842 = vmatprep.subr.mxu0 0.0
      %843 = vmatpush1.msra.mxu0 %v534
      %844 = vmatprep.subr.mxu0 0.0
      %845 = vmatpush1.msra.mxu0 %v533
      %846 = vmatprep.subr.mxu0 0.0
      %847 = vmatpush1.msra.mxu0 %v532
      %848 = vmatprep.subr.mxu0 0.0
      %849 = vmatpush1.msra.mxu0 %v531
      %850 = vmatprep.subr.mxu0 0.0
      %851 = vmatpush1.msra.mxu0 %v530
      %852 = vmatprep.subr.mxu0 0.0
      %853 = vmatpush2.msra.mxu0 0.0
      %854 = vmatprep.subr.mxu0 0.0
      %855 = vmatpush2.msra.mxu0 0.0
      %856 = vmatprep.subr.mxu0 0.0
      %857 = vmatpush2.msra.mxu0 0.0
      %858 = vmatprep.subr.mxu0 0.0
      %859 = vmatpush2.msra.mxu0 0.0
      %860 = vmatprep.subr.mxu0 0.0
      %861 = vmatpush2.msra.mxu0 0.0
      %862 = vmatprep.subr.mxu0 0.0
      %863 = vmatpush2.msra.mxu0 0.0
      %864 = vmatprep.subr.mxu0 0.0
      %865 = vmatpush2.msra.mxu0 0.0
      %866 = vmatprep.subr.mxu0 0.0
      %867 = vmatpush2.msra.mxu0 0.0
      %868 = vmatprep.subr.mxu0 0.0
      %869 = vmatpush2.msra.mxu0 0.0
      %870 = vmatprep.subr.mxu0 0.0
      %871 = vmatpush2.msra.mxu0 0.0
      %872 = vmatprep.subr.mxu0 0.0
      %873 = vmatpush2.msra.mxu0 0.0
      %874 = vmatprep.subr.mxu0 0.0
      %875 = vmatpush2.msra.mxu0 0.0
      %876 = vmatprep.subr.mxu0 0.0
      %877 = vmatpush2.msra.mxu0 0.0
      %878 = vmatprep.subr.mxu0 0.0
      %879 = vmatpush2.msra.mxu0 0.0
      %880 = vmatprep.subr.mxu0 0.0
      %881 = vmatpush2.msra.mxu0 0.0
      %882 = vmatprep.subr.mxu0 0.0
      %883 = vmatpush2.msra.mxu0 0.0
      %884 = vmatprep.mubr.f32.mxu0 0.0
      %885 = vmatmul.mubr.f32.gmra.mxu0 %v498
      %v886 = vpop.f32.mrf.mxu0
      %v887 = vadd.f32 %v662, %v886
      %v888 = vpop.f32.mrf.mxu0
      %889 = vmatprep.mubr.f32.mxu0 0.0
      %890 = vmatmul.mubr.f32.gmra.mxu0 %v499
      %v891 = vpop.f32.mrf.mxu0
      %v892 = vadd.f32 %v667, %v891
      %v893 = vpop.f32.mrf.mxu0
      %894 = vmatprep.mubr.f32.mxu0 0.0
      %895 = vmatmul.mubr.f32.gmra.mxu0 %v500
      %v896 = vpop.f32.mrf.mxu0
      %v897 = vadd.f32 %v672, %v896
      %v898 = vpop.f32.mrf.mxu0
      %899 = vmatprep.mubr.f32.mxu0 0.0
      %900 = vmatmul.mubr.f32.gmra.mxu0 %v501
      %v901 = vpop.f32.mrf.mxu0
      %v902 = vadd.f32 %v677, %v901
      %v903 = vpop.f32.mrf.mxu0
      %904 = vmatprep.mubr.f32.mxu0 0.0
      %905 = vmatmul.mubr.f32.gmra.mxu0 %v502
      %v906 = vpop.f32.mrf.mxu0
      %v907 = vadd.f32 %v682, %v906
      %v908 = vpop.f32.mrf.mxu0
      %909 = vmatprep.mubr.f32.mxu0 0.0
      %910 = vmatmul.mubr.f32.gmra.mxu0 %v503
      %v911 = vpop.f32.mrf.mxu0
      %v912 = vadd.f32 %v687, %v911
      %v913 = vpop.f32.mrf.mxu0
      %914 = vmatprep.mubr.f32.mxu0 0.0
      %915 = vmatmul.mubr.f32.gmra.mxu0 %v504
      %v916 = vpop.f32.mrf.mxu0
      %v917 = vadd.f32 %v692, %v916
      %v918 = vpop.f32.mrf.mxu0
      %919 = vmatprep.mubr.f32.mxu0 0.0
      %920 = vmatmul.mubr.f32.gmra.mxu0 %v505
      %v921 = vpop.f32.mrf.mxu0
      %v922 = vadd.f32 %v697, %v921
      %v923 = vpop.f32.mrf.mxu0
      %924 = vmatprep.mubr.f32.mxu0 0.0
      %925 = vmatmul.mubr.f32.gmra.mxu0 %v506
      %v926 = vpop.f32.mrf.mxu0
      %v927 = vadd.f32 %v702, %v926
      %v928 = vpop.f32.mrf.mxu0
      %929 = vmatprep.mubr.f32.mxu0 0.0
      %930 = vmatmul.mubr.f32.gmra.mxu0 %v507
      %v931 = vpop.f32.mrf.mxu0
      %v932 = vadd.f32 %v707, %v931
      %v933 = vpop.f32.mrf.mxu0
      %934 = vmatprep.mubr.f32.mxu0 0.0
      %935 = vmatmul.mubr.f32.gmra.mxu0 %v508
      %v936 = vpop.f32.mrf.mxu0
      %v937 = vadd.f32 %v712, %v936
      %v938 = vpop.f32.mrf.mxu0
      %939 = vmatprep.mubr.f32.mxu0 0.0
      %940 = vmatmul.mubr.f32.gmra.mxu0 %v509
      %v941 = vpop.f32.mrf.mxu0
      %v942 = vadd.f32 %v717, %v941
      %v943 = vpop.f32.mrf.mxu0
      %944 = vmatprep.mubr.f32.mxu0 0.0
      %945 = vmatmul.mubr.f32.gmra.mxu0 %v510
      %v946 = vpop.f32.mrf.mxu0
      %v947 = vadd.f32 %v722, %v946
      %v948 = vpop.f32.mrf.mxu0
      %949 = vmatprep.mubr.f32.mxu0 0.0
      %950 = vmatmul.mubr.f32.gmra.mxu0 %v511
      %v951 = vpop.f32.mrf.mxu0
      %v952 = vadd.f32 %v727, %v951
      %v953 = vpop.f32.mrf.mxu0
      %954 = vmatprep.mubr.f32.mxu0 0.0
      %955 = vmatmul.mubr.f32.gmra.mxu0 %v512
      %v956 = vpop.f32.mrf.mxu0
      %v957 = vadd.f32 %v732, %v956
      %v958 = vpop.f32.mrf.mxu0
      %959 = vmatprep.mubr.f32.mxu0 0.0
      %960 = vmatmul.mubr.f32.gmra.mxu0 %v513
      %v961 = vpop.f32.mrf.mxu0
      %v962 = vadd.f32 %v737, %v961
      %v963 = vpop.f32.mrf.mxu0
      %964 = vmatprep.mubr.f32.mxu0 0.0
      %965 = vmatmul.mubr.f32.gmra.mxu0 %v514
      %v966 = vpop.f32.mrf.mxu0
      %v967 = vadd.f32 %v742, %v966
      %v968 = vpop.f32.mrf.mxu0
      %969 = vmatprep.mubr.f32.mxu0 0.0
      %970 = vmatmul.mubr.f32.gmra.mxu0 %v515
      %v971 = vpop.f32.mrf.mxu0
      %v972 = vadd.f32 %v747, %v971
      %v973 = vpop.f32.mrf.mxu0
      %974 = vmatprep.mubr.f32.mxu0 0.0
      %975 = vmatmul.mubr.f32.gmra.mxu0 %v516
      %v976 = vpop.f32.mrf.mxu0
      %v977 = vadd.f32 %v752, %v976
      %v978 = vpop.f32.mrf.mxu0
      %979 = vmatprep.mubr.f32.mxu0 0.0
      %980 = vmatmul.mubr.f32.gmra.mxu0 %v517
      %v981 = vpop.f32.mrf.mxu0
      %v982 = vadd.f32 %v757, %v981
      %v983 = vpop.f32.mrf.mxu0
      %984 = vmatprep.mubr.f32.mxu0 0.0
      %985 = vmatmul.mubr.f32.gmra.mxu0 %v518
      %v986 = vpop.f32.mrf.mxu0
      %v987 = vadd.f32 %v762, %v986
      %v988 = vpop.f32.mrf.mxu0
      %989 = vmatprep.mubr.f32.mxu0 0.0
      %990 = vmatmul.mubr.f32.gmra.mxu0 %v519
      %v991 = vpop.f32.mrf.mxu0
      %v992 = vadd.f32 %v767, %v991
      %v993 = vpop.f32.mrf.mxu0
      %994 = vmatprep.mubr.f32.mxu0 0.0
      %995 = vmatmul.mubr.f32.gmra.mxu0 %v520
      %v996 = vpop.f32.mrf.mxu0
      %v997 = vadd.f32 %v772, %v996
      %v998 = vpop.f32.mrf.mxu0
      %999 = vmatprep.mubr.f32.mxu0 0.0
      %1000 = vmatmul.mubr.f32.gmra.mxu0 %v521
      %v1001 = vpop.f32.mrf.mxu0
      %v1002 = vadd.f32 %v777, %v1001
      %v1003 = vpop.f32.mrf.mxu0
      %1004 = vmatprep.mubr.f32.mxu0 0.0
      %1005 = vmatmul.mubr.f32.gmra.mxu0 %v522
      %v1006 = vpop.f32.mrf.mxu0
      %v1007 = vadd.f32 %v782, %v1006
      %v1008 = vpop.f32.mrf.mxu0
      %1009 = vmatprep.mubr.f32.mxu0 0.0
      %1010 = vmatmul.mubr.f32.gmra.mxu0 %v523
      %v1011 = vpop.f32.mrf.mxu0
      %v1012 = vadd.f32 %v787, %v1011
      %v1013 = vpop.f32.mrf.mxu0
      %1014 = vmatprep.mubr.f32.mxu0 0.0
      %1015 = vmatmul.mubr.f32.gmra.mxu0 %v524
      %v1016 = vpop.f32.mrf.mxu0
      %v1017 = vadd.f32 %v792, %v1016
      %v1018 = vpop.f32.mrf.mxu0
      %1019 = vmatprep.mubr.f32.mxu0 0.0
      %1020 = vmatmul.mubr.f32.gmra.mxu0 %v525
      %v1021 = vpop.f32.mrf.mxu0
      %v1022 = vadd.f32 %v797, %v1021
      %v1023 = vpop.f32.mrf.mxu0
      %1024 = vmatprep.mubr.f32.mxu0 0.0
      %1025 = vmatmul.mubr.f32.gmra.mxu0 %v526
      %v1026 = vpop.f32.mrf.mxu0
      %v1027 = vadd.f32 %v802, %v1026
      %v1028 = vpop.f32.mrf.mxu0
      %1029 = vmatprep.mubr.f32.mxu0 0.0
      %1030 = vmatmul.mubr.f32.gmra.mxu0 %v527
      %v1031 = vpop.f32.mrf.mxu0
      %v1032 = vadd.f32 %v807, %v1031
      %v1033 = vpop.f32.mrf.mxu0
      %1034 = vmatprep.mubr.f32.mxu0 0.0
      %1035 = vmatmul.mubr.f32.gmra.mxu0 %v528
      %v1036 = vpop.f32.mrf.mxu0
      %v1037 = vadd.f32 %v812, %v1036
      %v1038 = vpop.f32.mrf.mxu0
      %1039 = vmatprep.mubr.f32.mxu0 0.0
      %1040 = vmatmul.mubr.f32.gmra.mxu0 %v529
      %v1041 = vpop.f32.mrf.mxu0
      %v1042 = vadd.f32 %v817, %v1041
      %v1043 = vpop.f32.mrf.mxu0
      %1044 = vdwg.mxu0
      %v1045 = vld [vmem:[#allocation2 + $0x2] sm:$0xff]
      %v1046 = vld [vmem:[#allocation2 + $0xa] sm:$0xff]
      %v1047 = vld [vmem:[#allocation2 + $0x1a] sm:$0xff]
      %v1048 = vld [vmem:[#allocation2 + $0x22] sm:$0xff]
      %v1049 = vld [vmem:[#allocation2 + $0x32] sm:$0xff]
      %v1050 = vld [vmem:[#allocation2 + $0x3a] sm:$0xff]
      %v1051 = vld [vmem:[#allocation2 + $0x4a] sm:$0xff]
      %v1052 = vld [vmem:[#allocation2 + $0x52] sm:$0xff]
      %v1053 = vld [vmem:[#allocation2 + $0x62] sm:$0xff]
      %v1054 = vld [vmem:[#allocation2 + $0x6a] sm:$0xff]
      %v1055 = vld [vmem:[#allocation2 + $0x7a] sm:$0xff]
      %v1056 = vld [vmem:[#allocation2 + $0x82] sm:$0xff]
      %v1057 = vld [vmem:[#allocation2 + $0x92] sm:$0xff]
      %v1058 = vld [vmem:[#allocation2 + $0x9a] sm:$0xff]
      %v1059 = vld [vmem:[#allocation2 + $0xaa] sm:$0xff]
      %v1060 = vld [vmem:[#allocation2 + $0xb2] sm:$0xff]
      %v1061 = vld [vmem:[#allocation2 + $0xc2] sm:$0xff]
      %v1062 = vld [vmem:[#allocation2 + $0xca] sm:$0xff]
      %v1063 = vld [vmem:[#allocation2 + $0xda] sm:$0xff]
      %v1064 = vld [vmem:[#allocation2 + $0xe2] sm:$0xff]
      %v1065 = vld [vmem:[#allocation2 + $0xf2] sm:$0xff]
      %v1066 = vld [vmem:[#allocation2 + $0xfa] sm:$0xff]
      %v1067 = vld [vmem:[#allocation2 + $0x10a] sm:$0xff]
      %v1068 = vld [vmem:[#allocation2 + $0x112] sm:$0xff]
      %v1069 = vld [vmem:[#allocation2 + $0x122] sm:$0xff]
      %v1070 = vld [vmem:[#allocation2 + $0x12a] sm:$0xff]
      %v1071 = vld [vmem:[#allocation2 + $0x13a] sm:$0xff]
      %v1072 = vld [vmem:[#allocation2 + $0x142] sm:$0xff]
      %v1073 = vld [vmem:[#allocation2 + $0x152] sm:$0xff]
      %v1074 = vld [vmem:[#allocation2 + $0x15a] sm:$0xff]
      %v1075 = vld [vmem:[#allocation2 + $0x16a] sm:$0xff]
      %v1076 = vld [vmem:[#allocation2 + $0x172] sm:$0xff]
      %s1077 = scalar_lea.vmem %s3, 256
      %v1078 = vld [vmem:[%s1077] sm:$0xff]
      %v1079 = vld [vmem:[%s1077 + $0x8] sm:$0xff]
      %v1080 = vld [vmem:[%s1077 + $0x10] sm:$0xff]
      %v1081 = vld [vmem:[%s1077 + $0x18] sm:$0xff]
      %v1082 = vld [vmem:[%s1077 + $0x20] sm:$0xff]
      %v1083 = vld [vmem:[%s1077 + $0x28] sm:$0xff]
      %v1084 = vld [vmem:[%s1077 + $0x30] sm:$0xff]
      %v1085 = vld [vmem:[%s1077 + $0x38] sm:$0xff]
      %v1086 = vld [vmem:[%s1077 + $0x40] sm:$0xff]
      %v1087 = vld [vmem:[%s1077 + $0x48] sm:$0xff]
      %v1088 = vld [vmem:[%s1077 + $0x50] sm:$0xff]
      %v1089 = vld [vmem:[%s1077 + $0x58] sm:$0xff]
      %v1090 = vld [vmem:[%s1077 + $0x60] sm:$0xff]
      %v1091 = vld [vmem:[%s1077 + $0x68] sm:$0xff]
      %v1092 = vld [vmem:[%s1077 + $0x70] sm:$0xff]
      %v1093 = vld [vmem:[%s1077 + $0x78] sm:$0xff]
      %1094 = vmatprep.subr.mxu0 0.0
      %1095 = vmatpush1.msra.mxu0 %v1093
      %1096 = vmatprep.subr.mxu0 0.0
      %1097 = vmatpush1.msra.mxu0 %v1092
      %1098 = vmatprep.subr.mxu0 0.0
      %1099 = vmatpush1.msra.mxu0 %v1091
      %1100 = vmatprep.subr.mxu0 0.0
      %1101 = vmatpush1.msra.mxu0 %v1090
      %1102 = vmatprep.subr.mxu0 0.0
      %1103 = vmatpush1.msra.mxu0 %v1089
      %1104 = vmatprep.subr.mxu0 0.0
      %1105 = vmatpush1.msra.mxu0 %v1088
      %1106 = vmatprep.subr.mxu0 0.0
      %1107 = vmatpush1.msra.mxu0 %v1087
      %1108 = vmatprep.subr.mxu0 0.0
      %1109 = vmatpush1.msra.mxu0 %v1086
      %1110 = vmatprep.subr.mxu0 0.0
      %1111 = vmatpush1.msra.mxu0 %v1085
      %1112 = vmatprep.subr.mxu0 0.0
      %1113 = vmatpush1.msra.mxu0 %v1084
      %1114 = vmatprep.subr.mxu0 0.0
      %1115 = vmatpush1.msra.mxu0 %v1083
      %1116 = vmatprep.subr.mxu0 0.0
      %1117 = vmatpush1.msra.mxu0 %v1082
      %1118 = vmatprep.subr.mxu0 0.0
      %1119 = vmatpush1.msra.mxu0 %v1081
      %1120 = vmatprep.subr.mxu0 0.0
      %1121 = vmatpush1.msra.mxu0 %v1080
      %1122 = vmatprep.subr.mxu0 0.0
      %1123 = vmatpush1.msra.mxu0 %v1079
      %1124 = vmatprep.subr.mxu0 0.0
      %1125 = vmatpush1.msra.mxu0 %v1078
      %1126 = vmatprep.subr.mxu0 0.0
      %1127 = vmatpush2.msra.mxu0 0.0
      %1128 = vmatprep.subr.mxu0 0.0
      %1129 = vmatpush2.msra.mxu0 0.0
      %1130 = vmatprep.subr.mxu0 0.0
      %1131 = vmatpush2.msra.mxu0 0.0
      %1132 = vmatprep.subr.mxu0 0.0
      %1133 = vmatpush2.msra.mxu0 0.0
      %1134 = vmatprep.subr.mxu0 0.0
      %1135 = vmatpush2.msra.mxu0 0.0
      %1136 = vmatprep.subr.mxu0 0.0
      %1137 = vmatpush2.msra.mxu0 0.0
      %1138 = vmatprep.subr.mxu0 0.0
      %1139 = vmatpush2.msra.mxu0 0.0
      %1140 = vmatprep.subr.mxu0 0.0
      %1141 = vmatpush2.msra.mxu0 0.0
      %1142 = vmatprep.subr.mxu0 0.0
      %1143 = vmatpush2.msra.mxu0 0.0
      %1144 = vmatprep.subr.mxu0 0.0
      %1145 = vmatpush2.msra.mxu0 0.0
      %1146 = vmatprep.subr.mxu0 0.0
      %1147 = vmatpush2.msra.mxu0 0.0
      %1148 = vmatprep.subr.mxu0 0.0
      %1149 = vmatpush2.msra.mxu0 0.0
      %1150 = vmatprep.subr.mxu0 0.0
      %1151 = vmatpush2.msra.mxu0 0.0
      %1152 = vmatprep.subr.mxu0 0.0
      %1153 = vmatpush2.msra.mxu0 0.0
      %1154 = vmatprep.subr.mxu0 0.0
      %1155 = vmatpush2.msra.mxu0 0.0
      %1156 = vmatprep.subr.mxu0 0.0
      %1157 = vmatpush2.msra.mxu0 0.0
      %1158 = vmatprep.mubr.f32.mxu0 0.0
      %1159 = vmatmul.mubr.f32.gmra.mxu0 %v1045
      %v1160 = vpop.f32.mrf.mxu0
      %v1161 = vadd.f32 0.0, %v1160
      %v1162 = vpop.f32.mrf.mxu0
      %1163 = vmatprep.mubr.f32.mxu0 0.0
      %1164 = vmatmul.mubr.f32.gmra.mxu0 %v1046
      %v1165 = vpop.f32.mrf.mxu0
      %v1166 = vadd.f32 0.0, %v1165
      %v1167 = vpop.f32.mrf.mxu0
      %1168 = vmatprep.mubr.f32.mxu0 0.0
      %1169 = vmatmul.mubr.f32.gmra.mxu0 %v1047
      %v1170 = vpop.f32.mrf.mxu0
      %v1171 = vadd.f32 0.0, %v1170
      %v1172 = vpop.f32.mrf.mxu0
      %1173 = vmatprep.mubr.f32.mxu0 0.0
      %1174 = vmatmul.mubr.f32.gmra.mxu0 %v1048
      %v1175 = vpop.f32.mrf.mxu0
      %v1176 = vadd.f32 0.0, %v1175
      %v1177 = vpop.f32.mrf.mxu0
      %1178 = vmatprep.mubr.f32.mxu0 0.0
      %1179 = vmatmul.mubr.f32.gmra.mxu0 %v1049
      %v1180 = vpop.f32.mrf.mxu0
      %v1181 = vadd.f32 0.0, %v1180
      %v1182 = vpop.f32.mrf.mxu0
      %1183 = vmatprep.mubr.f32.mxu0 0.0
      %1184 = vmatmul.mubr.f32.gmra.mxu0 %v1050
      %v1185 = vpop.f32.mrf.mxu0
      %v1186 = vadd.f32 0.0, %v1185
      %v1187 = vpop.f32.mrf.mxu0
      %1188 = vmatprep.mubr.f32.mxu0 0.0
      %1189 = vmatmul.mubr.f32.gmra.mxu0 %v1051
      %v1190 = vpop.f32.mrf.mxu0
      %v1191 = vadd.f32 0.0, %v1190
      %v1192 = vpop.f32.mrf.mxu0
      %1193 = vmatprep.mubr.f32.mxu0 0.0
      %1194 = vmatmul.mubr.f32.gmra.mxu0 %v1052
      %v1195 = vpop.f32.mrf.mxu0
      %v1196 = vadd.f32 0.0, %v1195
      %v1197 = vpop.f32.mrf.mxu0
      %1198 = vmatprep.mubr.f32.mxu0 0.0
      %1199 = vmatmul.mubr.f32.gmra.mxu0 %v1053
      %v1200 = vpop.f32.mrf.mxu0
      %v1201 = vadd.f32 0.0, %v1200
      %v1202 = vpop.f32.mrf.mxu0
      %1203 = vmatprep.mubr.f32.mxu0 0.0
      %1204 = vmatmul.mubr.f32.gmra.mxu0 %v1054
      %v1205 = vpop.f32.mrf.mxu0
      %v1206 = vadd.f32 0.0, %v1205
      %v1207 = vpop.f32.mrf.mxu0
      %1208 = vmatprep.mubr.f32.mxu0 0.0
      %1209 = vmatmul.mubr.f32.gmra.mxu0 %v1055
      %v1210 = vpop.f32.mrf.mxu0
      %v1211 = vadd.f32 0.0, %v1210
      %v1212 = vpop.f32.mrf.mxu0
      %1213 = vmatprep.mubr.f32.mxu0 0.0
      %1214 = vmatmul.mubr.f32.gmra.mxu0 %v1056
      %v1215 = vpop.f32.mrf.mxu0
      %v1216 = vadd.f32 0.0, %v1215
      %v1217 = vpop.f32.mrf.mxu0
      %1218 = vmatprep.mubr.f32.mxu0 0.0
      %1219 = vmatmul.mubr.f32.gmra.mxu0 %v1057
      %v1220 = vpop.f32.mrf.mxu0
      %v1221 = vadd.f32 0.0, %v1220
      %v1222 = vpop.f32.mrf.mxu0
      %1223 = vmatprep.mubr.f32.mxu0 0.0
      %1224 = vmatmul.mubr.f32.gmra.mxu0 %v1058
      %v1225 = vpop.f32.mrf.mxu0
      %v1226 = vadd.f32 0.0, %v1225
      %v1227 = vpop.f32.mrf.mxu0
      %1228 = vmatprep.mubr.f32.mxu0 0.0
      %1229 = vmatmul.mubr.f32.gmra.mxu0 %v1059
      %v1230 = vpop.f32.mrf.mxu0
      %v1231 = vadd.f32 0.0, %v1230
      %v1232 = vpop.f32.mrf.mxu0
      %1233 = vmatprep.mubr.f32.mxu0 0.0
      %1234 = vmatmul.mubr.f32.gmra.mxu0 %v1060
      %v1235 = vpop.f32.mrf.mxu0
      %v1236 = vadd.f32 0.0, %v1235
      %v1237 = vpop.f32.mrf.mxu0
      %1238 = vmatprep.mubr.f32.mxu0 0.0
      %1239 = vmatmul.mubr.f32.gmra.mxu0 %v1061
      %v1240 = vpop.f32.mrf.mxu0
      %v1241 = vadd.f32 0.0, %v1240
      %v1242 = vpop.f32.mrf.mxu0
      %1243 = vmatprep.mubr.f32.mxu0 0.0
      %1244 = vmatmul.mubr.f32.gmra.mxu0 %v1062
      %v1245 = vpop.f32.mrf.mxu0
      %v1246 = vadd.f32 0.0, %v1245
      %v1247 = vpop.f32.mrf.mxu0
      %1248 = vmatprep.mubr.f32.mxu0 0.0
      %1249 = vmatmul.mubr.f32.gmra.mxu0 %v1063
      %v1250 = vpop.f32.mrf.mxu0
      %v1251 = vadd.f32 0.0, %v1250
      %v1252 = vpop.f32.mrf.mxu0
      %1253 = vmatprep.mubr.f32.mxu0 0.0
      %1254 = vmatmul.mubr.f32.gmra.mxu0 %v1064
      %v1255 = vpop.f32.mrf.mxu0
      %v1256 = vadd.f32 0.0, %v1255
      %v1257 = vpop.f32.mrf.mxu0
      %1258 = vmatprep.mubr.f32.mxu0 0.0
      %1259 = vmatmul.mubr.f32.gmra.mxu0 %v1065
      %v1260 = vpop.f32.mrf.mxu0
      %v1261 = vadd.f32 0.0, %v1260
      %v1262 = vpop.f32.mrf.mxu0
      %1263 = vmatprep.mubr.f32.mxu0 0.0
      %1264 = vmatmul.mubr.f32.gmra.mxu0 %v1066
      %v1265 = vpop.f32.mrf.mxu0
      %v1266 = vadd.f32 0.0, %v1265
      %v1267 = vpop.f32.mrf.mxu0
      %1268 = vmatprep.mubr.f32.mxu0 0.0
      %1269 = vmatmul.mubr.f32.gmra.mxu0 %v1067
      %v1270 = vpop.f32.mrf.mxu0
      %v1271 = vadd.f32 0.0, %v1270
      %v1272 = vpop.f32.mrf.mxu0
      %1273 = vmatprep.mubr.f32.mxu0 0.0
      %1274 = vmatmul.mubr.f32.gmra.mxu0 %v1068
      %v1275 = vpop.f32.mrf.mxu0
      %v1276 = vadd.f32 0.0, %v1275
      %v1277 = vpop.f32.mrf.mxu0
      %1278 = vmatprep.mubr.f32.mxu0 0.0
      %1279 = vmatmul.mubr.f32.gmra.mxu0 %v1069
      %v1280 = vpop.f32.mrf.mxu0
      %v1281 = vadd.f32 0.0, %v1280
      %v1282 = vpop.f32.mrf.mxu0
      %1283 = vmatprep.mubr.f32.mxu0 0.0
      %1284 = vmatmul.mubr.f32.gmra.mxu0 %v1070
      %v1285 = vpop.f32.mrf.mxu0
      %v1286 = vadd.f32 0.0, %v1285
      %v1287 = vpop.f32.mrf.mxu0
      %1288 = vmatprep.mubr.f32.mxu0 0.0
      %1289 = vmatmul.mubr.f32.gmra.mxu0 %v1071
      %v1290 = vpop.f32.mrf.mxu0
      %v1291 = vadd.f32 0.0, %v1290
      %v1292 = vpop.f32.mrf.mxu0
      %1293 = vmatprep.mubr.f32.mxu0 0.0
      %1294 = vmatmul.mubr.f32.gmra.mxu0 %v1072
      %v1295 = vpop.f32.mrf.mxu0
      %v1296 = vadd.f32 0.0, %v1295
      %v1297 = vpop.f32.mrf.mxu0
      %1298 = vmatprep.mubr.f32.mxu0 0.0
      %1299 = vmatmul.mubr.f32.gmra.mxu0 %v1073
      %v1300 = vpop.f32.mrf.mxu0
      %v1301 = vadd.f32 0.0, %v1300
      %v1302 = vpop.f32.mrf.mxu0
      %1303 = vmatprep.mubr.f32.mxu0 0.0
      %1304 = vmatmul.mubr.f32.gmra.mxu0 %v1074
      %v1305 = vpop.f32.mrf.mxu0
      %v1306 = vadd.f32 0.0, %v1305
      %v1307 = vpop.f32.mrf.mxu0
      %1308 = vmatprep.mubr.f32.mxu0 0.0
      %1309 = vmatmul.mubr.f32.gmra.mxu0 %v1075
      %v1310 = vpop.f32.mrf.mxu0
      %v1311 = vadd.f32 0.0, %v1310
      %v1312 = vpop.f32.mrf.mxu0
      %1313 = vmatprep.mubr.f32.mxu0 0.0
      %1314 = vmatmul.mubr.f32.gmra.mxu0 %v1076
      %v1315 = vpop.f32.mrf.mxu0
      %v1316 = vadd.f32 0.0, %v1315
      %v1317 = vpop.f32.mrf.mxu0
      %1318 = vdwg.mxu0
      %v1319 = vadd.f32 %v887, %v1161
      %v1320 = vadd.f32 %v892, %v1166
      %v1321 = vadd.f32 %v897, %v1171
      %v1322 = vadd.f32 %v902, %v1176
      %v1323 = vadd.f32 %v907, %v1181
      %v1324 = vadd.f32 %v912, %v1186
      %v1325 = vadd.f32 %v917, %v1191
      %v1326 = vadd.f32 %v922, %v1196
      %v1327 = vadd.f32 %v927, %v1201
      %v1328 = vadd.f32 %v932, %v1206
      %v1329 = vadd.f32 %v937, %v1211
      %v1330 = vadd.f32 %v942, %v1216
      %v1331 = vadd.f32 %v947, %v1221
      %v1332 = vadd.f32 %v952, %v1226
      %v1333 = vadd.f32 %v957, %v1231
      %v1334 = vadd.f32 %v962, %v1236
      %v1335 = vadd.f32 %v967, %v1241
      %v1336 = vadd.f32 %v972, %v1246
      %v1337 = vadd.f32 %v977, %v1251
      %v1338 = vadd.f32 %v982, %v1256
      %v1339 = vadd.f32 %v987, %v1261
      %v1340 = vadd.f32 %v992, %v1266
      %v1341 = vadd.f32 %v997, %v1271
      %v1342 = vadd.f32 %v1002, %v1276
      %v1343 = vadd.f32 %v1007, %v1281
      %v1344 = vadd.f32 %v1012, %v1286
      %v1345 = vadd.f32 %v1017, %v1291
      %v1346 = vadd.f32 %v1022, %v1296
      %v1347 = vadd.f32 %v1027, %v1301
      %v1348 = vadd.f32 %v1032, %v1306
      %v1349 = vadd.f32 %v1037, %v1311
      %v1350 = vadd.f32 %v1042, %v1316
      %v1351 = vld [vmem:[%s465] sm:$0xff]
      %v1352 = vld [vmem:[%s465 + $0x8] sm:$0xff]
      %v1353 = vld [vmem:[%s465 + $0x18] sm:$0xff]
      %v1354 = vld [vmem:[%s465 + $0x20] sm:$0xff]
      %v1355 = vld [vmem:[%s465 + $0x30] sm:$0xff]
      %v1356 = vld [vmem:[%s465 + $0x38] sm:$0xff]
      %v1357 = vld [vmem:[%s465 + $0x48] sm:$0xff]
      %v1358 = vld [vmem:[%s465 + $0x50] sm:$0xff]
      %v1359 = vld [vmem:[%s465 + $0x60] sm:$0xff]
      %v1360 = vld [vmem:[%s465 + $0x68] sm:$0xff]
      %v1361 = vld [vmem:[%s465 + $0x78] sm:$0xff]
      %v1362 = vld [vmem:[%s465 + $0x80] sm:$0xff]
      %v1363 = vld [vmem:[%s465 + $0x90] sm:$0xff]
      %v1364 = vld [vmem:[%s465 + $0x98] sm:$0xff]
      %v1365 = vld [vmem:[%s465 + $0xa8] sm:$0xff]
      %v1366 = vld [vmem:[%s465 + $0xb0] sm:$0xff]
      %v1367 = vld [vmem:[%s465 + $0xc0] sm:$0xff]
      %v1368 = vld [vmem:[%s465 + $0xc8] sm:$0xff]
      %v1369 = vld [vmem:[%s465 + $0xd8] sm:$0xff]
      %v1370 = vld [vmem:[%s465 + $0xe0] sm:$0xff]
      %v1371 = vld [vmem:[%s465 + $0xf0] sm:$0xff]
      %v1372 = vld [vmem:[%s465 + $0xf8] sm:$0xff]
      %v1373 = vld [vmem:[%s465 + $0x108] sm:$0xff]
      %v1374 = vld [vmem:[%s465 + $0x110] sm:$0xff]
      %v1375 = vld [vmem:[%s465 + $0x120] sm:$0xff]
      %v1376 = vld [vmem:[%s465 + $0x128] sm:$0xff]
      %v1377 = vld [vmem:[%s465 + $0x138] sm:$0xff]
      %v1378 = vld [vmem:[%s465 + $0x140] sm:$0xff]
      %v1379 = vld [vmem:[%s465 + $0x150] sm:$0xff]
      %v1380 = vld [vmem:[%s465 + $0x158] sm:$0xff]
      %v1381 = vld [vmem:[%s465 + $0x168] sm:$0xff]
      %v1382 = vld [vmem:[%s465 + $0x170] sm:$0xff]
      %s1383 = scalar_lea.vmem %s3, 384
      %v1384 = vld [vmem:[%s1383] sm:$0xff]
      %v1385 = vld [vmem:[%s1383 + $0x8] sm:$0xff]
      %v1386 = vld [vmem:[%s1383 + $0x10] sm:$0xff]
      %v1387 = vld [vmem:[%s1383 + $0x18] sm:$0xff]
      %v1388 = vld [vmem:[%s1383 + $0x20] sm:$0xff]
      %v1389 = vld [vmem:[%s1383 + $0x28] sm:$0xff]
      %v1390 = vld [vmem:[%s1383 + $0x30] sm:$0xff]
      %v1391 = vld [vmem:[%s1383 + $0x38] sm:$0xff]
      %v1392 = vld [vmem:[%s1383 + $0x40] sm:$0xff]
      %v1393 = vld [vmem:[%s1383 + $0x48] sm:$0xff]
      %v1394 = vld [vmem:[%s1383 + $0x50] sm:$0xff]
      %v1395 = vld [vmem:[%s1383 + $0x58] sm:$0xff]
      %v1396 = vld [vmem:[%s1383 + $0x60] sm:$0xff]
      %v1397 = vld [vmem:[%s1383 + $0x68] sm:$0xff]
      %v1398 = vld [vmem:[%s1383 + $0x70] sm:$0xff]
      %v1399 = vld [vmem:[%s1383 + $0x78] sm:$0xff]
      %1400 = vmatprep.subr.mxu0 0.0
      %1401 = vmatpush1.msra.mxu0 %v1399
      %1402 = vmatprep.subr.mxu0 0.0
      %1403 = vmatpush1.msra.mxu0 %v1398
      %1404 = vmatprep.subr.mxu0 0.0
      %1405 = vmatpush1.msra.mxu0 %v1397
      %1406 = vmatprep.subr.mxu0 0.0
      %1407 = vmatpush1.msra.mxu0 %v1396
      %1408 = vmatprep.subr.mxu0 0.0
      %1409 = vmatpush1.msra.mxu0 %v1395
      %1410 = vmatprep.subr.mxu0 0.0
      %1411 = vmatpush1.msra.mxu0 %v1394
      %1412 = vmatprep.subr.mxu0 0.0
      %1413 = vmatpush1.msra.mxu0 %v1393
      %1414 = vmatprep.subr.mxu0 0.0
      %1415 = vmatpush1.msra.mxu0 %v1392
      %1416 = vmatprep.subr.mxu0 0.0
      %1417 = vmatpush1.msra.mxu0 %v1391
      %1418 = vmatprep.subr.mxu0 0.0
      %1419 = vmatpush1.msra.mxu0 %v1390
      %1420 = vmatprep.subr.mxu0 0.0
      %1421 = vmatpush1.msra.mxu0 %v1389
      %1422 = vmatprep.subr.mxu0 0.0
      %1423 = vmatpush1.msra.mxu0 %v1388
      %1424 = vmatprep.subr.mxu0 0.0
      %1425 = vmatpush1.msra.mxu0 %v1387
      %1426 = vmatprep.subr.mxu0 0.0
      %1427 = vmatpush1.msra.mxu0 %v1386
      %1428 = vmatprep.subr.mxu0 0.0
      %1429 = vmatpush1.msra.mxu0 %v1385
      %1430 = vmatprep.subr.mxu0 0.0
      %1431 = vmatpush1.msra.mxu0 %v1384
      %1432 = vmatprep.subr.mxu0 0.0
      %1433 = vmatpush2.msra.mxu0 0.0
      %1434 = vmatprep.subr.mxu0 0.0
      %1435 = vmatpush2.msra.mxu0 0.0
      %1436 = vmatprep.subr.mxu0 0.0
      %1437 = vmatpush2.msra.mxu0 0.0
      %1438 = vmatprep.subr.mxu0 0.0
      %1439 = vmatpush2.msra.mxu0 0.0
      %1440 = vmatprep.subr.mxu0 0.0
      %1441 = vmatpush2.msra.mxu0 0.0
      %1442 = vmatprep.subr.mxu0 0.0
      %1443 = vmatpush2.msra.mxu0 0.0
      %1444 = vmatprep.subr.mxu0 0.0
      %1445 = vmatpush2.msra.mxu0 0.0
      %1446 = vmatprep.subr.mxu0 0.0
      %1447 = vmatpush2.msra.mxu0 0.0
      %1448 = vmatprep.subr.mxu0 0.0
      %1449 = vmatpush2.msra.mxu0 0.0
      %1450 = vmatprep.subr.mxu0 0.0
      %1451 = vmatpush2.msra.mxu0 0.0
      %1452 = vmatprep.subr.mxu0 0.0
      %1453 = vmatpush2.msra.mxu0 0.0
      %1454 = vmatprep.subr.mxu0 0.0
      %1455 = vmatpush2.msra.mxu0 0.0
      %1456 = vmatprep.subr.mxu0 0.0
      %1457 = vmatpush2.msra.mxu0 0.0
      %1458 = vmatprep.subr.mxu0 0.0
      %1459 = vmatpush2.msra.mxu0 0.0
      %1460 = vmatprep.subr.mxu0 0.0
      %1461 = vmatpush2.msra.mxu0 0.0
      %1462 = vmatprep.subr.mxu0 0.0
      %1463 = vmatpush2.msra.mxu0 0.0
      %1464 = vmatprep.mubr.f32.mxu0 0.0
      %1465 = vmatmul.mubr.f32.gmra.mxu0 %v1351
      %v1466 = vpop.f32.mrf.mxu0
      %v1467 = vadd.f32 0.0, %v1466
      %v1468 = vpop.f32.mrf.mxu0
      %1469 = vmatprep.mubr.f32.mxu0 0.0
      %1470 = vmatmul.mubr.f32.gmra.mxu0 %v1352
      %v1471 = vpop.f32.mrf.mxu0
      %v1472 = vadd.f32 0.0, %v1471
      %v1473 = vpop.f32.mrf.mxu0
      %1474 = vmatprep.mubr.f32.mxu0 0.0
      %1475 = vmatmul.mubr.f32.gmra.mxu0 %v1353
      %v1476 = vpop.f32.mrf.mxu0
      %v1477 = vadd.f32 0.0, %v1476
      %v1478 = vpop.f32.mrf.mxu0
      %1479 = vmatprep.mubr.f32.mxu0 0.0
      %1480 = vmatmul.mubr.f32.gmra.mxu0 %v1354
      %v1481 = vpop.f32.mrf.mxu0
      %v1482 = vadd.f32 0.0, %v1481
      %v1483 = vpop.f32.mrf.mxu0
      %1484 = vmatprep.mubr.f32.mxu0 0.0
      %1485 = vmatmul.mubr.f32.gmra.mxu0 %v1355
      %v1486 = vpop.f32.mrf.mxu0
      %v1487 = vadd.f32 0.0, %v1486
      %v1488 = vpop.f32.mrf.mxu0
      %1489 = vmatprep.mubr.f32.mxu0 0.0
      %1490 = vmatmul.mubr.f32.gmra.mxu0 %v1356
      %v1491 = vpop.f32.mrf.mxu0
      %v1492 = vadd.f32 0.0, %v1491
      %v1493 = vpop.f32.mrf.mxu0
      %1494 = vmatprep.mubr.f32.mxu0 0.0
      %1495 = vmatmul.mubr.f32.gmra.mxu0 %v1357
      %v1496 = vpop.f32.mrf.mxu0
      %v1497 = vadd.f32 0.0, %v1496
      %v1498 = vpop.f32.mrf.mxu0
      %1499 = vmatprep.mubr.f32.mxu0 0.0
      %1500 = vmatmul.mubr.f32.gmra.mxu0 %v1358
      %v1501 = vpop.f32.mrf.mxu0
      %v1502 = vadd.f32 0.0, %v1501
      %v1503 = vpop.f32.mrf.mxu0
      %1504 = vmatprep.mubr.f32.mxu0 0.0
      %1505 = vmatmul.mubr.f32.gmra.mxu0 %v1359
      %v1506 = vpop.f32.mrf.mxu0
      %v1507 = vadd.f32 0.0, %v1506
      %v1508 = vpop.f32.mrf.mxu0
      %1509 = vmatprep.mubr.f32.mxu0 0.0
      %1510 = vmatmul.mubr.f32.gmra.mxu0 %v1360
      %v1511 = vpop.f32.mrf.mxu0
      %v1512 = vadd.f32 0.0, %v1511
      %v1513 = vpop.f32.mrf.mxu0
      %1514 = vmatprep.mubr.f32.mxu0 0.0
      %1515 = vmatmul.mubr.f32.gmra.mxu0 %v1361
      %v1516 = vpop.f32.mrf.mxu0
      %v1517 = vadd.f32 0.0, %v1516
      %v1518 = vpop.f32.mrf.mxu0
      %1519 = vmatprep.mubr.f32.mxu0 0.0
      %1520 = vmatmul.mubr.f32.gmra.mxu0 %v1362
      %v1521 = vpop.f32.mrf.mxu0
      %v1522 = vadd.f32 0.0, %v1521
      %v1523 = vpop.f32.mrf.mxu0
      %1524 = vmatprep.mubr.f32.mxu0 0.0
      %1525 = vmatmul.mubr.f32.gmra.mxu0 %v1363
      %v1526 = vpop.f32.mrf.mxu0
      %v1527 = vadd.f32 0.0, %v1526
      %v1528 = vpop.f32.mrf.mxu0
      %1529 = vmatprep.mubr.f32.mxu0 0.0
      %1530 = vmatmul.mubr.f32.gmra.mxu0 %v1364
      %v1531 = vpop.f32.mrf.mxu0
      %v1532 = vadd.f32 0.0, %v1531
      %v1533 = vpop.f32.mrf.mxu0
      %1534 = vmatprep.mubr.f32.mxu0 0.0
      %1535 = vmatmul.mubr.f32.gmra.mxu0 %v1365
      %v1536 = vpop.f32.mrf.mxu0
      %v1537 = vadd.f32 0.0, %v1536
      %v1538 = vpop.f32.mrf.mxu0
      %1539 = vmatprep.mubr.f32.mxu0 0.0
      %1540 = vmatmul.mubr.f32.gmra.mxu0 %v1366
      %v1541 = vpop.f32.mrf.mxu0
      %v1542 = vadd.f32 0.0, %v1541
      %v1543 = vpop.f32.mrf.mxu0
      %1544 = vmatprep.mubr.f32.mxu0 0.0
      %1545 = vmatmul.mubr.f32.gmra.mxu0 %v1367
      %v1546 = vpop.f32.mrf.mxu0
      %v1547 = vadd.f32 0.0, %v1546
      %v1548 = vpop.f32.mrf.mxu0
      %1549 = vmatprep.mubr.f32.mxu0 0.0
      %1550 = vmatmul.mubr.f32.gmra.mxu0 %v1368
      %v1551 = vpop.f32.mrf.mxu0
      %v1552 = vadd.f32 0.0, %v1551
      %v1553 = vpop.f32.mrf.mxu0
      %1554 = vmatprep.mubr.f32.mxu0 0.0
      %1555 = vmatmul.mubr.f32.gmra.mxu0 %v1369
      %v1556 = vpop.f32.mrf.mxu0
      %v1557 = vadd.f32 0.0, %v1556
      %v1558 = vpop.f32.mrf.mxu0
      %1559 = vmatprep.mubr.f32.mxu0 0.0
      %1560 = vmatmul.mubr.f32.gmra.mxu0 %v1370
      %v1561 = vpop.f32.mrf.mxu0
      %v1562 = vadd.f32 0.0, %v1561
      %v1563 = vpop.f32.mrf.mxu0
      %1564 = vmatprep.mubr.f32.mxu0 0.0
      %1565 = vmatmul.mubr.f32.gmra.mxu0 %v1371
      %v1566 = vpop.f32.mrf.mxu0
      %v1567 = vadd.f32 0.0, %v1566
      %v1568 = vpop.f32.mrf.mxu0
      %1569 = vmatprep.mubr.f32.mxu0 0.0
      %1570 = vmatmul.mubr.f32.gmra.mxu0 %v1372
      %v1571 = vpop.f32.mrf.mxu0
      %v1572 = vadd.f32 0.0, %v1571
      %v1573 = vpop.f32.mrf.mxu0
      %1574 = vmatprep.mubr.f32.mxu0 0.0
      %1575 = vmatmul.mubr.f32.gmra.mxu0 %v1373
      %v1576 = vpop.f32.mrf.mxu0
      %v1577 = vadd.f32 0.0, %v1576
      %v1578 = vpop.f32.mrf.mxu0
      %1579 = vmatprep.mubr.f32.mxu0 0.0
      %1580 = vmatmul.mubr.f32.gmra.mxu0 %v1374
      %v1581 = vpop.f32.mrf.mxu0
      %v1582 = vadd.f32 0.0, %v1581
      %v1583 = vpop.f32.mrf.mxu0
      %1584 = vmatprep.mubr.f32.mxu0 0.0
      %1585 = vmatmul.mubr.f32.gmra.mxu0 %v1375
      %v1586 = vpop.f32.mrf.mxu0
      %v1587 = vadd.f32 0.0, %v1586
      %v1588 = vpop.f32.mrf.mxu0
      %1589 = vmatprep.mubr.f32.mxu0 0.0
      %1590 = vmatmul.mubr.f32.gmra.mxu0 %v1376
      %v1591 = vpop.f32.mrf.mxu0
      %v1592 = vadd.f32 0.0, %v1591
      %v1593 = vpop.f32.mrf.mxu0
      %1594 = vmatprep.mubr.f32.mxu0 0.0
      %1595 = vmatmul.mubr.f32.gmra.mxu0 %v1377
      %v1596 = vpop.f32.mrf.mxu0
      %v1597 = vadd.f32 0.0, %v1596
      %v1598 = vpop.f32.mrf.mxu0
      %1599 = vmatprep.mubr.f32.mxu0 0.0
      %1600 = vmatmul.mubr.f32.gmra.mxu0 %v1378
      %v1601 = vpop.f32.mrf.mxu0
      %v1602 = vadd.f32 0.0, %v1601
      %v1603 = vpop.f32.mrf.mxu0
      %1604 = vmatprep.mubr.f32.mxu0 0.0
      %1605 = vmatmul.mubr.f32.gmra.mxu0 %v1379
      %v1606 = vpop.f32.mrf.mxu0
      %v1607 = vadd.f32 0.0, %v1606
      %v1608 = vpop.f32.mrf.mxu0
      %1609 = vmatprep.mubr.f32.mxu0 0.0
      %1610 = vmatmul.mubr.f32.gmra.mxu0 %v1380
      %v1611 = vpop.f32.mrf.mxu0
      %v1612 = vadd.f32 0.0, %v1611
      %v1613 = vpop.f32.mrf.mxu0
      %1614 = vmatprep.mubr.f32.mxu0 0.0
      %1615 = vmatmul.mubr.f32.gmra.mxu0 %v1381
      %v1616 = vpop.f32.mrf.mxu0
      %v1617 = vadd.f32 0.0, %v1616
      %v1618 = vpop.f32.mrf.mxu0
      %1619 = vmatprep.mubr.f32.mxu0 0.0
      %1620 = vmatmul.mubr.f32.gmra.mxu0 %v1382
      %v1621 = vpop.f32.mrf.mxu0
      %v1622 = vadd.f32 0.0, %v1621
      %v1623 = vpop.f32.mrf.mxu0
      %1624 = vdwg.mxu0
      %v1625 = vadd.f32 %v1319, %v1467
      %v1626 = vadd.f32 %v1320, %v1472
      %v1627 = vadd.f32 %v1321, %v1477
      %v1628 = vadd.f32 %v1322, %v1482
      %v1629 = vadd.f32 %v1323, %v1487
      %v1630 = vadd.f32 %v1324, %v1492
      %v1631 = vadd.f32 %v1325, %v1497
      %v1632 = vadd.f32 %v1326, %v1502
      %v1633 = vadd.f32 %v1327, %v1507
      %v1634 = vadd.f32 %v1328, %v1512
      %v1635 = vadd.f32 %v1329, %v1517
      %v1636 = vadd.f32 %v1330, %v1522
      %v1637 = vadd.f32 %v1331, %v1527
      %v1638 = vadd.f32 %v1332, %v1532
      %v1639 = vadd.f32 %v1333, %v1537
      %v1640 = vadd.f32 %v1334, %v1542
      %v1641 = vadd.f32 %v1335, %v1547
      %v1642 = vadd.f32 %v1336, %v1552
      %v1643 = vadd.f32 %v1337, %v1557
      %v1644 = vadd.f32 %v1338, %v1562
      %v1645 = vadd.f32 %v1339, %v1567
      %v1646 = vadd.f32 %v1340, %v1572
      %v1647 = vadd.f32 %v1341, %v1577
      %v1648 = vadd.f32 %v1342, %v1582
      %v1649 = vadd.f32 %v1343, %v1587
      %v1650 = vadd.f32 %v1344, %v1592
      %v1651 = vadd.f32 %v1345, %v1597
      %v1652 = vadd.f32 %v1346, %v1602
      %v1653 = vadd.f32 %v1347, %v1607
      %v1654 = vadd.f32 %v1348, %v1612
      %v1655 = vadd.f32 %v1349, %v1617
      %v1656 = vadd.f32 %v1350, %v1622
      %v1657 = vld [vmem:[%s465 + $0x1] sm:$0xff]
      %v1658 = vld [vmem:[%s465 + $0x9] sm:$0xff]
      %v1659 = vld [vmem:[%s465 + $0x19] sm:$0xff]
      %v1660 = vld [vmem:[%s465 + $0x21] sm:$0xff]
      %v1661 = vld [vmem:[%s465 + $0x31] sm:$0xff]
      %v1662 = vld [vmem:[%s465 + $0x39] sm:$0xff]
      %v1663 = vld [vmem:[%s465 + $0x49] sm:$0xff]
      %v1664 = vld [vmem:[%s465 + $0x51] sm:$0xff]
      %v1665 = vld [vmem:[%s465 + $0x61] sm:$0xff]
      %v1666 = vld [vmem:[%s465 + $0x69] sm:$0xff]
      %v1667 = vld [vmem:[%s465 + $0x79] sm:$0xff]
      %v1668 = vld [vmem:[%s465 + $0x81] sm:$0xff]
      %v1669 = vld [vmem:[%s465 + $0x91] sm:$0xff]
      %v1670 = vld [vmem:[%s465 + $0x99] sm:$0xff]
      %v1671 = vld [vmem:[%s465 + $0xa9] sm:$0xff]
      %v1672 = vld [vmem:[%s465 + $0xb1] sm:$0xff]
      %v1673 = vld [vmem:[%s465 + $0xc1] sm:$0xff]
      %v1674 = vld [vmem:[%s465 + $0xc9] sm:$0xff]
      %v1675 = vld [vmem:[%s465 + $0xd9] sm:$0xff]
      %v1676 = vld [vmem:[%s465 + $0xe1] sm:$0xff]
      %v1677 = vld [vmem:[%s465 + $0xf1] sm:$0xff]
      %v1678 = vld [vmem:[%s465 + $0xf9] sm:$0xff]
      %v1679 = vld [vmem:[%s465 + $0x109] sm:$0xff]
      %v1680 = vld [vmem:[%s465 + $0x111] sm:$0xff]
      %v1681 = vld [vmem:[%s465 + $0x121] sm:$0xff]
      %v1682 = vld [vmem:[%s465 + $0x129] sm:$0xff]
      %v1683 = vld [vmem:[%s465 + $0x139] sm:$0xff]
      %v1684 = vld [vmem:[%s465 + $0x141] sm:$0xff]
      %v1685 = vld [vmem:[%s465 + $0x151] sm:$0xff]
      %v1686 = vld [vmem:[%s465 + $0x159] sm:$0xff]
      %v1687 = vld [vmem:[%s465 + $0x169] sm:$0xff]
      %v1688 = vld [vmem:[%s465 + $0x171] sm:$0xff]
      %s1689 = scalar_lea.vmem %s3, 512
      %v1690 = vld [vmem:[%s1689] sm:$0xff]
      %v1691 = vld [vmem:[%s1689 + $0x8] sm:$0xff]
      %v1692 = vld [vmem:[%s1689 + $0x10] sm:$0xff]
      %v1693 = vld [vmem:[%s1689 + $0x18] sm:$0xff]
      %v1694 = vld [vmem:[%s1689 + $0x20] sm:$0xff]
      %v1695 = vld [vmem:[%s1689 + $0x28] sm:$0xff]
      %v1696 = vld [vmem:[%s1689 + $0x30] sm:$0xff]
      %v1697 = vld [vmem:[%s1689 + $0x38] sm:$0xff]
      %v1698 = vld [vmem:[%s1689 + $0x40] sm:$0xff]
      %v1699 = vld [vmem:[%s1689 + $0x48] sm:$0xff]
      %v1700 = vld [vmem:[%s1689 + $0x50] sm:$0xff]
      %v1701 = vld [vmem:[%s1689 + $0x58] sm:$0xff]
      %v1702 = vld [vmem:[%s1689 + $0x60] sm:$0xff]
      %v1703 = vld [vmem:[%s1689 + $0x68] sm:$0xff]
      %v1704 = vld [vmem:[%s1689 + $0x70] sm:$0xff]
      %v1705 = vld [vmem:[%s1689 + $0x78] sm:$0xff]
      %1706 = vmatprep.subr.mxu0 0.0
      %1707 = vmatpush1.msra.mxu0 %v1705
      %1708 = vmatprep.subr.mxu0 0.0
      %1709 = vmatpush1.msra.mxu0 %v1704
      %1710 = vmatprep.subr.mxu0 0.0
      %1711 = vmatpush1.msra.mxu0 %v1703
      %1712 = vmatprep.subr.mxu0 0.0
      %1713 = vmatpush1.msra.mxu0 %v1702
      %1714 = vmatprep.subr.mxu0 0.0
      %1715 = vmatpush1.msra.mxu0 %v1701
      %1716 = vmatprep.subr.mxu0 0.0
      %1717 = vmatpush1.msra.mxu0 %v1700
      %1718 = vmatprep.subr.mxu0 0.0
      %1719 = vmatpush1.msra.mxu0 %v1699
      %1720 = vmatprep.subr.mxu0 0.0
      %1721 = vmatpush1.msra.mxu0 %v1698
      %1722 = vmatprep.subr.mxu0 0.0
      %1723 = vmatpush1.msra.mxu0 %v1697
      %1724 = vmatprep.subr.mxu0 0.0
      %1725 = vmatpush1.msra.mxu0 %v1696
      %1726 = vmatprep.subr.mxu0 0.0
      %1727 = vmatpush1.msra.mxu0 %v1695
      %1728 = vmatprep.subr.mxu0 0.0
      %1729 = vmatpush1.msra.mxu0 %v1694
      %1730 = vmatprep.subr.mxu0 0.0
      %1731 = vmatpush1.msra.mxu0 %v1693
      %1732 = vmatprep.subr.mxu0 0.0
      %1733 = vmatpush1.msra.mxu0 %v1692
      %1734 = vmatprep.subr.mxu0 0.0
      %1735 = vmatpush1.msra.mxu0 %v1691
      %1736 = vmatprep.subr.mxu0 0.0
      %1737 = vmatpush1.msra.mxu0 %v1690
      %1738 = vmatprep.subr.mxu0 0.0
      %1739 = vmatpush2.msra.mxu0 0.0
      %1740 = vmatprep.subr.mxu0 0.0
      %1741 = vmatpush2.msra.mxu0 0.0
      %1742 = vmatprep.subr.mxu0 0.0
      %1743 = vmatpush2.msra.mxu0 0.0
      %1744 = vmatprep.subr.mxu0 0.0
      %1745 = vmatpush2.msra.mxu0 0.0
      %1746 = vmatprep.subr.mxu0 0.0
      %1747 = vmatpush2.msra.mxu0 0.0
      %1748 = vmatprep.subr.mxu0 0.0
      %1749 = vmatpush2.msra.mxu0 0.0
      %1750 = vmatprep.subr.mxu0 0.0
      %1751 = vmatpush2.msra.mxu0 0.0
      %1752 = vmatprep.subr.mxu0 0.0
      %1753 = vmatpush2.msra.mxu0 0.0
      %1754 = vmatprep.subr.mxu0 0.0
      %1755 = vmatpush2.msra.mxu0 0.0
      %1756 = vmatprep.subr.mxu0 0.0
      %1757 = vmatpush2.msra.mxu0 0.0
      %1758 = vmatprep.subr.mxu0 0.0
      %1759 = vmatpush2.msra.mxu0 0.0
      %1760 = vmatprep.subr.mxu0 0.0
      %1761 = vmatpush2.msra.mxu0 0.0
      %1762 = vmatprep.subr.mxu0 0.0
      %1763 = vmatpush2.msra.mxu0 0.0
      %1764 = vmatprep.subr.mxu0 0.0
      %1765 = vmatpush2.msra.mxu0 0.0
      %1766 = vmatprep.subr.mxu0 0.0
      %1767 = vmatpush2.msra.mxu0 0.0
      %1768 = vmatprep.subr.mxu0 0.0
      %1769 = vmatpush2.msra.mxu0 0.0
      %1770 = vmatprep.mubr.f32.mxu0 0.0
      %1771 = vmatmul.mubr.f32.gmra.mxu0 %v1657
      %v1772 = vpop.f32.mrf.mxu0
      %v1773 = vadd.f32 0.0, %v1772
      %v1774 = vpop.f32.mrf.mxu0
      %1775 = vmatprep.mubr.f32.mxu0 0.0
      %1776 = vmatmul.mubr.f32.gmra.mxu0 %v1658
      %v1777 = vpop.f32.mrf.mxu0
      %v1778 = vadd.f32 0.0, %v1777
      %v1779 = vpop.f32.mrf.mxu0
      %1780 = vmatprep.mubr.f32.mxu0 0.0
      %1781 = vmatmul.mubr.f32.gmra.mxu0 %v1659
      %v1782 = vpop.f32.mrf.mxu0
      %v1783 = vadd.f32 0.0, %v1782
      %v1784 = vpop.f32.mrf.mxu0
      %1785 = vmatprep.mubr.f32.mxu0 0.0
      %1786 = vmatmul.mubr.f32.gmra.mxu0 %v1660
      %v1787 = vpop.f32.mrf.mxu0
      %v1788 = vadd.f32 0.0, %v1787
      %v1789 = vpop.f32.mrf.mxu0
      %1790 = vmatprep.mubr.f32.mxu0 0.0
      %1791 = vmatmul.mubr.f32.gmra.mxu0 %v1661
      %v1792 = vpop.f32.mrf.mxu0
      %v1793 = vadd.f32 0.0, %v1792
      %v1794 = vpop.f32.mrf.mxu0
      %1795 = vmatprep.mubr.f32.mxu0 0.0
      %1796 = vmatmul.mubr.f32.gmra.mxu0 %v1662
      %v1797 = vpop.f32.mrf.mxu0
      %v1798 = vadd.f32 0.0, %v1797
      %v1799 = vpop.f32.mrf.mxu0
      %1800 = vmatprep.mubr.f32.mxu0 0.0
      %1801 = vmatmul.mubr.f32.gmra.mxu0 %v1663
      %v1802 = vpop.f32.mrf.mxu0
      %v1803 = vadd.f32 0.0, %v1802
      %v1804 = vpop.f32.mrf.mxu0
      %1805 = vmatprep.mubr.f32.mxu0 0.0
      %1806 = vmatmul.mubr.f32.gmra.mxu0 %v1664
      %v1807 = vpop.f32.mrf.mxu0
      %v1808 = vadd.f32 0.0, %v1807
      %v1809 = vpop.f32.mrf.mxu0
      %1810 = vmatprep.mubr.f32.mxu0 0.0
      %1811 = vmatmul.mubr.f32.gmra.mxu0 %v1665
      %v1812 = vpop.f32.mrf.mxu0
      %v1813 = vadd.f32 0.0, %v1812
      %v1814 = vpop.f32.mrf.mxu0
      %1815 = vmatprep.mubr.f32.mxu0 0.0
      %1816 = vmatmul.mubr.f32.gmra.mxu0 %v1666
      %v1817 = vpop.f32.mrf.mxu0
      %v1818 = vadd.f32 0.0, %v1817
      %v1819 = vpop.f32.mrf.mxu0
      %1820 = vmatprep.mubr.f32.mxu0 0.0
      %1821 = vmatmul.mubr.f32.gmra.mxu0 %v1667
      %v1822 = vpop.f32.mrf.mxu0
      %v1823 = vadd.f32 0.0, %v1822
      %v1824 = vpop.f32.mrf.mxu0
      %1825 = vmatprep.mubr.f32.mxu0 0.0
      %1826 = vmatmul.mubr.f32.gmra.mxu0 %v1668
      %v1827 = vpop.f32.mrf.mxu0
      %v1828 = vadd.f32 0.0, %v1827
      %v1829 = vpop.f32.mrf.mxu0
      %1830 = vmatprep.mubr.f32.mxu0 0.0
      %1831 = vmatmul.mubr.f32.gmra.mxu0 %v1669
      %v1832 = vpop.f32.mrf.mxu0
      %v1833 = vadd.f32 0.0, %v1832
      %v1834 = vpop.f32.mrf.mxu0
      %1835 = vmatprep.mubr.f32.mxu0 0.0
      %1836 = vmatmul.mubr.f32.gmra.mxu0 %v1670
      %v1837 = vpop.f32.mrf.mxu0
      %v1838 = vadd.f32 0.0, %v1837
      %v1839 = vpop.f32.mrf.mxu0
      %1840 = vmatprep.mubr.f32.mxu0 0.0
      %1841 = vmatmul.mubr.f32.gmra.mxu0 %v1671
      %v1842 = vpop.f32.mrf.mxu0
      %v1843 = vadd.f32 0.0, %v1842
      %v1844 = vpop.f32.mrf.mxu0
      %1845 = vmatprep.mubr.f32.mxu0 0.0
      %1846 = vmatmul.mubr.f32.gmra.mxu0 %v1672
      %v1847 = vpop.f32.mrf.mxu0
      %v1848 = vadd.f32 0.0, %v1847
      %v1849 = vpop.f32.mrf.mxu0
      %1850 = vmatprep.mubr.f32.mxu0 0.0
      %1851 = vmatmul.mubr.f32.gmra.mxu0 %v1673
      %v1852 = vpop.f32.mrf.mxu0
      %v1853 = vadd.f32 0.0, %v1852
      %v1854 = vpop.f32.mrf.mxu0
      %1855 = vmatprep.mubr.f32.mxu0 0.0
      %1856 = vmatmul.mubr.f32.gmra.mxu0 %v1674
      %v1857 = vpop.f32.mrf.mxu0
      %v1858 = vadd.f32 0.0, %v1857
      %v1859 = vpop.f32.mrf.mxu0
      %1860 = vmatprep.mubr.f32.mxu0 0.0
      %1861 = vmatmul.mubr.f32.gmra.mxu0 %v1675
      %v1862 = vpop.f32.mrf.mxu0
      %v1863 = vadd.f32 0.0, %v1862
      %v1864 = vpop.f32.mrf.mxu0
      %1865 = vmatprep.mubr.f32.mxu0 0.0
      %1866 = vmatmul.mubr.f32.gmra.mxu0 %v1676
      %v1867 = vpop.f32.mrf.mxu0
      %v1868 = vadd.f32 0.0, %v1867
      %v1869 = vpop.f32.mrf.mxu0
      %1870 = vmatprep.mubr.f32.mxu0 0.0
      %1871 = vmatmul.mubr.f32.gmra.mxu0 %v1677
      %v1872 = vpop.f32.mrf.mxu0
      %v1873 = vadd.f32 0.0, %v1872
      %v1874 = vpop.f32.mrf.mxu0
      %1875 = vmatprep.mubr.f32.mxu0 0.0
      %1876 = vmatmul.mubr.f32.gmra.mxu0 %v1678
      %v1877 = vpop.f32.mrf.mxu0
      %v1878 = vadd.f32 0.0, %v1877
      %v1879 = vpop.f32.mrf.mxu0
      %1880 = vmatprep.mubr.f32.mxu0 0.0
      %1881 = vmatmul.mubr.f32.gmra.mxu0 %v1679
      %v1882 = vpop.f32.mrf.mxu0
      %v1883 = vadd.f32 0.0, %v1882
      %v1884 = vpop.f32.mrf.mxu0
      %1885 = vmatprep.mubr.f32.mxu0 0.0
      %1886 = vmatmul.mubr.f32.gmra.mxu0 %v1680
      %v1887 = vpop.f32.mrf.mxu0
      %v1888 = vadd.f32 0.0, %v1887
      %v1889 = vpop.f32.mrf.mxu0
      %1890 = vmatprep.mubr.f32.mxu0 0.0
      %1891 = vmatmul.mubr.f32.gmra.mxu0 %v1681
      %v1892 = vpop.f32.mrf.mxu0
      %v1893 = vadd.f32 0.0, %v1892
      %v1894 = vpop.f32.mrf.mxu0
      %1895 = vmatprep.mubr.f32.mxu0 0.0
      %1896 = vmatmul.mubr.f32.gmra.mxu0 %v1682
      %v1897 = vpop.f32.mrf.mxu0
      %v1898 = vadd.f32 0.0, %v1897
      %v1899 = vpop.f32.mrf.mxu0
      %1900 = vmatprep.mubr.f32.mxu0 0.0
      %1901 = vmatmul.mubr.f32.gmra.mxu0 %v1683
      %v1902 = vpop.f32.mrf.mxu0
      %v1903 = vadd.f32 0.0, %v1902
      %v1904 = vpop.f32.mrf.mxu0
      %1905 = vmatprep.mubr.f32.mxu0 0.0
      %1906 = vmatmul.mubr.f32.gmra.mxu0 %v1684
      %v1907 = vpop.f32.mrf.mxu0
      %v1908 = vadd.f32 0.0, %v1907
      %v1909 = vpop.f32.mrf.mxu0
      %1910 = vmatprep.mubr.f32.mxu0 0.0
      %1911 = vmatmul.mubr.f32.gmra.mxu0 %v1685
      %v1912 = vpop.f32.mrf.mxu0
      %v1913 = vadd.f32 0.0, %v1912
      %v1914 = vpop.f32.mrf.mxu0
      %1915 = vmatprep.mubr.f32.mxu0 0.0
      %1916 = vmatmul.mubr.f32.gmra.mxu0 %v1686
      %v1917 = vpop.f32.mrf.mxu0
      %v1918 = vadd.f32 0.0, %v1917
      %v1919 = vpop.f32.mrf.mxu0
      %1920 = vmatprep.mubr.f32.mxu0 0.0
      %1921 = vmatmul.mubr.f32.gmra.mxu0 %v1687
      %v1922 = vpop.f32.mrf.mxu0
      %v1923 = vadd.f32 0.0, %v1922
      %v1924 = vpop.f32.mrf.mxu0
      %1925 = vmatprep.mubr.f32.mxu0 0.0
      %1926 = vmatmul.mubr.f32.gmra.mxu0 %v1688
      %v1927 = vpop.f32.mrf.mxu0
      %v1928 = vadd.f32 0.0, %v1927
      %v1929 = vpop.f32.mrf.mxu0
      %1930 = vdwg.mxu0
      %v1931 = vadd.f32 %v1625, %v1773
      %v1932 = vadd.f32 %v1626, %v1778
      %v1933 = vadd.f32 %v1627, %v1783
      %v1934 = vadd.f32 %v1628, %v1788
      %v1935 = vadd.f32 %v1629, %v1793
      %v1936 = vadd.f32 %v1630, %v1798
      %v1937 = vadd.f32 %v1631, %v1803
      %v1938 = vadd.f32 %v1632, %v1808
      %v1939 = vadd.f32 %v1633, %v1813
      %v1940 = vadd.f32 %v1634, %v1818
      %v1941 = vadd.f32 %v1635, %v1823
      %v1942 = vadd.f32 %v1636, %v1828
      %v1943 = vadd.f32 %v1637, %v1833
      %v1944 = vadd.f32 %v1638, %v1838
      %v1945 = vadd.f32 %v1639, %v1843
      %v1946 = vadd.f32 %v1640, %v1848
      %v1947 = vadd.f32 %v1641, %v1853
      %v1948 = vadd.f32 %v1642, %v1858
      %v1949 = vadd.f32 %v1643, %v1863
      %v1950 = vadd.f32 %v1644, %v1868
      %v1951 = vadd.f32 %v1645, %v1873
      %v1952 = vadd.f32 %v1646, %v1878
      %v1953 = vadd.f32 %v1647, %v1883
      %v1954 = vadd.f32 %v1648, %v1888
      %v1955 = vadd.f32 %v1649, %v1893
      %v1956 = vadd.f32 %v1650, %v1898
      %v1957 = vadd.f32 %v1651, %v1903
      %v1958 = vadd.f32 %v1652, %v1908
      %v1959 = vadd.f32 %v1653, %v1913
      %v1960 = vadd.f32 %v1654, %v1918
      %v1961 = vadd.f32 %v1655, %v1923
      %v1962 = vadd.f32 %v1656, %v1928
      %v1963 = vld [vmem:[%s465 + $0x2] sm:$0xff]
      %v1964 = vld [vmem:[%s465 + $0xa] sm:$0xff]
      %v1965 = vld [vmem:[%s465 + $0x1a] sm:$0xff]
      %v1966 = vld [vmem:[%s465 + $0x22] sm:$0xff]
      %v1967 = vld [vmem:[%s465 + $0x32] sm:$0xff]
      %v1968 = vld [vmem:[%s465 + $0x3a] sm:$0xff]
      %v1969 = vld [vmem:[%s465 + $0x4a] sm:$0xff]
      %v1970 = vld [vmem:[%s465 + $0x52] sm:$0xff]
      %v1971 = vld [vmem:[%s465 + $0x62] sm:$0xff]
      %v1972 = vld [vmem:[%s465 + $0x6a] sm:$0xff]
      %v1973 = vld [vmem:[%s465 + $0x7a] sm:$0xff]
      %v1974 = vld [vmem:[%s465 + $0x82] sm:$0xff]
      %v1975 = vld [vmem:[%s465 + $0x92] sm:$0xff]
      %v1976 = vld [vmem:[%s465 + $0x9a] sm:$0xff]
      %v1977 = vld [vmem:[%s465 + $0xaa] sm:$0xff]
      %v1978 = vld [vmem:[%s465 + $0xb2] sm:$0xff]
      %v1979 = vld [vmem:[%s465 + $0xc2] sm:$0xff]
      %v1980 = vld [vmem:[%s465 + $0xca] sm:$0xff]
      %v1981 = vld [vmem:[%s465 + $0xda] sm:$0xff]
      %v1982 = vld [vmem:[%s465 + $0xe2] sm:$0xff]
      %v1983 = vld [vmem:[%s465 + $0xf2] sm:$0xff]
      %v1984 = vld [vmem:[%s465 + $0xfa] sm:$0xff]
      %v1985 = vld [vmem:[%s465 + $0x10a] sm:$0xff]
      %v1986 = vld [vmem:[%s465 + $0x112] sm:$0xff]
      %v1987 = vld [vmem:[%s465 + $0x122] sm:$0xff]
      %v1988 = vld [vmem:[%s465 + $0x12a] sm:$0xff]
      %v1989 = vld [vmem:[%s465 + $0x13a] sm:$0xff]
      %v1990 = vld [vmem:[%s465 + $0x142] sm:$0xff]
      %v1991 = vld [vmem:[%s465 + $0x152] sm:$0xff]
      %v1992 = vld [vmem:[%s465 + $0x15a] sm:$0xff]
      %v1993 = vld [vmem:[%s465 + $0x16a] sm:$0xff]
      %v1994 = vld [vmem:[%s465 + $0x172] sm:$0xff]
      %s1995 = scalar_lea.vmem %s3, 640
      %v1996 = vld [vmem:[%s1995] sm:$0xff]
      %v1997 = vld [vmem:[%s1995 + $0x8] sm:$0xff]
      %v1998 = vld [vmem:[%s1995 + $0x10] sm:$0xff]
      %v1999 = vld [vmem:[%s1995 + $0x18] sm:$0xff]
      %v2000 = vld [vmem:[%s1995 + $0x20] sm:$0xff]
      %v2001 = vld [vmem:[%s1995 + $0x28] sm:$0xff]
      %v2002 = vld [vmem:[%s1995 + $0x30] sm:$0xff]
      %v2003 = vld [vmem:[%s1995 + $0x38] sm:$0xff]
      %v2004 = vld [vmem:[%s1995 + $0x40] sm:$0xff]
      %v2005 = vld [vmem:[%s1995 + $0x48] sm:$0xff]
      %v2006 = vld [vmem:[%s1995 + $0x50] sm:$0xff]
      %v2007 = vld [vmem:[%s1995 + $0x58] sm:$0xff]
      %v2008 = vld [vmem:[%s1995 + $0x60] sm:$0xff]
      %v2009 = vld [vmem:[%s1995 + $0x68] sm:$0xff]
      %v2010 = vld [vmem:[%s1995 + $0x70] sm:$0xff]
      %v2011 = vld [vmem:[%s1995 + $0x78] sm:$0xff]
      %2012 = vmatprep.subr.mxu0 0.0
      %2013 = vmatpush1.msra.mxu0 %v2011
      %2014 = vmatprep.subr.mxu0 0.0
      %2015 = vmatpush1.msra.mxu0 %v2010
      %2016 = vmatprep.subr.mxu0 0.0
      %2017 = vmatpush1.msra.mxu0 %v2009
      %2018 = vmatprep.subr.mxu0 0.0
      %2019 = vmatpush1.msra.mxu0 %v2008
      %2020 = vmatprep.subr.mxu0 0.0
      %2021 = vmatpush1.msra.mxu0 %v2007
      %2022 = vmatprep.subr.mxu0 0.0
      %2023 = vmatpush1.msra.mxu0 %v2006
      %2024 = vmatprep.subr.mxu0 0.0
      %2025 = vmatpush1.msra.mxu0 %v2005
      %2026 = vmatprep.subr.mxu0 0.0
      %2027 = vmatpush1.msra.mxu0 %v2004
      %2028 = vmatprep.subr.mxu0 0.0
      %2029 = vmatpush1.msra.mxu0 %v2003
      %2030 = vmatprep.subr.mxu0 0.0
      %2031 = vmatpush1.msra.mxu0 %v2002
      %2032 = vmatprep.subr.mxu0 0.0
      %2033 = vmatpush1.msra.mxu0 %v2001
      %2034 = vmatprep.subr.mxu0 0.0
      %2035 = vmatpush1.msra.mxu0 %v2000
      %2036 = vmatprep.subr.mxu0 0.0
      %2037 = vmatpush1.msra.mxu0 %v1999
      %2038 = vmatprep.subr.mxu0 0.0
      %2039 = vmatpush1.msra.mxu0 %v1998
      %2040 = vmatprep.subr.mxu0 0.0
      %2041 = vmatpush1.msra.mxu0 %v1997
      %2042 = vmatprep.subr.mxu0 0.0
      %2043 = vmatpush1.msra.mxu0 %v1996
      %2044 = vmatprep.subr.mxu0 0.0
      %2045 = vmatpush2.msra.mxu0 0.0
      %2046 = vmatprep.subr.mxu0 0.0
      %2047 = vmatpush2.msra.mxu0 0.0
      %2048 = vmatprep.subr.mxu0 0.0
      %2049 = vmatpush2.msra.mxu0 0.0
      %2050 = vmatprep.subr.mxu0 0.0
      %2051 = vmatpush2.msra.mxu0 0.0
      %2052 = vmatprep.subr.mxu0 0.0
      %2053 = vmatpush2.msra.mxu0 0.0
      %2054 = vmatprep.subr.mxu0 0.0
      %2055 = vmatpush2.msra.mxu0 0.0
      %2056 = vmatprep.subr.mxu0 0.0
      %2057 = vmatpush2.msra.mxu0 0.0
      %2058 = vmatprep.subr.mxu0 0.0
      %2059 = vmatpush2.msra.mxu0 0.0
      %2060 = vmatprep.subr.mxu0 0.0
      %2061 = vmatpush2.msra.mxu0 0.0
      %2062 = vmatprep.subr.mxu0 0.0
      %2063 = vmatpush2.msra.mxu0 0.0
      %2064 = vmatprep.subr.mxu0 0.0
      %2065 = vmatpush2.msra.mxu0 0.0
      %2066 = vmatprep.subr.mxu0 0.0
      %2067 = vmatpush2.msra.mxu0 0.0
      %2068 = vmatprep.subr.mxu0 0.0
      %2069 = vmatpush2.msra.mxu0 0.0
      %2070 = vmatprep.subr.mxu0 0.0
      %2071 = vmatpush2.msra.mxu0 0.0
      %2072 = vmatprep.subr.mxu0 0.0
      %2073 = vmatpush2.msra.mxu0 0.0
      %2074 = vmatprep.subr.mxu0 0.0
      %2075 = vmatpush2.msra.mxu0 0.0
      %2076 = vmatprep.mubr.f32.mxu0 0.0
      %2077 = vmatmul.mubr.f32.gmra.mxu0 %v1963
      %v2078 = vpop.f32.mrf.mxu0
      %v2079 = vadd.f32 0.0, %v2078
      %v2080 = vpop.f32.mrf.mxu0
      %2081 = vmatprep.mubr.f32.mxu0 0.0
      %2082 = vmatmul.mubr.f32.gmra.mxu0 %v1964
      %v2083 = vpop.f32.mrf.mxu0
      %v2084 = vadd.f32 0.0, %v2083
      %v2085 = vpop.f32.mrf.mxu0
      %2086 = vmatprep.mubr.f32.mxu0 0.0
      %2087 = vmatmul.mubr.f32.gmra.mxu0 %v1965
      %v2088 = vpop.f32.mrf.mxu0
      %v2089 = vadd.f32 0.0, %v2088
      %v2090 = vpop.f32.mrf.mxu0
      %2091 = vmatprep.mubr.f32.mxu0 0.0
      %2092 = vmatmul.mubr.f32.gmra.mxu0 %v1966
      %v2093 = vpop.f32.mrf.mxu0
      %v2094 = vadd.f32 0.0, %v2093
      %v2095 = vpop.f32.mrf.mxu0
      %2096 = vmatprep.mubr.f32.mxu0 0.0
      %2097 = vmatmul.mubr.f32.gmra.mxu0 %v1967
      %v2098 = vpop.f32.mrf.mxu0
      %v2099 = vadd.f32 0.0, %v2098
      %v2100 = vpop.f32.mrf.mxu0
      %2101 = vmatprep.mubr.f32.mxu0 0.0
      %2102 = vmatmul.mubr.f32.gmra.mxu0 %v1968
      %v2103 = vpop.f32.mrf.mxu0
      %v2104 = vadd.f32 0.0, %v2103
      %v2105 = vpop.f32.mrf.mxu0
      %2106 = vmatprep.mubr.f32.mxu0 0.0
      %2107 = vmatmul.mubr.f32.gmra.mxu0 %v1969
      %v2108 = vpop.f32.mrf.mxu0
      %v2109 = vadd.f32 0.0, %v2108
      %v2110 = vpop.f32.mrf.mxu0
      %2111 = vmatprep.mubr.f32.mxu0 0.0
      %2112 = vmatmul.mubr.f32.gmra.mxu0 %v1970
      %v2113 = vpop.f32.mrf.mxu0
      %v2114 = vadd.f32 0.0, %v2113
      %v2115 = vpop.f32.mrf.mxu0
      %2116 = vmatprep.mubr.f32.mxu0 0.0
      %2117 = vmatmul.mubr.f32.gmra.mxu0 %v1971
      %v2118 = vpop.f32.mrf.mxu0
      %v2119 = vadd.f32 0.0, %v2118
      %v2120 = vpop.f32.mrf.mxu0
      %2121 = vmatprep.mubr.f32.mxu0 0.0
      %2122 = vmatmul.mubr.f32.gmra.mxu0 %v1972
      %v2123 = vpop.f32.mrf.mxu0
      %v2124 = vadd.f32 0.0, %v2123
      %v2125 = vpop.f32.mrf.mxu0
      %2126 = vmatprep.mubr.f32.mxu0 0.0
      %2127 = vmatmul.mubr.f32.gmra.mxu0 %v1973
      %v2128 = vpop.f32.mrf.mxu0
      %v2129 = vadd.f32 0.0, %v2128
      %v2130 = vpop.f32.mrf.mxu0
      %2131 = vmatprep.mubr.f32.mxu0 0.0
      %2132 = vmatmul.mubr.f32.gmra.mxu0 %v1974
      %v2133 = vpop.f32.mrf.mxu0
      %v2134 = vadd.f32 0.0, %v2133
      %v2135 = vpop.f32.mrf.mxu0
      %2136 = vmatprep.mubr.f32.mxu0 0.0
      %2137 = vmatmul.mubr.f32.gmra.mxu0 %v1975
      %v2138 = vpop.f32.mrf.mxu0
      %v2139 = vadd.f32 0.0, %v2138
      %v2140 = vpop.f32.mrf.mxu0
      %2141 = vmatprep.mubr.f32.mxu0 0.0
      %2142 = vmatmul.mubr.f32.gmra.mxu0 %v1976
      %v2143 = vpop.f32.mrf.mxu0
      %v2144 = vadd.f32 0.0, %v2143
      %v2145 = vpop.f32.mrf.mxu0
      %2146 = vmatprep.mubr.f32.mxu0 0.0
      %2147 = vmatmul.mubr.f32.gmra.mxu0 %v1977
      %v2148 = vpop.f32.mrf.mxu0
      %v2149 = vadd.f32 0.0, %v2148
      %v2150 = vpop.f32.mrf.mxu0
      %2151 = vmatprep.mubr.f32.mxu0 0.0
      %2152 = vmatmul.mubr.f32.gmra.mxu0 %v1978
      %v2153 = vpop.f32.mrf.mxu0
      %v2154 = vadd.f32 0.0, %v2153
      %v2155 = vpop.f32.mrf.mxu0
      %2156 = vmatprep.mubr.f32.mxu0 0.0
      %2157 = vmatmul.mubr.f32.gmra.mxu0 %v1979
      %v2158 = vpop.f32.mrf.mxu0
      %v2159 = vadd.f32 0.0, %v2158
      %v2160 = vpop.f32.mrf.mxu0
      %2161 = vmatprep.mubr.f32.mxu0 0.0
      %2162 = vmatmul.mubr.f32.gmra.mxu0 %v1980
      %v2163 = vpop.f32.mrf.mxu0
      %v2164 = vadd.f32 0.0, %v2163
      %v2165 = vpop.f32.mrf.mxu0
      %2166 = vmatprep.mubr.f32.mxu0 0.0
      %2167 = vmatmul.mubr.f32.gmra.mxu0 %v1981
      %v2168 = vpop.f32.mrf.mxu0
      %v2169 = vadd.f32 0.0, %v2168
      %v2170 = vpop.f32.mrf.mxu0
      %2171 = vmatprep.mubr.f32.mxu0 0.0
      %2172 = vmatmul.mubr.f32.gmra.mxu0 %v1982
      %v2173 = vpop.f32.mrf.mxu0
      %v2174 = vadd.f32 0.0, %v2173
      %v2175 = vpop.f32.mrf.mxu0
      %2176 = vmatprep.mubr.f32.mxu0 0.0
      %2177 = vmatmul.mubr.f32.gmra.mxu0 %v1983
      %v2178 = vpop.f32.mrf.mxu0
      %v2179 = vadd.f32 0.0, %v2178
      %v2180 = vpop.f32.mrf.mxu0
      %2181 = vmatprep.mubr.f32.mxu0 0.0
      %2182 = vmatmul.mubr.f32.gmra.mxu0 %v1984
      %v2183 = vpop.f32.mrf.mxu0
      %v2184 = vadd.f32 0.0, %v2183
      %v2185 = vpop.f32.mrf.mxu0
      %2186 = vmatprep.mubr.f32.mxu0 0.0
      %2187 = vmatmul.mubr.f32.gmra.mxu0 %v1985
      %v2188 = vpop.f32.mrf.mxu0
      %v2189 = vadd.f32 0.0, %v2188
      %v2190 = vpop.f32.mrf.mxu0
      %2191 = vmatprep.mubr.f32.mxu0 0.0
      %2192 = vmatmul.mubr.f32.gmra.mxu0 %v1986
      %v2193 = vpop.f32.mrf.mxu0
      %v2194 = vadd.f32 0.0, %v2193
      %v2195 = vpop.f32.mrf.mxu0
      %2196 = vmatprep.mubr.f32.mxu0 0.0
      %2197 = vmatmul.mubr.f32.gmra.mxu0 %v1987
      %v2198 = vpop.f32.mrf.mxu0
      %v2199 = vadd.f32 0.0, %v2198
      %v2200 = vpop.f32.mrf.mxu0
      %2201 = vmatprep.mubr.f32.mxu0 0.0
      %2202 = vmatmul.mubr.f32.gmra.mxu0 %v1988
      %v2203 = vpop.f32.mrf.mxu0
      %v2204 = vadd.f32 0.0, %v2203
      %v2205 = vpop.f32.mrf.mxu0
      %2206 = vmatprep.mubr.f32.mxu0 0.0
      %2207 = vmatmul.mubr.f32.gmra.mxu0 %v1989
      %v2208 = vpop.f32.mrf.mxu0
      %v2209 = vadd.f32 0.0, %v2208
      %v2210 = vpop.f32.mrf.mxu0
      %2211 = vmatprep.mubr.f32.mxu0 0.0
      %2212 = vmatmul.mubr.f32.gmra.mxu0 %v1990
      %v2213 = vpop.f32.mrf.mxu0
      %v2214 = vadd.f32 0.0, %v2213
      %v2215 = vpop.f32.mrf.mxu0
      %2216 = vmatprep.mubr.f32.mxu0 0.0
      %2217 = vmatmul.mubr.f32.gmra.mxu0 %v1991
      %v2218 = vpop.f32.mrf.mxu0
      %v2219 = vadd.f32 0.0, %v2218
      %v2220 = vpop.f32.mrf.mxu0
      %2221 = vmatprep.mubr.f32.mxu0 0.0
      %2222 = vmatmul.mubr.f32.gmra.mxu0 %v1992
      %v2223 = vpop.f32.mrf.mxu0
      %v2224 = vadd.f32 0.0, %v2223
      %v2225 = vpop.f32.mrf.mxu0
      %2226 = vmatprep.mubr.f32.mxu0 0.0
      %2227 = vmatmul.mubr.f32.gmra.mxu0 %v1993
      %v2228 = vpop.f32.mrf.mxu0
      %v2229 = vadd.f32 0.0, %v2228
      %v2230 = vpop.f32.mrf.mxu0
      %2231 = vmatprep.mubr.f32.mxu0 0.0
      %2232 = vmatmul.mubr.f32.gmra.mxu0 %v1994
      %v2233 = vpop.f32.mrf.mxu0
      %v2234 = vadd.f32 0.0, %v2233
      %v2235 = vpop.f32.mrf.mxu0
      %2236 = vdwg.mxu0
      %v2237 = vadd.f32 %v1931, %v2079
      %v2238 = vadd.f32 %v1932, %v2084
      %v2239 = vadd.f32 %v1933, %v2089
      %v2240 = vadd.f32 %v1934, %v2094
      %v2241 = vadd.f32 %v1935, %v2099
      %v2242 = vadd.f32 %v1936, %v2104
      %v2243 = vadd.f32 %v1937, %v2109
      %v2244 = vadd.f32 %v1938, %v2114
      %v2245 = vadd.f32 %v1939, %v2119
      %v2246 = vadd.f32 %v1940, %v2124
      %v2247 = vadd.f32 %v1941, %v2129
      %v2248 = vadd.f32 %v1942, %v2134
      %v2249 = vadd.f32 %v1943, %v2139
      %v2250 = vadd.f32 %v1944, %v2144
      %v2251 = vadd.f32 %v1945, %v2149
      %v2252 = vadd.f32 %v1946, %v2154
      %v2253 = vadd.f32 %v1947, %v2159
      %v2254 = vadd.f32 %v1948, %v2164
      %v2255 = vadd.f32 %v1949, %v2169
      %v2256 = vadd.f32 %v1950, %v2174
      %v2257 = vadd.f32 %v1951, %v2179
      %v2258 = vadd.f32 %v1952, %v2184
      %v2259 = vadd.f32 %v1953, %v2189
      %v2260 = vadd.f32 %v1954, %v2194
      %v2261 = vadd.f32 %v1955, %v2199
      %v2262 = vadd.f32 %v1956, %v2204
      %v2263 = vadd.f32 %v1957, %v2209
      %v2264 = vadd.f32 %v1958, %v2214
      %v2265 = vadd.f32 %v1959, %v2219
      %v2266 = vadd.f32 %v1960, %v2224
      %v2267 = vadd.f32 %v1961, %v2229
      %v2268 = vadd.f32 %v1962, %v2234
      %s2269 = scalar_lea.vmem [#allocation2], 48
      %v2270 = vld [vmem:[%s2269] sm:$0xff]
      %v2271 = vld [vmem:[%s2269 + $0x8] sm:$0xff]
      %v2272 = vld [vmem:[%s2269 + $0x18] sm:$0xff]
      %v2273 = vld [vmem:[%s2269 + $0x20] sm:$0xff]
      %v2274 = vld [vmem:[%s2269 + $0x30] sm:$0xff]
      %v2275 = vld [vmem:[%s2269 + $0x38] sm:$0xff]
      %v2276 = vld [vmem:[%s2269 + $0x48] sm:$0xff]
      %v2277 = vld [vmem:[%s2269 + $0x50] sm:$0xff]
      %v2278 = vld [vmem:[%s2269 + $0x60] sm:$0xff]
      %v2279 = vld [vmem:[%s2269 + $0x68] sm:$0xff]
      %v2280 = vld [vmem:[%s2269 + $0x78] sm:$0xff]
      %v2281 = vld [vmem:[%s2269 + $0x80] sm:$0xff]
      %v2282 = vld [vmem:[%s2269 + $0x90] sm:$0xff]
      %v2283 = vld [vmem:[%s2269 + $0x98] sm:$0xff]
      %v2284 = vld [vmem:[%s2269 + $0xa8] sm:$0xff]
      %v2285 = vld [vmem:[%s2269 + $0xb0] sm:$0xff]
      %v2286 = vld [vmem:[%s2269 + $0xc0] sm:$0xff]
      %v2287 = vld [vmem:[%s2269 + $0xc8] sm:$0xff]
      %v2288 = vld [vmem:[%s2269 + $0xd8] sm:$0xff]
      %v2289 = vld [vmem:[%s2269 + $0xe0] sm:$0xff]
      %v2290 = vld [vmem:[%s2269 + $0xf0] sm:$0xff]
      %v2291 = vld [vmem:[%s2269 + $0xf8] sm:$0xff]
      %v2292 = vld [vmem:[%s2269 + $0x108] sm:$0xff]
      %v2293 = vld [vmem:[%s2269 + $0x110] sm:$0xff]
      %v2294 = vld [vmem:[%s2269 + $0x120] sm:$0xff]
      %v2295 = vld [vmem:[%s2269 + $0x128] sm:$0xff]
      %v2296 = vld [vmem:[%s2269 + $0x138] sm:$0xff]
      %v2297 = vld [vmem:[%s2269 + $0x140] sm:$0xff]
      %v2298 = vld [vmem:[%s2269 + $0x150] sm:$0xff]
      %v2299 = vld [vmem:[%s2269 + $0x158] sm:$0xff]
      %v2300 = vld [vmem:[%s2269 + $0x168] sm:$0xff]
      %v2301 = vld [vmem:[%s2269 + $0x170] sm:$0xff]
      %s2302 = scalar_lea.vmem %s3, 768
      %v2303 = vld [vmem:[%s2302] sm:$0xff]
      %v2304 = vld [vmem:[%s2302 + $0x8] sm:$0xff]
      %v2305 = vld [vmem:[%s2302 + $0x10] sm:$0xff]
      %v2306 = vld [vmem:[%s2302 + $0x18] sm:$0xff]
      %v2307 = vld [vmem:[%s2302 + $0x20] sm:$0xff]
      %v2308 = vld [vmem:[%s2302 + $0x28] sm:$0xff]
      %v2309 = vld [vmem:[%s2302 + $0x30] sm:$0xff]
      %v2310 = vld [vmem:[%s2302 + $0x38] sm:$0xff]
      %v2311 = vld [vmem:[%s2302 + $0x40] sm:$0xff]
      %v2312 = vld [vmem:[%s2302 + $0x48] sm:$0xff]
      %v2313 = vld [vmem:[%s2302 + $0x50] sm:$0xff]
      %v2314 = vld [vmem:[%s2302 + $0x58] sm:$0xff]
      %v2315 = vld [vmem:[%s2302 + $0x60] sm:$0xff]
      %v2316 = vld [vmem:[%s2302 + $0x68] sm:$0xff]
      %v2317 = vld [vmem:[%s2302 + $0x70] sm:$0xff]
      %v2318 = vld [vmem:[%s2302 + $0x78] sm:$0xff]
      %2319 = vmatprep.subr.mxu0 0.0
      %2320 = vmatpush1.msra.mxu0 %v2318
      %2321 = vmatprep.subr.mxu0 0.0
      %2322 = vmatpush1.msra.mxu0 %v2317
      %2323 = vmatprep.subr.mxu0 0.0
      %2324 = vmatpush1.msra.mxu0 %v2316
      %2325 = vmatprep.subr.mxu0 0.0
      %2326 = vmatpush1.msra.mxu0 %v2315
      %2327 = vmatprep.subr.mxu0 0.0
      %2328 = vmatpush1.msra.mxu0 %v2314
      %2329 = vmatprep.subr.mxu0 0.0
      %2330 = vmatpush1.msra.mxu0 %v2313
      %2331 = vmatprep.subr.mxu0 0.0
      %2332 = vmatpush1.msra.mxu0 %v2312
      %2333 = vmatprep.subr.mxu0 0.0
      %2334 = vmatpush1.msra.mxu0 %v2311
      %2335 = vmatprep.subr.mxu0 0.0
      %2336 = vmatpush1.msra.mxu0 %v2310
      %2337 = vmatprep.subr.mxu0 0.0
      %2338 = vmatpush1.msra.mxu0 %v2309
      %2339 = vmatprep.subr.mxu0 0.0
      %2340 = vmatpush1.msra.mxu0 %v2308
      %2341 = vmatprep.subr.mxu0 0.0
      %2342 = vmatpush1.msra.mxu0 %v2307
      %2343 = vmatprep.subr.mxu0 0.0
      %2344 = vmatpush1.msra.mxu0 %v2306
      %2345 = vmatprep.subr.mxu0 0.0
      %2346 = vmatpush1.msra.mxu0 %v2305
      %2347 = vmatprep.subr.mxu0 0.0
      %2348 = vmatpush1.msra.mxu0 %v2304
      %2349 = vmatprep.subr.mxu0 0.0
      %2350 = vmatpush1.msra.mxu0 %v2303
      %2351 = vmatprep.subr.mxu0 0.0
      %2352 = vmatpush2.msra.mxu0 0.0
      %2353 = vmatprep.subr.mxu0 0.0
      %2354 = vmatpush2.msra.mxu0 0.0
      %2355 = vmatprep.subr.mxu0 0.0
      %2356 = vmatpush2.msra.mxu0 0.0
      %2357 = vmatprep.subr.mxu0 0.0
      %2358 = vmatpush2.msra.mxu0 0.0
      %2359 = vmatprep.subr.mxu0 0.0
      %2360 = vmatpush2.msra.mxu0 0.0
      %2361 = vmatprep.subr.mxu0 0.0
      %2362 = vmatpush2.msra.mxu0 0.0
      %2363 = vmatprep.subr.mxu0 0.0
      %2364 = vmatpush2.msra.mxu0 0.0
      %2365 = vmatprep.subr.mxu0 0.0
      %2366 = vmatpush2.msra.mxu0 0.0
      %2367 = vmatprep.subr.mxu0 0.0
      %2368 = vmatpush2.msra.mxu0 0.0
      %2369 = vmatprep.subr.mxu0 0.0
      %2370 = vmatpush2.msra.mxu0 0.0
      %2371 = vmatprep.subr.mxu0 0.0
      %2372 = vmatpush2.msra.mxu0 0.0
      %2373 = vmatprep.subr.mxu0 0.0
      %2374 = vmatpush2.msra.mxu0 0.0
      %2375 = vmatprep.subr.mxu0 0.0
      %2376 = vmatpush2.msra.mxu0 0.0
      %2377 = vmatprep.subr.mxu0 0.0
      %2378 = vmatpush2.msra.mxu0 0.0
      %2379 = vmatprep.subr.mxu0 0.0
      %2380 = vmatpush2.msra.mxu0 0.0
      %2381 = vmatprep.subr.mxu0 0.0
      %2382 = vmatpush2.msra.mxu0 0.0
      %2383 = vmatprep.mubr.f32.mxu0 0.0
      %2384 = vmatmul.mubr.f32.gmra.mxu0 %v2270
      %v2385 = vpop.f32.mrf.mxu0
      %v2386 = vadd.f32 0.0, %v2385
      %v2387 = vpop.f32.mrf.mxu0
      %2388 = vmatprep.mubr.f32.mxu0 0.0
      %2389 = vmatmul.mubr.f32.gmra.mxu0 %v2271
      %v2390 = vpop.f32.mrf.mxu0
      %v2391 = vadd.f32 0.0, %v2390
      %v2392 = vpop.f32.mrf.mxu0
      %2393 = vmatprep.mubr.f32.mxu0 0.0
      %2394 = vmatmul.mubr.f32.gmra.mxu0 %v2272
      %v2395 = vpop.f32.mrf.mxu0
      %v2396 = vadd.f32 0.0, %v2395
      %v2397 = vpop.f32.mrf.mxu0
      %2398 = vmatprep.mubr.f32.mxu0 0.0
      %2399 = vmatmul.mubr.f32.gmra.mxu0 %v2273
      %v2400 = vpop.f32.mrf.mxu0
      %v2401 = vadd.f32 0.0, %v2400
      %v2402 = vpop.f32.mrf.mxu0
      %2403 = vmatprep.mubr.f32.mxu0 0.0
      %2404 = vmatmul.mubr.f32.gmra.mxu0 %v2274
      %v2405 = vpop.f32.mrf.mxu0
      %v2406 = vadd.f32 0.0, %v2405
      %v2407 = vpop.f32.mrf.mxu0
      %2408 = vmatprep.mubr.f32.mxu0 0.0
      %2409 = vmatmul.mubr.f32.gmra.mxu0 %v2275
      %v2410 = vpop.f32.mrf.mxu0
      %v2411 = vadd.f32 0.0, %v2410
      %v2412 = vpop.f32.mrf.mxu0
      %2413 = vmatprep.mubr.f32.mxu0 0.0
      %2414 = vmatmul.mubr.f32.gmra.mxu0 %v2276
      %v2415 = vpop.f32.mrf.mxu0
      %v2416 = vadd.f32 0.0, %v2415
      %v2417 = vpop.f32.mrf.mxu0
      %2418 = vmatprep.mubr.f32.mxu0 0.0
      %2419 = vmatmul.mubr.f32.gmra.mxu0 %v2277
      %v2420 = vpop.f32.mrf.mxu0
      %v2421 = vadd.f32 0.0, %v2420
      %v2422 = vpop.f32.mrf.mxu0
      %2423 = vmatprep.mubr.f32.mxu0 0.0
      %2424 = vmatmul.mubr.f32.gmra.mxu0 %v2278
      %v2425 = vpop.f32.mrf.mxu0
      %v2426 = vadd.f32 0.0, %v2425
      %v2427 = vpop.f32.mrf.mxu0
      %2428 = vmatprep.mubr.f32.mxu0 0.0
      %2429 = vmatmul.mubr.f32.gmra.mxu0 %v2279
      %v2430 = vpop.f32.mrf.mxu0
      %v2431 = vadd.f32 0.0, %v2430
      %v2432 = vpop.f32.mrf.mxu0
      %2433 = vmatprep.mubr.f32.mxu0 0.0
      %2434 = vmatmul.mubr.f32.gmra.mxu0 %v2280
      %v2435 = vpop.f32.mrf.mxu0
      %v2436 = vadd.f32 0.0, %v2435
      %v2437 = vpop.f32.mrf.mxu0
      %2438 = vmatprep.mubr.f32.mxu0 0.0
      %2439 = vmatmul.mubr.f32.gmra.mxu0 %v2281
      %v2440 = vpop.f32.mrf.mxu0
      %v2441 = vadd.f32 0.0, %v2440
      %v2442 = vpop.f32.mrf.mxu0
      %2443 = vmatprep.mubr.f32.mxu0 0.0
      %2444 = vmatmul.mubr.f32.gmra.mxu0 %v2282
      %v2445 = vpop.f32.mrf.mxu0
      %v2446 = vadd.f32 0.0, %v2445
      %v2447 = vpop.f32.mrf.mxu0
      %2448 = vmatprep.mubr.f32.mxu0 0.0
      %2449 = vmatmul.mubr.f32.gmra.mxu0 %v2283
      %v2450 = vpop.f32.mrf.mxu0
      %v2451 = vadd.f32 0.0, %v2450
      %v2452 = vpop.f32.mrf.mxu0
      %2453 = vmatprep.mubr.f32.mxu0 0.0
      %2454 = vmatmul.mubr.f32.gmra.mxu0 %v2284
      %v2455 = vpop.f32.mrf.mxu0
      %v2456 = vadd.f32 0.0, %v2455
      %v2457 = vpop.f32.mrf.mxu0
      %2458 = vmatprep.mubr.f32.mxu0 0.0
      %2459 = vmatmul.mubr.f32.gmra.mxu0 %v2285
      %v2460 = vpop.f32.mrf.mxu0
      %v2461 = vadd.f32 0.0, %v2460
      %v2462 = vpop.f32.mrf.mxu0
      %2463 = vmatprep.mubr.f32.mxu0 0.0
      %2464 = vmatmul.mubr.f32.gmra.mxu0 %v2286
      %v2465 = vpop.f32.mrf.mxu0
      %v2466 = vadd.f32 0.0, %v2465
      %v2467 = vpop.f32.mrf.mxu0
      %2468 = vmatprep.mubr.f32.mxu0 0.0
      %2469 = vmatmul.mubr.f32.gmra.mxu0 %v2287
      %v2470 = vpop.f32.mrf.mxu0
      %v2471 = vadd.f32 0.0, %v2470
      %v2472 = vpop.f32.mrf.mxu0
      %2473 = vmatprep.mubr.f32.mxu0 0.0
      %2474 = vmatmul.mubr.f32.gmra.mxu0 %v2288
      %v2475 = vpop.f32.mrf.mxu0
      %v2476 = vadd.f32 0.0, %v2475
      %v2477 = vpop.f32.mrf.mxu0
      %2478 = vmatprep.mubr.f32.mxu0 0.0
      %2479 = vmatmul.mubr.f32.gmra.mxu0 %v2289
      %v2480 = vpop.f32.mrf.mxu0
      %v2481 = vadd.f32 0.0, %v2480
      %v2482 = vpop.f32.mrf.mxu0
      %2483 = vmatprep.mubr.f32.mxu0 0.0
      %2484 = vmatmul.mubr.f32.gmra.mxu0 %v2290
      %v2485 = vpop.f32.mrf.mxu0
      %v2486 = vadd.f32 0.0, %v2485
      %v2487 = vpop.f32.mrf.mxu0
      %2488 = vmatprep.mubr.f32.mxu0 0.0
      %2489 = vmatmul.mubr.f32.gmra.mxu0 %v2291
      %v2490 = vpop.f32.mrf.mxu0
      %v2491 = vadd.f32 0.0, %v2490
      %v2492 = vpop.f32.mrf.mxu0
      %2493 = vmatprep.mubr.f32.mxu0 0.0
      %2494 = vmatmul.mubr.f32.gmra.mxu0 %v2292
      %v2495 = vpop.f32.mrf.mxu0
      %v2496 = vadd.f32 0.0, %v2495
      %v2497 = vpop.f32.mrf.mxu0
      %2498 = vmatprep.mubr.f32.mxu0 0.0
      %2499 = vmatmul.mubr.f32.gmra.mxu0 %v2293
      %v2500 = vpop.f32.mrf.mxu0
      %v2501 = vadd.f32 0.0, %v2500
      %v2502 = vpop.f32.mrf.mxu0
      %2503 = vmatprep.mubr.f32.mxu0 0.0
      %2504 = vmatmul.mubr.f32.gmra.mxu0 %v2294
      %v2505 = vpop.f32.mrf.mxu0
      %v2506 = vadd.f32 0.0, %v2505
      %v2507 = vpop.f32.mrf.mxu0
      %2508 = vmatprep.mubr.f32.mxu0 0.0
      %2509 = vmatmul.mubr.f32.gmra.mxu0 %v2295
      %v2510 = vpop.f32.mrf.mxu0
      %v2511 = vadd.f32 0.0, %v2510
      %v2512 = vpop.f32.mrf.mxu0
      %2513 = vmatprep.mubr.f32.mxu0 0.0
      %2514 = vmatmul.mubr.f32.gmra.mxu0 %v2296
      %v2515 = vpop.f32.mrf.mxu0
      %v2516 = vadd.f32 0.0, %v2515
      %v2517 = vpop.f32.mrf.mxu0
      %2518 = vmatprep.mubr.f32.mxu0 0.0
      %2519 = vmatmul.mubr.f32.gmra.mxu0 %v2297
      %v2520 = vpop.f32.mrf.mxu0
      %v2521 = vadd.f32 0.0, %v2520
      %v2522 = vpop.f32.mrf.mxu0
      %2523 = vmatprep.mubr.f32.mxu0 0.0
      %2524 = vmatmul.mubr.f32.gmra.mxu0 %v2298
      %v2525 = vpop.f32.mrf.mxu0
      %v2526 = vadd.f32 0.0, %v2525
      %v2527 = vpop.f32.mrf.mxu0
      %2528 = vmatprep.mubr.f32.mxu0 0.0
      %2529 = vmatmul.mubr.f32.gmra.mxu0 %v2299
      %v2530 = vpop.f32.mrf.mxu0
      %v2531 = vadd.f32 0.0, %v2530
      %v2532 = vpop.f32.mrf.mxu0
      %2533 = vmatprep.mubr.f32.mxu0 0.0
      %2534 = vmatmul.mubr.f32.gmra.mxu0 %v2300
      %v2535 = vpop.f32.mrf.mxu0
      %v2536 = vadd.f32 0.0, %v2535
      %v2537 = vpop.f32.mrf.mxu0
      %2538 = vmatprep.mubr.f32.mxu0 0.0
      %2539 = vmatmul.mubr.f32.gmra.mxu0 %v2301
      %v2540 = vpop.f32.mrf.mxu0
      %v2541 = vadd.f32 0.0, %v2540
      %v2542 = vpop.f32.mrf.mxu0
      %2543 = vdwg.mxu0
      %v2544 = vadd.f32 %v2237, %v2386
      %v2545 = vadd.f32 %v2238, %v2391
      %v2546 = vadd.f32 %v2239, %v2396
      %v2547 = vadd.f32 %v2240, %v2401
      %v2548 = vadd.f32 %v2241, %v2406
      %v2549 = vadd.f32 %v2242, %v2411
      %v2550 = vadd.f32 %v2243, %v2416
      %v2551 = vadd.f32 %v2244, %v2421
      %v2552 = vadd.f32 %v2245, %v2426
      %v2553 = vadd.f32 %v2246, %v2431
      %v2554 = vadd.f32 %v2247, %v2436
      %v2555 = vadd.f32 %v2248, %v2441
      %v2556 = vadd.f32 %v2249, %v2446
      %v2557 = vadd.f32 %v2250, %v2451
      %v2558 = vadd.f32 %v2251, %v2456
      %v2559 = vadd.f32 %v2252, %v2461
      %v2560 = vadd.f32 %v2253, %v2466
      %v2561 = vadd.f32 %v2254, %v2471
      %v2562 = vadd.f32 %v2255, %v2476
      %v2563 = vadd.f32 %v2256, %v2481
      %v2564 = vadd.f32 %v2257, %v2486
      %v2565 = vadd.f32 %v2258, %v2491
      %v2566 = vadd.f32 %v2259, %v2496
      %v2567 = vadd.f32 %v2260, %v2501
      %v2568 = vadd.f32 %v2261, %v2506
      %v2569 = vadd.f32 %v2262, %v2511
      %v2570 = vadd.f32 %v2263, %v2516
      %v2571 = vadd.f32 %v2264, %v2521
      %v2572 = vadd.f32 %v2265, %v2526
      %v2573 = vadd.f32 %v2266, %v2531
      %v2574 = vadd.f32 %v2267, %v2536
      %v2575 = vadd.f32 %v2268, %v2541
      %v2576 = vld [vmem:[%s2269 + $0x1] sm:$0xff]
      %v2577 = vld [vmem:[%s2269 + $0x9] sm:$0xff]
      %v2578 = vld [vmem:[%s2269 + $0x19] sm:$0xff]
      %v2579 = vld [vmem:[%s2269 + $0x21] sm:$0xff]
      %v2580 = vld [vmem:[%s2269 + $0x31] sm:$0xff]
      %v2581 = vld [vmem:[%s2269 + $0x39] sm:$0xff]
      %v2582 = vld [vmem:[%s2269 + $0x49] sm:$0xff]
      %v2583 = vld [vmem:[%s2269 + $0x51] sm:$0xff]
      %v2584 = vld [vmem:[%s2269 + $0x61] sm:$0xff]
      %v2585 = vld [vmem:[%s2269 + $0x69] sm:$0xff]
      %v2586 = vld [vmem:[%s2269 + $0x79] sm:$0xff]
      %v2587 = vld [vmem:[%s2269 + $0x81] sm:$0xff]
      %v2588 = vld [vmem:[%s2269 + $0x91] sm:$0xff]
      %v2589 = vld [vmem:[%s2269 + $0x99] sm:$0xff]
      %v2590 = vld [vmem:[%s2269 + $0xa9] sm:$0xff]
      %v2591 = vld [vmem:[%s2269 + $0xb1] sm:$0xff]
      %v2592 = vld [vmem:[%s2269 + $0xc1] sm:$0xff]
      %v2593 = vld [vmem:[%s2269 + $0xc9] sm:$0xff]
      %v2594 = vld [vmem:[%s2269 + $0xd9] sm:$0xff]
      %v2595 = vld [vmem:[%s2269 + $0xe1] sm:$0xff]
      %v2596 = vld [vmem:[%s2269 + $0xf1] sm:$0xff]
      %v2597 = vld [vmem:[%s2269 + $0xf9] sm:$0xff]
      %v2598 = vld [vmem:[%s2269 + $0x109] sm:$0xff]
      %v2599 = vld [vmem:[%s2269 + $0x111] sm:$0xff]
      %v2600 = vld [vmem:[%s2269 + $0x121] sm:$0xff]
      %v2601 = vld [vmem:[%s2269 + $0x129] sm:$0xff]
      %v2602 = vld [vmem:[%s2269 + $0x139] sm:$0xff]
      %v2603 = vld [vmem:[%s2269 + $0x141] sm:$0xff]
      %v2604 = vld [vmem:[%s2269 + $0x151] sm:$0xff]
      %v2605 = vld [vmem:[%s2269 + $0x159] sm:$0xff]
      %v2606 = vld [vmem:[%s2269 + $0x169] sm:$0xff]
      %v2607 = vld [vmem:[%s2269 + $0x171] sm:$0xff]
      %s2608 = scalar_lea.vmem %s3, 896
      %v2609 = vld [vmem:[%s2608] sm:$0xff]
      %v2610 = vld [vmem:[%s2608 + $0x8] sm:$0xff]
      %v2611 = vld [vmem:[%s2608 + $0x10] sm:$0xff]
      %v2612 = vld [vmem:[%s2608 + $0x18] sm:$0xff]
      %v2613 = vld [vmem:[%s2608 + $0x20] sm:$0xff]
      %v2614 = vld [vmem:[%s2608 + $0x28] sm:$0xff]
      %v2615 = vld [vmem:[%s2608 + $0x30] sm:$0xff]
      %v2616 = vld [vmem:[%s2608 + $0x38] sm:$0xff]
      %v2617 = vld [vmem:[%s2608 + $0x40] sm:$0xff]
      %v2618 = vld [vmem:[%s2608 + $0x48] sm:$0xff]
      %v2619 = vld [vmem:[%s2608 + $0x50] sm:$0xff]
      %v2620 = vld [vmem:[%s2608 + $0x58] sm:$0xff]
      %v2621 = vld [vmem:[%s2608 + $0x60] sm:$0xff]
      %v2622 = vld [vmem:[%s2608 + $0x68] sm:$0xff]
      %v2623 = vld [vmem:[%s2608 + $0x70] sm:$0xff]
      %v2624 = vld [vmem:[%s2608 + $0x78] sm:$0xff]
      %2625 = vmatprep.subr.mxu0 0.0
      %2626 = vmatpush1.msra.mxu0 %v2624
      %2627 = vmatprep.subr.mxu0 0.0
      %2628 = vmatpush1.msra.mxu0 %v2623
      %2629 = vmatprep.subr.mxu0 0.0
      %2630 = vmatpush1.msra.mxu0 %v2622
      %2631 = vmatprep.subr.mxu0 0.0
      %2632 = vmatpush1.msra.mxu0 %v2621
      %2633 = vmatprep.subr.mxu0 0.0
      %2634 = vmatpush1.msra.mxu0 %v2620
      %2635 = vmatprep.subr.mxu0 0.0
      %2636 = vmatpush1.msra.mxu0 %v2619
      %2637 = vmatprep.subr.mxu0 0.0
      %2638 = vmatpush1.msra.mxu0 %v2618
      %2639 = vmatprep.subr.mxu0 0.0
      %2640 = vmatpush1.msra.mxu0 %v2617
      %2641 = vmatprep.subr.mxu0 0.0
      %2642 = vmatpush1.msra.mxu0 %v2616
      %2643 = vmatprep.subr.mxu0 0.0
      %2644 = vmatpush1.msra.mxu0 %v2615
      %2645 = vmatprep.subr.mxu0 0.0
      %2646 = vmatpush1.msra.mxu0 %v2614
      %2647 = vmatprep.subr.mxu0 0.0
      %2648 = vmatpush1.msra.mxu0 %v2613
      %2649 = vmatprep.subr.mxu0 0.0
      %2650 = vmatpush1.msra.mxu0 %v2612
      %2651 = vmatprep.subr.mxu0 0.0
      %2652 = vmatpush1.msra.mxu0 %v2611
      %2653 = vmatprep.subr.mxu0 0.0
      %2654 = vmatpush1.msra.mxu0 %v2610
      %2655 = vmatprep.subr.mxu0 0.0
      %2656 = vmatpush1.msra.mxu0 %v2609
      %2657 = vmatprep.subr.mxu0 0.0
      %2658 = vmatpush2.msra.mxu0 0.0
      %2659 = vmatprep.subr.mxu0 0.0
      %2660 = vmatpush2.msra.mxu0 0.0
      %2661 = vmatprep.subr.mxu0 0.0
      %2662 = vmatpush2.msra.mxu0 0.0
      %2663 = vmatprep.subr.mxu0 0.0
      %2664 = vmatpush2.msra.mxu0 0.0
      %2665 = vmatprep.subr.mxu0 0.0
      %2666 = vmatpush2.msra.mxu0 0.0
      %2667 = vmatprep.subr.mxu0 0.0
      %2668 = vmatpush2.msra.mxu0 0.0
      %2669 = vmatprep.subr.mxu0 0.0
      %2670 = vmatpush2.msra.mxu0 0.0
      %2671 = vmatprep.subr.mxu0 0.0
      %2672 = vmatpush2.msra.mxu0 0.0
      %2673 = vmatprep.subr.mxu0 0.0
      %2674 = vmatpush2.msra.mxu0 0.0
      %2675 = vmatprep.subr.mxu0 0.0
      %2676 = vmatpush2.msra.mxu0 0.0
      %2677 = vmatprep.subr.mxu0 0.0
      %2678 = vmatpush2.msra.mxu0 0.0
      %2679 = vmatprep.subr.mxu0 0.0
      %2680 = vmatpush2.msra.mxu0 0.0
      %2681 = vmatprep.subr.mxu0 0.0
      %2682 = vmatpush2.msra.mxu0 0.0
      %2683 = vmatprep.subr.mxu0 0.0
      %2684 = vmatpush2.msra.mxu0 0.0
      %2685 = vmatprep.subr.mxu0 0.0
      %2686 = vmatpush2.msra.mxu0 0.0
      %2687 = vmatprep.subr.mxu0 0.0
      %2688 = vmatpush2.msra.mxu0 0.0
      %2689 = vmatprep.mubr.f32.mxu0 0.0
      %2690 = vmatmul.mubr.f32.gmra.mxu0 %v2576
      %v2691 = vpop.f32.mrf.mxu0
      %v2692 = vadd.f32 0.0, %v2691
      %v2693 = vpop.f32.mrf.mxu0
      %2694 = vmatprep.mubr.f32.mxu0 0.0
      %2695 = vmatmul.mubr.f32.gmra.mxu0 %v2577
      %v2696 = vpop.f32.mrf.mxu0
      %v2697 = vadd.f32 0.0, %v2696
      %v2698 = vpop.f32.mrf.mxu0
      %2699 = vmatprep.mubr.f32.mxu0 0.0
      %2700 = vmatmul.mubr.f32.gmra.mxu0 %v2578
      %v2701 = vpop.f32.mrf.mxu0
      %v2702 = vadd.f32 0.0, %v2701
      %v2703 = vpop.f32.mrf.mxu0
      %2704 = vmatprep.mubr.f32.mxu0 0.0
      %2705 = vmatmul.mubr.f32.gmra.mxu0 %v2579
      %v2706 = vpop.f32.mrf.mxu0
      %v2707 = vadd.f32 0.0, %v2706
      %v2708 = vpop.f32.mrf.mxu0
      %2709 = vmatprep.mubr.f32.mxu0 0.0
      %2710 = vmatmul.mubr.f32.gmra.mxu0 %v2580
      %v2711 = vpop.f32.mrf.mxu0
      %v2712 = vadd.f32 0.0, %v2711
      %v2713 = vpop.f32.mrf.mxu0
      %2714 = vmatprep.mubr.f32.mxu0 0.0
      %2715 = vmatmul.mubr.f32.gmra.mxu0 %v2581
      %v2716 = vpop.f32.mrf.mxu0
      %v2717 = vadd.f32 0.0, %v2716
      %v2718 = vpop.f32.mrf.mxu0
      %2719 = vmatprep.mubr.f32.mxu0 0.0
      %2720 = vmatmul.mubr.f32.gmra.mxu0 %v2582
      %v2721 = vpop.f32.mrf.mxu0
      %v2722 = vadd.f32 0.0, %v2721
      %v2723 = vpop.f32.mrf.mxu0
      %2724 = vmatprep.mubr.f32.mxu0 0.0
      %2725 = vmatmul.mubr.f32.gmra.mxu0 %v2583
      %v2726 = vpop.f32.mrf.mxu0
      %v2727 = vadd.f32 0.0, %v2726
      %v2728 = vpop.f32.mrf.mxu0
      %2729 = vmatprep.mubr.f32.mxu0 0.0
      %2730 = vmatmul.mubr.f32.gmra.mxu0 %v2584
      %v2731 = vpop.f32.mrf.mxu0
      %v2732 = vadd.f32 0.0, %v2731
      %v2733 = vpop.f32.mrf.mxu0
      %2734 = vmatprep.mubr.f32.mxu0 0.0
      %2735 = vmatmul.mubr.f32.gmra.mxu0 %v2585
      %v2736 = vpop.f32.mrf.mxu0
      %v2737 = vadd.f32 0.0, %v2736
      %v2738 = vpop.f32.mrf.mxu0
      %2739 = vmatprep.mubr.f32.mxu0 0.0
      %2740 = vmatmul.mubr.f32.gmra.mxu0 %v2586
      %v2741 = vpop.f32.mrf.mxu0
      %v2742 = vadd.f32 0.0, %v2741
      %v2743 = vpop.f32.mrf.mxu0
      %2744 = vmatprep.mubr.f32.mxu0 0.0
      %2745 = vmatmul.mubr.f32.gmra.mxu0 %v2587
      %v2746 = vpop.f32.mrf.mxu0
      %v2747 = vadd.f32 0.0, %v2746
      %v2748 = vpop.f32.mrf.mxu0
      %2749 = vmatprep.mubr.f32.mxu0 0.0
      %2750 = vmatmul.mubr.f32.gmra.mxu0 %v2588
      %v2751 = vpop.f32.mrf.mxu0
      %v2752 = vadd.f32 0.0, %v2751
      %v2753 = vpop.f32.mrf.mxu0
      %2754 = vmatprep.mubr.f32.mxu0 0.0
      %2755 = vmatmul.mubr.f32.gmra.mxu0 %v2589
      %v2756 = vpop.f32.mrf.mxu0
      %v2757 = vadd.f32 0.0, %v2756
      %v2758 = vpop.f32.mrf.mxu0
      %2759 = vmatprep.mubr.f32.mxu0 0.0
      %2760 = vmatmul.mubr.f32.gmra.mxu0 %v2590
      %v2761 = vpop.f32.mrf.mxu0
      %v2762 = vadd.f32 0.0, %v2761
      %v2763 = vpop.f32.mrf.mxu0
      %2764 = vmatprep.mubr.f32.mxu0 0.0
      %2765 = vmatmul.mubr.f32.gmra.mxu0 %v2591
      %v2766 = vpop.f32.mrf.mxu0
      %v2767 = vadd.f32 0.0, %v2766
      %v2768 = vpop.f32.mrf.mxu0
      %2769 = vmatprep.mubr.f32.mxu0 0.0
      %2770 = vmatmul.mubr.f32.gmra.mxu0 %v2592
      %v2771 = vpop.f32.mrf.mxu0
      %v2772 = vadd.f32 0.0, %v2771
      %v2773 = vpop.f32.mrf.mxu0
      %2774 = vmatprep.mubr.f32.mxu0 0.0
      %2775 = vmatmul.mubr.f32.gmra.mxu0 %v2593
      %v2776 = vpop.f32.mrf.mxu0
      %v2777 = vadd.f32 0.0, %v2776
      %v2778 = vpop.f32.mrf.mxu0
      %2779 = vmatprep.mubr.f32.mxu0 0.0
      %2780 = vmatmul.mubr.f32.gmra.mxu0 %v2594
      %v2781 = vpop.f32.mrf.mxu0
      %v2782 = vadd.f32 0.0, %v2781
      %v2783 = vpop.f32.mrf.mxu0
      %2784 = vmatprep.mubr.f32.mxu0 0.0
      %2785 = vmatmul.mubr.f32.gmra.mxu0 %v2595
      %v2786 = vpop.f32.mrf.mxu0
      %v2787 = vadd.f32 0.0, %v2786
      %v2788 = vpop.f32.mrf.mxu0
      %2789 = vmatprep.mubr.f32.mxu0 0.0
      %2790 = vmatmul.mubr.f32.gmra.mxu0 %v2596
      %v2791 = vpop.f32.mrf.mxu0
      %v2792 = vadd.f32 0.0, %v2791
      %v2793 = vpop.f32.mrf.mxu0
      %2794 = vmatprep.mubr.f32.mxu0 0.0
      %2795 = vmatmul.mubr.f32.gmra.mxu0 %v2597
      %v2796 = vpop.f32.mrf.mxu0
      %v2797 = vadd.f32 0.0, %v2796
      %v2798 = vpop.f32.mrf.mxu0
      %2799 = vmatprep.mubr.f32.mxu0 0.0
      %2800 = vmatmul.mubr.f32.gmra.mxu0 %v2598
      %v2801 = vpop.f32.mrf.mxu0
      %v2802 = vadd.f32 0.0, %v2801
      %v2803 = vpop.f32.mrf.mxu0
      %2804 = vmatprep.mubr.f32.mxu0 0.0
      %2805 = vmatmul.mubr.f32.gmra.mxu0 %v2599
      %v2806 = vpop.f32.mrf.mxu0
      %v2807 = vadd.f32 0.0, %v2806
      %v2808 = vpop.f32.mrf.mxu0
      %2809 = vmatprep.mubr.f32.mxu0 0.0
      %2810 = vmatmul.mubr.f32.gmra.mxu0 %v2600
      %v2811 = vpop.f32.mrf.mxu0
      %v2812 = vadd.f32 0.0, %v2811
      %v2813 = vpop.f32.mrf.mxu0
      %2814 = vmatprep.mubr.f32.mxu0 0.0
      %2815 = vmatmul.mubr.f32.gmra.mxu0 %v2601
      %v2816 = vpop.f32.mrf.mxu0
      %v2817 = vadd.f32 0.0, %v2816
      %v2818 = vpop.f32.mrf.mxu0
      %2819 = vmatprep.mubr.f32.mxu0 0.0
      %2820 = vmatmul.mubr.f32.gmra.mxu0 %v2602
      %v2821 = vpop.f32.mrf.mxu0
      %v2822 = vadd.f32 0.0, %v2821
      %v2823 = vpop.f32.mrf.mxu0
      %2824 = vmatprep.mubr.f32.mxu0 0.0
      %2825 = vmatmul.mubr.f32.gmra.mxu0 %v2603
      %v2826 = vpop.f32.mrf.mxu0
      %v2827 = vadd.f32 0.0, %v2826
      %v2828 = vpop.f32.mrf.mxu0
      %2829 = vmatprep.mubr.f32.mxu0 0.0
      %2830 = vmatmul.mubr.f32.gmra.mxu0 %v2604
      %v2831 = vpop.f32.mrf.mxu0
      %v2832 = vadd.f32 0.0, %v2831
      %v2833 = vpop.f32.mrf.mxu0
      %2834 = vmatprep.mubr.f32.mxu0 0.0
      %2835 = vmatmul.mubr.f32.gmra.mxu0 %v2605
      %v2836 = vpop.f32.mrf.mxu0
      %v2837 = vadd.f32 0.0, %v2836
      %v2838 = vpop.f32.mrf.mxu0
      %2839 = vmatprep.mubr.f32.mxu0 0.0
      %2840 = vmatmul.mubr.f32.gmra.mxu0 %v2606
      %v2841 = vpop.f32.mrf.mxu0
      %v2842 = vadd.f32 0.0, %v2841
      %v2843 = vpop.f32.mrf.mxu0
      %2844 = vmatprep.mubr.f32.mxu0 0.0
      %2845 = vmatmul.mubr.f32.gmra.mxu0 %v2607
      %v2846 = vpop.f32.mrf.mxu0
      %v2847 = vadd.f32 0.0, %v2846
      %v2848 = vpop.f32.mrf.mxu0
      %2849 = vdwg.mxu0
      %v2850 = vadd.f32 %v2544, %v2692
      %v2851 = vadd.f32 %v2545, %v2697
      %v2852 = vadd.f32 %v2546, %v2702
      %v2853 = vadd.f32 %v2547, %v2707
      %v2854 = vadd.f32 %v2548, %v2712
      %v2855 = vadd.f32 %v2549, %v2717
      %v2856 = vadd.f32 %v2550, %v2722
      %v2857 = vadd.f32 %v2551, %v2727
      %v2858 = vadd.f32 %v2552, %v2732
      %v2859 = vadd.f32 %v2553, %v2737
      %v2860 = vadd.f32 %v2554, %v2742
      %v2861 = vadd.f32 %v2555, %v2747
      %v2862 = vadd.f32 %v2556, %v2752
      %v2863 = vadd.f32 %v2557, %v2757
      %v2864 = vadd.f32 %v2558, %v2762
      %v2865 = vadd.f32 %v2559, %v2767
      %v2866 = vadd.f32 %v2560, %v2772
      %v2867 = vadd.f32 %v2561, %v2777
      %v2868 = vadd.f32 %v2562, %v2782
      %v2869 = vadd.f32 %v2563, %v2787
      %v2870 = vadd.f32 %v2564, %v2792
      %v2871 = vadd.f32 %v2565, %v2797
      %v2872 = vadd.f32 %v2566, %v2802
      %v2873 = vadd.f32 %v2567, %v2807
      %v2874 = vadd.f32 %v2568, %v2812
      %v2875 = vadd.f32 %v2569, %v2817
      %v2876 = vadd.f32 %v2570, %v2822
      %v2877 = vadd.f32 %v2571, %v2827
      %v2878 = vadd.f32 %v2572, %v2832
      %v2879 = vadd.f32 %v2573, %v2837
      %v2880 = vadd.f32 %v2574, %v2842
      %v2881 = vadd.f32 %v2575, %v2847
      %v2882 = vld [vmem:[%s2269 + $0x2] sm:$0xff]
      %v2883 = vld [vmem:[%s2269 + $0xa] sm:$0xff]
      %v2884 = vld [vmem:[%s2269 + $0x1a] sm:$0xff]
      %v2885 = vld [vmem:[%s2269 + $0x22] sm:$0xff]
      %v2886 = vld [vmem:[%s2269 + $0x32] sm:$0xff]
      %v2887 = vld [vmem:[%s2269 + $0x3a] sm:$0xff]
      %v2888 = vld [vmem:[%s2269 + $0x4a] sm:$0xff]
      %v2889 = vld [vmem:[%s2269 + $0x52] sm:$0xff]
      %v2890 = vld [vmem:[%s2269 + $0x62] sm:$0xff]
      %v2891 = vld [vmem:[%s2269 + $0x6a] sm:$0xff]
      %v2892 = vld [vmem:[%s2269 + $0x7a] sm:$0xff]
      %v2893 = vld [vmem:[%s2269 + $0x82] sm:$0xff]
      %v2894 = vld [vmem:[%s2269 + $0x92] sm:$0xff]
      %v2895 = vld [vmem:[%s2269 + $0x9a] sm:$0xff]
      %v2896 = vld [vmem:[%s2269 + $0xaa] sm:$0xff]
      %v2897 = vld [vmem:[%s2269 + $0xb2] sm:$0xff]
      %v2898 = vld [vmem:[%s2269 + $0xc2] sm:$0xff]
      %v2899 = vld [vmem:[%s2269 + $0xca] sm:$0xff]
      %v2900 = vld [vmem:[%s2269 + $0xda] sm:$0xff]
      %v2901 = vld [vmem:[%s2269 + $0xe2] sm:$0xff]
      %v2902 = vld [vmem:[%s2269 + $0xf2] sm:$0xff]
      %v2903 = vld [vmem:[%s2269 + $0xfa] sm:$0xff]
      %v2904 = vld [vmem:[%s2269 + $0x10a] sm:$0xff]
      %v2905 = vld [vmem:[%s2269 + $0x112] sm:$0xff]
      %v2906 = vld [vmem:[%s2269 + $0x122] sm:$0xff]
      %v2907 = vld [vmem:[%s2269 + $0x12a] sm:$0xff]
      %v2908 = vld [vmem:[%s2269 + $0x13a] sm:$0xff]
      %v2909 = vld [vmem:[%s2269 + $0x142] sm:$0xff]
      %v2910 = vld [vmem:[%s2269 + $0x152] sm:$0xff]
      %v2911 = vld [vmem:[%s2269 + $0x15a] sm:$0xff]
      %v2912 = vld [vmem:[%s2269 + $0x16a] sm:$0xff]
      %v2913 = vld [vmem:[%s2269 + $0x172] sm:$0xff]
      %s2914 = scalar_lea.vmem %s3, 1024
      %v2915 = vld [vmem:[%s2914] sm:$0xff]
      %v2916 = vld [vmem:[%s2914 + $0x8] sm:$0xff]
      %v2917 = vld [vmem:[%s2914 + $0x10] sm:$0xff]
      %v2918 = vld [vmem:[%s2914 + $0x18] sm:$0xff]
      %v2919 = vld [vmem:[%s2914 + $0x20] sm:$0xff]
      %v2920 = vld [vmem:[%s2914 + $0x28] sm:$0xff]
      %v2921 = vld [vmem:[%s2914 + $0x30] sm:$0xff]
      %v2922 = vld [vmem:[%s2914 + $0x38] sm:$0xff]
      %v2923 = vld [vmem:[%s2914 + $0x40] sm:$0xff]
      %v2924 = vld [vmem:[%s2914 + $0x48] sm:$0xff]
      %v2925 = vld [vmem:[%s2914 + $0x50] sm:$0xff]
      %v2926 = vld [vmem:[%s2914 + $0x58] sm:$0xff]
      %v2927 = vld [vmem:[%s2914 + $0x60] sm:$0xff]
      %v2928 = vld [vmem:[%s2914 + $0x68] sm:$0xff]
      %v2929 = vld [vmem:[%s2914 + $0x70] sm:$0xff]
      %v2930 = vld [vmem:[%s2914 + $0x78] sm:$0xff]
      %2931 = vmatprep.subr.mxu0 0.0
      %2932 = vmatpush1.msra.mxu0 %v2930
      %2933 = vmatprep.subr.mxu0 0.0
      %2934 = vmatpush1.msra.mxu0 %v2929
      %2935 = vmatprep.subr.mxu0 0.0
      %2936 = vmatpush1.msra.mxu0 %v2928
      %2937 = vmatprep.subr.mxu0 0.0
      %2938 = vmatpush1.msra.mxu0 %v2927
      %2939 = vmatprep.subr.mxu0 0.0
      %2940 = vmatpush1.msra.mxu0 %v2926
      %2941 = vmatprep.subr.mxu0 0.0
      %2942 = vmatpush1.msra.mxu0 %v2925
      %2943 = vmatprep.subr.mxu0 0.0
      %2944 = vmatpush1.msra.mxu0 %v2924
      %2945 = vmatprep.subr.mxu0 0.0
      %2946 = vmatpush1.msra.mxu0 %v2923
      %2947 = vmatprep.subr.mxu0 0.0
      %2948 = vmatpush1.msra.mxu0 %v2922
      %2949 = vmatprep.subr.mxu0 0.0
      %2950 = vmatpush1.msra.mxu0 %v2921
      %2951 = vmatprep.subr.mxu0 0.0
      %2952 = vmatpush1.msra.mxu0 %v2920
      %2953 = vmatprep.subr.mxu0 0.0
      %2954 = vmatpush1.msra.mxu0 %v2919
      %2955 = vmatprep.subr.mxu0 0.0
      %2956 = vmatpush1.msra.mxu0 %v2918
      %2957 = vmatprep.subr.mxu0 0.0
      %2958 = vmatpush1.msra.mxu0 %v2917
      %2959 = vmatprep.subr.mxu0 0.0
      %2960 = vmatpush1.msra.mxu0 %v2916
      %2961 = vmatprep.subr.mxu0 0.0
      %2962 = vmatpush1.msra.mxu0 %v2915
      %2963 = vmatprep.subr.mxu0 0.0
      %2964 = vmatpush2.msra.mxu0 0.0
      %2965 = vmatprep.subr.mxu0 0.0
      %2966 = vmatpush2.msra.mxu0 0.0
      %2967 = vmatprep.subr.mxu0 0.0
      %2968 = vmatpush2.msra.mxu0 0.0
      %2969 = vmatprep.subr.mxu0 0.0
      %2970 = vmatpush2.msra.mxu0 0.0
      %2971 = vmatprep.subr.mxu0 0.0
      %2972 = vmatpush2.msra.mxu0 0.0
      %2973 = vmatprep.subr.mxu0 0.0
      %2974 = vmatpush2.msra.mxu0 0.0
      %2975 = vmatprep.subr.mxu0 0.0
      %2976 = vmatpush2.msra.mxu0 0.0
      %2977 = vmatprep.subr.mxu0 0.0
      %2978 = vmatpush2.msra.mxu0 0.0
      %2979 = vmatprep.subr.mxu0 0.0
      %2980 = vmatpush2.msra.mxu0 0.0
      %2981 = vmatprep.subr.mxu0 0.0
      %2982 = vmatpush2.msra.mxu0 0.0
      %2983 = vmatprep.subr.mxu0 0.0
      %2984 = vmatpush2.msra.mxu0 0.0
      %2985 = vmatprep.subr.mxu0 0.0
      %2986 = vmatpush2.msra.mxu0 0.0
      %2987 = vmatprep.subr.mxu0 0.0
      %2988 = vmatpush2.msra.mxu0 0.0
      %2989 = vmatprep.subr.mxu0 0.0
      %2990 = vmatpush2.msra.mxu0 0.0
      %2991 = vmatprep.subr.mxu0 0.0
      %2992 = vmatpush2.msra.mxu0 0.0
      %2993 = vmatprep.subr.mxu0 0.0
      %2994 = vmatpush2.msra.mxu0 0.0
      %2995 = vmatprep.mubr.f32.mxu0 0.0
      %2996 = vmatmul.mubr.f32.gmra.mxu0 %v2882
      %v2997 = vpop.f32.mrf.mxu0
      %v2998 = vadd.f32 0.0, %v2997
      %v2999 = vpop.f32.mrf.mxu0
      %3000 = vmatprep.mubr.f32.mxu0 0.0
      %3001 = vmatmul.mubr.f32.gmra.mxu0 %v2883
      %v3002 = vpop.f32.mrf.mxu0
      %v3003 = vadd.f32 0.0, %v3002
      %v3004 = vpop.f32.mrf.mxu0
      %3005 = vmatprep.mubr.f32.mxu0 0.0
      %3006 = vmatmul.mubr.f32.gmra.mxu0 %v2884
      %v3007 = vpop.f32.mrf.mxu0
      %v3008 = vadd.f32 0.0, %v3007
      %v3009 = vpop.f32.mrf.mxu0
      %3010 = vmatprep.mubr.f32.mxu0 0.0
      %3011 = vmatmul.mubr.f32.gmra.mxu0 %v2885
      %v3012 = vpop.f32.mrf.mxu0
      %v3013 = vadd.f32 0.0, %v3012
      %v3014 = vpop.f32.mrf.mxu0
      %3015 = vmatprep.mubr.f32.mxu0 0.0
      %3016 = vmatmul.mubr.f32.gmra.mxu0 %v2886
      %v3017 = vpop.f32.mrf.mxu0
      %v3018 = vadd.f32 0.0, %v3017
      %v3019 = vpop.f32.mrf.mxu0
      %3020 = vmatprep.mubr.f32.mxu0 0.0
      %3021 = vmatmul.mubr.f32.gmra.mxu0 %v2887
      %v3022 = vpop.f32.mrf.mxu0
      %v3023 = vadd.f32 0.0, %v3022
      %v3024 = vpop.f32.mrf.mxu0
      %3025 = vmatprep.mubr.f32.mxu0 0.0
      %3026 = vmatmul.mubr.f32.gmra.mxu0 %v2888
      %v3027 = vpop.f32.mrf.mxu0
      %v3028 = vadd.f32 0.0, %v3027
      %v3029 = vpop.f32.mrf.mxu0
      %3030 = vmatprep.mubr.f32.mxu0 0.0
      %3031 = vmatmul.mubr.f32.gmra.mxu0 %v2889
      %v3032 = vpop.f32.mrf.mxu0
      %v3033 = vadd.f32 0.0, %v3032
      %v3034 = vpop.f32.mrf.mxu0
      %3035 = vmatprep.mubr.f32.mxu0 0.0
      %3036 = vmatmul.mubr.f32.gmra.mxu0 %v2890
      %v3037 = vpop.f32.mrf.mxu0
      %v3038 = vadd.f32 0.0, %v3037
      %v3039 = vpop.f32.mrf.mxu0
      %3040 = vmatprep.mubr.f32.mxu0 0.0
      %3041 = vmatmul.mubr.f32.gmra.mxu0 %v2891
      %v3042 = vpop.f32.mrf.mxu0
      %v3043 = vadd.f32 0.0, %v3042
      %v3044 = vpop.f32.mrf.mxu0
      %3045 = vmatprep.mubr.f32.mxu0 0.0
      %3046 = vmatmul.mubr.f32.gmra.mxu0 %v2892
      %v3047 = vpop.f32.mrf.mxu0
      %v3048 = vadd.f32 0.0, %v3047
      %v3049 = vpop.f32.mrf.mxu0
      %3050 = vmatprep.mubr.f32.mxu0 0.0
      %3051 = vmatmul.mubr.f32.gmra.mxu0 %v2893
      %v3052 = vpop.f32.mrf.mxu0
      %v3053 = vadd.f32 0.0, %v3052
      %v3054 = vpop.f32.mrf.mxu0
      %3055 = vmatprep.mubr.f32.mxu0 0.0
      %3056 = vmatmul.mubr.f32.gmra.mxu0 %v2894
      %v3057 = vpop.f32.mrf.mxu0
      %v3058 = vadd.f32 0.0, %v3057
      %v3059 = vpop.f32.mrf.mxu0
      %3060 = vmatprep.mubr.f32.mxu0 0.0
      %3061 = vmatmul.mubr.f32.gmra.mxu0 %v2895
      %v3062 = vpop.f32.mrf.mxu0
      %v3063 = vadd.f32 0.0, %v3062
      %v3064 = vpop.f32.mrf.mxu0
      %3065 = vmatprep.mubr.f32.mxu0 0.0
      %3066 = vmatmul.mubr.f32.gmra.mxu0 %v2896
      %v3067 = vpop.f32.mrf.mxu0
      %v3068 = vadd.f32 0.0, %v3067
      %v3069 = vpop.f32.mrf.mxu0
      %3070 = vmatprep.mubr.f32.mxu0 0.0
      %3071 = vmatmul.mubr.f32.gmra.mxu0 %v2897
      %v3072 = vpop.f32.mrf.mxu0
      %v3073 = vadd.f32 0.0, %v3072
      %v3074 = vpop.f32.mrf.mxu0
      %3075 = vmatprep.mubr.f32.mxu0 0.0
      %3076 = vmatmul.mubr.f32.gmra.mxu0 %v2898
      %v3077 = vpop.f32.mrf.mxu0
      %v3078 = vadd.f32 0.0, %v3077
      %v3079 = vpop.f32.mrf.mxu0
      %3080 = vmatprep.mubr.f32.mxu0 0.0
      %3081 = vmatmul.mubr.f32.gmra.mxu0 %v2899
      %v3082 = vpop.f32.mrf.mxu0
      %v3083 = vadd.f32 0.0, %v3082
      %v3084 = vpop.f32.mrf.mxu0
      %3085 = vmatprep.mubr.f32.mxu0 0.0
      %3086 = vmatmul.mubr.f32.gmra.mxu0 %v2900
      %v3087 = vpop.f32.mrf.mxu0
      %v3088 = vadd.f32 0.0, %v3087
      %v3089 = vpop.f32.mrf.mxu0
      %3090 = vmatprep.mubr.f32.mxu0 0.0
      %3091 = vmatmul.mubr.f32.gmra.mxu0 %v2901
      %v3092 = vpop.f32.mrf.mxu0
      %v3093 = vadd.f32 0.0, %v3092
      %v3094 = vpop.f32.mrf.mxu0
      %3095 = vmatprep.mubr.f32.mxu0 0.0
      %3096 = vmatmul.mubr.f32.gmra.mxu0 %v2902
      %v3097 = vpop.f32.mrf.mxu0
      %v3098 = vadd.f32 0.0, %v3097
      %v3099 = vpop.f32.mrf.mxu0
      %3100 = vmatprep.mubr.f32.mxu0 0.0
      %3101 = vmatmul.mubr.f32.gmra.mxu0 %v2903
      %v3102 = vpop.f32.mrf.mxu0
      %v3103 = vadd.f32 0.0, %v3102
      %v3104 = vpop.f32.mrf.mxu0
      %3105 = vmatprep.mubr.f32.mxu0 0.0
      %3106 = vmatmul.mubr.f32.gmra.mxu0 %v2904
      %v3107 = vpop.f32.mrf.mxu0
      %v3108 = vadd.f32 0.0, %v3107
      %v3109 = vpop.f32.mrf.mxu0
      %3110 = vmatprep.mubr.f32.mxu0 0.0
      %3111 = vmatmul.mubr.f32.gmra.mxu0 %v2905
      %v3112 = vpop.f32.mrf.mxu0
      %v3113 = vadd.f32 0.0, %v3112
      %v3114 = vpop.f32.mrf.mxu0
      %3115 = vmatprep.mubr.f32.mxu0 0.0
      %3116 = vmatmul.mubr.f32.gmra.mxu0 %v2906
      %v3117 = vpop.f32.mrf.mxu0
      %v3118 = vadd.f32 0.0, %v3117
      %v3119 = vpop.f32.mrf.mxu0
      %3120 = vmatprep.mubr.f32.mxu0 0.0
      %3121 = vmatmul.mubr.f32.gmra.mxu0 %v2907
      %v3122 = vpop.f32.mrf.mxu0
      %v3123 = vadd.f32 0.0, %v3122
      %v3124 = vpop.f32.mrf.mxu0
      %3125 = vmatprep.mubr.f32.mxu0 0.0
      %3126 = vmatmul.mubr.f32.gmra.mxu0 %v2908
      %v3127 = vpop.f32.mrf.mxu0
      %v3128 = vadd.f32 0.0, %v3127
      %v3129 = vpop.f32.mrf.mxu0
      %3130 = vmatprep.mubr.f32.mxu0 0.0
      %3131 = vmatmul.mubr.f32.gmra.mxu0 %v2909
      %v3132 = vpop.f32.mrf.mxu0
      %v3133 = vadd.f32 0.0, %v3132
      %v3134 = vpop.f32.mrf.mxu0
      %3135 = vmatprep.mubr.f32.mxu0 0.0
      %3136 = vmatmul.mubr.f32.gmra.mxu0 %v2910
      %v3137 = vpop.f32.mrf.mxu0
      %v3138 = vadd.f32 0.0, %v3137
      %v3139 = vpop.f32.mrf.mxu0
      %3140 = vmatprep.mubr.f32.mxu0 0.0
      %3141 = vmatmul.mubr.f32.gmra.mxu0 %v2911
      %v3142 = vpop.f32.mrf.mxu0
      %v3143 = vadd.f32 0.0, %v3142
      %v3144 = vpop.f32.mrf.mxu0
      %3145 = vmatprep.mubr.f32.mxu0 0.0
      %3146 = vmatmul.mubr.f32.gmra.mxu0 %v2912
      %v3147 = vpop.f32.mrf.mxu0
      %v3148 = vadd.f32 0.0, %v3147
      %v3149 = vpop.f32.mrf.mxu0
      %3150 = vmatprep.mubr.f32.mxu0 0.0
      %3151 = vmatmul.mubr.f32.gmra.mxu0 %v2913
      %v3152 = vpop.f32.mrf.mxu0
      %v3153 = vadd.f32 0.0, %v3152
      %v3154 = vpop.f32.mrf.mxu0
      %3155 = vdwg.mxu0
      %v3156 = vadd.f32 %v2850, %v2998
      %v3157 = vadd.f32 %v2851, %v3003
      %v3158 = vadd.f32 %v2852, %v3008
      %v3159 = vadd.f32 %v2853, %v3013
      %v3160 = vadd.f32 %v2854, %v3018
      %v3161 = vadd.f32 %v2855, %v3023
      %v3162 = vadd.f32 %v2856, %v3028
      %v3163 = vadd.f32 %v2857, %v3033
      %v3164 = vadd.f32 %v2858, %v3038
      %v3165 = vadd.f32 %v2859, %v3043
      %v3166 = vadd.f32 %v2860, %v3048
      %v3167 = vadd.f32 %v2861, %v3053
      %v3168 = vadd.f32 %v2862, %v3058
      %v3169 = vadd.f32 %v2863, %v3063
      %v3170 = vadd.f32 %v2864, %v3068
      %v3171 = vadd.f32 %v2865, %v3073
      %v3172 = vadd.f32 %v2866, %v3078
      %v3173 = vadd.f32 %v2867, %v3083
      %v3174 = vadd.f32 %v2868, %v3088
      %v3175 = vadd.f32 %v2869, %v3093
      %v3176 = vadd.f32 %v2870, %v3098
      %v3177 = vadd.f32 %v2871, %v3103
      %v3178 = vadd.f32 %v2872, %v3108
      %v3179 = vadd.f32 %v2873, %v3113
      %v3180 = vadd.f32 %v2874, %v3118
      %v3181 = vadd.f32 %v2875, %v3123
      %v3182 = vadd.f32 %v2876, %v3128
      %v3183 = vadd.f32 %v2877, %v3133
      %v3184 = vadd.f32 %v2878, %v3138
      %v3185 = vadd.f32 %v2879, %v3143
      %v3186 = vadd.f32 %v2880, %v3148
      %v3187 = vadd.f32 %v2881, %v3153
      %3188 = vst [vmem:[%s262] sm:$0xff] %v3156
      %3189 = vst [vmem:[%s262 + $0x8] sm:$0xff] %v3157
      %3190 = vst [vmem:[%s262 + $0x10] sm:$0xff] %v3158
      %3191 = vst [vmem:[%s262 + $0x18] sm:$0xff] %v3159
      %3192 = vst [vmem:[%s262 + $0x20] sm:$0xff] %v3160
      %3193 = vst [vmem:[%s262 + $0x28] sm:$0xff] %v3161
      %3194 = vst [vmem:[%s262 + $0x30] sm:$0xff] %v3162
      %3195 = vst [vmem:[%s262 + $0x38] sm:$0xff] %v3163
      %3196 = vst [vmem:[%s262 + $0x40] sm:$0xff] %v3164
      %3197 = vst [vmem:[%s262 + $0x48] sm:$0xff] %v3165
      %3198 = vst [vmem:[%s262 + $0x50] sm:$0xff] %v3166
      %3199 = vst [vmem:[%s262 + $0x58] sm:$0xff] %v3167
      %3200 = vst [vmem:[%s262 + $0x60] sm:$0xff] %v3168
      %3201 = vst [vmem:[%s262 + $0x68] sm:$0xff] %v3169
      %3202 = vst [vmem:[%s262 + $0x70] sm:$0xff] %v3170
      %3203 = vst [vmem:[%s262 + $0x78] sm:$0xff] %v3171
      %3204 = vst [vmem:[%s262 + $0x80] sm:$0xff] %v3172
      %3205 = vst [vmem:[%s262 + $0x88] sm:$0xff] %v3173
      %3206 = vst [vmem:[%s262 + $0x90] sm:$0xff] %v3174
      %3207 = vst [vmem:[%s262 + $0x98] sm:$0xff] %v3175
      %3208 = vst [vmem:[%s262 + $0xa0] sm:$0xff] %v3176
      %3209 = vst [vmem:[%s262 + $0xa8] sm:$0xff] %v3177
      %3210 = vst [vmem:[%s262 + $0xb0] sm:$0xff] %v3178
      %3211 = vst [vmem:[%s262 + $0xb8] sm:$0xff] %v3179
      %3212 = vst [vmem:[%s262 + $0xc0] sm:$0xff] %v3180
      %3213 = vst [vmem:[%s262 + $0xc8] sm:$0xff] %v3181
      %3214 = vst [vmem:[%s262 + $0xd0] sm:$0xff] %v3182
      %3215 = vst [vmem:[%s262 + $0xd8] sm:$0xff] %v3183
      %3216 = vst [vmem:[%s262 + $0xe0] sm:$0xff] %v3184
      %3217 = vst [vmem:[%s262 + $0xe8] sm:$0xff] %v3185
      %3218 = vst [vmem:[%s262 + $0xf0] sm:$0xff] %v3186
      %3219 = vst [vmem:[%s262 + $0xf8] sm:$0xff] %v3187
      %v3220 = vadd.f32 %v3156, %v3157
      %v3221 = vadd.f32 %v3220, %v3158
      %v3222 = vadd.f32 %v3221, %v3159
      %v3223 = vadd.f32 %v3222, %v3160
      %v3224 = vadd.f32 %v3223, %v3161
      %v3225 = vadd.f32 %v3224, %v3162
      %v3226 = vadd.f32 %v3225, %v3163
      %v3227 = vadd.f32 %v3226, %v3164
      %v3228 = vadd.f32 %v3227, %v3165
      %v3229 = vadd.f32 %v3228, %v3166
      %v3230 = vadd.f32 %v3229, %v3167
      %v3231 = vadd.f32 %v3230, %v3168
      %v3232 = vadd.f32 %v3231, %v3169
      %v3233 = vadd.f32 %v3232, %v3170
      %v3234 = vadd.f32 %v3233, %v3171
      %v3235 = vadd.f32 %v3234, %v3172
      %v3236 = vadd.f32 %v3235, %v3173
      %v3237 = vadd.f32 %v3236, %v3174
      %v3238 = vadd.f32 %v3237, %v3175
      %v3239 = vadd.f32 %v3238, %v3176
      %v3240 = vadd.f32 %v3239, %v3177
      %v3241 = vadd.f32 %v3240, %v3178
      %v3242 = vadd.f32 %v3241, %v3179
      %v3243 = vadd.f32 %v3242, %v3180
      %v3244 = vadd.f32 %v3243, %v3181
      %v3245 = vadd.f32 %v3244, %v3182
      %v3246 = vadd.f32 %v3245, %v3183
      %v3247 = vadd.f32 %v3246, %v3184
      %v3248 = vadd.f32 %v3247, %v3185
      %v3249 = vadd.f32 %v3248, %v3186
      %v3250 = vadd.f32 %v3249, %v3187
      %v3251 = vrot.slane %v3250, 4
      %v3252 = vadd.f32 %v3250, %v3251
      %v3253 = vrot.slane %v3252, 2
      %v3254 = vadd.f32 %v3252, %v3253
      %v3255 = vrot.slane %v3254, 1
      %v3256 = vadd.f32 %v3254, %v3255
      %3257 = vst [vmem:[%s265] sm:$0x1] %v3256
      %v3258 = vmul.f32 %v3156, %v3156
      %v3259 = vmul.f32 %v3157, %v3157
      %v3260 = vmul.f32 %v3158, %v3158
      %v3261 = vmul.f32 %v3159, %v3159
      %v3262 = vmul.f32 %v3160, %v3160
      %v3263 = vmul.f32 %v3161, %v3161
      %v3264 = vmul.f32 %v3162, %v3162
      %v3265 = vmul.f32 %v3163, %v3163
      %v3266 = vmul.f32 %v3164, %v3164
      %v3267 = vmul.f32 %v3165, %v3165
      %v3268 = vmul.f32 %v3166, %v3166
      %v3269 = vmul.f32 %v3167, %v3167
      %v3270 = vmul.f32 %v3168, %v3168
      %v3271 = vmul.f32 %v3169, %v3169
      %v3272 = vmul.f32 %v3170, %v3170
      %v3273 = vmul.f32 %v3171, %v3171
      %v3274 = vmul.f32 %v3172, %v3172
      %v3275 = vmul.f32 %v3173, %v3173
      %v3276 = vmul.f32 %v3174, %v3174
      %v3277 = vmul.f32 %v3175, %v3175
      %v3278 = vmul.f32 %v3176, %v3176
      %v3279 = vmul.f32 %v3177, %v3177
      %v3280 = vmul.f32 %v3178, %v3178
      %v3281 = vmul.f32 %v3179, %v3179
      %v3282 = vmul.f32 %v3180, %v3180
      %v3283 = vmul.f32 %v3181, %v3181
      %v3284 = vmul.f32 %v3182, %v3182
      %v3285 = vmul.f32 %v3183, %v3183
      %v3286 = vmul.f32 %v3184, %v3184
      %v3287 = vmul.f32 %v3185, %v3185
      %v3288 = vmul.f32 %v3186, %v3186
      %v3289 = vmul.f32 %v3187, %v3187
      %v3290 = vadd.f32 %v3258, %v3259
      %v3291 = vadd.f32 %v3290, %v3260
      %v3292 = vadd.f32 %v3291, %v3261
      %v3293 = vadd.f32 %v3292, %v3262
      %v3294 = vadd.f32 %v3293, %v3263
      %v3295 = vadd.f32 %v3294, %v3264
      %v3296 = vadd.f32 %v3295, %v3265
      %v3297 = vadd.f32 %v3296, %v3266
      %v3298 = vadd.f32 %v3297, %v3267
      %v3299 = vadd.f32 %v3298, %v3268
      %v3300 = vadd.f32 %v3299, %v3269
      %v3301 = vadd.f32 %v3300, %v3270
      %v3302 = vadd.f32 %v3301, %v3271
      %v3303 = vadd.f32 %v3302, %v3272
      %v3304 = vadd.f32 %v3303, %v3273
      %v3305 = vadd.f32 %v3304, %v3274
      %v3306 = vadd.f32 %v3305, %v3275
      %v3307 = vadd.f32 %v3306, %v3276
      %v3308 = vadd.f32 %v3307, %v3277
      %v3309 = vadd.f32 %v3308, %v3278
      %v3310 = vadd.f32 %v3309, %v3279
      %v3311 = vadd.f32 %v3310, %v3280
      %v3312 = vadd.f32 %v3311, %v3281
      %v3313 = vadd.f32 %v3312, %v3282
      %v3314 = vadd.f32 %v3313, %v3283
      %v3315 = vadd.f32 %v3314, %v3284
      %v3316 = vadd.f32 %v3315, %v3285
      %v3317 = vadd.f32 %v3316, %v3286
      %v3318 = vadd.f32 %v3317, %v3287
      %v3319 = vadd.f32 %v3318, %v3288
      %v3320 = vadd.f32 %v3319, %v3289
      %v3321 = vrot.slane %v3320, 4
      %v3322 = vadd.f32 %v3320, %v3321
      %v3323 = vrot.slane %v3322, 2
      %v3324 = vadd.f32 %v3322, %v3323
      %v3325 = vrot.slane %v3324, 1
      %v3326 = vadd.f32 %v3324, %v3325
      %3327 = vst [vmem:[%s268] sm:$0x1] %v3326
      %p3328 = scmp.lt.s32.totalorder %s18, 1
      %s3329 = scalar_select %p3328, %s18, 1
      %s3330 = smul.addr %s3329, 32
      %s3331 = smul.addr %s3330, 8
      %s3332 = scalar_lea.vmem %s4, %s3331
      %p3333 = scmp.lt.s32.totalorder %s18, 1
      %s3334 = scalar_select %p3333, %s18, 1
      %s3335 = scalar_lea.vmem %s5, %s3334
      %p3336 = scmp.lt.s32.totalorder %s18, 1
      %s3337 = scalar_select %p3336, %s18, 1
      %s3338 = scalar_lea.vmem %s6, %s3337
      // Predicated region
      $region37: #{resblock_forward.4} parent=35 // pred_check
        %p3339 = pneg %p125
      $region38: #{resblock_forward.4} parent=35 // pred_check_branch
        %3341 = sbr.rel (%p3339) target = $region40
      $region39: #{resblock_forward.4} parent=35 // pred_region
        _
      $region40: #{resblock_forward.4} parent=35 // pred_fallthru
        _
      // Predicated region
      $region41: #{resblock_forward.4} parent=35 // pred_check
        %p3342 = pneg %p151
      $region42: #{resblock_forward.4} parent=35 // pred_check_branch
        %3344 = sbr.rel (%p3342) target = $region44
      $region43: #{resblock_forward.4} parent=35 // pred_region
        _
      $region44: #{resblock_forward.4} parent=35 // pred_fallthru
        _
      // Predicated region
      $region45: #{resblock_forward.4} parent=35 // pred_check
        %p3345 = pneg %p177
      $region46: #{resblock_forward.4} parent=35 // pred_check_branch
        %3347 = sbr.rel (%p3345) target = $region48
      $region47: #{resblock_forward.4} parent=35 // pred_region
        _
      $region48: #{resblock_forward.4} parent=35 // pred_fallthru
        _
    $region36: #{resblock_forward.4} parent=5 // pred_fallthru
      _
    %p3348 = scmp.le.s32.totalorder 2, %s13
    // Predicated region
    $region49: #{resblock_forward.4} parent=5 // pred_check
      %p3349 = pneg %p3348
    $region50: #{resblock_forward.4} parent=5 // pred_check_branch
      %3351 = sbr.rel (%p3349) target = $region52
    $region51: #{resblock_forward.4} parent=5 // pred_region
      %s3352 = ssub.s32 %s13, 2
      // Predicated region
      $region53: #{resblock_forward.4} parent=51 // pred_check
        %p3353 = pneg %p131
      $region54: #{resblock_forward.4} parent=51 // pred_check_branch
        %3355 = sbr.rel (%p3353) target = $region56
      $region55: #{resblock_forward.4} parent=51 // pred_region
        %p3356 = scmp.lt.s32.totalorder %s19, 1
        %s3357 = scalar_select %p3356, %s19, 1
        %s3358 = smul.addr %s3357, 32
        %s3359 = smul.addr %s3358, 8
        %s3360 = scalar_lea.vmem %s4, %s3359
      $region56: #{resblock_forward.4} parent=51 // pred_fallthru
        _
      // Predicated region
      $region57: #{resblock_forward.4} parent=51 // pred_check
        %p3361 = pneg %p157
      $region58: #{resblock_forward.4} parent=51 // pred_check_branch
        %3363 = sbr.rel (%p3361) target = $region60
      $region59: #{resblock_forward.4} parent=51 // pred_region
        %p3364 = scmp.lt.s32.totalorder %s19, 1
        %s3365 = scalar_select %p3364, %s19, 1
        %s3366 = scalar_lea.vmem %s5, %s3365
      $region60: #{resblock_forward.4} parent=51 // pred_fallthru
        _
      // Predicated region
      $region61: #{resblock_forward.4} parent=51 // pred_check
        %p3367 = pneg %p183
      $region62: #{resblock_forward.4} parent=51 // pred_check_branch
        %3369 = sbr.rel (%p3367) target = $region64
      $region63: #{resblock_forward.4} parent=51 // pred_region
        %p3370 = scmp.lt.s32.totalorder %s19, 1
        %s3371 = scalar_select %p3370, %s19, 1
        %s3372 = scalar_lea.vmem %s6, %s3371
      $region64: #{resblock_forward.4} parent=51 // pred_fallthru
        _
    $region52: #{resblock_forward.4} parent=5 // pred_fallthru
      _
  $region6: #{resblock_forward.4} parent=0 // loop_footer
    %s17 = sadd.s32 1, %s13
  $region7: #{resblock_forward.4} parent=0 // loop_footer_branch
    %12 = sbr.rel target = $region3
  $region8: #{resblock_forward.4} parent=0 // loop_exit
    _

</llo_original>
